<compile_context>
chip_gen: v5e
topology: v5e:2x2
jax: 0.10.0
libtpu: 0.0.40
codegen_flags: <defaults>
</compile_context>

<pallas_src>
import jax
import jax.numpy as jnp
from jax.experimental import pallas as pl
from jax.experimental.pallas import tpu as pltpu

SEQ = 50    # LSTM input feature size (fixed by the module)
HS = 256    # hidden size (fixed by the module)
T = 8       # number of time steps (dim 0 of x) -- small example shape
B = 2       # batch size (dim 1 of x)            -- small example shape


# ----------------------------- Pallas kernel ------------------------------- #

def _lstm_head_kernel(x_ref, wih0_ref, whh0_ref, b0_ref, wih1_ref, whh1_ref,
                      b1_ref, wfc1_ref, bfc1_ref, wfc2_ref, bfc2_ref, out_ref,
                      gx_scratch, sel_scratch):
    """Fused 2-layer LSTM recurrence (T steps, unrolled) + fc1/relu/fc2 head.

    x_ref      : (T*B, SEQ)  f32   -- feature-flipped input, time-major rows
    wih0_ref   : (SEQ, 4HS)  bf16  -- gate columns reordered to [i, f, o, g]
    whh0_ref   : (HS, 4HS)   bf16
    b0_ref     : (1, 4HS)    f32   -- b_ih0 + b_hh0
    wih1_ref   : (HS, 4HS)   bf16
    whh1_ref   : (HS, 4HS)   bf16
    b1_ref     : (1, 4HS)    f32   -- b_ih1 + b_hh1
    wfc1_ref   : (HS, HS)    bf16
    bfc1_ref   : (1, HS)     f32
    wfc2_ref   : (1, HS)     f32   -- fc2 weight as a row (VPU reduction path)
    bfc2_ref   : (1, 1)      f32
    out_ref    : (T, 1)      f32
    gx_scratch : (T, B, 4HS) f32 VMEM scratch (sublane-aligned per-step gx)
    sel_scratch: (T, HS)     f32 VMEM scratch (head input rows)
    """
    # Layer-0 input projection for all T steps at once: one M=T*B matmul instead
    # of T matmuls with M=B; removes it from the serial recurrence chain.
    gx = (jnp.dot(x_ref[...].astype(jnp.bfloat16), wih0_ref[...],
                  preferred_element_type=jnp.float32)
          + b0_ref[...])                                        # (T*B, 4*HS) f32

    # One-time repack into a time-major scratch so the hot loop reads aligned
    # (B, 4*HS) tiles (`gx_scratch[t]`) instead of sublane-offset slices of gx,
    # and gx's ~16 vregs die here instead of staying live across the loop.
    for t in range(T):
        gx_scratch[t] = gx[t * B:(t + 1) * B, :]

    whh0 = whh0_ref[...]                                        # (HS, 4HS) bf16
    wih1 = wih1_ref[...]                                        # (HS, 4HS) bf16
    whh1 = whh1_ref[...]                                        # (HS, 4HS) bf16
    b1f = jnp.broadcast_to(b1_ref[...], (B, 4 * HS))            # hoisted (once)

    def nonlin(gates, c):
        # Gate columns are pre-permuted to [i, f, o, g]: one sigmoid over a
        # contiguous 3*HS slab, one tanh over the last HS.  All f32 (v5e-safe).
        ifo = jax.nn.sigmoid(gates[:, :3 * HS])
        g = jnp.tanh(gates[:, 3 * HS:])
        i = ifo[:, 0 * HS:1 * HS]
        f = ifo[:, 1 * HS:2 * HS]
        o = ifo[:, 2 * HS:3 * HS]
        c_new = f * c + i * g
        return o * jnp.tanh(c_new), c_new

    h0 = jnp.zeros((B, HS), jnp.float32)
    c0 = jnp.zeros((B, HS), jnp.float32)
    h1 = jnp.zeros((B, HS), jnp.float32)
    c1 = jnp.zeros((B, HS), jnp.float32)

    # Carried (software-pipelined) recurrent-matmul results.  Initial states are
    # zero, so the carried layer-0 term is 0 and the layer-1 term is just bias.
    g0_hh = jnp.zeros((B, 4 * HS), jnp.float32)   # h0_{t-1} @ W_hh0
    g1_hh = b1f                                   # h1_{t-1} @ W_hh1 + b1

    # T=8: fully unrolled at trace time -> one basic block for the LLO scheduler.
    for t in range(T):
        # ---- layer 0, step t: only gate math on the serial chain (input and
        #      recurrent matmuls were both issued earlier).
        g0 = gx_scratch[t] + g0_hh
        h0, c0 = nonlin(g0, c0)
        h0b = h0.astype(jnp.bfloat16)

        # ---- cross-step overlap: issue step t+1's layer-0 recurrent matmul now;
        #      it only needs h0_t and overlaps with layer-1 work below.
        if t + 1 < T:
            g0_hh = jnp.dot(h0b, whh0, preferred_element_type=jnp.float32)

        # ---- layer 1, step t: the W_hh1 half (and the bias) were issued at the
        #      end of step t-1 (g1_hh); only h0_t @ W_ih1 sits on the serial chain.
        g1 = g1_hh + jnp.dot(h0b, wih1, preferred_element_type=jnp.float32)
        h1, c1 = nonlin(g1, c1)

        # Faithful to the PyTorch x[:, -1, :]: last batch element per time step.
        # Aligned row write into scratch (no Python list / post-loop concat).
        sel_scratch[t:t + 1, :] = h1[B - 1:B, :]

        # ---- cross-step overlap: issue step t+1's layer-1 recurrent matmul
        #      (+ bias) right after h1_t is produced.
        if t + 1 < T:
            g1_hh = (jnp.dot(h1.astype(jnp.bfloat16), whh1,
                             preferred_element_type=jnp.float32) + b1f)

    # TODO(synk): explicit MXU driving (matmul_push_rhs/acc_lhs/pop) to avoid
    # re-streaming W_hh0 weight tiles 8 times for a 2-row LHS is a possible
    # follow-up on v6e/v7x; verify in the bundle dump before committing.

    sel = sel_scratch[...]                                      # (T, HS)

    # Head: fc1 -> relu -> dropout (eval identity) -> fc2.
    h = (jnp.dot(sel.astype(jnp.bfloat16), wfc1_ref[...],
                 preferred_element_type=jnp.float32) + bfc1_ref[...])
    h = jnp.maximum(h, 0.0)
    # TODO(synk): nn.Dropout(p=0.2) is stochastic only in training mode; eval-mode
    # identity is implemented (training parity would need pltpu.prng_seed/random_bits).
    # fc2 with out_features=1: VPU multiply + lane reduction instead of N=1 MXU matmul.
    out_ref[...] = (jnp.sum(h * wfc2_ref[...], axis=-1, keepdims=True)
                    + bfc2_ref[...])


# ------------------------------ JAX wrapper -------------------------------- #

def _reorder_gates(a):
    """PyTorch gate order [i, f, g, o] -> kernel order [i, f, o, g] (one-time)."""
    i, f, g, o = jnp.split(a, 4, axis=-1)
    return jnp.concatenate([i, f, o, g], axis=-1)


def lstm_model_forward(x, p):
    # torch.flip(x, [2]) -> reverse the feature axis (glue op, wrapper-side).
    xf = jnp.flip(x, axis=2).reshape(T * B, SEQ)

    # Operand packing (once, outside the kernel): gate-column reorder, bf16 MXU
    # weights, fc2 weight as a lane row.  W_ih1 / W_hh1 stay SEPARATE so the
    # kernel can issue the recurrent half a step early.
    wih0 = _reorder_gates(p["wih0"]).astype(jnp.bfloat16)
    whh0 = _reorder_gates(p["whh0"]).astype(jnp.bfloat16)
    b0 = _reorder_gates(p["b0"])
    wih1 = _reorder_gates(p["wih1"]).astype(jnp.bfloat16)
    whh1 = _reorder_gates(p["whh1"]).astype(jnp.bfloat16)
    b1 = _reorder_gates(p["b1"])
    wfc1 = p["w1"].astype(jnp.bfloat16)
    wfc2_row = p["w2"].T                                   # (1, HS), f32

    out = pl.pallas_call(
        _lstm_head_kernel,
        out_shape=jax.ShapeDtypeStruct((T, 1), jnp.float32),
        grid_spec=pltpu.PrefetchScalarGridSpec(
            num_scalar_prefetch=0,
            grid=(1,),                                     # single invocation,
            # all weights resident (~1.8 MB bf16) -- no per-step grid overhead,
            # no re-tiling / Buffered pipelining needed at this footprint.
            in_specs=[
                pl.BlockSpec((T * B, SEQ), lambda i: (0, 0)),      # x (flipped)
                pl.BlockSpec((SEQ, 4 * HS), lambda i: (0, 0)),     # W_ih layer0
                pl.BlockSpec((HS, 4 * HS), lambda i: (0, 0)),      # W_hh layer0
                pl.BlockSpec((1, 4 * HS), lambda i: (0, 0)),       # b_ih0 + b_hh0
                pl.BlockSpec((HS, 4 * HS), lambda i: (0, 0)),      # W_ih layer1
                pl.BlockSpec((HS, 4 * HS), lambda i: (0, 0)),      # W_hh layer1
                pl.BlockSpec((1, 4 * HS), lambda i: (0, 0)),       # b_ih1 + b_hh1
                pl.BlockSpec((HS, HS), lambda i: (0, 0)),          # fc1 weight
                pl.BlockSpec((1, HS), lambda i: (0, 0)),           # fc1 bias
                pl.BlockSpec((1, HS), lambda i: (0, 0)),           # fc2 weight row
                pl.BlockSpec((1, 1), lambda i: (0, 0)),            # fc2 bias
            ],
            out_specs=pl.BlockSpec((T, 1), lambda i: (0, 0)),
            scratch_shapes=[
                pltpu.VMEM((T, B, 4 * HS), jnp.float32),           # gx, time-major
                pltpu.VMEM((T, HS), jnp.float32),                  # head input rows
            ],
        ),
        # Sequential recurrence on one TensorCore; a real multi-sequence workload
        # would add a leading "parallel" batch-group axis to use v7x's second TC.
        compiler_params=pltpu.CompilerParams(
            dimension_semantics=("arbitrary",)),
    )(xf, wih0, whh0, b0, wih1, whh1, b1, wfc1, p["bb1"], wfc2_row, p["bb2"])
    return out


def init_params(key):
    """Deterministic synthetic params with PyTorch-default uniform(+-1/sqrt(hs)) ranges.
    Weights are stored transposed (in_features, out_features) so the kernel does x @ W;
    gate column order is PyTorch's [i, f, g, o] (wrapper reorders for the kernel)."""
    keys = jax.random.split(key, 12)
    k = 1.0 / jnp.sqrt(HS)

    def u(kk, shape, scale):
        return jax.random.uniform(kk, shape, jnp.float32, -scale, scale)

    return dict(
        wih0=u(keys[0], (SEQ, 4 * HS), k),
        whh0=u(keys[1], (HS, 4 * HS), k),
        b0=u(keys[2], (1, 4 * HS), k) + u(keys[3], (1, 4 * HS), k),
        wih1=u(keys[4], (HS, 4 * HS), k),
        whh1=u(keys[5], (HS, 4 * HS), k),
        b1=u(keys[6], (1, 4 * HS), k) + u(keys[7], (1, 4 * HS), k),
        w1=u(keys[8], (HS, HS), k),
        bb1=u(keys[9], (1, HS), k),
        w2=u(keys[10], (HS, 1), k),
        bb2=u(keys[11], (1, 1), k),
    )


def reference_forward(x, p):
    """Pure-JAX f32 reference (same math, HIGHEST precision) for correctness."""
    x = jnp.flip(x, axis=2)

    def cell(x_t, h, c, wih, whh, b):
        g = (jnp.dot(x_t, wih, precision=jax.lax.Precision.HIGHEST)
             + jnp.dot(h, whh, precision=jax.lax.Precision.HIGHEST) + b)
        i = jax.nn.sigmoid(g[:, :HS])
        f = jax.nn.sigmoid(g[:, HS:2 * HS])
        gg = jnp.tanh(g[:, 2 * HS:3 * HS])
        o = jax.nn.sigmoid(g[:, 3 * HS:])
        c = f * c + i * gg
        h = o * jnp.tanh(c)
        return h, c

    def step(carry, x_t):
        h0, c0, h1, c1 = carry
        h0, c0 = cell(x_t, h0, c0, p["wih0"], p["whh0"], p["b0"])
        h1, c1 = cell(h0, h1, c1, p["wih1"], p["whh1"], p["b1"])
        return (h0, c0, h1, c1), h1

    init = tuple(jnp.zeros((B, HS), jnp.float32) for _ in range(4))
    _, outs = jax.lax.scan(step, init, x)
    sel = outs[:, -1, :]
    h = jnp.maximum(jnp.dot(sel, p["w1"], precision=jax.lax.Precision.HIGHEST)
                    + p["bb1"], 0.0)
    return jnp.dot(h, p["w2"], precision=jax.lax.Precision.HIGHEST) + p["bb2"]


if __name__ == "__main__":
    key = jax.random.PRNGKey(0)
    kx, kp = jax.random.split(key)
    x = jax.random.normal(kx, (T, B, SEQ), jnp.float32)
    params = init_params(kp)

    fwd = jax.jit(lstm_model_forward)
    out = jax.block_until_ready(fwd(x, params))
    assert out.shape == (T, 1), out.shape

    ref = jax.block_until_ready(reference_forward(x, params))
    # bf16 matmul operands (with f32 accumulation) vs. the f32 HIGHEST reference
    # introduce ~1e-2-level drift over the 8-step recurrence; tolerance set accordingly.
    if not jnp.allclose(out, ref, rtol=5e-2, atol=5e-2):
        raise AssertionError(f"kernel mismatch: max |diff| = {jnp.max(jnp.abs(out - ref))}")

    print("KERNEL_OK")
</pallas_src>

<mosaic_0001>
module attributes {stable_mosaic.version = 11 : i64} {
  func.func @_lstm_head_kernel(%arg0: i32, %arg1: memref<16x50xf32, #tpu.memory_space<vmem>>, %arg2: memref<50x1024xbf16, #tpu.memory_space<vmem>>, %arg3: memref<256x1024xbf16, #tpu.memory_space<vmem>>, %arg4: memref<1x1024xf32, #tpu.memory_space<vmem>>, %arg5: memref<256x1024xbf16, #tpu.memory_space<vmem>>, %arg6: memref<256x1024xbf16, #tpu.memory_space<vmem>>, %arg7: memref<1x1024xf32, #tpu.memory_space<vmem>>, %arg8: memref<256x256xbf16, #tpu.memory_space<vmem>>, %arg9: memref<1x256xf32, #tpu.memory_space<vmem>>, %arg10: memref<1x256xf32, #tpu.memory_space<vmem>>, %arg11: memref<1x1xf32, #tpu.memory_space<vmem>>, %arg12: memref<8x1xf32, #tpu.memory_space<vmem>>, %arg13: memref<8x2x1024xf32, #tpu.memory_space<vmem>>, %arg14: memref<8x256xf32, #tpu.memory_space<vmem>>) attributes {dimension_semantics = [#tpu.dimension_semantics<arbitrary>], iteration_bounds = array<i64: 1>, scalar_prefetch = 0 : i64, scratch_operands = 2 : i64, tpu.core_type = #tpu.core_type<tc>, window_params = [{pipeline_mode = #tpu.pipeline_mode<synchronous>, transform_indices = @transform_0, window_bounds = array<i64: 16, 50>}, {pipeline_mode = #tpu.pipeline_mode<synchronous>, transform_indices = @transform_1, window_bounds = array<i64: 50, 1024>}, {pipeline_mode = #tpu.pipeline_mode<synchronous>, transform_indices = @transform_2, window_bounds = array<i64: 256, 1024>}, {pipeline_mode = #tpu.pipeline_mode<synchronous>, transform_indices = @transform_3, window_bounds = array<i64: 1, 1024>}, {pipeline_mode = #tpu.pipeline_mode<synchronous>, transform_indices = @transform_4, window_bounds = array<i64: 256, 1024>}, {pipeline_mode = #tpu.pipeline_mode<synchronous>, transform_indices = @transform_5, window_bounds = array<i64: 256, 1024>}, {pipeline_mode = #tpu.pipeline_mode<synchronous>, transform_indices = @transform_6, window_bounds = array<i64: 1, 1024>}, {pipeline_mode = #tpu.pipeline_mode<synchronous>, transform_indices = @transform_7, window_bounds = array<i64: 256, 256>}, {pipeline_mode = #tpu.pipeline_mode<synchronous>, transform_indices = @transform_8, window_bounds = array<i64: 1, 256>}, {pipeline_mode = #tpu.pipeline_mode<synchronous>, transform_indices = @transform_9, window_bounds = array<i64: 1, 256>}, {pipeline_mode = #tpu.pipeline_mode<synchronous>, transform_indices = @transform_10, window_bounds = array<i64: 1, 1>}, {pipeline_mode = #tpu.pipeline_mode<synchronous>, transform_indices = @transform_11, window_bounds = array<i64: 8, 1>}]} {
    %c0 = arith.constant 0 : index
    %c0_0 = arith.constant 0 : index
    %0 = vector.load %arg1[%c0, %c0_0] : memref<16x50xf32, #tpu.memory_space<vmem>>, vector<16x50xf32>
    %1 = arith.truncf %0 : vector<16x50xf32> to vector<16x50xbf16>
    %c0_1 = arith.constant 0 : index
    %c0_2 = arith.constant 0 : index
    %2 = vector.load %arg2[%c0_1, %c0_2] : memref<50x1024xbf16, #tpu.memory_space<vmem>>, vector<50x1024xbf16>
    %cst = arith.constant dense<0.000000e+00> : vector<16x1024xf32>
    %3 = tpu.matmul %1, %2, %cst {dimension_numbers = #tpu.dot_dimension_numbers<[1], [0], [0], [1], [0, 0, 1, 1], [], []>} : vector<16x50xbf16>, vector<50x1024xbf16>, vector<16x1024xf32> -> vector<16x1024xf32>
    %c0_3 = arith.constant 0 : index
    %c0_4 = arith.constant 0 : index
    %4 = vector.load %arg4[%c0_3, %c0_4] : memref<1x1024xf32, #tpu.memory_space<vmem>>, vector<1x1024xf32>
    %5 = vector.broadcast %4 : vector<1x1024xf32> to vector<16x1024xf32>
    %6 = arith.addf %3, %5 : vector<16x1024xf32>
    %7 = vector.extract_strided_slice %6 {offsets = [0, 0], sizes = [2, 1024], strides = [1, 1]} : vector<16x1024xf32> to vector<2x1024xf32>
    %c0_5 = arith.constant 0 : index
    %c0_6 = arith.constant 0 : index
    %c0_7 = arith.constant 0 : index
    %8 = vector.load %arg13[%c0_5, %c0_6, %c0_7] : memref<8x2x1024xf32, #tpu.memory_space<vmem>>, vector<1x2x1024xf32>
    %9 = vector.shape_cast %8 : vector<1x2x1024xf32> to vector<2x1024xf32>
    %10 = vector.shape_cast %7 : vector<2x1024xf32> to vector<1x2x1024xf32>
    tpu.vector_store %arg13[%c0_5, %c0_6, %c0_7], %10 {strides = array<i32>} : memref<8x2x1024xf32, #tpu.memory_space<vmem>>, vector<1x2x1024xf32>,
    %11 = vector.extract_strided_slice %6 {offsets = [2, 0], sizes = [2, 1024], strides = [1, 1]} : vector<16x1024xf32> to vector<2x1024xf32>
    %c1 = arith.constant 1 : index
    %c0_8 = arith.constant 0 : index
    %c0_9 = arith.constant 0 : index
    %12 = vector.load %arg13[%c1, %c0_8, %c0_9] : memref<8x2x1024xf32, #tpu.memory_space<vmem>>, vector<1x2x1024xf32>
    %13 = vector.shape_cast %12 : vector<1x2x1024xf32> to vector<2x1024xf32>
    %14 = vector.shape_cast %11 : vector<2x1024xf32> to vector<1x2x1024xf32>
    tpu.vector_store %arg13[%c1, %c0_8, %c0_9], %14 {strides = array<i32>} : memref<8x2x1024xf32, #tpu.memory_space<vmem>>, vector<1x2x1024xf32>,
    %15 = vector.extract_strided_slice %6 {offsets = [4, 0], sizes = [2, 1024], strides = [1, 1]} : vector<16x1024xf32> to vector<2x1024xf32>
    %c2 = arith.constant 2 : index
    %c0_10 = arith.constant 0 : index
    %c0_11 = arith.constant 0 : index
    %16 = vector.load %arg13[%c2, %c0_10, %c0_11] : memref<8x2x1024xf32, #tpu.memory_space<vmem>>, vector<1x2x1024xf32>
    %17 = vector.shape_cast %16 : vector<1x2x1024xf32> to vector<2x1024xf32>
    %18 = vector.shape_cast %15 : vector<2x1024xf32> to vector<1x2x1024xf32>
    tpu.vector_store %arg13[%c2, %c0_10, %c0_11], %18 {strides = array<i32>} : memref<8x2x1024xf32, #tpu.memory_space<vmem>>, vector<1x2x1024xf32>,
    %19 = vector.extract_strided_slice %6 {offsets = [6, 0], sizes = [2, 1024], strides = [1, 1]} : vector<16x1024xf32> to vector<2x1024xf32>
    %c3 = arith.constant 3 : index
    %c0_12 = arith.constant 0 : index
    %c0_13 = arith.constant 0 : index
    %20 = vector.load %arg13[%c3, %c0_12, %c0_13] : memref<8x2x1024xf32, #tpu.memory_space<vmem>>, vector<1x2x1024xf32>
    %21 = vector.shape_cast %20 : vector<1x2x1024xf32> to vector<2x1024xf32>
    %22 = vector.shape_cast %19 : vector<2x1024xf32> to vector<1x2x1024xf32>
    tpu.vector_store %arg13[%c3, %c0_12, %c0_13], %22 {strides = array<i32>} : memref<8x2x1024xf32, #tpu.memory_space<vmem>>, vector<1x2x1024xf32>,
    %23 = vector.extract_strided_slice %6 {offsets = [8, 0], sizes = [2, 1024], strides = [1, 1]} : vector<16x1024xf32> to vector<2x1024xf32>
    %c4 = arith.constant 4 : index
    %c0_14 = arith.constant 0 : index
    %c0_15 = arith.constant 0 : index
    %24 = vector.load %arg13[%c4, %c0_14, %c0_15] : memref<8x2x1024xf32, #tpu.memory_space<vmem>>, vector<1x2x1024xf32>
    %25 = vector.shape_cast %24 : vector<1x2x1024xf32> to vector<2x1024xf32>
    %26 = vector.shape_cast %23 : vector<2x1024xf32> to vector<1x2x1024xf32>
    tpu.vector_store %arg13[%c4, %c0_14, %c0_15], %26 {strides = array<i32>} : memref<8x2x1024xf32, #tpu.memory_space<vmem>>, vector<1x2x1024xf32>,
    %27 = vector.extract_strided_slice %6 {offsets = [10, 0], sizes = [2, 1024], strides = [1, 1]} : vector<16x1024xf32> to vector<2x1024xf32>
    %c5 = arith.constant 5 : index
    %c0_16 = arith.constant 0 : index
    %c0_17 = arith.constant 0 : index
    %28 = vector.load %arg13[%c5, %c0_16, %c0_17] : memref<8x2x1024xf32, #tpu.memory_space<vmem>>, vector<1x2x1024xf32>
    %29 = vector.shape_cast %28 : vector<1x2x1024xf32> to vector<2x1024xf32>
    %30 = vector.shape_cast %27 : vector<2x1024xf32> to vector<1x2x1024xf32>
    tpu.vector_store %arg13[%c5, %c0_16, %c0_17], %30 {strides = array<i32>} : memref<8x2x1024xf32, #tpu.memory_space<vmem>>, vector<1x2x1024xf32>,
    %31 = vector.extract_strided_slice %6 {offsets = [12, 0], sizes = [2, 1024], strides = [1, 1]} : vector<16x1024xf32> to vector<2x1024xf32>
    %c6 = arith.constant 6 : index
    %c0_18 = arith.constant 0 : index
    %c0_19 = arith.constant 0 : index
    %32 = vector.load %arg13[%c6, %c0_18, %c0_19] : memref<8x2x1024xf32, #tpu.memory_space<vmem>>, vector<1x2x1024xf32>
    %33 = vector.shape_cast %32 : vector<1x2x1024xf32> to vector<2x1024xf32>
    %34 = vector.shape_cast %31 : vector<2x1024xf32> to vector<1x2x1024xf32>
    tpu.vector_store %arg13[%c6, %c0_18, %c0_19], %34 {strides = array<i32>} : memref<8x2x1024xf32, #tpu.memory_space<vmem>>, vector<1x2x1024xf32>,
    %35 = vector.extract_strided_slice %6 {offsets = [14, 0], sizes = [2, 1024], strides = [1, 1]} : vector<16x1024xf32> to vector<2x1024xf32>
    %c7 = arith.constant 7 : index
    %c0_20 = arith.constant 0 : index
    %c0_21 = arith.constant 0 : index
    %36 = vector.load %arg13[%c7, %c0_20, %c0_21] : memref<8x2x1024xf32, #tpu.memory_space<vmem>>, vector<1x2x1024xf32>
    %37 = vector.shape_cast %36 : vector<1x2x1024xf32> to vector<2x1024xf32>
    %38 = vector.shape_cast %35 : vector<2x1024xf32> to vector<1x2x1024xf32>
    tpu.vector_store %arg13[%c7, %c0_20, %c0_21], %38 {strides = array<i32>} : memref<8x2x1024xf32, #tpu.memory_space<vmem>>, vector<1x2x1024xf32>,
    %c0_22 = arith.constant 0 : index
    %c0_23 = arith.constant 0 : index
    %39 = vector.load %arg3[%c0_22, %c0_23] : memref<256x1024xbf16, #tpu.memory_space<vmem>>, vector<256x1024xbf16>
    %c0_24 = arith.constant 0 : index
    %c0_25 = arith.constant 0 : index
    %40 = vector.load %arg5[%c0_24, %c0_25] : memref<256x1024xbf16, #tpu.memory_space<vmem>>, vector<256x1024xbf16>
    %c0_26 = arith.constant 0 : index
    %c0_27 = arith.constant 0 : index
    %41 = vector.load %arg6[%c0_26, %c0_27] : memref<256x1024xbf16, #tpu.memory_space<vmem>>, vector<256x1024xbf16>
    %c0_28 = arith.constant 0 : index
    %c0_29 = arith.constant 0 : index
    %42 = vector.load %arg7[%c0_28, %c0_29] : memref<1x1024xf32, #tpu.memory_space<vmem>>, vector<1x1024xf32>
    %43 = vector.shape_cast %42 : vector<1x1024xf32> to vector<1x1024xf32>
    %44 = vector.broadcast %43 : vector<1x1024xf32> to vector<2x1024xf32>
    %cst_30 = arith.constant 0.000000e+00 : f32
    %45 = vector.broadcast %cst_30 : f32 to vector<2x256xf32>
    %cst_31 = arith.constant 0.000000e+00 : f32
    %46 = vector.broadcast %cst_31 : f32 to vector<2x256xf32>
    %cst_32 = arith.constant 0.000000e+00 : f32
    %47 = vector.broadcast %cst_32 : f32 to vector<2x1024xf32>
    %c0_33 = arith.constant 0 : index
    %c0_34 = arith.constant 0 : index
    %c0_35 = arith.constant 0 : index
    %48 = vector.load %arg13[%c0_33, %c0_34, %c0_35] : memref<8x2x1024xf32, #tpu.memory_space<vmem>>, vector<1x2x1024xf32>
    %49 = vector.shape_cast %48 : vector<1x2x1024xf32> to vector<2x1024xf32>
    %50 = arith.addf %49, %47 : vector<2x1024xf32>
    %51 = vector.extract_strided_slice %50 {offsets = [0, 0], sizes = [2, 768], strides = [1, 1]} : vector<2x1024xf32> to vector<2x768xf32>
    %52 = arith.negf %51 : vector<2x768xf32>
    %53 = math.exp %52 : vector<2x768xf32>
    %cst_36 = arith.constant 1.000000e+00 : f32
    %54 = vector.broadcast %cst_36 : f32 to vector<2x768xf32>
    %55 = arith.addf %54, %53 : vector<2x768xf32>
    %56 = arith.divf %54, %55 : vector<2x768xf32>
    %57 = vector.extract_strided_slice %50 {offsets = [0, 768], sizes = [2, 256], strides = [1, 1]} : vector<2x1024xf32> to vector<2x256xf32>
    %58 = math.tanh %57 : vector<2x256xf32>
    %59 = vector.extract_strided_slice %56 {offsets = [0, 0], sizes = [2, 256], strides = [1, 1]} : vector<2x768xf32> to vector<2x256xf32>
    %60 = vector.extract_strided_slice %56 {offsets = [0, 256], sizes = [2, 256], strides = [1, 1]} : vector<2x768xf32> to vector<2x256xf32>
    %61 = vector.extract_strided_slice %56 {offsets = [0, 512], sizes = [2, 256], strides = [1, 1]} : vector<2x768xf32> to vector<2x256xf32>
    %62 = arith.mulf %60, %45 : vector<2x256xf32>
    %63 = arith.mulf %59, %58 : vector<2x256xf32>
    %64 = arith.addf %62, %63 : vector<2x256xf32>
    %65 = math.tanh %64 : vector<2x256xf32>
    %66 = arith.mulf %61, %65 : vector<2x256xf32>
    %67 = arith.truncf %66 : vector<2x256xf32> to vector<2x256xbf16>
    %cst_37 = arith.constant dense<0.000000e+00> : vector<2x1024xf32>
    %68 = tpu.matmul %67, %39, %cst_37 {dimension_numbers = #tpu.dot_dimension_numbers<[1], [0], [0], [1], [0, 0, 1, 1], [], []>} : vector<2x256xbf16>, vector<256x1024xbf16>, vector<2x1024xf32> -> vector<2x1024xf32>
    %cst_38 = arith.constant dense<0.000000e+00> : vector<2x1024xf32>
    %69 = tpu.matmul %67, %40, %cst_38 {dimension_numbers = #tpu.dot_dimension_numbers<[1], [0], [0], [1], [0, 0, 1, 1], [], []>} : vector<2x256xbf16>, vector<256x1024xbf16>, vector<2x1024xf32> -> vector<2x1024xf32>
    %70 = arith.addf %44, %69 : vector<2x1024xf32>
    %71 = vector.extract_strided_slice %70 {offsets = [0, 0], sizes = [2, 768], strides = [1, 1]} : vector<2x1024xf32> to vector<2x768xf32>
    %72 = arith.negf %71 : vector<2x768xf32>
    %73 = math.exp %72 : vector<2x768xf32>
    %cst_39 = arith.constant 1.000000e+00 : f32
    %74 = vector.broadcast %cst_39 : f32 to vector<2x768xf32>
    %75 = arith.addf %74, %73 : vector<2x768xf32>
    %76 = arith.divf %74, %75 : vector<2x768xf32>
    %77 = vector.extract_strided_slice %70 {offsets = [0, 768], sizes = [2, 256], strides = [1, 1]} : vector<2x1024xf32> to vector<2x256xf32>
    %78 = math.tanh %77 : vector<2x256xf32>
    %79 = vector.extract_strided_slice %76 {offsets = [0, 0], sizes = [2, 256], strides = [1, 1]} : vector<2x768xf32> to vector<2x256xf32>
    %80 = vector.extract_strided_slice %76 {offsets = [0, 256], sizes = [2, 256], strides = [1, 1]} : vector<2x768xf32> to vector<2x256xf32>
    %81 = vector.extract_strided_slice %76 {offsets = [0, 512], sizes = [2, 256], strides = [1, 1]} : vector<2x768xf32> to vector<2x256xf32>
    %82 = arith.mulf %80, %46 : vector<2x256xf32>
    %83 = arith.mulf %79, %78 : vector<2x256xf32>
    %84 = arith.addf %82, %83 : vector<2x256xf32>
    %85 = math.tanh %84 : vector<2x256xf32>
    %86 = arith.mulf %81, %85 : vector<2x256xf32>
    %87 = vector.extract_strided_slice %86 {offsets = [1, 0], sizes = [1, 256], strides = [1, 1]} : vector<2x256xf32> to vector<1x256xf32>
    %c0_40 = arith.constant 0 : index
    %c0_41 = arith.constant 0 : index
    %88 = vector.load %arg14[%c0_40, %c0_41] : memref<8x256xf32, #tpu.memory_space<vmem>>, vector<1x256xf32>
    tpu.vector_store %arg14[%c0_40, %c0_41], %87 {strides = array<i32>} : memref<8x256xf32, #tpu.memory_space<vmem>>, vector<1x256xf32>,
    %89 = arith.truncf %86 : vector<2x256xf32> to vector<2x256xbf16>
    %cst_42 = arith.constant dense<0.000000e+00> : vector<2x1024xf32>
    %90 = tpu.matmul %89, %41, %cst_42 {dimension_numbers = #tpu.dot_dimension_numbers<[1], [0], [0], [1], [0, 0, 1, 1], [], []>} : vector<2x256xbf16>, vector<256x1024xbf16>, vector<2x1024xf32> -> vector<2x1024xf32>
    %91 = arith.addf %90, %44 : vector<2x1024xf32>
    %c1_43 = arith.constant 1 : index
    %c0_44 = arith.constant 0 : index
    %c0_45 = arith.constant 0 : index
    %92 = vector.load %arg13[%c1_43, %c0_44, %c0_45] : memref<8x2x1024xf32, #tpu.memory_space<vmem>>, vector<1x2x1024xf32>
    %93 = vector.shape_cast %92 : vector<1x2x1024xf32> to vector<2x1024xf32>
    %94 = arith.addf %93, %68 : vector<2x1024xf32>
    %95 = vector.extract_strided_slice %94 {offsets = [0, 0], sizes = [2, 768], strides = [1, 1]} : vector<2x1024xf32> to vector<2x768xf32>
    %96 = arith.negf %95 : vector<2x768xf32>
    %97 = math.exp %96 : vector<2x768xf32>
    %cst_46 = arith.constant 1.000000e+00 : f32
    %98 = vector.broadcast %cst_46 : f32 to vector<2x768xf32>
    %99 = arith.addf %98, %97 : vector<2x768xf32>
    %100 = arith.divf %98, %99 : vector<2x768xf32>
    %101 = vector.extract_strided_slice %94 {offsets = [0, 768], sizes = [2, 256], strides = [1, 1]} : vector<2x1024xf32> to vector<2x256xf32>
    %102 = math.tanh %101 : vector<2x256xf32>
    %103 = vector.extract_strided_slice %100 {offsets = [0, 0], sizes = [2, 256], strides = [1, 1]} : vector<2x768xf32> to vector<2x256xf32>
    %104 = vector.extract_strided_slice %100 {offsets = [0, 256], sizes = [2, 256], strides = [1, 1]} : vector<2x768xf32> to vector<2x256xf32>
    %105 = vector.extract_strided_slice %100 {offsets = [0, 512], sizes = [2, 256], strides = [1, 1]} : vector<2x768xf32> to vector<2x256xf32>
    %106 = arith.mulf %104, %64 : vector<2x256xf32>
    %107 = arith.mulf %103, %102 : vector<2x256xf32>
    %108 = arith.addf %106, %107 : vector<2x256xf32>
    %109 = math.tanh %108 : vector<2x256xf32>
    %110 = arith.mulf %105, %109 : vector<2x256xf32>
    %111 = arith.truncf %110 : vector<2x256xf32> to vector<2x256xbf16>
    %cst_47 = arith.constant dense<0.000000e+00> : vector<2x1024xf32>
    %112 = tpu.matmul %111, %39, %cst_47 {dimension_numbers = #tpu.dot_dimension_numbers<[1], [0], [0], [1], [0, 0, 1, 1], [], []>} : vector<2x256xbf16>, vector<256x1024xbf16>, vector<2x1024xf32> -> vector<2x1024xf32>
    %cst_48 = arith.constant dense<0.000000e+00> : vector<2x1024xf32>
    %113 = tpu.matmul %111, %40, %cst_48 {dimension_numbers = #tpu.dot_dimension_numbers<[1], [0], [0], [1], [0, 0, 1, 1], [], []>} : vector<2x256xbf16>, vector<256x1024xbf16>, vector<2x1024xf32> -> vector<2x1024xf32>
    %114 = arith.addf %91, %113 : vector<2x1024xf32>
    %115 = vector.extract_strided_slice %114 {offsets = [0, 0], sizes = [2, 768], strides = [1, 1]} : vector<2x1024xf32> to vector<2x768xf32>
    %116 = arith.negf %115 : vector<2x768xf32>
    %117 = math.exp %116 : vector<2x768xf32>
    %cst_49 = arith.constant 1.000000e+00 : f32
    %118 = vector.broadcast %cst_49 : f32 to vector<2x768xf32>
    %119 = arith.addf %118, %117 : vector<2x768xf32>
    %120 = arith.divf %118, %119 : vector<2x768xf32>
    %121 = vector.extract_strided_slice %114 {offsets = [0, 768], sizes = [2, 256], strides = [1, 1]} : vector<2x1024xf32> to vector<2x256xf32>
    %122 = math.tanh %121 : vector<2x256xf32>
    %123 = vector.extract_strided_slice %120 {offsets = [0, 0], sizes = [2, 256], strides = [1, 1]} : vector<2x768xf32> to vector<2x256xf32>
    %124 = vector.extract_strided_slice %120 {offsets = [0, 256], sizes = [2, 256], strides = [1, 1]} : vector<2x768xf32> to vector<2x256xf32>
    %125 = vector.extract_strided_slice %120 {offsets = [0, 512], sizes = [2, 256], strides = [1, 1]} : vector<2x768xf32> to vector<2x256xf32>
    %126 = arith.mulf %124, %84 : vector<2x256xf32>
    %127 = arith.mulf %123, %122 : vector<2x256xf32>
    %128 = arith.addf %126, %127 : vector<2x256xf32>
    %129 = math.tanh %128 : vector<2x256xf32>
    %130 = arith.mulf %125, %129 : vector<2x256xf32>
    %131 = vector.extract_strided_slice %130 {offsets = [1, 0], sizes = [1, 256], strides = [1, 1]} : vector<2x256xf32> to vector<1x256xf32>
    %c1_50 = arith.constant 1 : index
    %c0_51 = arith.constant 0 : index
    %132 = vector.load %arg14[%c1_50, %c0_51] : memref<8x256xf32, #tpu.memory_space<vmem>>, vector<1x256xf32>
    tpu.vector_store %arg14[%c1_50, %c0_51], %131 {strides = array<i32>} : memref<8x256xf32, #tpu.memory_space<vmem>>, vector<1x256xf32>,
    %133 = arith.truncf %130 : vector<2x256xf32> to vector<2x256xbf16>
    %cst_52 = arith.constant dense<0.000000e+00> : vector<2x1024xf32>
    %134 = tpu.matmul %133, %41, %cst_52 {dimension_numbers = #tpu.dot_dimension_numbers<[1], [0], [0], [1], [0, 0, 1, 1], [], []>} : vector<2x256xbf16>, vector<256x1024xbf16>, vector<2x1024xf32> -> vector<2x1024xf32>
    %135 = arith.addf %134, %44 : vector<2x1024xf32>
    %c2_53 = arith.constant 2 : index
    %c0_54 = arith.constant 0 : index
    %c0_55 = arith.constant 0 : index
    %136 = vector.load %arg13[%c2_53, %c0_54, %c0_55] : memref<8x2x1024xf32, #tpu.memory_space<vmem>>, vector<1x2x1024xf32>
    %137 = vector.shape_cast %136 : vector<1x2x1024xf32> to vector<2x1024xf32>
    %138 = arith.addf %137, %112 : vector<2x1024xf32>
    %139 = vector.extract_strided_slice %138 {offsets = [0, 0], sizes = [2, 768], strides = [1, 1]} : vector<2x1024xf32> to vector<2x768xf32>
    %140 = arith.negf %139 : vector<2x768xf32>
    %141 = math.exp %140 : vector<2x768xf32>
    %cst_56 = arith.constant 1.000000e+00 : f32
    %142 = vector.broadcast %cst_56 : f32 to vector<2x768xf32>
    %143 = arith.addf %142, %141 : vector<2x768xf32>
    %144 = arith.divf %142, %143 : vector<2x768xf32>
    %145 = vector.extract_strided_slice %138 {offsets = [0, 768], sizes = [2, 256], strides = [1, 1]} : vector<2x1024xf32> to vector<2x256xf32>
    %146 = math.tanh %145 : vector<2x256xf32>
    %147 = vector.extract_strided_slice %144 {offsets = [0, 0], sizes = [2, 256], strides = [1, 1]} : vector<2x768xf32> to vector<2x256xf32>
    %148 = vector.extract_strided_slice %144 {offsets = [0, 256], sizes = [2, 256], strides = [1, 1]} : vector<2x768xf32> to vector<2x256xf32>
    %149 = vector.extract_strided_slice %144 {offsets = [0, 512], sizes = [2, 256], strides = [1, 1]} : vector<2x768xf32> to vector<2x256xf32>
    %150 = arith.mulf %148, %108 : vector<2x256xf32>
    %151 = arith.mulf %147, %146 : vector<2x256xf32>
    %152 = arith.addf %150, %151 : vector<2x256xf32>
    %153 = math.tanh %152 : vector<2x256xf32>
    %154 = arith.mulf %149, %153 : vector<2x256xf32>
    %155 = arith.truncf %154 : vector<2x256xf32> to vector<2x256xbf16>
    %cst_57 = arith.constant dense<0.000000e+00> : vector<2x1024xf32>
    %156 = tpu.matmul %155, %39, %cst_57 {dimension_numbers = #tpu.dot_dimension_numbers<[1], [0], [0], [1], [0, 0, 1, 1], [], []>} : vector<2x256xbf16>, vector<256x1024xbf16>, vector<2x1024xf32> -> vector<2x1024xf32>
    %cst_58 = arith.constant dense<0.000000e+00> : vector<2x1024xf32>
    %157 = tpu.matmul %155, %40, %cst_58 {dimension_numbers = #tpu.dot_dimension_numbers<[1], [0], [0], [1], [0, 0, 1, 1], [], []>} : vector<2x256xbf16>, vector<256x1024xbf16>, vector<2x1024xf32> -> vector<2x1024xf32>
    %158 = arith.addf %135, %157 : vector<2x1024xf32>
    %159 = vector.extract_strided_slice %158 {offsets = [0, 0], sizes = [2, 768], strides = [1, 1]} : vector<2x1024xf32> to vector<2x768xf32>
    %160 = arith.negf %159 : vector<2x768xf32>
    %161 = math.exp %160 : vector<2x768xf32>
    %cst_59 = arith.constant 1.000000e+00 : f32
    %162 = vector.broadcast %cst_59 : f32 to vector<2x768xf32>
    %163 = arith.addf %162, %161 : vector<2x768xf32>
    %164 = arith.divf %162, %163 : vector<2x768xf32>
    %165 = vector.extract_strided_slice %158 {offsets = [0, 768], sizes = [2, 256], strides = [1, 1]} : vector<2x1024xf32> to vector<2x256xf32>
    %166 = math.tanh %165 : vector<2x256xf32>
    %167 = vector.extract_strided_slice %164 {offsets = [0, 0], sizes = [2, 256], strides = [1, 1]} : vector<2x768xf32> to vector<2x256xf32>
    %168 = vector.extract_strided_slice %164 {offsets = [0, 256], sizes = [2, 256], strides = [1, 1]} : vector<2x768xf32> to vector<2x256xf32>
    %169 = vector.extract_strided_slice %164 {offsets = [0, 512], sizes = [2, 256], strides = [1, 1]} : vector<2x768xf32> to vector<2x256xf32>
    %170 = arith.mulf %168, %128 : vector<2x256xf32>
    %171 = arith.mulf %167, %166 : vector<2x256xf32>
    %172 = arith.addf %170, %171 : vector<2x256xf32>
    %173 = math.tanh %172 : vector<2x256xf32>
    %174 = arith.mulf %169, %173 : vector<2x256xf32>
    %175 = vector.extract_strided_slice %174 {offsets = [1, 0], sizes = [1, 256], strides = [1, 1]} : vector<2x256xf32> to vector<1x256xf32>
    %c2_60 = arith.constant 2 : index
    %c0_61 = arith.constant 0 : index
    %176 = vector.load %arg14[%c2_60, %c0_61] : memref<8x256xf32, #tpu.memory_space<vmem>>, vector<1x256xf32>
    tpu.vector_store %arg14[%c2_60, %c0_61], %175 {strides = array<i32>} : memref<8x256xf32, #tpu.memory_space<vmem>>, vector<1x256xf32>,
    %177 = arith.truncf %174 : vector<2x256xf32> to vector<2x256xbf16>
    %cst_62 = arith.constant dense<0.000000e+00> : vector<2x1024xf32>
    %178 = tpu.matmul %177, %41, %cst_62 {dimension_numbers = #tpu.dot_dimension_numbers<[1], [0], [0], [1], [0, 0, 1, 1], [], []>} : vector<2x256xbf16>, vector<256x1024xbf16>, vector<2x1024xf32> -> vector<2x1024xf32>
    %179 = arith.addf %178, %44 : vector<2x1024xf32>
    %c3_63 = arith.constant 3 : index
    %c0_64 = arith.constant 0 : index
    %c0_65 = arith.constant 0 : index
    %180 = vector.load %arg13[%c3_63, %c0_64, %c0_65] : memref<8x2x1024xf32, #tpu.memory_space<vmem>>, vector<1x2x1024xf32>
    %181 = vector.shape_cast %180 : vector<1x2x1024xf32> to vector<2x1024xf32>
    %182 = arith.addf %181, %156 : vector<2x1024xf32>
    %183 = vector.extract_strided_slice %182 {offsets = [0, 0], sizes = [2, 768], strides = [1, 1]} : vector<2x1024xf32> to vector<2x768xf32>
    %184 = arith.negf %183 : vector<2x768xf32>
    %185 = math.exp %184 : vector<2x768xf32>
    %cst_66 = arith.constant 1.000000e+00 : f32
    %186 = vector.broadcast %cst_66 : f32 to vector<2x768xf32>
    %187 = arith.addf %186, %185 : vector<2x768xf32>
    %188 = arith.divf %186, %187 : vector<2x768xf32>
    %189 = vector.extract_strided_slice %182 {offsets = [0, 768], sizes = [2, 256], strides = [1, 1]} : vector<2x1024xf32> to vector<2x256xf32>
    %190 = math.tanh %189 : vector<2x256xf32>
    %191 = vector.extract_strided_slice %188 {offsets = [0, 0], sizes = [2, 256], strides = [1, 1]} : vector<2x768xf32> to vector<2x256xf32>
    %192 = vector.extract_strided_slice %188 {offsets = [0, 256], sizes = [2, 256], strides = [1, 1]} : vector<2x768xf32> to vector<2x256xf32>
    %193 = vector.extract_strided_slice %188 {offsets = [0, 512], sizes = [2, 256], strides = [1, 1]} : vector<2x768xf32> to vector<2x256xf32>
    %194 = arith.mulf %192, %152 : vector<2x256xf32>
    %195 = arith.mulf %191, %190 : vector<2x256xf32>
    %196 = arith.addf %194, %195 : vector<2x256xf32>
    %197 = math.tanh %196 : vector<2x256xf32>
    %198 = arith.mulf %193, %197 : vector<2x256xf32>
    %199 = arith.truncf %198 : vector<2x256xf32> to vector<2x256xbf16>
    %cst_67 = arith.constant dense<0.000000e+00> : vector<2x1024xf32>
    %200 = tpu.matmul %199, %39, %cst_67 {dimension_numbers = #tpu.dot_dimension_numbers<[1], [0], [0], [1], [0, 0, 1, 1], [], []>} : vector<2x256xbf16>, vector<256x1024xbf16>, vector<2x1024xf32> -> vector<2x1024xf32>
    %cst_68 = arith.constant dense<0.000000e+00> : vector<2x1024xf32>
    %201 = tpu.matmul %199, %40, %cst_68 {dimension_numbers = #tpu.dot_dimension_numbers<[1], [0], [0], [1], [0, 0, 1, 1], [], []>} : vector<2x256xbf16>, vector<256x1024xbf16>, vector<2x1024xf32> -> vector<2x1024xf32>
    %202 = arith.addf %179, %201 : vector<2x1024xf32>
    %203 = vector.extract_strided_slice %202 {offsets = [0, 0], sizes = [2, 768], strides = [1, 1]} : vector<2x1024xf32> to vector<2x768xf32>
    %204 = arith.negf %203 : vector<2x768xf32>
    %205 = math.exp %204 : vector<2x768xf32>
    %cst_69 = arith.constant 1.000000e+00 : f32
    %206 = vector.broadcast %cst_69 : f32 to vector<2x768xf32>
    %207 = arith.addf %206, %205 : vector<2x768xf32>
    %208 = arith.divf %206, %207 : vector<2x768xf32>
    %209 = vector.extract_strided_slice %202 {offsets = [0, 768], sizes = [2, 256], strides = [1, 1]} : vector<2x1024xf32> to vector<2x256xf32>
    %210 = math.tanh %209 : vector<2x256xf32>
    %211 = vector.extract_strided_slice %208 {offsets = [0, 0], sizes = [2, 256], strides = [1, 1]} : vector<2x768xf32> to vector<2x256xf32>
    %212 = vector.extract_strided_slice %208 {offsets = [0, 256], sizes = [2, 256], strides = [1, 1]} : vector<2x768xf32> to vector<2x256xf32>
    %213 = vector.extract_strided_slice %208 {offsets = [0, 512], sizes = [2, 256], strides = [1, 1]} : vector<2x768xf32> to vector<2x256xf32>
    %214 = arith.mulf %212, %172 : vector<2x256xf32>
    %215 = arith.mulf %211, %210 : vector<2x256xf32>
    %216 = arith.addf %214, %215 : vector<2x256xf32>
    %217 = math.tanh %216 : vector<2x256xf32>
    %218 = arith.mulf %213, %217 : vector<2x256xf32>
    %219 = vector.extract_strided_slice %218 {offsets = [1, 0], sizes = [1, 256], strides = [1, 1]} : vector<2x256xf32> to vector<1x256xf32>
    %c3_70 = arith.constant 3 : index
    %c0_71 = arith.constant 0 : index
    %220 = vector.load %arg14[%c3_70, %c0_71] : memref<8x256xf32, #tpu.memory_space<vmem>>, vector<1x256xf32>
    tpu.vector_store %arg14[%c3_70, %c0_71], %219 {strides = array<i32>} : memref<8x256xf32, #tpu.memory_space<vmem>>, vector<1x256xf32>,
    %221 = arith.truncf %218 : vector<2x256xf32> to vector<2x256xbf16>
    %cst_72 = arith.constant dense<0.000000e+00> : vector<2x1024xf32>
    %222 = tpu.matmul %221, %41, %cst_72 {dimension_numbers = #tpu.dot_dimension_numbers<[1], [0], [0], [1], [0, 0, 1, 1], [], []>} : vector<2x256xbf16>, vector<256x1024xbf16>, vector<2x1024xf32> -> vector<2x1024xf32>
    %223 = arith.addf %222, %44 : vector<2x1024xf32>
    %c4_73 = arith.constant 4 : index
    %c0_74 = arith.constant 0 : index
    %c0_75 = arith.constant 0 : index
    %224 = vector.load %arg13[%c4_73, %c0_74, %c0_75] : memref<8x2x1024xf32, #tpu.memory_space<vmem>>, vector<1x2x1024xf32>
    %225 = vector.shape_cast %224 : vector<1x2x1024xf32> to vector<2x1024xf32>
    %226 = arith.addf %225, %200 : vector<2x1024xf32>
    %227 = vector.extract_strided_slice %226 {offsets = [0, 0], sizes = [2, 768], strides = [1, 1]} : vector<2x1024xf32> to vector<2x768xf32>
    %228 = arith.negf %227 : vector<2x768xf32>
    %229 = math.exp %228 : vector<2x768xf32>
    %cst_76 = arith.constant 1.000000e+00 : f32
    %230 = vector.broadcast %cst_76 : f32 to vector<2x768xf32>
    %231 = arith.addf %230, %229 : vector<2x768xf32>
    %232 = arith.divf %230, %231 : vector<2x768xf32>
    %233 = vector.extract_strided_slice %226 {offsets = [0, 768], sizes = [2, 256], strides = [1, 1]} : vector<2x1024xf32> to vector<2x256xf32>
    %234 = math.tanh %233 : vector<2x256xf32>
    %235 = vector.extract_strided_slice %232 {offsets = [0, 0], sizes = [2, 256], strides = [1, 1]} : vector<2x768xf32> to vector<2x256xf32>
    %236 = vector.extract_strided_slice %232 {offsets = [0, 256], sizes = [2, 256], strides = [1, 1]} : vector<2x768xf32> to vector<2x256xf32>
    %237 = vector.extract_strided_slice %232 {offsets = [0, 512], sizes = [2, 256], strides = [1, 1]} : vector<2x768xf32> to vector<2x256xf32>
    %238 = arith.mulf %236, %196 : vector<2x256xf32>
    %239 = arith.mulf %235, %234 : vector<2x256xf32>
    %240 = arith.addf %238, %239 : vector<2x256xf32>
    %241 = math.tanh %240 : vector<2x256xf32>
    %242 = arith.mulf %237, %241 : vector<2x256xf32>
    %243 = arith.truncf %242 : vector<2x256xf32> to vector<2x256xbf16>
    %cst_77 = arith.constant dense<0.000000e+00> : vector<2x1024xf32>
    %244 = tpu.matmul %243, %39, %cst_77 {dimension_numbers = #tpu.dot_dimension_numbers<[1], [0], [0], [1], [0, 0, 1, 1], [], []>} : vector<2x256xbf16>, vector<256x1024xbf16>, vector<2x1024xf32> -> vector<2x1024xf32>
    %cst_78 = arith.constant dense<0.000000e+00> : vector<2x1024xf32>
    %245 = tpu.matmul %243, %40, %cst_78 {dimension_numbers = #tpu.dot_dimension_numbers<[1], [0], [0], [1], [0, 0, 1, 1], [], []>} : vector<2x256xbf16>, vector<256x1024xbf16>, vector<2x1024xf32> -> vector<2x1024xf32>
    %246 = arith.addf %223, %245 : vector<2x1024xf32>
    %247 = vector.extract_strided_slice %246 {offsets = [0, 0], sizes = [2, 768], strides = [1, 1]} : vector<2x1024xf32> to vector<2x768xf32>
    %248 = arith.negf %247 : vector<2x768xf32>
    %249 = math.exp %248 : vector<2x768xf32>
    %cst_79 = arith.constant 1.000000e+00 : f32
    %250 = vector.broadcast %cst_79 : f32 to vector<2x768xf32>
    %251 = arith.addf %250, %249 : vector<2x768xf32>
    %252 = arith.divf %250, %251 : vector<2x768xf32>
    %253 = vector.extract_strided_slice %246 {offsets = [0, 768], sizes = [2, 256], strides = [1, 1]} : vector<2x1024xf32> to vector<2x256xf32>
    %254 = math.tanh %253 : vector<2x256xf32>
    %255 = vector.extract_strided_slice %252 {offsets = [0, 0], sizes = [2, 256], strides = [1, 1]} : vector<2x768xf32> to vector<2x256xf32>
    %256 = vector.extract_strided_slice %252 {offsets = [0, 256], sizes = [2, 256], strides = [1, 1]} : vector<2x768xf32> to vector<2x256xf32>
    %257 = vector.extract_strided_slice %252 {offsets = [0, 512], sizes = [2, 256], strides = [1, 1]} : vector<2x768xf32> to vector<2x256xf32>
    %258 = arith.mulf %256, %216 : vector<2x256xf32>
    %259 = arith.mulf %255, %254 : vector<2x256xf32>
    %260 = arith.addf %258, %259 : vector<2x256xf32>
    %261 = math.tanh %260 : vector<2x256xf32>
    %262 = arith.mulf %257, %261 : vector<2x256xf32>
    %263 = vector.extract_strided_slice %262 {offsets = [1, 0], sizes = [1, 256], strides = [1, 1]} : vector<2x256xf32> to vector<1x256xf32>
    %c4_80 = arith.constant 4 : index
    %c0_81 = arith.constant 0 : index
    %264 = vector.load %arg14[%c4_80, %c0_81] : memref<8x256xf32, #tpu.memory_space<vmem>>, vector<1x256xf32>
    tpu.vector_store %arg14[%c4_80, %c0_81], %263 {strides = array<i32>} : memref<8x256xf32, #tpu.memory_space<vmem>>, vector<1x256xf32>,
    %265 = arith.truncf %262 : vector<2x256xf32> to vector<2x256xbf16>
    %cst_82 = arith.constant dense<0.000000e+00> : vector<2x1024xf32>
    %266 = tpu.matmul %265, %41, %cst_82 {dimension_numbers = #tpu.dot_dimension_numbers<[1], [0], [0], [1], [0, 0, 1, 1], [], []>} : vector<2x256xbf16>, vector<256x1024xbf16>, vector<2x1024xf32> -> vector<2x1024xf32>
    %267 = arith.addf %266, %44 : vector<2x1024xf32>
    %c5_83 = arith.constant 5 : index
    %c0_84 = arith.constant 0 : index
    %c0_85 = arith.constant 0 : index
    %268 = vector.load %arg13[%c5_83, %c0_84, %c0_85] : memref<8x2x1024xf32, #tpu.memory_space<vmem>>, vector<1x2x1024xf32>
    %269 = vector.shape_cast %268 : vector<1x2x1024xf32> to vector<2x1024xf32>
    %270 = arith.addf %269, %244 : vector<2x1024xf32>
    %271 = vector.extract_strided_slice %270 {offsets = [0, 0], sizes = [2, 768], strides = [1, 1]} : vector<2x1024xf32> to vector<2x768xf32>
    %272 = arith.negf %271 : vector<2x768xf32>
    %273 = math.exp %272 : vector<2x768xf32>
    %cst_86 = arith.constant 1.000000e+00 : f32
    %274 = vector.broadcast %cst_86 : f32 to vector<2x768xf32>
    %275 = arith.addf %274, %273 : vector<2x768xf32>
    %276 = arith.divf %274, %275 : vector<2x768xf32>
    %277 = vector.extract_strided_slice %270 {offsets = [0, 768], sizes = [2, 256], strides = [1, 1]} : vector<2x1024xf32> to vector<2x256xf32>
    %278 = math.tanh %277 : vector<2x256xf32>
    %279 = vector.extract_strided_slice %276 {offsets = [0, 0], sizes = [2, 256], strides = [1, 1]} : vector<2x768xf32> to vector<2x256xf32>
    %280 = vector.extract_strided_slice %276 {offsets = [0, 256], sizes = [2, 256], strides = [1, 1]} : vector<2x768xf32> to vector<2x256xf32>
    %281 = vector.extract_strided_slice %276 {offsets = [0, 512], sizes = [2, 256], strides = [1, 1]} : vector<2x768xf32> to vector<2x256xf32>
    %282 = arith.mulf %280, %240 : vector<2x256xf32>
    %283 = arith.mulf %279, %278 : vector<2x256xf32>
    %284 = arith.addf %282, %283 : vector<2x256xf32>
    %285 = math.tanh %284 : vector<2x256xf32>
    %286 = arith.mulf %281, %285 : vector<2x256xf32>
    %287 = arith.truncf %286 : vector<2x256xf32> to vector<2x256xbf16>
    %cst_87 = arith.constant dense<0.000000e+00> : vector<2x1024xf32>
    %288 = tpu.matmul %287, %39, %cst_87 {dimension_numbers = #tpu.dot_dimension_numbers<[1], [0], [0], [1], [0, 0, 1, 1], [], []>} : vector<2x256xbf16>, vector<256x1024xbf16>, vector<2x1024xf32> -> vector<2x1024xf32>
    %cst_88 = arith.constant dense<0.000000e+00> : vector<2x1024xf32>
    %289 = tpu.matmul %287, %40, %cst_88 {dimension_numbers = #tpu.dot_dimension_numbers<[1], [0], [0], [1], [0, 0, 1, 1], [], []>} : vector<2x256xbf16>, vector<256x1024xbf16>, vector<2x1024xf32> -> vector<2x1024xf32>
    %290 = arith.addf %267, %289 : vector<2x1024xf32>
    %291 = vector.extract_strided_slice %290 {offsets = [0, 0], sizes = [2, 768], strides = [1, 1]} : vector<2x1024xf32> to vector<2x768xf32>
    %292 = arith.negf %291 : vector<2x768xf32>
    %293 = math.exp %292 : vector<2x768xf32>
    %cst_89 = arith.constant 1.000000e+00 : f32
    %294 = vector.broadcast %cst_89 : f32 to vector<2x768xf32>
    %295 = arith.addf %294, %293 : vector<2x768xf32>
    %296 = arith.divf %294, %295 : vector<2x768xf32>
    %297 = vector.extract_strided_slice %290 {offsets = [0, 768], sizes = [2, 256], strides = [1, 1]} : vector<2x1024xf32> to vector<2x256xf32>
    %298 = math.tanh %297 : vector<2x256xf32>
    %299 = vector.extract_strided_slice %296 {offsets = [0, 0], sizes = [2, 256], strides = [1, 1]} : vector<2x768xf32> to vector<2x256xf32>
    %300 = vector.extract_strided_slice %296 {offsets = [0, 256], sizes = [2, 256], strides = [1, 1]} : vector<2x768xf32> to vector<2x256xf32>
    %301 = vector.extract_strided_slice %296 {offsets = [0, 512], sizes = [2, 256], strides = [1, 1]} : vector<2x768xf32> to vector<2x256xf32>
    %302 = arith.mulf %300, %260 : vector<2x256xf32>
    %303 = arith.mulf %299, %298 : vector<2x256xf32>
    %304 = arith.addf %302, %303 : vector<2x256xf32>
    %305 = math.tanh %304 : vector<2x256xf32>
    %306 = arith.mulf %301, %305 : vector<2x256xf32>
    %307 = vector.extract_strided_slice %306 {offsets = [1, 0], sizes = [1, 256], strides = [1, 1]} : vector<2x256xf32> to vector<1x256xf32>
    %c5_90 = arith.constant 5 : index
    %c0_91 = arith.constant 0 : index
    %308 = vector.load %arg14[%c5_90, %c0_91] : memref<8x256xf32, #tpu.memory_space<vmem>>, vector<1x256xf32>
    tpu.vector_store %arg14[%c5_90, %c0_91], %307 {strides = array<i32>} : memref<8x256xf32, #tpu.memory_space<vmem>>, vector<1x256xf32>,
    %309 = arith.truncf %306 : vector<2x256xf32> to vector<2x256xbf16>
    %cst_92 = arith.constant dense<0.000000e+00> : vector<2x1024xf32>
    %310 = tpu.matmul %309, %41, %cst_92 {dimension_numbers = #tpu.dot_dimension_numbers<[1], [0], [0], [1], [0, 0, 1, 1], [], []>} : vector<2x256xbf16>, vector<256x1024xbf16>, vector<2x1024xf32> -> vector<2x1024xf32>
    %311 = arith.addf %310, %44 : vector<2x1024xf32>
    %c6_93 = arith.constant 6 : index
    %c0_94 = arith.constant 0 : index
    %c0_95 = arith.constant 0 : index
    %312 = vector.load %arg13[%c6_93, %c0_94, %c0_95] : memref<8x2x1024xf32, #tpu.memory_space<vmem>>, vector<1x2x1024xf32>
    %313 = vector.shape_cast %312 : vector<1x2x1024xf32> to vector<2x1024xf32>
    %314 = arith.addf %313, %288 : vector<2x1024xf32>
    %315 = vector.extract_strided_slice %314 {offsets = [0, 0], sizes = [2, 768], strides = [1, 1]} : vector<2x1024xf32> to vector<2x768xf32>
    %316 = arith.negf %315 : vector<2x768xf32>
    %317 = math.exp %316 : vector<2x768xf32>
    %cst_96 = arith.constant 1.000000e+00 : f32
    %318 = vector.broadcast %cst_96 : f32 to vector<2x768xf32>
    %319 = arith.addf %318, %317 : vector<2x768xf32>
    %320 = arith.divf %318, %319 : vector<2x768xf32>
    %321 = vector.extract_strided_slice %314 {offsets = [0, 768], sizes = [2, 256], strides = [1, 1]} : vector<2x1024xf32> to vector<2x256xf32>
    %322 = math.tanh %321 : vector<2x256xf32>
    %323 = vector.extract_strided_slice %320 {offsets = [0, 0], sizes = [2, 256], strides = [1, 1]} : vector<2x768xf32> to vector<2x256xf32>
    %324 = vector.extract_strided_slice %320 {offsets = [0, 256], sizes = [2, 256], strides = [1, 1]} : vector<2x768xf32> to vector<2x256xf32>
    %325 = vector.extract_strided_slice %320 {offsets = [0, 512], sizes = [2, 256], strides = [1, 1]} : vector<2x768xf32> to vector<2x256xf32>
    %326 = arith.mulf %324, %284 : vector<2x256xf32>
    %327 = arith.mulf %323, %322 : vector<2x256xf32>
    %328 = arith.addf %326, %327 : vector<2x256xf32>
    %329 = math.tanh %328 : vector<2x256xf32>
    %330 = arith.mulf %325, %329 : vector<2x256xf32>
    %331 = arith.truncf %330 : vector<2x256xf32> to vector<2x256xbf16>
    %cst_97 = arith.constant dense<0.000000e+00> : vector<2x1024xf32>
    %332 = tpu.matmul %331, %39, %cst_97 {dimension_numbers = #tpu.dot_dimension_numbers<[1], [0], [0], [1], [0, 0, 1, 1], [], []>} : vector<2x256xbf16>, vector<256x1024xbf16>, vector<2x1024xf32> -> vector<2x1024xf32>
    %cst_98 = arith.constant dense<0.000000e+00> : vector<2x1024xf32>
    %333 = tpu.matmul %331, %40, %cst_98 {dimension_numbers = #tpu.dot_dimension_numbers<[1], [0], [0], [1], [0, 0, 1, 1], [], []>} : vector<2x256xbf16>, vector<256x1024xbf16>, vector<2x1024xf32> -> vector<2x1024xf32>
    %334 = arith.addf %311, %333 : vector<2x1024xf32>
    %335 = vector.extract_strided_slice %334 {offsets = [0, 0], sizes = [2, 768], strides = [1, 1]} : vector<2x1024xf32> to vector<2x768xf32>
    %336 = arith.negf %335 : vector<2x768xf32>
    %337 = math.exp %336 : vector<2x768xf32>
    %cst_99 = arith.constant 1.000000e+00 : f32
    %338 = vector.broadcast %cst_99 : f32 to vector<2x768xf32>
    %339 = arith.addf %338, %337 : vector<2x768xf32>
    %340 = arith.divf %338, %339 : vector<2x768xf32>
    %341 = vector.extract_strided_slice %334 {offsets = [0, 768], sizes = [2, 256], strides = [1, 1]} : vector<2x1024xf32> to vector<2x256xf32>
    %342 = math.tanh %341 : vector<2x256xf32>
    %343 = vector.extract_strided_slice %340 {offsets = [0, 0], sizes = [2, 256], strides = [1, 1]} : vector<2x768xf32> to vector<2x256xf32>
    %344 = vector.extract_strided_slice %340 {offsets = [0, 256], sizes = [2, 256], strides = [1, 1]} : vector<2x768xf32> to vector<2x256xf32>
    %345 = vector.extract_strided_slice %340 {offsets = [0, 512], sizes = [2, 256], strides = [1, 1]} : vector<2x768xf32> to vector<2x256xf32>
    %346 = arith.mulf %344, %304 : vector<2x256xf32>
    %347 = arith.mulf %343, %342 : vector<2x256xf32>
    %348 = arith.addf %346, %347 : vector<2x256xf32>
    %349 = math.tanh %348 : vector<2x256xf32>
    %350 = arith.mulf %345, %349 : vector<2x256xf32>
    %351 = vector.extract_strided_slice %350 {offsets = [1, 0], sizes = [1, 256], strides = [1, 1]} : vector<2x256xf32> to vector<1x256xf32>
    %c6_100 = arith.constant 6 : index
    %c0_101 = arith.constant 0 : index
    %352 = vector.load %arg14[%c6_100, %c0_101] : memref<8x256xf32, #tpu.memory_space<vmem>>, vector<1x256xf32>
    tpu.vector_store %arg14[%c6_100, %c0_101], %351 {strides = array<i32>} : memref<8x256xf32, #tpu.memory_space<vmem>>, vector<1x256xf32>,
    %353 = arith.truncf %350 : vector<2x256xf32> to vector<2x256xbf16>
    %cst_102 = arith.constant dense<0.000000e+00> : vector<2x1024xf32>
    %354 = tpu.matmul %353, %41, %cst_102 {dimension_numbers = #tpu.dot_dimension_numbers<[1], [0], [0], [1], [0, 0, 1, 1], [], []>} : vector<2x256xbf16>, vector<256x1024xbf16>, vector<2x1024xf32> -> vector<2x1024xf32>
    %355 = arith.addf %354, %44 : vector<2x1024xf32>
    %c7_103 = arith.constant 7 : index
    %c0_104 = arith.constant 0 : index
    %c0_105 = arith.constant 0 : index
    %356 = vector.load %arg13[%c7_103, %c0_104, %c0_105] : memref<8x2x1024xf32, #tpu.memory_space<vmem>>, vector<1x2x1024xf32>
    %357 = vector.shape_cast %356 : vector<1x2x1024xf32> to vector<2x1024xf32>
    %358 = arith.addf %357, %332 : vector<2x1024xf32>
    %359 = vector.extract_strided_slice %358 {offsets = [0, 0], sizes = [2, 768], strides = [1, 1]} : vector<2x1024xf32> to vector<2x768xf32>
    %360 = arith.negf %359 : vector<2x768xf32>
    %361 = math.exp %360 : vector<2x768xf32>
    %cst_106 = arith.constant 1.000000e+00 : f32
    %362 = vector.broadcast %cst_106 : f32 to vector<2x768xf32>
    %363 = arith.addf %362, %361 : vector<2x768xf32>
    %364 = arith.divf %362, %363 : vector<2x768xf32>
    %365 = vector.extract_strided_slice %358 {offsets = [0, 768], sizes = [2, 256], strides = [1, 1]} : vector<2x1024xf32> to vector<2x256xf32>
    %366 = math.tanh %365 : vector<2x256xf32>
    %367 = vector.extract_strided_slice %364 {offsets = [0, 0], sizes = [2, 256], strides = [1, 1]} : vector<2x768xf32> to vector<2x256xf32>
    %368 = vector.extract_strided_slice %364 {offsets = [0, 256], sizes = [2, 256], strides = [1, 1]} : vector<2x768xf32> to vector<2x256xf32>
    %369 = vector.extract_strided_slice %364 {offsets = [0, 512], sizes = [2, 256], strides = [1, 1]} : vector<2x768xf32> to vector<2x256xf32>
    %370 = arith.mulf %368, %328 : vector<2x256xf32>
    %371 = arith.mulf %367, %366 : vector<2x256xf32>
    %372 = arith.addf %370, %371 : vector<2x256xf32>
    %373 = math.tanh %372 : vector<2x256xf32>
    %374 = arith.mulf %369, %373 : vector<2x256xf32>
    %375 = arith.truncf %374 : vector<2x256xf32> to vector<2x256xbf16>
    %cst_107 = arith.constant dense<0.000000e+00> : vector<2x1024xf32>
    %376 = tpu.matmul %375, %40, %cst_107 {dimension_numbers = #tpu.dot_dimension_numbers<[1], [0], [0], [1], [0, 0, 1, 1], [], []>} : vector<2x256xbf16>, vector<256x1024xbf16>, vector<2x1024xf32> -> vector<2x1024xf32>
    %377 = arith.addf %355, %376 : vector<2x1024xf32>
    %378 = vector.extract_strided_slice %377 {offsets = [0, 0], sizes = [2, 768], strides = [1, 1]} : vector<2x1024xf32> to vector<2x768xf32>
    %379 = arith.negf %378 : vector<2x768xf32>
    %380 = math.exp %379 : vector<2x768xf32>
    %cst_108 = arith.constant 1.000000e+00 : f32
    %381 = vector.broadcast %cst_108 : f32 to vector<2x768xf32>
    %382 = arith.addf %381, %380 : vector<2x768xf32>
    %383 = arith.divf %381, %382 : vector<2x768xf32>
    %384 = vector.extract_strided_slice %377 {offsets = [0, 768], sizes = [2, 256], strides = [1, 1]} : vector<2x1024xf32> to vector<2x256xf32>
    %385 = math.tanh %384 : vector<2x256xf32>
    %386 = vector.extract_strided_slice %383 {offsets = [0, 0], sizes = [2, 256], strides = [1, 1]} : vector<2x768xf32> to vector<2x256xf32>
    %387 = vector.extract_strided_slice %383 {offsets = [0, 256], sizes = [2, 256], strides = [1, 1]} : vector<2x768xf32> to vector<2x256xf32>
    %388 = vector.extract_strided_slice %383 {offsets = [0, 512], sizes = [2, 256], strides = [1, 1]} : vector<2x768xf32> to vector<2x256xf32>
    %389 = arith.mulf %387, %348 : vector<2x256xf32>
    %390 = arith.mulf %386, %385 : vector<2x256xf32>
    %391 = arith.addf %389, %390 : vector<2x256xf32>
    %392 = math.tanh %391 : vector<2x256xf32>
    %393 = arith.mulf %388, %392 : vector<2x256xf32>
    %394 = vector.extract_strided_slice %393 {offsets = [1, 0], sizes = [1, 256], strides = [1, 1]} : vector<2x256xf32> to vector<1x256xf32>
    %c7_109 = arith.constant 7 : index
    %c0_110 = arith.constant 0 : index
    %395 = vector.load %arg14[%c7_109, %c0_110] : memref<8x256xf32, #tpu.memory_space<vmem>>, vector<1x256xf32>
    tpu.vector_store %arg14[%c7_109, %c0_110], %394 {strides = array<i32>} : memref<8x256xf32, #tpu.memory_space<vmem>>, vector<1x256xf32>,
    %c0_111 = arith.constant 0 : index
    %c0_112 = arith.constant 0 : index
    %396 = vector.load %arg14[%c0_111, %c0_112] : memref<8x256xf32, #tpu.memory_space<vmem>>, vector<8x256xf32>
    %397 = arith.truncf %396 : vector<8x256xf32> to vector<8x256xbf16>
    %c0_113 = arith.constant 0 : index
    %c0_114 = arith.constant 0 : index
    %398 = vector.load %arg8[%c0_113, %c0_114] : memref<256x256xbf16, #tpu.memory_space<vmem>>, vector<256x256xbf16>
    %cst_115 = arith.constant dense<0.000000e+00> : vector<8x256xf32>
    %399 = tpu.matmul %397, %398, %cst_115 {dimension_numbers = #tpu.dot_dimension_numbers<[1], [0], [0], [1], [0, 0, 1, 1], [], []>} : vector<8x256xbf16>, vector<256x256xbf16>, vector<8x256xf32> -> vector<8x256xf32>
    %c0_116 = arith.constant 0 : index
    %c0_117 = arith.constant 0 : index
    %400 = vector.load %arg9[%c0_116, %c0_117] : memref<1x256xf32, #tpu.memory_space<vmem>>, vector<1x256xf32>
    %401 = vector.broadcast %400 : vector<1x256xf32> to vector<8x256xf32>
    %402 = arith.addf %399, %401 : vector<8x256xf32>
    %cst_118 = arith.constant 0.000000e+00 : f32
    %403 = vector.broadcast %cst_118 : f32 to vector<8x256xf32>
    %404 = arith.maximumf %402, %403 : vector<8x256xf32>
    %c0_119 = arith.constant 0 : index
    %c0_120 = arith.constant 0 : index
    %405 = vector.load %arg10[%c0_119, %c0_120] : memref<1x256xf32, #tpu.memory_space<vmem>>, vector<1x256xf32>
    %406 = vector.broadcast %405 : vector<1x256xf32> to vector<8x256xf32>
    %407 = arith.mulf %404, %406 : vector<8x256xf32>
    %cst_121 = arith.constant dense<0.000000e+00> : vector<8xf32>
    %408 = vector.multi_reduction <add>, %407, %cst_121 [1] : vector<8x256xf32> to vector<8xf32>
    %409 = vector.shape_cast %408 : vector<8xf32> to vector<8x1xf32>
    %c0_122 = arith.constant 0 : index
    %c0_123 = arith.constant 0 : index
    %410 = vector.load %arg11[%c0_122, %c0_123] : memref<1x1xf32, #tpu.memory_space<vmem>>, vector<1x1xf32>
    %411 = vector.broadcast %410 : vector<1x1xf32> to vector<8x1xf32>
    %412 = arith.addf %409, %411 : vector<8x1xf32>
    %c0_124 = arith.constant 0 : index
    %c0_125 = arith.constant 0 : index
    %413 = vector.load %arg12[%c0_124, %c0_125] : memref<8x1xf32, #tpu.memory_space<vmem>>, vector<8x1xf32>
    tpu.vector_store %arg12[%c0_124, %c0_125], %412 {strides = array<i32>} : memref<8x1xf32, #tpu.memory_space<vmem>>, vector<8x1xf32>,
    return
  }
  func.func @transform_0(%arg0: i32) -> (i32, i32) {
    %c0_i32 = arith.constant 0 : i32
    %c0_i32_0 = arith.constant 0 : i32
    %c0_i32_1 = arith.constant 0 : i32
    return %c0_i32, %c0_i32_0 : i32, i32
  }
  func.func @transform_1(%arg0: i32) -> (i32, i32) {
    %c0_i32 = arith.constant 0 : i32
    %c0_i32_0 = arith.constant 0 : i32
    %c0_i32_1 = arith.constant 0 : i32
    return %c0_i32, %c0_i32_0 : i32, i32
  }
  func.func @transform_2(%arg0: i32) -> (i32, i32) {
    %c0_i32 = arith.constant 0 : i32
    %c0_i32_0 = arith.constant 0 : i32
    %c0_i32_1 = arith.constant 0 : i32
    return %c0_i32, %c0_i32_0 : i32, i32
  }
  func.func @transform_3(%arg0: i32) -> (i32, i32) {
    %c0_i32 = arith.constant 0 : i32
    %c0_i32_0 = arith.constant 0 : i32
    %c0_i32_1 = arith.constant 0 : i32
    return %c0_i32, %c0_i32_0 : i32, i32
  }
  func.func @transform_4(%arg0: i32) -> (i32, i32) {
    %c0_i32 = arith.constant 0 : i32
    %c0_i32_0 = arith.constant 0 : i32
    %c0_i32_1 = arith.constant 0 : i32
    return %c0_i32, %c0_i32_0 : i32, i32
  }
  func.func @transform_5(%arg0: i32) -> (i32, i32) {
    %c0_i32 = arith.constant 0 : i32
    %c0_i32_0 = arith.constant 0 : i32
    %c0_i32_1 = arith.constant 0 : i32
    return %c0_i32, %c0_i32_0 : i32, i32
  }
  func.func @transform_6(%arg0: i32) -> (i32, i32) {
    %c0_i32 = arith.constant 0 : i32
    %c0_i32_0 = arith.constant 0 : i32
    %c0_i32_1 = arith.constant 0 : i32
    return %c0_i32, %c0_i32_0 : i32, i32
  }
  func.func @transform_7(%arg0: i32) -> (i32, i32) {
    %c0_i32 = arith.constant 0 : i32
    %c0_i32_0 = arith.constant 0 : i32
    %c0_i32_1 = arith.constant 0 : i32
    return %c0_i32, %c0_i32_0 : i32, i32
  }
  func.func @transform_8(%arg0: i32) -> (i32, i32) {
    %c0_i32 = arith.constant 0 : i32
    %c0_i32_0 = arith.constant 0 : i32
    %c0_i32_1 = arith.constant 0 : i32
    return %c0_i32, %c0_i32_0 : i32, i32
  }
  func.func @transform_9(%arg0: i32) -> (i32, i32) {
    %c0_i32 = arith.constant 0 : i32
    %c0_i32_0 = arith.constant 0 : i32
    %c0_i32_1 = arith.constant 0 : i32
    return %c0_i32, %c0_i32_0 : i32, i32
  }
  func.func @transform_10(%arg0: i32) -> (i32, i32) {
    %c0_i32 = arith.constant 0 : i32
    %c0_i32_0 = arith.constant 0 : i32
    %c0_i32_1 = arith.constant 0 : i32
    return %c0_i32, %c0_i32_0 : i32, i32
  }
  func.func @transform_11(%arg0: i32) -> (i32, i32) {
    %c0_i32 = arith.constant 0 : i32
    %c0_i32_0 = arith.constant 0 : i32
    %c0_i32_1 = arith.constant 0 : i32
    return %c0_i32, %c0_i32_0 : i32, i32
  }
}

</mosaic_0001>

<llo_original>
// kernel: lstm_model_forward.1
$region0: #{lstm_model_forward.1}
  #allocation0 [shape = 'u32[]', space=smem, size = 0x4, offset = 0x4, fixed_abs, tag = 'smem constant byte address 0x4 - core index']
  #allocation1 [shape = 'u32[72,128]{1,0:T(1,128)}', space=vmem, size = 0x9000, scoped, tag = 'internal scratch']
  #allocation2 [shape = 'f32[8,2,1024]{2,1,0:T(2,128)}', space=vmem, size = 0x10000, scoped, tag = 'scratch operand']
  #allocation3 [shape = 'f32[8,256]{1,0:T(8,128)}', space=vmem, size = 0x2000, scoped, tag = 'scratch operand']
  #allocation4 [shape = 'f32[1,1]{1,0:T(1,128)S(1)}', space=vmem, size = 0x200, scoped, tag = 'scoped memory for lstm_model_forward.1']
  %s0 = inlined_call_operand.vmem [shape: f32[16,50], index: 0, kind: input, shape index: {}]
  %s1 = inlined_call_operand.vmem [shape: bf16[50,1024], index: 1, kind: input, shape index: {}]
  %s2 = inlined_call_operand.vmem [shape: bf16[256,1024], index: 2, kind: input, shape index: {}]
  %s3 = inlined_call_operand.vmem [shape: f32[1,1024], index: 3, kind: input, shape index: {}]
  %s4 = inlined_call_operand.vmem [shape: bf16[256,1024], index: 4, kind: input, shape index: {}]
  %s5 = inlined_call_operand.vmem [shape: bf16[256,1024], index: 5, kind: input, shape index: {}]
  %s6 = inlined_call_operand.vmem [shape: f32[1,1024], index: 6, kind: input, shape index: {}]
  %s7 = inlined_call_operand.vmem [shape: bf16[256,256], index: 7, kind: input, shape index: {}]
  %s8 = inlined_call_operand.vmem [shape: f32[1,256], index: 8, kind: input, shape index: {}]
  %s9 = inlined_call_operand.vmem [shape: f32[1,256], index: 9, kind: input, shape index: {}]
  %s10 = inlined_call_operand.<no memory space> [shape: f32[1,1], index: 10, kind: input, shape index: {}]
  %s11 = inlined_call_operand.vmem [shape: f32[8,1], index: 11, kind: output, shape index: {}]
  %s12 = sld [smem:[#allocation0]]
  $region54: #{lstm_model_forward.1} parent=0
    _
  %s14 = ssub.s32 1, %s12
  %s15 = scalar_select 0, %s14, %s12
  %v16 = vstv %s10
  %17 = vst [vmem:[#allocation4] sm:$0x1] %v16
  // Predicated region
  $region2: #{lstm_model_forward.1} parent=0 // pred_check
    _
  $region3: #{lstm_model_forward.1} parent=0 // pred_check_branch
    %19 = sbr.rel (0) target = $region5
  $region4: #{lstm_model_forward.1} parent=0 // pred_region
    _
  $region5: #{lstm_model_forward.1} parent=0 // pred_fallthru
    _
  // Predicated region
  $region6: #{lstm_model_forward.1} parent=0 // pred_check
    _
  $region7: #{lstm_model_forward.1} parent=0 // pred_check_branch
    %21 = sbr.rel (0) target = $region9
  $region8: #{lstm_model_forward.1} parent=0 // pred_region
    _
  $region9: #{lstm_model_forward.1} parent=0 // pred_fallthru
    _
  // Predicated region
  $region10: #{lstm_model_forward.1} parent=0 // pred_check
    _
  $region11: #{lstm_model_forward.1} parent=0 // pred_check_branch
    %23 = sbr.rel (0) target = $region13
  $region12: #{lstm_model_forward.1} parent=0 // pred_region
    _
  $region13: #{lstm_model_forward.1} parent=0 // pred_fallthru
    _
  // Predicated region
  $region14: #{lstm_model_forward.1} parent=0 // pred_check
    _
  $region15: #{lstm_model_forward.1} parent=0 // pred_check_branch
    %25 = sbr.rel (0) target = $region17
  $region16: #{lstm_model_forward.1} parent=0 // pred_region
    _
  $region17: #{lstm_model_forward.1} parent=0 // pred_fallthru
    _
  // Predicated region
  $region18: #{lstm_model_forward.1} parent=0 // pred_check
    _
  $region19: #{lstm_model_forward.1} parent=0 // pred_check_branch
    %27 = sbr.rel (0) target = $region21
  $region20: #{lstm_model_forward.1} parent=0 // pred_region
    _
  $region21: #{lstm_model_forward.1} parent=0 // pred_fallthru
    _
  // Predicated region
  $region22: #{lstm_model_forward.1} parent=0 // pred_check
    _
  $region23: #{lstm_model_forward.1} parent=0 // pred_check_branch
    %29 = sbr.rel (0) target = $region25
  $region24: #{lstm_model_forward.1} parent=0 // pred_region
    _
  $region25: #{lstm_model_forward.1} parent=0 // pred_fallthru
    _
  // Predicated region
  $region26: #{lstm_model_forward.1} parent=0 // pred_check
    _
  $region27: #{lstm_model_forward.1} parent=0 // pred_check_branch
    %31 = sbr.rel (0) target = $region29
  $region28: #{lstm_model_forward.1} parent=0 // pred_region
    _
  $region29: #{lstm_model_forward.1} parent=0 // pred_fallthru
    _
  // Predicated region
  $region30: #{lstm_model_forward.1} parent=0 // pred_check
    _
  $region31: #{lstm_model_forward.1} parent=0 // pred_check_branch
    %33 = sbr.rel (0) target = $region33
  $region32: #{lstm_model_forward.1} parent=0 // pred_region
    _
  $region33: #{lstm_model_forward.1} parent=0 // pred_fallthru
    _
  // Predicated region
  $region34: #{lstm_model_forward.1} parent=0 // pred_check
    _
  $region35: #{lstm_model_forward.1} parent=0 // pred_check_branch
    %35 = sbr.rel (0) target = $region37
  $region36: #{lstm_model_forward.1} parent=0 // pred_region
    _
  $region37: #{lstm_model_forward.1} parent=0 // pred_fallthru
    _
  // Predicated region
  $region38: #{lstm_model_forward.1} parent=0 // pred_check
    _
  $region39: #{lstm_model_forward.1} parent=0 // pred_check_branch
    %37 = sbr.rel (0) target = $region41
  $region40: #{lstm_model_forward.1} parent=0 // pred_region
    _
  $region41: #{lstm_model_forward.1} parent=0 // pred_fallthru
    _
  // Predicated region
  $region42: #{lstm_model_forward.1} parent=0 // pred_check
    _
  $region43: #{lstm_model_forward.1} parent=0 // pred_check_branch
    %39 = sbr.rel (0) target = $region45
  $region44: #{lstm_model_forward.1} parent=0 // pred_region
    _
  $region45: #{lstm_model_forward.1} parent=0 // pred_fallthru
    _
  %v41 = vld [vmem:[%s0] sm:$0xff]
  %v42 = vld [vmem:[%s0 + $0x8] sm:$0xff]
  %v43 = vpack.c.bf16 %v42, %v41
  %v44 = vld [vmem:[%s1] sm:$0xff]
  %v45 = vld [vmem:[%s1 + $0x8] sm:$0xff]
  %v46 = vld [vmem:[%s1 + $0x10] sm:$0xff]
  %v47 = vld [vmem:[%s1 + $0x18] sm:$0xff]
  %v48 = vld [vmem:[%s1 + $0x20] sm:$0xff]
  %v49 = vld [vmem:[%s1 + $0x28] sm:$0xff]
  %v50 = vld [vmem:[%s1 + $0x30] sm:$0xff]
  %v51 = vld [vmem:[%s1 + $0x38] sm:$0xff]
  %v52 = vld [vmem:[%s1 + $0x40] sm:$0xff]
  %v53 = vld [vmem:[%s1 + $0x48] sm:$0xff]
  %v54 = vld [vmem:[%s1 + $0x50] sm:$0xff]
  %v55 = vld [vmem:[%s1 + $0x58] sm:$0xff]
  %v56 = vld [vmem:[%s1 + $0x60] sm:$0xff]
  %v57 = vld [vmem:[%s1 + $0x68] sm:$0xff]
  %v58 = vld [vmem:[%s1 + $0x70] sm:$0xff]
  %v59 = vld [vmem:[%s1 + $0x78] sm:$0xff]
  %v60 = vld [vmem:[%s1 + $0x80] sm:$0xff]
  %v61 = vld [vmem:[%s1 + $0x88] sm:$0xff]
  %v62 = vld [vmem:[%s1 + $0x90] sm:$0xff]
  %v63 = vld [vmem:[%s1 + $0x98] sm:$0xff]
  %v64 = vld [vmem:[%s1 + $0xa0] sm:$0xff]
  %v65 = vld [vmem:[%s1 + $0xa8] sm:$0xff]
  %v66 = vld [vmem:[%s1 + $0xb0] sm:$0xff]
  %v67 = vld [vmem:[%s1 + $0xb8] sm:$0xff]
  %v68 = vld [vmem:[%s1 + $0xc0] sm:$0x11]
  %v69 = vld [vmem:[%s1 + $0xc8] sm:$0x11]
  %v70 = vld [vmem:[%s1 + $0xd0] sm:$0x11]
  %v71 = vld [vmem:[%s1 + $0xd8] sm:$0x11]
  %v72 = vld [vmem:[%s3] sm:$0xff]
  %v74 = vperm.slane %v72, 0
  %v75 = vperm.slane %v72, 1
  %v76 = vperm.slane %v72, 2
  %v77 = vperm.slane %v72, 3
  %v78 = vperm.slane %v72, 4
  %v79 = vperm.slane %v72, 5
  %v80 = vperm.slane %v72, 6
  %v81 = vperm.slane %v72, 7
  %v118 = vunpack.c.l.b16 %v44
  %v119 = vunpack.c.h.b16 %v44
  %v120 = vunpack.c.l.b16 %v45
  %v121 = vunpack.c.h.b16 %v45
  %v122 = vunpack.c.l.b16 %v46
  %v123 = vunpack.c.h.b16 %v46
  %v124 = vunpack.c.l.b16 %v47
  %v125 = vunpack.c.h.b16 %v47
  %v126 = vunpack.c.l.b16 %v48
  %v127 = vunpack.c.h.b16 %v48
  %v128 = vunpack.c.l.b16 %v49
  %v129 = vunpack.c.h.b16 %v49
  %v130 = vunpack.c.l.b16 %v50
  %v131 = vunpack.c.h.b16 %v50
  %v132 = vunpack.c.l.b16 %v51
  %v133 = vunpack.c.h.b16 %v51
  %v134 = vunpack.c.l.b16 %v52
  %v135 = vunpack.c.h.b16 %v52
  %v136 = vunpack.c.l.b16 %v53
  %v137 = vunpack.c.h.b16 %v53
  %v138 = vunpack.c.l.b16 %v54
  %v139 = vunpack.c.h.b16 %v54
  %v140 = vunpack.c.l.b16 %v55
  %v141 = vunpack.c.h.b16 %v55
  %v142 = vunpack.c.l.b16 %v56
  %v143 = vunpack.c.h.b16 %v56
  %v144 = vunpack.c.l.b16 %v57
  %v145 = vunpack.c.h.b16 %v57
  %v146 = vunpack.c.l.b16 %v58
  %v147 = vunpack.c.h.b16 %v58
  %v148 = vunpack.c.l.b16 %v59
  %v149 = vunpack.c.h.b16 %v59
  %v150 = vunpack.c.l.b16 %v60
  %v151 = vunpack.c.h.b16 %v60
  %v152 = vunpack.c.l.b16 %v61
  %v153 = vunpack.c.h.b16 %v61
  %v154 = vunpack.c.l.b16 %v62
  %v155 = vunpack.c.h.b16 %v62
  %v156 = vunpack.c.l.b16 %v63
  %v157 = vunpack.c.h.b16 %v63
  %v158 = vunpack.c.l.b16 %v64
  %v159 = vunpack.c.h.b16 %v64
  %v160 = vunpack.c.l.b16 %v65
  %v161 = vunpack.c.h.b16 %v65
  %v162 = vunpack.c.l.b16 %v66
  %v163 = vunpack.c.h.b16 %v66
  %v164 = vunpack.c.l.b16 %v67
  %v165 = vunpack.c.h.b16 %v67
  %v166 = vunpack.c.l.b16 %v68
  %v167 = vunpack.c.h.b16 %v68
  %v168 = vunpack.c.l.b16 %v69
  %v169 = vunpack.c.h.b16 %v69
  %v170 = vunpack.c.l.b16 %v70
  %v171 = vunpack.c.h.b16 %v70
  %v172 = vunpack.c.l.b16 %v71
  %v173 = vunpack.c.h.b16 %v71
  %v174 = vpack.c.b16 %v126, %v118
  %v175 = vpack.c.b16 %v127, %v119
  %v176 = vpack.c.b16 %v128, %v120
  %v177 = vpack.c.b16 %v129, %v121
  %v178 = vpack.c.b16 %v130, %v122
  %v179 = vpack.c.b16 %v131, %v123
  %v180 = vpack.c.b16 %v132, %v124
  %v181 = vpack.c.b16 %v133, %v125
  %v182 = vpack.c.b16 %v142, %v134
  %v183 = vpack.c.b16 %v143, %v135
  %v184 = vpack.c.b16 %v144, %v136
  %v185 = vpack.c.b16 %v145, %v137
  %v186 = vpack.c.b16 %v146, %v138
  %v187 = vpack.c.b16 %v147, %v139
  %v188 = vpack.c.b16 %v148, %v140
  %v189 = vpack.c.b16 %v149, %v141
  %v190 = vpack.c.b16 %v158, %v150
  %v191 = vpack.c.b16 %v159, %v151
  %v192 = vpack.c.b16 %v160, %v152
  %v193 = vpack.c.b16 %v161, %v153
  %v194 = vpack.c.b16 %v162, %v154
  %v195 = vpack.c.b16 %v163, %v155
  %v196 = vpack.c.b16 %v164, %v156
  %v197 = vpack.c.b16 %v165, %v157
  %v198 = vpack.c.b16 %v166, %v166
  %v199 = vpack.c.b16 %v167, %v167
  %v200 = vpack.c.b16 %v168, %v168
  %v201 = vpack.c.b16 %v169, %v169
  %v202 = vpack.c.b16 %v170, %v170
  %v203 = vpack.c.b16 %v171, %v171
  %v204 = vpack.c.b16 %v172, %v172
  %v205 = vpack.c.b16 %v173, %v173
  %vm230 = vcmask 408576
  %v232 = vsel %vm230, %v43, 0
  %vm234 = vcmask 1040384
  %v236 = vsel %vm234, %v198, 0
  %v239 = vsel %vm234, %v199, 0
  %v242 = vsel %vm234, %v200, 0
  %v245 = vsel %vm234, %v201, 0
  %v248 = vsel %vm234, %v202, 0
  %v251 = vsel %vm234, %v203, 0
  %v254 = vsel %vm234, %v204, 0
  %v257 = vsel %vm234, %v205, 0
  %259 = vmatpush.bf16.msra.mxu0 0
  %260 = vmatpush.bf16.msra.mxu0 0
  %261 = vmatpush.bf16.msra.mxu0 0
  %262 = vmatpush.bf16.msra.mxu0 0
  %263 = vmatpush.bf16.msra.mxu0 %v236
  %264 = vmatpush.bf16.msra.mxu0 %v190
  %265 = vmatpush.bf16.msra.mxu0 %v182
  %266 = vmatpush.bf16.msra.mxu0 %v174
  %267 = vmatmul.bf16.gmra.mxu0 %v232
  %v268 = vpop.f32.mrf.mxu0
  %v269 = vadd.f32 %v74, %v268
  %v270 = vpop.f32.mrf.mxu0
  %v271 = vadd.f32 %v74, %v270
  %272 = vdwg.mxu0
  %273 = vmatpush.bf16.msra.mxu0 0
  %274 = vmatpush.bf16.msra.mxu0 0
  %275 = vmatpush.bf16.msra.mxu0 0
  %276 = vmatpush.bf16.msra.mxu0 0
  %277 = vmatpush.bf16.msra.mxu0 %v239
  %278 = vmatpush.bf16.msra.mxu0 %v191
  %279 = vmatpush.bf16.msra.mxu0 %v183
  %280 = vmatpush.bf16.msra.mxu0 %v175
  %281 = vmatmul.bf16.gmra.mxu0 %v232
  %v282 = vpop.f32.mrf.mxu0
  %v283 = vadd.f32 %v75, %v282
  %v284 = vpop.f32.mrf.mxu0
  %v285 = vadd.f32 %v75, %v284
  %286 = vdwg.mxu0
  %287 = vmatpush.bf16.msra.mxu0 0
  %288 = vmatpush.bf16.msra.mxu0 0
  %289 = vmatpush.bf16.msra.mxu0 0
  %290 = vmatpush.bf16.msra.mxu0 0
  %291 = vmatpush.bf16.msra.mxu0 %v242
  %292 = vmatpush.bf16.msra.mxu0 %v192
  %293 = vmatpush.bf16.msra.mxu0 %v184
  %294 = vmatpush.bf16.msra.mxu0 %v176
  %295 = vmatmul.bf16.gmra.mxu0 %v232
  %v296 = vpop.f32.mrf.mxu0
  %v297 = vadd.f32 %v76, %v296
  %v298 = vpop.f32.mrf.mxu0
  %v299 = vadd.f32 %v76, %v298
  %300 = vdwg.mxu0
  %301 = vmatpush.bf16.msra.mxu0 0
  %302 = vmatpush.bf16.msra.mxu0 0
  %303 = vmatpush.bf16.msra.mxu0 0
  %304 = vmatpush.bf16.msra.mxu0 0
  %305 = vmatpush.bf16.msra.mxu0 %v245
  %306 = vmatpush.bf16.msra.mxu0 %v193
  %307 = vmatpush.bf16.msra.mxu0 %v185
  %308 = vmatpush.bf16.msra.mxu0 %v177
  %309 = vmatmul.bf16.gmra.mxu0 %v232
  %v310 = vpop.f32.mrf.mxu0
  %v311 = vadd.f32 %v77, %v310
  %v312 = vpop.f32.mrf.mxu0
  %v313 = vadd.f32 %v77, %v312
  %314 = vdwg.mxu0
  %315 = vmatpush.bf16.msra.mxu0 0
  %316 = vmatpush.bf16.msra.mxu0 0
  %317 = vmatpush.bf16.msra.mxu0 0
  %318 = vmatpush.bf16.msra.mxu0 0
  %319 = vmatpush.bf16.msra.mxu0 %v248
  %320 = vmatpush.bf16.msra.mxu0 %v194
  %321 = vmatpush.bf16.msra.mxu0 %v186
  %322 = vmatpush.bf16.msra.mxu0 %v178
  %323 = vmatmul.bf16.gmra.mxu0 %v232
  %v324 = vpop.f32.mrf.mxu0
  %v325 = vadd.f32 %v78, %v324
  %v326 = vpop.f32.mrf.mxu0
  %v327 = vadd.f32 %v78, %v326
  %328 = vdwg.mxu0
  %329 = vmatpush.bf16.msra.mxu0 0
  %330 = vmatpush.bf16.msra.mxu0 0
  %331 = vmatpush.bf16.msra.mxu0 0
  %332 = vmatpush.bf16.msra.mxu0 0
  %333 = vmatpush.bf16.msra.mxu0 %v251
  %334 = vmatpush.bf16.msra.mxu0 %v195
  %335 = vmatpush.bf16.msra.mxu0 %v187
  %336 = vmatpush.bf16.msra.mxu0 %v179
  %337 = vmatmul.bf16.gmra.mxu0 %v232
  %v338 = vpop.f32.mrf.mxu0
  %v339 = vadd.f32 %v79, %v338
  %v340 = vpop.f32.mrf.mxu0
  %v341 = vadd.f32 %v79, %v340
  %342 = vdwg.mxu0
  %343 = vmatpush.bf16.msra.mxu0 0
  %344 = vmatpush.bf16.msra.mxu0 0
  %345 = vmatpush.bf16.msra.mxu0 0
  %346 = vmatpush.bf16.msra.mxu0 0
  %347 = vmatpush.bf16.msra.mxu0 %v254
  %348 = vmatpush.bf16.msra.mxu0 %v196
  %349 = vmatpush.bf16.msra.mxu0 %v188
  %350 = vmatpush.bf16.msra.mxu0 %v180
  %351 = vmatmul.bf16.gmra.mxu0 %v232
  %v352 = vpop.f32.mrf.mxu0
  %v353 = vadd.f32 %v80, %v352
  %v354 = vpop.f32.mrf.mxu0
  %v355 = vadd.f32 %v80, %v354
  %356 = vdwg.mxu0
  %357 = vmatpush.bf16.msra.mxu0 0
  %358 = vmatpush.bf16.msra.mxu0 0
  %359 = vmatpush.bf16.msra.mxu0 0
  %360 = vmatpush.bf16.msra.mxu0 0
  %361 = vmatpush.bf16.msra.mxu0 %v257
  %362 = vmatpush.bf16.msra.mxu0 %v197
  %363 = vmatpush.bf16.msra.mxu0 %v189
  %364 = vmatpush.bf16.msra.mxu0 %v181
  %365 = vmatmul.bf16.gmra.mxu0 %v232
  %v366 = vpop.f32.mrf.mxu0
  %v367 = vadd.f32 %v81, %v366
  %v368 = vpop.f32.mrf.mxu0
  %v369 = vadd.f32 %v81, %v368
  %370 = vdwg.mxu0
  %v379 = vrot.slane %v283, 6
  %v380 = vrot.slane %v297, 4
  %v381 = vrot.slane %v311, 2
  %v382 = vrot.slane %v339, 6
  %v383 = vrot.slane %v353, 4
  %v384 = vrot.slane %v367, 2
  %vm385 = vcmask 1041408
  %v386 = vsel %vm385, %v269, %v379
  %vm387 = vcmask 1045508
  %v388 = vsel %vm387, %v380, %v381
  %vm389 = vcmask 1043456
  %v390 = vsel %vm389, %v386, %v388
  %v391 = vsel %vm385, %v325, %v382
  %v392 = vsel %vm387, %v383, %v384
  %v393 = vsel %vm389, %v391, %v392
  %396 = vst [vmem:[#allocation2] sm:$0xff] %v390
  %397 = vst [vmem:[#allocation2 + $0x8] sm:$0xff] %v393
  %398 = vst.sshfl [vmem:[#allocation1] sm:$0xff pattern:$0x73625140] %v269
  %399 = vst.sshfl [vmem:[#allocation1 + $0x8] sm:$0xff pattern:$0x73625140] %v283
  %400 = vst.sshfl [vmem:[#allocation1 + $0x10] sm:$0xff pattern:$0x73625140] %v297
  %401 = vst.sshfl [vmem:[#allocation1 + $0x18] sm:$0xff pattern:$0x73625140] %v311
  %402 = vst.sshfl [vmem:[#allocation1 + $0x20] sm:$0xff pattern:$0x73625140] %v325
  %403 = vst.sshfl [vmem:[#allocation1 + $0x28] sm:$0xff pattern:$0x73625140] %v339
  %404 = vst.sshfl [vmem:[#allocation1 + $0x30] sm:$0xff pattern:$0x73625140] %v353
  %405 = vst.sshfl [vmem:[#allocation1 + $0x38] sm:$0xff pattern:$0x73625140] %v367
  %s406 = scalar_lea.vmem [#allocation1], 1
  %v407 = vld [vmem:[%s406] ss:$4 sm:$0xff]
  %s408 = scalar_lea.vmem [#allocation1], 33
  %v409 = vld [vmem:[%s408] ss:$4 sm:$0xff]
  %s412 = scalar_lea.vmem [#allocation2], 16
  %413 = vst [vmem:[%s412] sm:$0xff] %v407
  %414 = vst [vmem:[%s412 + $0x8] sm:$0xff] %v409
  %415 = vst.sshfl [vmem:[#allocation1] sm:$0xff pattern:$0x73625140] %v269
  %416 = vst.sshfl [vmem:[#allocation1 + $0x8] sm:$0xff pattern:$0x73625140] %v283
  %417 = vst.sshfl [vmem:[#allocation1 + $0x10] sm:$0xff pattern:$0x73625140] %v297
  %418 = vst.sshfl [vmem:[#allocation1 + $0x18] sm:$0xff pattern:$0x73625140] %v311
  %419 = vst.sshfl [vmem:[#allocation1 + $0x20] sm:$0xff pattern:$0x73625140] %v325
  %420 = vst.sshfl [vmem:[#allocation1 + $0x28] sm:$0xff pattern:$0x73625140] %v339
  %421 = vst.sshfl [vmem:[#allocation1 + $0x30] sm:$0xff pattern:$0x73625140] %v353
  %422 = vst.sshfl [vmem:[#allocation1 + $0x38] sm:$0xff pattern:$0x73625140] %v367
  %s423 = scalar_lea.vmem [#allocation1], 2
  %v424 = vld [vmem:[%s423] ss:$4 sm:$0xff]
  %s425 = scalar_lea.vmem [#allocation1], 34
  %v426 = vld [vmem:[%s425] ss:$4 sm:$0xff]
  %s429 = scalar_lea.vmem [#allocation2], 32
  %430 = vst [vmem:[%s429] sm:$0xff] %v424
  %431 = vst [vmem:[%s429 + $0x8] sm:$0xff] %v426
  %432 = vst.sshfl [vmem:[#allocation1] sm:$0xff pattern:$0x73625140] %v269
  %433 = vst.sshfl [vmem:[#allocation1 + $0x8] sm:$0xff pattern:$0x73625140] %v283
  %434 = vst.sshfl [vmem:[#allocation1 + $0x10] sm:$0xff pattern:$0x73625140] %v297
  %435 = vst.sshfl [vmem:[#allocation1 + $0x18] sm:$0xff pattern:$0x73625140] %v311
  %436 = vst.sshfl [vmem:[#allocation1 + $0x20] sm:$0xff pattern:$0x73625140] %v325
  %437 = vst.sshfl [vmem:[#allocation1 + $0x28] sm:$0xff pattern:$0x73625140] %v339
  %438 = vst.sshfl [vmem:[#allocation1 + $0x30] sm:$0xff pattern:$0x73625140] %v353
  %439 = vst.sshfl [vmem:[#allocation1 + $0x38] sm:$0xff pattern:$0x73625140] %v367
  %s440 = scalar_lea.vmem [#allocation1], 3
  %v441 = vld [vmem:[%s440] ss:$4 sm:$0xff]
  %s442 = scalar_lea.vmem [#allocation1], 35
  %v443 = vld [vmem:[%s442] ss:$4 sm:$0xff]
  %s446 = scalar_lea.vmem [#allocation2], 48
  %447 = vst [vmem:[%s446] sm:$0xff] %v441
  %448 = vst [vmem:[%s446 + $0x8] sm:$0xff] %v443
  %v457 = vrot.slane %v285, 6
  %v458 = vrot.slane %v299, 4
  %v459 = vrot.slane %v313, 2
  %v460 = vrot.slane %v341, 6
  %v461 = vrot.slane %v355, 4
  %v462 = vrot.slane %v369, 2
  %v463 = vsel %vm385, %v271, %v457
  %v464 = vsel %vm387, %v458, %v459
  %v465 = vsel %vm389, %v463, %v464
  %v466 = vsel %vm385, %v327, %v460
  %v467 = vsel %vm387, %v461, %v462
  %v468 = vsel %vm389, %v466, %v467
  %s471 = scalar_lea.vmem [#allocation2], 64
  %472 = vst [vmem:[%s471] sm:$0xff] %v465
  %473 = vst [vmem:[%s471 + $0x8] sm:$0xff] %v468
  %474 = vst.sshfl [vmem:[#allocation1] sm:$0xff pattern:$0x73625140] %v271
  %475 = vst.sshfl [vmem:[#allocation1 + $0x8] sm:$0xff pattern:$0x73625140] %v285
  %476 = vst.sshfl [vmem:[#allocation1 + $0x10] sm:$0xff pattern:$0x73625140] %v299
  %477 = vst.sshfl [vmem:[#allocation1 + $0x18] sm:$0xff pattern:$0x73625140] %v313
  %478 = vst.sshfl [vmem:[#allocation1 + $0x20] sm:$0xff pattern:$0x73625140] %v327
  %479 = vst.sshfl [vmem:[#allocation1 + $0x28] sm:$0xff pattern:$0x73625140] %v341
  %480 = vst.sshfl [vmem:[#allocation1 + $0x30] sm:$0xff pattern:$0x73625140] %v355
  %481 = vst.sshfl [vmem:[#allocation1 + $0x38] sm:$0xff pattern:$0x73625140] %v369
  %s482 = scalar_lea.vmem [#allocation1], 1
  %v483 = vld [vmem:[%s482] ss:$4 sm:$0xff]
  %s484 = scalar_lea.vmem [#allocation1], 33
  %v485 = vld [vmem:[%s484] ss:$4 sm:$0xff]
  %s488 = scalar_lea.vmem [#allocation2], 80
  %489 = vst [vmem:[%s488] sm:$0xff] %v483
  %490 = vst [vmem:[%s488 + $0x8] sm:$0xff] %v485
  %491 = vst.sshfl [vmem:[#allocation1] sm:$0xff pattern:$0x73625140] %v271
  %492 = vst.sshfl [vmem:[#allocation1 + $0x8] sm:$0xff pattern:$0x73625140] %v285
  %493 = vst.sshfl [vmem:[#allocation1 + $0x10] sm:$0xff pattern:$0x73625140] %v299
  %494 = vst.sshfl [vmem:[#allocation1 + $0x18] sm:$0xff pattern:$0x73625140] %v313
  %495 = vst.sshfl [vmem:[#allocation1 + $0x20] sm:$0xff pattern:$0x73625140] %v327
  %496 = vst.sshfl [vmem:[#allocation1 + $0x28] sm:$0xff pattern:$0x73625140] %v341
  %497 = vst.sshfl [vmem:[#allocation1 + $0x30] sm:$0xff pattern:$0x73625140] %v355
  %498 = vst.sshfl [vmem:[#allocation1 + $0x38] sm:$0xff pattern:$0x73625140] %v369
  %s499 = scalar_lea.vmem [#allocation1], 2
  %v500 = vld [vmem:[%s499] ss:$4 sm:$0xff]
  %s501 = scalar_lea.vmem [#allocation1], 34
  %v502 = vld [vmem:[%s501] ss:$4 sm:$0xff]
  %s505 = scalar_lea.vmem [#allocation2], 96
  %506 = vst [vmem:[%s505] sm:$0xff] %v500
  %507 = vst [vmem:[%s505 + $0x8] sm:$0xff] %v502
  %508 = vst.sshfl [vmem:[#allocation1] sm:$0xff pattern:$0x73625140] %v271
  %509 = vst.sshfl [vmem:[#allocation1 + $0x8] sm:$0xff pattern:$0x73625140] %v285
  %510 = vst.sshfl [vmem:[#allocation1 + $0x10] sm:$0xff pattern:$0x73625140] %v299
  %511 = vst.sshfl [vmem:[#allocation1 + $0x18] sm:$0xff pattern:$0x73625140] %v313
  %512 = vst.sshfl [vmem:[#allocation1 + $0x20] sm:$0xff pattern:$0x73625140] %v327
  %513 = vst.sshfl [vmem:[#allocation1 + $0x28] sm:$0xff pattern:$0x73625140] %v341
  %514 = vst.sshfl [vmem:[#allocation1 + $0x30] sm:$0xff pattern:$0x73625140] %v355
  %515 = vst.sshfl [vmem:[#allocation1 + $0x38] sm:$0xff pattern:$0x73625140] %v369
  %s516 = scalar_lea.vmem [#allocation1], 3
  %v517 = vld [vmem:[%s516] ss:$4 sm:$0xff]
  %s518 = scalar_lea.vmem [#allocation1], 35
  %v519 = vld [vmem:[%s518] ss:$4 sm:$0xff]
  %s522 = scalar_lea.vmem [#allocation2], 112
  %523 = vst [vmem:[%s522] sm:$0xff] %v517
  %524 = vst [vmem:[%s522 + $0x8] sm:$0xff] %v519
  %v525 = vld [vmem:[%s2] sm:$0xff]
  %v526 = vld [vmem:[%s2 + $0x8] sm:$0xff]
  %v527 = vld [vmem:[%s2 + $0x10] sm:$0xff]
  %v528 = vld [vmem:[%s2 + $0x18] sm:$0xff]
  %v529 = vld [vmem:[%s2 + $0x20] sm:$0xff]
  %v530 = vld [vmem:[%s2 + $0x28] sm:$0xff]
  %v531 = vld [vmem:[%s2 + $0x30] sm:$0xff]
  %v532 = vld [vmem:[%s2 + $0x38] sm:$0xff]
  %v533 = vld [vmem:[%s2 + $0x40] sm:$0xff]
  %v534 = vld [vmem:[%s2 + $0x48] sm:$0xff]
  %v535 = vld [vmem:[%s2 + $0x50] sm:$0xff]
  %v536 = vld [vmem:[%s2 + $0x58] sm:$0xff]
  %v537 = vld [vmem:[%s2 + $0x60] sm:$0xff]
  %v538 = vld [vmem:[%s2 + $0x68] sm:$0xff]
  %v539 = vld [vmem:[%s2 + $0x70] sm:$0xff]
  %v540 = vld [vmem:[%s2 + $0x78] sm:$0xff]
  %v541 = vld [vmem:[%s2 + $0x80] sm:$0xff]
  %v542 = vld [vmem:[%s2 + $0x88] sm:$0xff]
  %v543 = vld [vmem:[%s2 + $0x90] sm:$0xff]
  %v544 = vld [vmem:[%s2 + $0x98] sm:$0xff]
  %v545 = vld [vmem:[%s2 + $0xa0] sm:$0xff]
  %v546 = vld [vmem:[%s2 + $0xa8] sm:$0xff]
  %v547 = vld [vmem:[%s2 + $0xb0] sm:$0xff]
  %v548 = vld [vmem:[%s2 + $0xb8] sm:$0xff]
  %v549 = vld [vmem:[%s2 + $0xc0] sm:$0xff]
  %v550 = vld [vmem:[%s2 + $0xc8] sm:$0xff]
  %v551 = vld [vmem:[%s2 + $0xd0] sm:$0xff]
  %v552 = vld [vmem:[%s2 + $0xd8] sm:$0xff]
  %v553 = vld [vmem:[%s2 + $0xe0] sm:$0xff]
  %v554 = vld [vmem:[%s2 + $0xe8] sm:$0xff]
  %v555 = vld [vmem:[%s2 + $0xf0] sm:$0xff]
  %v556 = vld [vmem:[%s2 + $0xf8] sm:$0xff]
  %v557 = vld [vmem:[%s2 + $0x100] sm:$0xff]
  %v558 = vld [vmem:[%s2 + $0x108] sm:$0xff]
  %v559 = vld [vmem:[%s2 + $0x110] sm:$0xff]
  %v560 = vld [vmem:[%s2 + $0x118] sm:$0xff]
  %v561 = vld [vmem:[%s2 + $0x120] sm:$0xff]
  %v562 = vld [vmem:[%s2 + $0x128] sm:$0xff]
  %v563 = vld [vmem:[%s2 + $0x130] sm:$0xff]
  %v564 = vld [vmem:[%s2 + $0x138] sm:$0xff]
  %v565 = vld [vmem:[%s2 + $0x140] sm:$0xff]
  %v566 = vld [vmem:[%s2 + $0x148] sm:$0xff]
  %v567 = vld [vmem:[%s2 + $0x150] sm:$0xff]
  %v568 = vld [vmem:[%s2 + $0x158] sm:$0xff]
  %v569 = vld [vmem:[%s2 + $0x160] sm:$0xff]
  %v570 = vld [vmem:[%s2 + $0x168] sm:$0xff]
  %v571 = vld [vmem:[%s2 + $0x170] sm:$0xff]
  %v572 = vld [vmem:[%s2 + $0x178] sm:$0xff]
  %v573 = vld [vmem:[%s2 + $0x180] sm:$0xff]
  %v574 = vld [vmem:[%s2 + $0x188] sm:$0xff]
  %v575 = vld [vmem:[%s2 + $0x190] sm:$0xff]
  %v576 = vld [vmem:[%s2 + $0x198] sm:$0xff]
  %v577 = vld [vmem:[%s2 + $0x1a0] sm:$0xff]
  %v578 = vld [vmem:[%s2 + $0x1a8] sm:$0xff]
  %v579 = vld [vmem:[%s2 + $0x1b0] sm:$0xff]
  %v580 = vld [vmem:[%s2 + $0x1b8] sm:$0xff]
  %v581 = vld [vmem:[%s2 + $0x1c0] sm:$0xff]
  %v582 = vld [vmem:[%s2 + $0x1c8] sm:$0xff]
  %v583 = vld [vmem:[%s2 + $0x1d0] sm:$0xff]
  %v584 = vld [vmem:[%s2 + $0x1d8] sm:$0xff]
  %v585 = vld [vmem:[%s2 + $0x1e0] sm:$0xff]
  %v586 = vld [vmem:[%s2 + $0x1e8] sm:$0xff]
  %v587 = vld [vmem:[%s2 + $0x1f0] sm:$0xff]
  %v588 = vld [vmem:[%s2 + $0x1f8] sm:$0xff]
  %v589 = vld [vmem:[%s2 + $0x200] sm:$0xff]
  %v590 = vld [vmem:[%s2 + $0x208] sm:$0xff]
  %v591 = vld [vmem:[%s2 + $0x210] sm:$0xff]
  %v592 = vld [vmem:[%s2 + $0x218] sm:$0xff]
  %v593 = vld [vmem:[%s2 + $0x220] sm:$0xff]
  %v594 = vld [vmem:[%s2 + $0x228] sm:$0xff]
  %v595 = vld [vmem:[%s2 + $0x230] sm:$0xff]
  %v596 = vld [vmem:[%s2 + $0x238] sm:$0xff]
  %v597 = vld [vmem:[%s2 + $0x240] sm:$0xff]
  %v598 = vld [vmem:[%s2 + $0x248] sm:$0xff]
  %v599 = vld [vmem:[%s2 + $0x250] sm:$0xff]
  %v600 = vld [vmem:[%s2 + $0x258] sm:$0xff]
  %v601 = vld [vmem:[%s2 + $0x260] sm:$0xff]
  %v602 = vld [vmem:[%s2 + $0x268] sm:$0xff]
  %v603 = vld [vmem:[%s2 + $0x270] sm:$0xff]
  %v604 = vld [vmem:[%s2 + $0x278] sm:$0xff]
  %v605 = vld [vmem:[%s2 + $0x280] sm:$0xff]
  %v606 = vld [vmem:[%s2 + $0x288] sm:$0xff]
  %v607 = vld [vmem:[%s2 + $0x290] sm:$0xff]
  %v608 = vld [vmem:[%s2 + $0x298] sm:$0xff]
  %v609 = vld [vmem:[%s2 + $0x2a0] sm:$0xff]
  %v610 = vld [vmem:[%s2 + $0x2a8] sm:$0xff]
  %v611 = vld [vmem:[%s2 + $0x2b0] sm:$0xff]
  %v612 = vld [vmem:[%s2 + $0x2b8] sm:$0xff]
  %v613 = vld [vmem:[%s2 + $0x2c0] sm:$0xff]
  %v614 = vld [vmem:[%s2 + $0x2c8] sm:$0xff]
  %v615 = vld [vmem:[%s2 + $0x2d0] sm:$0xff]
  %v616 = vld [vmem:[%s2 + $0x2d8] sm:$0xff]
  %v617 = vld [vmem:[%s2 + $0x2e0] sm:$0xff]
  %v618 = vld [vmem:[%s2 + $0x2e8] sm:$0xff]
  %v619 = vld [vmem:[%s2 + $0x2f0] sm:$0xff]
  %v620 = vld [vmem:[%s2 + $0x2f8] sm:$0xff]
  %v621 = vld [vmem:[%s2 + $0x300] sm:$0xff]
  %v622 = vld [vmem:[%s2 + $0x308] sm:$0xff]
  %v623 = vld [vmem:[%s2 + $0x310] sm:$0xff]
  %v624 = vld [vmem:[%s2 + $0x318] sm:$0xff]
  %v625 = vld [vmem:[%s2 + $0x320] sm:$0xff]
  %v626 = vld [vmem:[%s2 + $0x328] sm:$0xff]
  %v627 = vld [vmem:[%s2 + $0x330] sm:$0xff]
  %v628 = vld [vmem:[%s2 + $0x338] sm:$0xff]
  %v629 = vld [vmem:[%s2 + $0x340] sm:$0xff]
  %v630 = vld [vmem:[%s2 + $0x348] sm:$0xff]
  %v631 = vld [vmem:[%s2 + $0x350] sm:$0xff]
  %v632 = vld [vmem:[%s2 + $0x358] sm:$0xff]
  %v633 = vld [vmem:[%s2 + $0x360] sm:$0xff]
  %v634 = vld [vmem:[%s2 + $0x368] sm:$0xff]
  %v635 = vld [vmem:[%s2 + $0x370] sm:$0xff]
  %v636 = vld [vmem:[%s2 + $0x378] sm:$0xff]
  %v637 = vld [vmem:[%s2 + $0x380] sm:$0xff]
  %v638 = vld [vmem:[%s2 + $0x388] sm:$0xff]
  %v639 = vld [vmem:[%s2 + $0x390] sm:$0xff]
  %v640 = vld [vmem:[%s2 + $0x398] sm:$0xff]
  %v641 = vld [vmem:[%s2 + $0x3a0] sm:$0xff]
  %v642 = vld [vmem:[%s2 + $0x3a8] sm:$0xff]
  %v643 = vld [vmem:[%s2 + $0x3b0] sm:$0xff]
  %v644 = vld [vmem:[%s2 + $0x3b8] sm:$0xff]
  %v645 = vld [vmem:[%s2 + $0x3c0] sm:$0xff]
  %v646 = vld [vmem:[%s2 + $0x3c8] sm:$0xff]
  %v647 = vld [vmem:[%s2 + $0x3d0] sm:$0xff]
  %v648 = vld [vmem:[%s2 + $0x3d8] sm:$0xff]
  %v649 = vld [vmem:[%s2 + $0x3e0] sm:$0xff]
  %v650 = vld [vmem:[%s2 + $0x3e8] sm:$0xff]
  %v651 = vld [vmem:[%s2 + $0x3f0] sm:$0xff]
  %v652 = vld [vmem:[%s2 + $0x3f8] sm:$0xff]
  %v653 = vld [vmem:[%s4] sm:$0xff]
  %v654 = vld [vmem:[%s4 + $0x8] sm:$0xff]
  %v655 = vld [vmem:[%s4 + $0x10] sm:$0xff]
  %v656 = vld [vmem:[%s4 + $0x18] sm:$0xff]
  %v657 = vld [vmem:[%s4 + $0x20] sm:$0xff]
  %v658 = vld [vmem:[%s4 + $0x28] sm:$0xff]
  %v659 = vld [vmem:[%s4 + $0x30] sm:$0xff]
  %v660 = vld [vmem:[%s4 + $0x38] sm:$0xff]
  %v661 = vld [vmem:[%s4 + $0x40] sm:$0xff]
  %v662 = vld [vmem:[%s4 + $0x48] sm:$0xff]
  %v663 = vld [vmem:[%s4 + $0x50] sm:$0xff]
  %v664 = vld [vmem:[%s4 + $0x58] sm:$0xff]
  %v665 = vld [vmem:[%s4 + $0x60] sm:$0xff]
  %v666 = vld [vmem:[%s4 + $0x68] sm:$0xff]
  %v667 = vld [vmem:[%s4 + $0x70] sm:$0xff]
  %v668 = vld [vmem:[%s4 + $0x78] sm:$0xff]
  %v669 = vld [vmem:[%s4 + $0x80] sm:$0xff]
  %v670 = vld [vmem:[%s4 + $0x88] sm:$0xff]
  %v671 = vld [vmem:[%s4 + $0x90] sm:$0xff]
  %v672 = vld [vmem:[%s4 + $0x98] sm:$0xff]
  %v673 = vld [vmem:[%s4 + $0xa0] sm:$0xff]
  %v674 = vld [vmem:[%s4 + $0xa8] sm:$0xff]
  %v675 = vld [vmem:[%s4 + $0xb0] sm:$0xff]
  %v676 = vld [vmem:[%s4 + $0xb8] sm:$0xff]
  %v677 = vld [vmem:[%s4 + $0xc0] sm:$0xff]
  %v678 = vld [vmem:[%s4 + $0xc8] sm:$0xff]
  %v679 = vld [vmem:[%s4 + $0xd0] sm:$0xff]
  %v680 = vld [vmem:[%s4 + $0xd8] sm:$0xff]
  %v681 = vld [vmem:[%s4 + $0xe0] sm:$0xff]
  %v682 = vld [vmem:[%s4 + $0xe8] sm:$0xff]
  %v683 = vld [vmem:[%s4 + $0xf0] sm:$0xff]
  %v684 = vld [vmem:[%s4 + $0xf8] sm:$0xff]
  %v685 = vld [vmem:[%s4 + $0x100] sm:$0xff]
  %v686 = vld [vmem:[%s4 + $0x108] sm:$0xff]
  %v687 = vld [vmem:[%s4 + $0x110] sm:$0xff]
  %v688 = vld [vmem:[%s4 + $0x118] sm:$0xff]
  %v689 = vld [vmem:[%s4 + $0x120] sm:$0xff]
  %v690 = vld [vmem:[%s4 + $0x128] sm:$0xff]
  %v691 = vld [vmem:[%s4 + $0x130] sm:$0xff]
  %v692 = vld [vmem:[%s4 + $0x138] sm:$0xff]
  %v693 = vld [vmem:[%s4 + $0x140] sm:$0xff]
  %v694 = vld [vmem:[%s4 + $0x148] sm:$0xff]
  %v695 = vld [vmem:[%s4 + $0x150] sm:$0xff]
  %v696 = vld [vmem:[%s4 + $0x158] sm:$0xff]
  %v697 = vld [vmem:[%s4 + $0x160] sm:$0xff]
  %v698 = vld [vmem:[%s4 + $0x168] sm:$0xff]
  %v699 = vld [vmem:[%s4 + $0x170] sm:$0xff]
  %v700 = vld [vmem:[%s4 + $0x178] sm:$0xff]
  %v701 = vld [vmem:[%s4 + $0x180] sm:$0xff]
  %v702 = vld [vmem:[%s4 + $0x188] sm:$0xff]
  %v703 = vld [vmem:[%s4 + $0x190] sm:$0xff]
  %v704 = vld [vmem:[%s4 + $0x198] sm:$0xff]
  %v705 = vld [vmem:[%s4 + $0x1a0] sm:$0xff]
  %v706 = vld [vmem:[%s4 + $0x1a8] sm:$0xff]
  %v707 = vld [vmem:[%s4 + $0x1b0] sm:$0xff]
  %v708 = vld [vmem:[%s4 + $0x1b8] sm:$0xff]
  %v709 = vld [vmem:[%s4 + $0x1c0] sm:$0xff]
  %v710 = vld [vmem:[%s4 + $0x1c8] sm:$0xff]
  %v711 = vld [vmem:[%s4 + $0x1d0] sm:$0xff]
  %v712 = vld [vmem:[%s4 + $0x1d8] sm:$0xff]
  %v713 = vld [vmem:[%s4 + $0x1e0] sm:$0xff]
  %v714 = vld [vmem:[%s4 + $0x1e8] sm:$0xff]
  %v715 = vld [vmem:[%s4 + $0x1f0] sm:$0xff]
  %v716 = vld [vmem:[%s4 + $0x1f8] sm:$0xff]
  %v717 = vld [vmem:[%s4 + $0x200] sm:$0xff]
  %v718 = vld [vmem:[%s4 + $0x208] sm:$0xff]
  %v719 = vld [vmem:[%s4 + $0x210] sm:$0xff]
  %v720 = vld [vmem:[%s4 + $0x218] sm:$0xff]
  %v721 = vld [vmem:[%s4 + $0x220] sm:$0xff]
  %v722 = vld [vmem:[%s4 + $0x228] sm:$0xff]
  %v723 = vld [vmem:[%s4 + $0x230] sm:$0xff]
  %v724 = vld [vmem:[%s4 + $0x238] sm:$0xff]
  %v725 = vld [vmem:[%s4 + $0x240] sm:$0xff]
  %v726 = vld [vmem:[%s4 + $0x248] sm:$0xff]
  %v727 = vld [vmem:[%s4 + $0x250] sm:$0xff]
  %v728 = vld [vmem:[%s4 + $0x258] sm:$0xff]
  %v729 = vld [vmem:[%s4 + $0x260] sm:$0xff]
  %v730 = vld [vmem:[%s4 + $0x268] sm:$0xff]
  %v731 = vld [vmem:[%s4 + $0x270] sm:$0xff]
  %v732 = vld [vmem:[%s4 + $0x278] sm:$0xff]
  %v733 = vld [vmem:[%s4 + $0x280] sm:$0xff]
  %v734 = vld [vmem:[%s4 + $0x288] sm:$0xff]
  %v735 = vld [vmem:[%s4 + $0x290] sm:$0xff]
  %v736 = vld [vmem:[%s4 + $0x298] sm:$0xff]
  %v737 = vld [vmem:[%s4 + $0x2a0] sm:$0xff]
  %v738 = vld [vmem:[%s4 + $0x2a8] sm:$0xff]
  %v739 = vld [vmem:[%s4 + $0x2b0] sm:$0xff]
  %v740 = vld [vmem:[%s4 + $0x2b8] sm:$0xff]
  %v741 = vld [vmem:[%s4 + $0x2c0] sm:$0xff]
  %v742 = vld [vmem:[%s4 + $0x2c8] sm:$0xff]
  %v743 = vld [vmem:[%s4 + $0x2d0] sm:$0xff]
  %v744 = vld [vmem:[%s4 + $0x2d8] sm:$0xff]
  %v745 = vld [vmem:[%s4 + $0x2e0] sm:$0xff]
  %v746 = vld [vmem:[%s4 + $0x2e8] sm:$0xff]
  %v747 = vld [vmem:[%s4 + $0x2f0] sm:$0xff]
  %v748 = vld [vmem:[%s4 + $0x2f8] sm:$0xff]
  %v749 = vld [vmem:[%s4 + $0x300] sm:$0xff]
  %v750 = vld [vmem:[%s4 + $0x308] sm:$0xff]
  %v751 = vld [vmem:[%s4 + $0x310] sm:$0xff]
  %v752 = vld [vmem:[%s4 + $0x318] sm:$0xff]
  %v753 = vld [vmem:[%s4 + $0x320] sm:$0xff]
  %v754 = vld [vmem:[%s4 + $0x328] sm:$0xff]
  %v755 = vld [vmem:[%s4 + $0x330] sm:$0xff]
  %v756 = vld [vmem:[%s4 + $0x338] sm:$0xff]
  %v757 = vld [vmem:[%s4 + $0x340] sm:$0xff]
  %v758 = vld [vmem:[%s4 + $0x348] sm:$0xff]
  %v759 = vld [vmem:[%s4 + $0x350] sm:$0xff]
  %v760 = vld [vmem:[%s4 + $0x358] sm:$0xff]
  %v761 = vld [vmem:[%s4 + $0x360] sm:$0xff]
  %v762 = vld [vmem:[%s4 + $0x368] sm:$0xff]
  %v763 = vld [vmem:[%s4 + $0x370] sm:$0xff]
  %v764 = vld [vmem:[%s4 + $0x378] sm:$0xff]
  %v765 = vld [vmem:[%s4 + $0x380] sm:$0xff]
  %v766 = vld [vmem:[%s4 + $0x388] sm:$0xff]
  %v767 = vld [vmem:[%s4 + $0x390] sm:$0xff]
  %v768 = vld [vmem:[%s4 + $0x398] sm:$0xff]
  %v769 = vld [vmem:[%s4 + $0x3a0] sm:$0xff]
  %v770 = vld [vmem:[%s4 + $0x3a8] sm:$0xff]
  %v771 = vld [vmem:[%s4 + $0x3b0] sm:$0xff]
  %v772 = vld [vmem:[%s4 + $0x3b8] sm:$0xff]
  %v773 = vld [vmem:[%s4 + $0x3c0] sm:$0xff]
  %v774 = vld [vmem:[%s4 + $0x3c8] sm:$0xff]
  %v775 = vld [vmem:[%s4 + $0x3d0] sm:$0xff]
  %v776 = vld [vmem:[%s4 + $0x3d8] sm:$0xff]
  %v777 = vld [vmem:[%s4 + $0x3e0] sm:$0xff]
  %v778 = vld [vmem:[%s4 + $0x3e8] sm:$0xff]
  %v779 = vld [vmem:[%s4 + $0x3f0] sm:$0xff]
  %v780 = vld [vmem:[%s4 + $0x3f8] sm:$0xff]
  %v781 = vld [vmem:[%s5] sm:$0xff]
  %v782 = vld [vmem:[%s5 + $0x8] sm:$0xff]
  %v783 = vld [vmem:[%s5 + $0x10] sm:$0xff]
  %v784 = vld [vmem:[%s5 + $0x18] sm:$0xff]
  %v785 = vld [vmem:[%s5 + $0x20] sm:$0xff]
  %v786 = vld [vmem:[%s5 + $0x28] sm:$0xff]
  %v787 = vld [vmem:[%s5 + $0x30] sm:$0xff]
  %v788 = vld [vmem:[%s5 + $0x38] sm:$0xff]
  %v789 = vld [vmem:[%s5 + $0x40] sm:$0xff]
  %v790 = vld [vmem:[%s5 + $0x48] sm:$0xff]
  %v791 = vld [vmem:[%s5 + $0x50] sm:$0xff]
  %v792 = vld [vmem:[%s5 + $0x58] sm:$0xff]
  %v793 = vld [vmem:[%s5 + $0x60] sm:$0xff]
  %v794 = vld [vmem:[%s5 + $0x68] sm:$0xff]
  %v795 = vld [vmem:[%s5 + $0x70] sm:$0xff]
  %v796 = vld [vmem:[%s5 + $0x78] sm:$0xff]
  %v797 = vld [vmem:[%s5 + $0x80] sm:$0xff]
  %v798 = vld [vmem:[%s5 + $0x88] sm:$0xff]
  %v799 = vld [vmem:[%s5 + $0x90] sm:$0xff]
  %v800 = vld [vmem:[%s5 + $0x98] sm:$0xff]
  %v801 = vld [vmem:[%s5 + $0xa0] sm:$0xff]
  %v802 = vld [vmem:[%s5 + $0xa8] sm:$0xff]
  %v803 = vld [vmem:[%s5 + $0xb0] sm:$0xff]
  %v804 = vld [vmem:[%s5 + $0xb8] sm:$0xff]
  %v805 = vld [vmem:[%s5 + $0xc0] sm:$0xff]
  %v806 = vld [vmem:[%s5 + $0xc8] sm:$0xff]
  %v807 = vld [vmem:[%s5 + $0xd0] sm:$0xff]
  %v808 = vld [vmem:[%s5 + $0xd8] sm:$0xff]
  %v809 = vld [vmem:[%s5 + $0xe0] sm:$0xff]
  %v810 = vld [vmem:[%s5 + $0xe8] sm:$0xff]
  %v811 = vld [vmem:[%s5 + $0xf0] sm:$0xff]
  %v812 = vld [vmem:[%s5 + $0xf8] sm:$0xff]
  %v813 = vld [vmem:[%s5 + $0x100] sm:$0xff]
  %v814 = vld [vmem:[%s5 + $0x108] sm:$0xff]
  %v815 = vld [vmem:[%s5 + $0x110] sm:$0xff]
  %v816 = vld [vmem:[%s5 + $0x118] sm:$0xff]
  %v817 = vld [vmem:[%s5 + $0x120] sm:$0xff]
  %v818 = vld [vmem:[%s5 + $0x128] sm:$0xff]
  %v819 = vld [vmem:[%s5 + $0x130] sm:$0xff]
  %v820 = vld [vmem:[%s5 + $0x138] sm:$0xff]
  %v821 = vld [vmem:[%s5 + $0x140] sm:$0xff]
  %v822 = vld [vmem:[%s5 + $0x148] sm:$0xff]
  %v823 = vld [vmem:[%s5 + $0x150] sm:$0xff]
  %v824 = vld [vmem:[%s5 + $0x158] sm:$0xff]
  %v825 = vld [vmem:[%s5 + $0x160] sm:$0xff]
  %v826 = vld [vmem:[%s5 + $0x168] sm:$0xff]
  %v827 = vld [vmem:[%s5 + $0x170] sm:$0xff]
  %v828 = vld [vmem:[%s5 + $0x178] sm:$0xff]
  %v829 = vld [vmem:[%s5 + $0x180] sm:$0xff]
  %v830 = vld [vmem:[%s5 + $0x188] sm:$0xff]
  %v831 = vld [vmem:[%s5 + $0x190] sm:$0xff]
  %v832 = vld [vmem:[%s5 + $0x198] sm:$0xff]
  %v833 = vld [vmem:[%s5 + $0x1a0] sm:$0xff]
  %v834 = vld [vmem:[%s5 + $0x1a8] sm:$0xff]
  %v835 = vld [vmem:[%s5 + $0x1b0] sm:$0xff]
  %v836 = vld [vmem:[%s5 + $0x1b8] sm:$0xff]
  %v837 = vld [vmem:[%s5 + $0x1c0] sm:$0xff]
  %v838 = vld [vmem:[%s5 + $0x1c8] sm:$0xff]
  %v839 = vld [vmem:[%s5 + $0x1d0] sm:$0xff]
  %v840 = vld [vmem:[%s5 + $0x1d8] sm:$0xff]
  %v841 = vld [vmem:[%s5 + $0x1e0] sm:$0xff]
  %v842 = vld [vmem:[%s5 + $0x1e8] sm:$0xff]
  %v843 = vld [vmem:[%s5 + $0x1f0] sm:$0xff]
  %v844 = vld [vmem:[%s5 + $0x1f8] sm:$0xff]
  %v845 = vld [vmem:[%s5 + $0x200] sm:$0xff]
  %v846 = vld [vmem:[%s5 + $0x208] sm:$0xff]
  %v847 = vld [vmem:[%s5 + $0x210] sm:$0xff]
  %v848 = vld [vmem:[%s5 + $0x218] sm:$0xff]
  %v849 = vld [vmem:[%s5 + $0x220] sm:$0xff]
  %v850 = vld [vmem:[%s5 + $0x228] sm:$0xff]
  %v851 = vld [vmem:[%s5 + $0x230] sm:$0xff]
  %v852 = vld [vmem:[%s5 + $0x238] sm:$0xff]
  %v853 = vld [vmem:[%s5 + $0x240] sm:$0xff]
  %v854 = vld [vmem:[%s5 + $0x248] sm:$0xff]
  %v855 = vld [vmem:[%s5 + $0x250] sm:$0xff]
  %v856 = vld [vmem:[%s5 + $0x258] sm:$0xff]
  %v857 = vld [vmem:[%s5 + $0x260] sm:$0xff]
  %v858 = vld [vmem:[%s5 + $0x268] sm:$0xff]
  %v859 = vld [vmem:[%s5 + $0x270] sm:$0xff]
  %v860 = vld [vmem:[%s5 + $0x278] sm:$0xff]
  %v861 = vld [vmem:[%s5 + $0x280] sm:$0xff]
  %v862 = vld [vmem:[%s5 + $0x288] sm:$0xff]
  %v863 = vld [vmem:[%s5 + $0x290] sm:$0xff]
  %v864 = vld [vmem:[%s5 + $0x298] sm:$0xff]
  %v865 = vld [vmem:[%s5 + $0x2a0] sm:$0xff]
  %v866 = vld [vmem:[%s5 + $0x2a8] sm:$0xff]
  %v867 = vld [vmem:[%s5 + $0x2b0] sm:$0xff]
  %v868 = vld [vmem:[%s5 + $0x2b8] sm:$0xff]
  %v869 = vld [vmem:[%s5 + $0x2c0] sm:$0xff]
  %v870 = vld [vmem:[%s5 + $0x2c8] sm:$0xff]
  %v871 = vld [vmem:[%s5 + $0x2d0] sm:$0xff]
  %v872 = vld [vmem:[%s5 + $0x2d8] sm:$0xff]
  %v873 = vld [vmem:[%s5 + $0x2e0] sm:$0xff]
  %v874 = vld [vmem:[%s5 + $0x2e8] sm:$0xff]
  %v875 = vld [vmem:[%s5 + $0x2f0] sm:$0xff]
  %v876 = vld [vmem:[%s5 + $0x2f8] sm:$0xff]
  %v877 = vld [vmem:[%s5 + $0x300] sm:$0xff]
  %v878 = vld [vmem:[%s5 + $0x308] sm:$0xff]
  %v879 = vld [vmem:[%s5 + $0x310] sm:$0xff]
  %v880 = vld [vmem:[%s5 + $0x318] sm:$0xff]
  %v881 = vld [vmem:[%s5 + $0x320] sm:$0xff]
  %v882 = vld [vmem:[%s5 + $0x328] sm:$0xff]
  %v883 = vld [vmem:[%s5 + $0x330] sm:$0xff]
  %v884 = vld [vmem:[%s5 + $0x338] sm:$0xff]
  %v885 = vld [vmem:[%s5 + $0x340] sm:$0xff]
  %v886 = vld [vmem:[%s5 + $0x348] sm:$0xff]
  %v887 = vld [vmem:[%s5 + $0x350] sm:$0xff]
  %v888 = vld [vmem:[%s5 + $0x358] sm:$0xff]
  %v889 = vld [vmem:[%s5 + $0x360] sm:$0xff]
  %v890 = vld [vmem:[%s5 + $0x368] sm:$0xff]
  %v891 = vld [vmem:[%s5 + $0x370] sm:$0xff]
  %v892 = vld [vmem:[%s5 + $0x378] sm:$0xff]
  %v893 = vld [vmem:[%s5 + $0x380] sm:$0xff]
  %v894 = vld [vmem:[%s5 + $0x388] sm:$0xff]
  %v895 = vld [vmem:[%s5 + $0x390] sm:$0xff]
  %v896 = vld [vmem:[%s5 + $0x398] sm:$0xff]
  %v897 = vld [vmem:[%s5 + $0x3a0] sm:$0xff]
  %v898 = vld [vmem:[%s5 + $0x3a8] sm:$0xff]
  %v899 = vld [vmem:[%s5 + $0x3b0] sm:$0xff]
  %v900 = vld [vmem:[%s5 + $0x3b8] sm:$0xff]
  %v901 = vld [vmem:[%s5 + $0x3c0] sm:$0xff]
  %v902 = vld [vmem:[%s5 + $0x3c8] sm:$0xff]
  %v903 = vld [vmem:[%s5 + $0x3d0] sm:$0xff]
  %v904 = vld [vmem:[%s5 + $0x3d8] sm:$0xff]
  %v905 = vld [vmem:[%s5 + $0x3e0] sm:$0xff]
  %v906 = vld [vmem:[%s5 + $0x3e8] sm:$0xff]
  %v907 = vld [vmem:[%s5 + $0x3f0] sm:$0xff]
  %v908 = vld [vmem:[%s5 + $0x3f8] sm:$0xff]
  %v909 = vld [vmem:[%s6] sm:$0xff]
  %v911 = vperm.slane %v909, 0
  %v912 = vperm.slane %v909, 1
  %v913 = vperm.slane %v909, 2
  %v914 = vperm.slane %v909, 3
  %v915 = vperm.slane %v909, 4
  %v916 = vperm.slane %v909, 5
  %v917 = vperm.slane %v909, 6
  %v918 = vperm.slane %v909, 7
  %v927 = vld [vmem:[#allocation2] sm:$0xff]
  %v928 = vld [vmem:[#allocation2 + $0x8] sm:$0xff]
  %v929 = vadd.f32 %v927, 0.0
  %v930 = vadd.f32 %v928, 0.0
  %v931 = vxor.u32 %v929, 2147483648
  %v932 = vxor.u32 %v930, 2147483648
  %v933 = vmul.f32 %v931, 1.442695
  %v934 = vpow.pop %v933
  %v935 = vmul.f32 %v932, 1.442695
  %v936 = vpow.pop %v935
  %v937 = vadd.f32 %v934, 1.0
  %v938 = vadd.f32 %v936, 1.0
  %v939 = vrcp.pop %v937
  %v940 = vmul.f32 %v937, %v939
  %v941 = vsub.f32 1.0, %v940
  %v942 = vmul.f32 %v939, %v941
  %v943 = vadd.f32 %v939, %v942
  %vm944 = vweird.f32 %v937
  %vm945 = vweird.f32 %v939
  %vm946 = vmor %vm944, %vm945
  %v947 = vsel %vm946, %v939, %v943
  %v948 = vand.u32 2147483647, %v937
  %vm949 = vcmp.eq.f32.partialorder %v948, 8.507059e+37
  %v950 = vand.u32 %v937, 2147483648
  %v951 = vor.u32 1.1754944e-38, %v950
  %v952 = vsel %vm949, %v951, %v947
  %v953 = vmul.f32 1.0, %v952
  %v954 = vrcp.pop %v938
  %v955 = vmul.f32 %v938, %v954
  %v956 = vsub.f32 1.0, %v955
  %v957 = vmul.f32 %v954, %v956
  %v958 = vadd.f32 %v954, %v957
  %vm959 = vweird.f32 %v938
  %vm960 = vweird.f32 %v954
  %vm961 = vmor %vm959, %vm960
  %v962 = vsel %vm961, %v954, %v958
  %v963 = vand.u32 2147483647, %v938
  %vm964 = vcmp.eq.f32.partialorder %v963, 8.507059e+37
  %v965 = vand.u32 %v938, 2147483648
  %v966 = vor.u32 1.1754944e-38, %v965
  %v967 = vsel %vm964, %v966, %v962
  %v968 = vmul.f32 1.0, %v967
  %v970 = vrot.slane %v930, 4
  %v972 = vtanh.pop %v970
  %v974 = vrot.slane %v953, 4
  %v976 = vmul.f32 %v974, 0.0
  %v977 = vmul.f32 %v953, %v972
  %v978 = vadd.f32 %v976, %v977
  %v979 = vtanh.pop %v978
  %v980 = vmul.f32 %v968, %v979
  %982 = vst [vmem:[#allocation1] ss:$4 sm:$0xff] %v980
  %v983 = vld.sshfl [vmem:[#allocation1] sm:$0xff pattern:$0x73625140]
  %v984 = vld.sshfl [vmem:[#allocation1 + $0x8] sm:$0xff pattern:$0x73625140]
  %v987 = vpack.c.bf16 %v983, %v983
  %v988 = vpack.c.bf16 %v984, %v984
  %v1117 = vunpack.c.l.b16 %v525
  %v1118 = vunpack.c.h.b16 %v525
  %v1119 = vunpack.c.l.b16 %v526
  %v1120 = vunpack.c.h.b16 %v526
  %v1121 = vunpack.c.l.b16 %v527
  %v1122 = vunpack.c.h.b16 %v527
  %v1123 = vunpack.c.l.b16 %v528
  %v1124 = vunpack.c.h.b16 %v528
  %v1125 = vunpack.c.l.b16 %v529
  %v1126 = vunpack.c.h.b16 %v529
  %v1127 = vunpack.c.l.b16 %v530
  %v1128 = vunpack.c.h.b16 %v530
  %v1129 = vunpack.c.l.b16 %v531
  %v1130 = vunpack.c.h.b16 %v531
  %v1131 = vunpack.c.l.b16 %v532
  %v1132 = vunpack.c.h.b16 %v532
  %v1133 = vunpack.c.l.b16 %v533
  %v1134 = vunpack.c.h.b16 %v533
  %v1135 = vunpack.c.l.b16 %v534
  %v1136 = vunpack.c.h.b16 %v534
  %v1137 = vunpack.c.l.b16 %v535
  %v1138 = vunpack.c.h.b16 %v535
  %v1139 = vunpack.c.l.b16 %v536
  %v1140 = vunpack.c.h.b16 %v536
  %v1141 = vunpack.c.l.b16 %v537
  %v1142 = vunpack.c.h.b16 %v537
  %v1143 = vunpack.c.l.b16 %v538
  %v1144 = vunpack.c.h.b16 %v538
  %v1145 = vunpack.c.l.b16 %v539
  %v1146 = vunpack.c.h.b16 %v539
  %v1147 = vunpack.c.l.b16 %v540
  %v1148 = vunpack.c.h.b16 %v540
  %v1149 = vunpack.c.l.b16 %v541
  %v1150 = vunpack.c.h.b16 %v541
  %v1151 = vunpack.c.l.b16 %v542
  %v1152 = vunpack.c.h.b16 %v542
  %v1153 = vunpack.c.l.b16 %v543
  %v1154 = vunpack.c.h.b16 %v543
  %v1155 = vunpack.c.l.b16 %v544
  %v1156 = vunpack.c.h.b16 %v544
  %v1157 = vunpack.c.l.b16 %v545
  %v1158 = vunpack.c.h.b16 %v545
  %v1159 = vunpack.c.l.b16 %v546
  %v1160 = vunpack.c.h.b16 %v546
  %v1161 = vunpack.c.l.b16 %v547
  %v1162 = vunpack.c.h.b16 %v547
  %v1163 = vunpack.c.l.b16 %v548
  %v1164 = vunpack.c.h.b16 %v548
  %v1165 = vunpack.c.l.b16 %v549
  %v1166 = vunpack.c.h.b16 %v549
  %v1167 = vunpack.c.l.b16 %v550
  %v1168 = vunpack.c.h.b16 %v550
  %v1169 = vunpack.c.l.b16 %v551
  %v1170 = vunpack.c.h.b16 %v551
  %v1171 = vunpack.c.l.b16 %v552
  %v1172 = vunpack.c.h.b16 %v552
  %v1173 = vunpack.c.l.b16 %v553
  %v1174 = vunpack.c.h.b16 %v553
  %v1175 = vunpack.c.l.b16 %v554
  %v1176 = vunpack.c.h.b16 %v554
  %v1177 = vunpack.c.l.b16 %v555
  %v1178 = vunpack.c.h.b16 %v555
  %v1179 = vunpack.c.l.b16 %v556
  %v1180 = vunpack.c.h.b16 %v556
  %v1181 = vunpack.c.l.b16 %v557
  %v1182 = vunpack.c.h.b16 %v557
  %v1183 = vunpack.c.l.b16 %v558
  %v1184 = vunpack.c.h.b16 %v558
  %v1185 = vunpack.c.l.b16 %v559
  %v1186 = vunpack.c.h.b16 %v559
  %v1187 = vunpack.c.l.b16 %v560
  %v1188 = vunpack.c.h.b16 %v560
  %v1189 = vunpack.c.l.b16 %v561
  %v1190 = vunpack.c.h.b16 %v561
  %v1191 = vunpack.c.l.b16 %v562
  %v1192 = vunpack.c.h.b16 %v562
  %v1193 = vunpack.c.l.b16 %v563
  %v1194 = vunpack.c.h.b16 %v563
  %v1195 = vunpack.c.l.b16 %v564
  %v1196 = vunpack.c.h.b16 %v564
  %v1197 = vunpack.c.l.b16 %v565
  %v1198 = vunpack.c.h.b16 %v565
  %v1199 = vunpack.c.l.b16 %v566
  %v1200 = vunpack.c.h.b16 %v566
  %v1201 = vunpack.c.l.b16 %v567
  %v1202 = vunpack.c.h.b16 %v567
  %v1203 = vunpack.c.l.b16 %v568
  %v1204 = vunpack.c.h.b16 %v568
  %v1205 = vunpack.c.l.b16 %v569
  %v1206 = vunpack.c.h.b16 %v569
  %v1207 = vunpack.c.l.b16 %v570
  %v1208 = vunpack.c.h.b16 %v570
  %v1209 = vunpack.c.l.b16 %v571
  %v1210 = vunpack.c.h.b16 %v571
  %v1211 = vunpack.c.l.b16 %v572
  %v1212 = vunpack.c.h.b16 %v572
  %v1213 = vunpack.c.l.b16 %v573
  %v1214 = vunpack.c.h.b16 %v573
  %v1215 = vunpack.c.l.b16 %v574
  %v1216 = vunpack.c.h.b16 %v574
  %v1217 = vunpack.c.l.b16 %v575
  %v1218 = vunpack.c.h.b16 %v575
  %v1219 = vunpack.c.l.b16 %v576
  %v1220 = vunpack.c.h.b16 %v576
  %v1221 = vunpack.c.l.b16 %v577
  %v1222 = vunpack.c.h.b16 %v577
  %v1223 = vunpack.c.l.b16 %v578
  %v1224 = vunpack.c.h.b16 %v578
  %v1225 = vunpack.c.l.b16 %v579
  %v1226 = vunpack.c.h.b16 %v579
  %v1227 = vunpack.c.l.b16 %v580
  %v1228 = vunpack.c.h.b16 %v580
  %v1229 = vunpack.c.l.b16 %v581
  %v1230 = vunpack.c.h.b16 %v581
  %v1231 = vunpack.c.l.b16 %v582
  %v1232 = vunpack.c.h.b16 %v582
  %v1233 = vunpack.c.l.b16 %v583
  %v1234 = vunpack.c.h.b16 %v583
  %v1235 = vunpack.c.l.b16 %v584
  %v1236 = vunpack.c.h.b16 %v584
  %v1237 = vunpack.c.l.b16 %v585
  %v1238 = vunpack.c.h.b16 %v585
  %v1239 = vunpack.c.l.b16 %v586
  %v1240 = vunpack.c.h.b16 %v586
  %v1241 = vunpack.c.l.b16 %v587
  %v1242 = vunpack.c.h.b16 %v587
  %v1243 = vunpack.c.l.b16 %v588
  %v1244 = vunpack.c.h.b16 %v588
  %v1245 = vunpack.c.l.b16 %v589
  %v1246 = vunpack.c.h.b16 %v589
  %v1247 = vunpack.c.l.b16 %v590
  %v1248 = vunpack.c.h.b16 %v590
  %v1249 = vunpack.c.l.b16 %v591
  %v1250 = vunpack.c.h.b16 %v591
  %v1251 = vunpack.c.l.b16 %v592
  %v1252 = vunpack.c.h.b16 %v592
  %v1253 = vunpack.c.l.b16 %v593
  %v1254 = vunpack.c.h.b16 %v593
  %v1255 = vunpack.c.l.b16 %v594
  %v1256 = vunpack.c.h.b16 %v594
  %v1257 = vunpack.c.l.b16 %v595
  %v1258 = vunpack.c.h.b16 %v595
  %v1259 = vunpack.c.l.b16 %v596
  %v1260 = vunpack.c.h.b16 %v596
  %v1261 = vunpack.c.l.b16 %v597
  %v1262 = vunpack.c.h.b16 %v597
  %v1263 = vunpack.c.l.b16 %v598
  %v1264 = vunpack.c.h.b16 %v598
  %v1265 = vunpack.c.l.b16 %v599
  %v1266 = vunpack.c.h.b16 %v599
  %v1267 = vunpack.c.l.b16 %v600
  %v1268 = vunpack.c.h.b16 %v600
  %v1269 = vunpack.c.l.b16 %v601
  %v1270 = vunpack.c.h.b16 %v601
  %v1271 = vunpack.c.l.b16 %v602
  %v1272 = vunpack.c.h.b16 %v602
  %v1273 = vunpack.c.l.b16 %v603
  %v1274 = vunpack.c.h.b16 %v603
  %v1275 = vunpack.c.l.b16 %v604
  %v1276 = vunpack.c.h.b16 %v604
  %v1277 = vunpack.c.l.b16 %v605
  %v1278 = vunpack.c.h.b16 %v605
  %v1279 = vunpack.c.l.b16 %v606
  %v1280 = vunpack.c.h.b16 %v606
  %v1281 = vunpack.c.l.b16 %v607
  %v1282 = vunpack.c.h.b16 %v607
  %v1283 = vunpack.c.l.b16 %v608
  %v1284 = vunpack.c.h.b16 %v608
  %v1285 = vunpack.c.l.b16 %v609
  %v1286 = vunpack.c.h.b16 %v609
  %v1287 = vunpack.c.l.b16 %v610
  %v1288 = vunpack.c.h.b16 %v610
  %v1289 = vunpack.c.l.b16 %v611
  %v1290 = vunpack.c.h.b16 %v611
  %v1291 = vunpack.c.l.b16 %v612
  %v1292 = vunpack.c.h.b16 %v612
  %v1293 = vunpack.c.l.b16 %v613
  %v1294 = vunpack.c.h.b16 %v613
  %v1295 = vunpack.c.l.b16 %v614
  %v1296 = vunpack.c.h.b16 %v614
  %v1297 = vunpack.c.l.b16 %v615
  %v1298 = vunpack.c.h.b16 %v615
  %v1299 = vunpack.c.l.b16 %v616
  %v1300 = vunpack.c.h.b16 %v616
  %v1301 = vunpack.c.l.b16 %v617
  %v1302 = vunpack.c.h.b16 %v617
  %v1303 = vunpack.c.l.b16 %v618
  %v1304 = vunpack.c.h.b16 %v618
  %v1305 = vunpack.c.l.b16 %v619
  %v1306 = vunpack.c.h.b16 %v619
  %v1307 = vunpack.c.l.b16 %v620
  %v1308 = vunpack.c.h.b16 %v620
  %v1309 = vunpack.c.l.b16 %v621
  %v1310 = vunpack.c.h.b16 %v621
  %v1311 = vunpack.c.l.b16 %v622
  %v1312 = vunpack.c.h.b16 %v622
  %v1313 = vunpack.c.l.b16 %v623
  %v1314 = vunpack.c.h.b16 %v623
  %v1315 = vunpack.c.l.b16 %v624
  %v1316 = vunpack.c.h.b16 %v624
  %v1317 = vunpack.c.l.b16 %v625
  %v1318 = vunpack.c.h.b16 %v625
  %v1319 = vunpack.c.l.b16 %v626
  %v1320 = vunpack.c.h.b16 %v626
  %v1321 = vunpack.c.l.b16 %v627
  %v1322 = vunpack.c.h.b16 %v627
  %v1323 = vunpack.c.l.b16 %v628
  %v1324 = vunpack.c.h.b16 %v628
  %v1325 = vunpack.c.l.b16 %v629
  %v1326 = vunpack.c.h.b16 %v629
  %v1327 = vunpack.c.l.b16 %v630
  %v1328 = vunpack.c.h.b16 %v630
  %v1329 = vunpack.c.l.b16 %v631
  %v1330 = vunpack.c.h.b16 %v631
  %v1331 = vunpack.c.l.b16 %v632
  %v1332 = vunpack.c.h.b16 %v632
  %v1333 = vunpack.c.l.b16 %v633
  %v1334 = vunpack.c.h.b16 %v633
  %v1335 = vunpack.c.l.b16 %v634
  %v1336 = vunpack.c.h.b16 %v634
  %v1337 = vunpack.c.l.b16 %v635
  %v1338 = vunpack.c.h.b16 %v635
  %v1339 = vunpack.c.l.b16 %v636
  %v1340 = vunpack.c.h.b16 %v636
  %v1341 = vunpack.c.l.b16 %v637
  %v1342 = vunpack.c.h.b16 %v637
  %v1343 = vunpack.c.l.b16 %v638
  %v1344 = vunpack.c.h.b16 %v638
  %v1345 = vunpack.c.l.b16 %v639
  %v1346 = vunpack.c.h.b16 %v639
  %v1347 = vunpack.c.l.b16 %v640
  %v1348 = vunpack.c.h.b16 %v640
  %v1349 = vunpack.c.l.b16 %v641
  %v1350 = vunpack.c.h.b16 %v641
  %v1351 = vunpack.c.l.b16 %v642
  %v1352 = vunpack.c.h.b16 %v642
  %v1353 = vunpack.c.l.b16 %v643
  %v1354 = vunpack.c.h.b16 %v643
  %v1355 = vunpack.c.l.b16 %v644
  %v1356 = vunpack.c.h.b16 %v644
  %v1357 = vunpack.c.l.b16 %v645
  %v1358 = vunpack.c.h.b16 %v645
  %v1359 = vunpack.c.l.b16 %v646
  %v1360 = vunpack.c.h.b16 %v646
  %v1361 = vunpack.c.l.b16 %v647
  %v1362 = vunpack.c.h.b16 %v647
  %v1363 = vunpack.c.l.b16 %v648
  %v1364 = vunpack.c.h.b16 %v648
  %v1365 = vunpack.c.l.b16 %v649
  %v1366 = vunpack.c.h.b16 %v649
  %v1367 = vunpack.c.l.b16 %v650
  %v1368 = vunpack.c.h.b16 %v650
  %v1369 = vunpack.c.l.b16 %v651
  %v1370 = vunpack.c.h.b16 %v651
  %v1371 = vunpack.c.l.b16 %v652
  %v1372 = vunpack.c.h.b16 %v652
  %v1373 = vpack.c.b16 %v1125, %v1117
  %v1374 = vpack.c.b16 %v1126, %v1118
  %v1375 = vpack.c.b16 %v1127, %v1119
  %v1376 = vpack.c.b16 %v1128, %v1120
  %v1377 = vpack.c.b16 %v1129, %v1121
  %v1378 = vpack.c.b16 %v1130, %v1122
  %v1379 = vpack.c.b16 %v1131, %v1123
  %v1380 = vpack.c.b16 %v1132, %v1124
  %v1381 = vpack.c.b16 %v1141, %v1133
  %v1382 = vpack.c.b16 %v1142, %v1134
  %v1383 = vpack.c.b16 %v1143, %v1135
  %v1384 = vpack.c.b16 %v1144, %v1136
  %v1385 = vpack.c.b16 %v1145, %v1137
  %v1386 = vpack.c.b16 %v1146, %v1138
  %v1387 = vpack.c.b16 %v1147, %v1139
  %v1388 = vpack.c.b16 %v1148, %v1140
  %v1389 = vpack.c.b16 %v1157, %v1149
  %v1390 = vpack.c.b16 %v1158, %v1150
  %v1391 = vpack.c.b16 %v1159, %v1151
  %v1392 = vpack.c.b16 %v1160, %v1152
  %v1393 = vpack.c.b16 %v1161, %v1153
  %v1394 = vpack.c.b16 %v1162, %v1154
  %v1395 = vpack.c.b16 %v1163, %v1155
  %v1396 = vpack.c.b16 %v1164, %v1156
  %v1397 = vpack.c.b16 %v1173, %v1165
  %v1398 = vpack.c.b16 %v1174, %v1166
  %v1399 = vpack.c.b16 %v1175, %v1167
  %v1400 = vpack.c.b16 %v1176, %v1168
  %v1401 = vpack.c.b16 %v1177, %v1169
  %v1402 = vpack.c.b16 %v1178, %v1170
  %v1403 = vpack.c.b16 %v1179, %v1171
  %v1404 = vpack.c.b16 %v1180, %v1172
  %v1405 = vpack.c.b16 %v1189, %v1181
  %v1406 = vpack.c.b16 %v1190, %v1182
  %v1407 = vpack.c.b16 %v1191, %v1183
  %v1408 = vpack.c.b16 %v1192, %v1184
  %v1409 = vpack.c.b16 %v1193, %v1185
  %v1410 = vpack.c.b16 %v1194, %v1186
  %v1411 = vpack.c.b16 %v1195, %v1187
  %v1412 = vpack.c.b16 %v1196, %v1188
  %v1413 = vpack.c.b16 %v1205, %v1197
  %v1414 = vpack.c.b16 %v1206, %v1198
  %v1415 = vpack.c.b16 %v1207, %v1199
  %v1416 = vpack.c.b16 %v1208, %v1200
  %v1417 = vpack.c.b16 %v1209, %v1201
  %v1418 = vpack.c.b16 %v1210, %v1202
  %v1419 = vpack.c.b16 %v1211, %v1203
  %v1420 = vpack.c.b16 %v1212, %v1204
  %v1421 = vpack.c.b16 %v1221, %v1213
  %v1422 = vpack.c.b16 %v1222, %v1214
  %v1423 = vpack.c.b16 %v1223, %v1215
  %v1424 = vpack.c.b16 %v1224, %v1216
  %v1425 = vpack.c.b16 %v1225, %v1217
  %v1426 = vpack.c.b16 %v1226, %v1218
  %v1427 = vpack.c.b16 %v1227, %v1219
  %v1428 = vpack.c.b16 %v1228, %v1220
  %v1429 = vpack.c.b16 %v1237, %v1229
  %v1430 = vpack.c.b16 %v1238, %v1230
  %v1431 = vpack.c.b16 %v1239, %v1231
  %v1432 = vpack.c.b16 %v1240, %v1232
  %v1433 = vpack.c.b16 %v1241, %v1233
  %v1434 = vpack.c.b16 %v1242, %v1234
  %v1435 = vpack.c.b16 %v1243, %v1235
  %v1436 = vpack.c.b16 %v1244, %v1236
  %v1437 = vpack.c.b16 %v1253, %v1245
  %v1438 = vpack.c.b16 %v1254, %v1246
  %v1439 = vpack.c.b16 %v1255, %v1247
  %v1440 = vpack.c.b16 %v1256, %v1248
  %v1441 = vpack.c.b16 %v1257, %v1249
  %v1442 = vpack.c.b16 %v1258, %v1250
  %v1443 = vpack.c.b16 %v1259, %v1251
  %v1444 = vpack.c.b16 %v1260, %v1252
  %v1445 = vpack.c.b16 %v1269, %v1261
  %v1446 = vpack.c.b16 %v1270, %v1262
  %v1447 = vpack.c.b16 %v1271, %v1263
  %v1448 = vpack.c.b16 %v1272, %v1264
  %v1449 = vpack.c.b16 %v1273, %v1265
  %v1450 = vpack.c.b16 %v1274, %v1266
  %v1451 = vpack.c.b16 %v1275, %v1267
  %v1452 = vpack.c.b16 %v1276, %v1268
  %v1453 = vpack.c.b16 %v1285, %v1277
  %v1454 = vpack.c.b16 %v1286, %v1278
  %v1455 = vpack.c.b16 %v1287, %v1279
  %v1456 = vpack.c.b16 %v1288, %v1280
  %v1457 = vpack.c.b16 %v1289, %v1281
  %v1458 = vpack.c.b16 %v1290, %v1282
  %v1459 = vpack.c.b16 %v1291, %v1283
  %v1460 = vpack.c.b16 %v1292, %v1284
  %v1461 = vpack.c.b16 %v1301, %v1293
  %v1462 = vpack.c.b16 %v1302, %v1294
  %v1463 = vpack.c.b16 %v1303, %v1295
  %v1464 = vpack.c.b16 %v1304, %v1296
  %v1465 = vpack.c.b16 %v1305, %v1297
  %v1466 = vpack.c.b16 %v1306, %v1298
  %v1467 = vpack.c.b16 %v1307, %v1299
  %v1468 = vpack.c.b16 %v1308, %v1300
  %v1469 = vpack.c.b16 %v1317, %v1309
  %v1470 = vpack.c.b16 %v1318, %v1310
  %v1471 = vpack.c.b16 %v1319, %v1311
  %v1472 = vpack.c.b16 %v1320, %v1312
  %v1473 = vpack.c.b16 %v1321, %v1313
  %v1474 = vpack.c.b16 %v1322, %v1314
  %v1475 = vpack.c.b16 %v1323, %v1315
  %v1476 = vpack.c.b16 %v1324, %v1316
  %v1477 = vpack.c.b16 %v1333, %v1325
  %v1478 = vpack.c.b16 %v1334, %v1326
  %v1479 = vpack.c.b16 %v1335, %v1327
  %v1480 = vpack.c.b16 %v1336, %v1328
  %v1481 = vpack.c.b16 %v1337, %v1329
  %v1482 = vpack.c.b16 %v1338, %v1330
  %v1483 = vpack.c.b16 %v1339, %v1331
  %v1484 = vpack.c.b16 %v1340, %v1332
  %v1485 = vpack.c.b16 %v1349, %v1341
  %v1486 = vpack.c.b16 %v1350, %v1342
  %v1487 = vpack.c.b16 %v1351, %v1343
  %v1488 = vpack.c.b16 %v1352, %v1344
  %v1489 = vpack.c.b16 %v1353, %v1345
  %v1490 = vpack.c.b16 %v1354, %v1346
  %v1491 = vpack.c.b16 %v1355, %v1347
  %v1492 = vpack.c.b16 %v1356, %v1348
  %v1493 = vpack.c.b16 %v1365, %v1357
  %v1494 = vpack.c.b16 %v1366, %v1358
  %v1495 = vpack.c.b16 %v1367, %v1359
  %v1496 = vpack.c.b16 %v1368, %v1360
  %v1497 = vpack.c.b16 %v1369, %v1361
  %v1498 = vpack.c.b16 %v1370, %v1362
  %v1499 = vpack.c.b16 %v1371, %v1363
  %v1500 = vpack.c.b16 %v1372, %v1364
  %1629 = vmatpush.bf16.msra.mxu0 %v1429
  %1630 = vmatpush.bf16.msra.mxu0 %v1421
  %1631 = vmatpush.bf16.msra.mxu0 %v1413
  %1632 = vmatpush.bf16.msra.mxu0 %v1405
  %1633 = vmatpush.bf16.msra.mxu0 %v1397
  %1634 = vmatpush.bf16.msra.mxu0 %v1389
  %1635 = vmatpush.bf16.msra.mxu0 %v1381
  %1636 = vmatpush.bf16.msra.mxu0 %v1373
  %1637 = vmatmul.bf16.gmra.mxu0 %v987
  %v1638 = vpop.f32.mrf.mxu0
  %v1639 = vadd.f32 0.0, %v1638
  %v1640 = vpop.f32.mrf.mxu0
  %1641 = vdwg.mxu0
  %1642 = vmatpush.bf16.msra.mxu0 %v1493
  %1643 = vmatpush.bf16.msra.mxu0 %v1485
  %1644 = vmatpush.bf16.msra.mxu0 %v1477
  %1645 = vmatpush.bf16.msra.mxu0 %v1469
  %1646 = vmatpush.bf16.msra.mxu0 %v1461
  %1647 = vmatpush.bf16.msra.mxu0 %v1453
  %1648 = vmatpush.bf16.msra.mxu0 %v1445
  %1649 = vmatpush.bf16.msra.mxu0 %v1437
  %1650 = vmatmul.bf16.gmra.mxu0 %v988
  %v1651 = vpop.f32.mrf.mxu0
  %v1652 = vadd.f32 %v1639, %v1651
  %v1653 = vpop.f32.mrf.mxu0
  %1654 = vdwg.mxu0
  %1655 = vmatpush.bf16.msra.mxu0 %v1430
  %1656 = vmatpush.bf16.msra.mxu0 %v1422
  %1657 = vmatpush.bf16.msra.mxu0 %v1414
  %1658 = vmatpush.bf16.msra.mxu0 %v1406
  %1659 = vmatpush.bf16.msra.mxu0 %v1398
  %1660 = vmatpush.bf16.msra.mxu0 %v1390
  %1661 = vmatpush.bf16.msra.mxu0 %v1382
  %1662 = vmatpush.bf16.msra.mxu0 %v1374
  %1663 = vmatmul.bf16.gmra.mxu0 %v987
  %v1664 = vpop.f32.mrf.mxu0
  %v1665 = vadd.f32 0.0, %v1664
  %v1666 = vpop.f32.mrf.mxu0
  %1667 = vdwg.mxu0
  %1668 = vmatpush.bf16.msra.mxu0 %v1494
  %1669 = vmatpush.bf16.msra.mxu0 %v1486
  %1670 = vmatpush.bf16.msra.mxu0 %v1478
  %1671 = vmatpush.bf16.msra.mxu0 %v1470
  %1672 = vmatpush.bf16.msra.mxu0 %v1462
  %1673 = vmatpush.bf16.msra.mxu0 %v1454
  %1674 = vmatpush.bf16.msra.mxu0 %v1446
  %1675 = vmatpush.bf16.msra.mxu0 %v1438
  %1676 = vmatmul.bf16.gmra.mxu0 %v988
  %v1677 = vpop.f32.mrf.mxu0
  %v1678 = vadd.f32 %v1665, %v1677
  %v1679 = vpop.f32.mrf.mxu0
  %1680 = vdwg.mxu0
  %1681 = vmatpush.bf16.msra.mxu0 %v1431
  %1682 = vmatpush.bf16.msra.mxu0 %v1423
  %1683 = vmatpush.bf16.msra.mxu0 %v1415
  %1684 = vmatpush.bf16.msra.mxu0 %v1407
  %1685 = vmatpush.bf16.msra.mxu0 %v1399
  %1686 = vmatpush.bf16.msra.mxu0 %v1391
  %1687 = vmatpush.bf16.msra.mxu0 %v1383
  %1688 = vmatpush.bf16.msra.mxu0 %v1375
  %1689 = vmatmul.bf16.gmra.mxu0 %v987
  %v1690 = vpop.f32.mrf.mxu0
  %v1691 = vadd.f32 0.0, %v1690
  %v1692 = vpop.f32.mrf.mxu0
  %1693 = vdwg.mxu0
  %1694 = vmatpush.bf16.msra.mxu0 %v1495
  %1695 = vmatpush.bf16.msra.mxu0 %v1487
  %1696 = vmatpush.bf16.msra.mxu0 %v1479
  %1697 = vmatpush.bf16.msra.mxu0 %v1471
  %1698 = vmatpush.bf16.msra.mxu0 %v1463
  %1699 = vmatpush.bf16.msra.mxu0 %v1455
  %1700 = vmatpush.bf16.msra.mxu0 %v1447
  %1701 = vmatpush.bf16.msra.mxu0 %v1439
  %1702 = vmatmul.bf16.gmra.mxu0 %v988
  %v1703 = vpop.f32.mrf.mxu0
  %v1704 = vadd.f32 %v1691, %v1703
  %v1705 = vpop.f32.mrf.mxu0
  %1706 = vdwg.mxu0
  %1707 = vmatpush.bf16.msra.mxu0 %v1432
  %1708 = vmatpush.bf16.msra.mxu0 %v1424
  %1709 = vmatpush.bf16.msra.mxu0 %v1416
  %1710 = vmatpush.bf16.msra.mxu0 %v1408
  %1711 = vmatpush.bf16.msra.mxu0 %v1400
  %1712 = vmatpush.bf16.msra.mxu0 %v1392
  %1713 = vmatpush.bf16.msra.mxu0 %v1384
  %1714 = vmatpush.bf16.msra.mxu0 %v1376
  %1715 = vmatmul.bf16.gmra.mxu0 %v987
  %v1716 = vpop.f32.mrf.mxu0
  %v1717 = vadd.f32 0.0, %v1716
  %v1718 = vpop.f32.mrf.mxu0
  %1719 = vdwg.mxu0
  %1720 = vmatpush.bf16.msra.mxu0 %v1496
  %1721 = vmatpush.bf16.msra.mxu0 %v1488
  %1722 = vmatpush.bf16.msra.mxu0 %v1480
  %1723 = vmatpush.bf16.msra.mxu0 %v1472
  %1724 = vmatpush.bf16.msra.mxu0 %v1464
  %1725 = vmatpush.bf16.msra.mxu0 %v1456
  %1726 = vmatpush.bf16.msra.mxu0 %v1448
  %1727 = vmatpush.bf16.msra.mxu0 %v1440
  %1728 = vmatmul.bf16.gmra.mxu0 %v988
  %v1729 = vpop.f32.mrf.mxu0
  %v1730 = vadd.f32 %v1717, %v1729
  %v1731 = vpop.f32.mrf.mxu0
  %1732 = vdwg.mxu0
  %1733 = vmatpush.bf16.msra.mxu0 %v1433
  %1734 = vmatpush.bf16.msra.mxu0 %v1425
  %1735 = vmatpush.bf16.msra.mxu0 %v1417
  %1736 = vmatpush.bf16.msra.mxu0 %v1409
  %1737 = vmatpush.bf16.msra.mxu0 %v1401
  %1738 = vmatpush.bf16.msra.mxu0 %v1393
  %1739 = vmatpush.bf16.msra.mxu0 %v1385
  %1740 = vmatpush.bf16.msra.mxu0 %v1377
  %1741 = vmatmul.bf16.gmra.mxu0 %v987
  %v1742 = vpop.f32.mrf.mxu0
  %v1743 = vadd.f32 0.0, %v1742
  %v1744 = vpop.f32.mrf.mxu0
  %1745 = vdwg.mxu0
  %1746 = vmatpush.bf16.msra.mxu0 %v1497
  %1747 = vmatpush.bf16.msra.mxu0 %v1489
  %1748 = vmatpush.bf16.msra.mxu0 %v1481
  %1749 = vmatpush.bf16.msra.mxu0 %v1473
  %1750 = vmatpush.bf16.msra.mxu0 %v1465
  %1751 = vmatpush.bf16.msra.mxu0 %v1457
  %1752 = vmatpush.bf16.msra.mxu0 %v1449
  %1753 = vmatpush.bf16.msra.mxu0 %v1441
  %1754 = vmatmul.bf16.gmra.mxu0 %v988
  %v1755 = vpop.f32.mrf.mxu0
  %v1756 = vadd.f32 %v1743, %v1755
  %v1757 = vpop.f32.mrf.mxu0
  %1758 = vdwg.mxu0
  %1759 = vmatpush.bf16.msra.mxu0 %v1434
  %1760 = vmatpush.bf16.msra.mxu0 %v1426
  %1761 = vmatpush.bf16.msra.mxu0 %v1418
  %1762 = vmatpush.bf16.msra.mxu0 %v1410
  %1763 = vmatpush.bf16.msra.mxu0 %v1402
  %1764 = vmatpush.bf16.msra.mxu0 %v1394
  %1765 = vmatpush.bf16.msra.mxu0 %v1386
  %1766 = vmatpush.bf16.msra.mxu0 %v1378
  %1767 = vmatmul.bf16.gmra.mxu0 %v987
  %v1768 = vpop.f32.mrf.mxu0
  %v1769 = vadd.f32 0.0, %v1768
  %v1770 = vpop.f32.mrf.mxu0
  %1771 = vdwg.mxu0
  %1772 = vmatpush.bf16.msra.mxu0 %v1498
  %1773 = vmatpush.bf16.msra.mxu0 %v1490
  %1774 = vmatpush.bf16.msra.mxu0 %v1482
  %1775 = vmatpush.bf16.msra.mxu0 %v1474
  %1776 = vmatpush.bf16.msra.mxu0 %v1466
  %1777 = vmatpush.bf16.msra.mxu0 %v1458
  %1778 = vmatpush.bf16.msra.mxu0 %v1450
  %1779 = vmatpush.bf16.msra.mxu0 %v1442
  %1780 = vmatmul.bf16.gmra.mxu0 %v988
  %v1781 = vpop.f32.mrf.mxu0
  %v1782 = vadd.f32 %v1769, %v1781
  %v1783 = vpop.f32.mrf.mxu0
  %1784 = vdwg.mxu0
  %1785 = vmatpush.bf16.msra.mxu0 %v1435
  %1786 = vmatpush.bf16.msra.mxu0 %v1427
  %1787 = vmatpush.bf16.msra.mxu0 %v1419
  %1788 = vmatpush.bf16.msra.mxu0 %v1411
  %1789 = vmatpush.bf16.msra.mxu0 %v1403
  %1790 = vmatpush.bf16.msra.mxu0 %v1395
  %1791 = vmatpush.bf16.msra.mxu0 %v1387
  %1792 = vmatpush.bf16.msra.mxu0 %v1379
  %1793 = vmatmul.bf16.gmra.mxu0 %v987
  %v1794 = vpop.f32.mrf.mxu0
  %v1795 = vadd.f32 0.0, %v1794
  %v1796 = vpop.f32.mrf.mxu0
  %1797 = vdwg.mxu0
  %1798 = vmatpush.bf16.msra.mxu0 %v1499
  %1799 = vmatpush.bf16.msra.mxu0 %v1491
  %1800 = vmatpush.bf16.msra.mxu0 %v1483
  %1801 = vmatpush.bf16.msra.mxu0 %v1475
  %1802 = vmatpush.bf16.msra.mxu0 %v1467
  %1803 = vmatpush.bf16.msra.mxu0 %v1459
  %1804 = vmatpush.bf16.msra.mxu0 %v1451
  %1805 = vmatpush.bf16.msra.mxu0 %v1443
  %1806 = vmatmul.bf16.gmra.mxu0 %v988
  %v1807 = vpop.f32.mrf.mxu0
  %v1808 = vadd.f32 %v1795, %v1807
  %v1809 = vpop.f32.mrf.mxu0
  %1810 = vdwg.mxu0
  %1811 = vmatpush.bf16.msra.mxu0 %v1436
  %1812 = vmatpush.bf16.msra.mxu0 %v1428
  %1813 = vmatpush.bf16.msra.mxu0 %v1420
  %1814 = vmatpush.bf16.msra.mxu0 %v1412
  %1815 = vmatpush.bf16.msra.mxu0 %v1404
  %1816 = vmatpush.bf16.msra.mxu0 %v1396
  %1817 = vmatpush.bf16.msra.mxu0 %v1388
  %1818 = vmatpush.bf16.msra.mxu0 %v1380
  %1819 = vmatmul.bf16.gmra.mxu0 %v987
  %v1820 = vpop.f32.mrf.mxu0
  %v1821 = vadd.f32 0.0, %v1820
  %v1822 = vpop.f32.mrf.mxu0
  %1823 = vdwg.mxu0
  %1824 = vmatpush.bf16.msra.mxu0 %v1500
  %1825 = vmatpush.bf16.msra.mxu0 %v1492
  %1826 = vmatpush.bf16.msra.mxu0 %v1484
  %1827 = vmatpush.bf16.msra.mxu0 %v1476
  %1828 = vmatpush.bf16.msra.mxu0 %v1468
  %1829 = vmatpush.bf16.msra.mxu0 %v1460
  %1830 = vmatpush.bf16.msra.mxu0 %v1452
  %1831 = vmatpush.bf16.msra.mxu0 %v1444
  %1832 = vmatmul.bf16.gmra.mxu0 %v988
  %v1833 = vpop.f32.mrf.mxu0
  %v1834 = vadd.f32 %v1821, %v1833
  %v1835 = vpop.f32.mrf.mxu0
  %1836 = vdwg.mxu0
  %v1965 = vunpack.c.l.b16 %v653
  %v1966 = vunpack.c.h.b16 %v653
  %v1967 = vunpack.c.l.b16 %v654
  %v1968 = vunpack.c.h.b16 %v654
  %v1969 = vunpack.c.l.b16 %v655
  %v1970 = vunpack.c.h.b16 %v655
  %v1971 = vunpack.c.l.b16 %v656
  %v1972 = vunpack.c.h.b16 %v656
  %v1973 = vunpack.c.l.b16 %v657
  %v1974 = vunpack.c.h.b16 %v657
  %v1975 = vunpack.c.l.b16 %v658
  %v1976 = vunpack.c.h.b16 %v658
  %v1977 = vunpack.c.l.b16 %v659
  %v1978 = vunpack.c.h.b16 %v659
  %v1979 = vunpack.c.l.b16 %v660
  %v1980 = vunpack.c.h.b16 %v660
  %v1981 = vunpack.c.l.b16 %v661
  %v1982 = vunpack.c.h.b16 %v661
  %v1983 = vunpack.c.l.b16 %v662
  %v1984 = vunpack.c.h.b16 %v662
  %v1985 = vunpack.c.l.b16 %v663
  %v1986 = vunpack.c.h.b16 %v663
  %v1987 = vunpack.c.l.b16 %v664
  %v1988 = vunpack.c.h.b16 %v664
  %v1989 = vunpack.c.l.b16 %v665
  %v1990 = vunpack.c.h.b16 %v665
  %v1991 = vunpack.c.l.b16 %v666
  %v1992 = vunpack.c.h.b16 %v666
  %v1993 = vunpack.c.l.b16 %v667
  %v1994 = vunpack.c.h.b16 %v667
  %v1995 = vunpack.c.l.b16 %v668
  %v1996 = vunpack.c.h.b16 %v668
  %v1997 = vunpack.c.l.b16 %v669
  %v1998 = vunpack.c.h.b16 %v669
  %v1999 = vunpack.c.l.b16 %v670
  %v2000 = vunpack.c.h.b16 %v670
  %v2001 = vunpack.c.l.b16 %v671
  %v2002 = vunpack.c.h.b16 %v671
  %v2003 = vunpack.c.l.b16 %v672
  %v2004 = vunpack.c.h.b16 %v672
  %v2005 = vunpack.c.l.b16 %v673
  %v2006 = vunpack.c.h.b16 %v673
  %v2007 = vunpack.c.l.b16 %v674
  %v2008 = vunpack.c.h.b16 %v674
  %v2009 = vunpack.c.l.b16 %v675
  %v2010 = vunpack.c.h.b16 %v675
  %v2011 = vunpack.c.l.b16 %v676
  %v2012 = vunpack.c.h.b16 %v676
  %v2013 = vunpack.c.l.b16 %v677
  %v2014 = vunpack.c.h.b16 %v677
  %v2015 = vunpack.c.l.b16 %v678
  %v2016 = vunpack.c.h.b16 %v678
  %v2017 = vunpack.c.l.b16 %v679
  %v2018 = vunpack.c.h.b16 %v679
  %v2019 = vunpack.c.l.b16 %v680
  %v2020 = vunpack.c.h.b16 %v680
  %v2021 = vunpack.c.l.b16 %v681
  %v2022 = vunpack.c.h.b16 %v681
  %v2023 = vunpack.c.l.b16 %v682
  %v2024 = vunpack.c.h.b16 %v682
  %v2025 = vunpack.c.l.b16 %v683
  %v2026 = vunpack.c.h.b16 %v683
  %v2027 = vunpack.c.l.b16 %v684
  %v2028 = vunpack.c.h.b16 %v684
  %v2029 = vunpack.c.l.b16 %v685
  %v2030 = vunpack.c.h.b16 %v685
  %v2031 = vunpack.c.l.b16 %v686
  %v2032 = vunpack.c.h.b16 %v686
  %v2033 = vunpack.c.l.b16 %v687
  %v2034 = vunpack.c.h.b16 %v687
  %v2035 = vunpack.c.l.b16 %v688
  %v2036 = vunpack.c.h.b16 %v688
  %v2037 = vunpack.c.l.b16 %v689
  %v2038 = vunpack.c.h.b16 %v689
  %v2039 = vunpack.c.l.b16 %v690
  %v2040 = vunpack.c.h.b16 %v690
  %v2041 = vunpack.c.l.b16 %v691
  %v2042 = vunpack.c.h.b16 %v691
  %v2043 = vunpack.c.l.b16 %v692
  %v2044 = vunpack.c.h.b16 %v692
  %v2045 = vunpack.c.l.b16 %v693
  %v2046 = vunpack.c.h.b16 %v693
  %v2047 = vunpack.c.l.b16 %v694
  %v2048 = vunpack.c.h.b16 %v694
  %v2049 = vunpack.c.l.b16 %v695
  %v2050 = vunpack.c.h.b16 %v695
  %v2051 = vunpack.c.l.b16 %v696
  %v2052 = vunpack.c.h.b16 %v696
  %v2053 = vunpack.c.l.b16 %v697
  %v2054 = vunpack.c.h.b16 %v697
  %v2055 = vunpack.c.l.b16 %v698
  %v2056 = vunpack.c.h.b16 %v698
  %v2057 = vunpack.c.l.b16 %v699
  %v2058 = vunpack.c.h.b16 %v699
  %v2059 = vunpack.c.l.b16 %v700
  %v2060 = vunpack.c.h.b16 %v700
  %v2061 = vunpack.c.l.b16 %v701
  %v2062 = vunpack.c.h.b16 %v701
  %v2063 = vunpack.c.l.b16 %v702
  %v2064 = vunpack.c.h.b16 %v702
  %v2065 = vunpack.c.l.b16 %v703
  %v2066 = vunpack.c.h.b16 %v703
  %v2067 = vunpack.c.l.b16 %v704
  %v2068 = vunpack.c.h.b16 %v704
  %v2069 = vunpack.c.l.b16 %v705
  %v2070 = vunpack.c.h.b16 %v705
  %v2071 = vunpack.c.l.b16 %v706
  %v2072 = vunpack.c.h.b16 %v706
  %v2073 = vunpack.c.l.b16 %v707
  %v2074 = vunpack.c.h.b16 %v707
  %v2075 = vunpack.c.l.b16 %v708
  %v2076 = vunpack.c.h.b16 %v708
  %v2077 = vunpack.c.l.b16 %v709
  %v2078 = vunpack.c.h.b16 %v709
  %v2079 = vunpack.c.l.b16 %v710
  %v2080 = vunpack.c.h.b16 %v710
  %v2081 = vunpack.c.l.b16 %v711
  %v2082 = vunpack.c.h.b16 %v711
  %v2083 = vunpack.c.l.b16 %v712
  %v2084 = vunpack.c.h.b16 %v712
  %v2085 = vunpack.c.l.b16 %v713
  %v2086 = vunpack.c.h.b16 %v713
  %v2087 = vunpack.c.l.b16 %v714
  %v2088 = vunpack.c.h.b16 %v714
  %v2089 = vunpack.c.l.b16 %v715
  %v2090 = vunpack.c.h.b16 %v715
  %v2091 = vunpack.c.l.b16 %v716
  %v2092 = vunpack.c.h.b16 %v716
  %v2093 = vunpack.c.l.b16 %v717
  %v2094 = vunpack.c.h.b16 %v717
  %v2095 = vunpack.c.l.b16 %v718
  %v2096 = vunpack.c.h.b16 %v718
  %v2097 = vunpack.c.l.b16 %v719
  %v2098 = vunpack.c.h.b16 %v719
  %v2099 = vunpack.c.l.b16 %v720
  %v2100 = vunpack.c.h.b16 %v720
  %v2101 = vunpack.c.l.b16 %v721
  %v2102 = vunpack.c.h.b16 %v721
  %v2103 = vunpack.c.l.b16 %v722
  %v2104 = vunpack.c.h.b16 %v722
  %v2105 = vunpack.c.l.b16 %v723
  %v2106 = vunpack.c.h.b16 %v723
  %v2107 = vunpack.c.l.b16 %v724
  %v2108 = vunpack.c.h.b16 %v724
  %v2109 = vunpack.c.l.b16 %v725
  %v2110 = vunpack.c.h.b16 %v725
  %v2111 = vunpack.c.l.b16 %v726
  %v2112 = vunpack.c.h.b16 %v726
  %v2113 = vunpack.c.l.b16 %v727
  %v2114 = vunpack.c.h.b16 %v727
  %v2115 = vunpack.c.l.b16 %v728
  %v2116 = vunpack.c.h.b16 %v728
  %v2117 = vunpack.c.l.b16 %v729
  %v2118 = vunpack.c.h.b16 %v729
  %v2119 = vunpack.c.l.b16 %v730
  %v2120 = vunpack.c.h.b16 %v730
  %v2121 = vunpack.c.l.b16 %v731
  %v2122 = vunpack.c.h.b16 %v731
  %v2123 = vunpack.c.l.b16 %v732
  %v2124 = vunpack.c.h.b16 %v732
  %v2125 = vunpack.c.l.b16 %v733
  %v2126 = vunpack.c.h.b16 %v733
  %v2127 = vunpack.c.l.b16 %v734
  %v2128 = vunpack.c.h.b16 %v734
  %v2129 = vunpack.c.l.b16 %v735
  %v2130 = vunpack.c.h.b16 %v735
  %v2131 = vunpack.c.l.b16 %v736
  %v2132 = vunpack.c.h.b16 %v736
  %v2133 = vunpack.c.l.b16 %v737
  %v2134 = vunpack.c.h.b16 %v737
  %v2135 = vunpack.c.l.b16 %v738
  %v2136 = vunpack.c.h.b16 %v738
  %v2137 = vunpack.c.l.b16 %v739
  %v2138 = vunpack.c.h.b16 %v739
  %v2139 = vunpack.c.l.b16 %v740
  %v2140 = vunpack.c.h.b16 %v740
  %v2141 = vunpack.c.l.b16 %v741
  %v2142 = vunpack.c.h.b16 %v741
  %v2143 = vunpack.c.l.b16 %v742
  %v2144 = vunpack.c.h.b16 %v742
  %v2145 = vunpack.c.l.b16 %v743
  %v2146 = vunpack.c.h.b16 %v743
  %v2147 = vunpack.c.l.b16 %v744
  %v2148 = vunpack.c.h.b16 %v744
  %v2149 = vunpack.c.l.b16 %v745
  %v2150 = vunpack.c.h.b16 %v745
  %v2151 = vunpack.c.l.b16 %v746
  %v2152 = vunpack.c.h.b16 %v746
  %v2153 = vunpack.c.l.b16 %v747
  %v2154 = vunpack.c.h.b16 %v747
  %v2155 = vunpack.c.l.b16 %v748
  %v2156 = vunpack.c.h.b16 %v748
  %v2157 = vunpack.c.l.b16 %v749
  %v2158 = vunpack.c.h.b16 %v749
  %v2159 = vunpack.c.l.b16 %v750
  %v2160 = vunpack.c.h.b16 %v750
  %v2161 = vunpack.c.l.b16 %v751
  %v2162 = vunpack.c.h.b16 %v751
  %v2163 = vunpack.c.l.b16 %v752
  %v2164 = vunpack.c.h.b16 %v752
  %v2165 = vunpack.c.l.b16 %v753
  %v2166 = vunpack.c.h.b16 %v753
  %v2167 = vunpack.c.l.b16 %v754
  %v2168 = vunpack.c.h.b16 %v754
  %v2169 = vunpack.c.l.b16 %v755
  %v2170 = vunpack.c.h.b16 %v755
  %v2171 = vunpack.c.l.b16 %v756
  %v2172 = vunpack.c.h.b16 %v756
  %v2173 = vunpack.c.l.b16 %v757
  %v2174 = vunpack.c.h.b16 %v757
  %v2175 = vunpack.c.l.b16 %v758
  %v2176 = vunpack.c.h.b16 %v758
  %v2177 = vunpack.c.l.b16 %v759
  %v2178 = vunpack.c.h.b16 %v759
  %v2179 = vunpack.c.l.b16 %v760
  %v2180 = vunpack.c.h.b16 %v760
  %v2181 = vunpack.c.l.b16 %v761
  %v2182 = vunpack.c.h.b16 %v761
  %v2183 = vunpack.c.l.b16 %v762
  %v2184 = vunpack.c.h.b16 %v762
  %v2185 = vunpack.c.l.b16 %v763
  %v2186 = vunpack.c.h.b16 %v763
  %v2187 = vunpack.c.l.b16 %v764
  %v2188 = vunpack.c.h.b16 %v764
  %v2189 = vunpack.c.l.b16 %v765
  %v2190 = vunpack.c.h.b16 %v765
  %v2191 = vunpack.c.l.b16 %v766
  %v2192 = vunpack.c.h.b16 %v766
  %v2193 = vunpack.c.l.b16 %v767
  %v2194 = vunpack.c.h.b16 %v767
  %v2195 = vunpack.c.l.b16 %v768
  %v2196 = vunpack.c.h.b16 %v768
  %v2197 = vunpack.c.l.b16 %v769
  %v2198 = vunpack.c.h.b16 %v769
  %v2199 = vunpack.c.l.b16 %v770
  %v2200 = vunpack.c.h.b16 %v770
  %v2201 = vunpack.c.l.b16 %v771
  %v2202 = vunpack.c.h.b16 %v771
  %v2203 = vunpack.c.l.b16 %v772
  %v2204 = vunpack.c.h.b16 %v772
  %v2205 = vunpack.c.l.b16 %v773
  %v2206 = vunpack.c.h.b16 %v773
  %v2207 = vunpack.c.l.b16 %v774
  %v2208 = vunpack.c.h.b16 %v774
  %v2209 = vunpack.c.l.b16 %v775
  %v2210 = vunpack.c.h.b16 %v775
  %v2211 = vunpack.c.l.b16 %v776
  %v2212 = vunpack.c.h.b16 %v776
  %v2213 = vunpack.c.l.b16 %v777
  %v2214 = vunpack.c.h.b16 %v777
  %v2215 = vunpack.c.l.b16 %v778
  %v2216 = vunpack.c.h.b16 %v778
  %v2217 = vunpack.c.l.b16 %v779
  %v2218 = vunpack.c.h.b16 %v779
  %v2219 = vunpack.c.l.b16 %v780
  %v2220 = vunpack.c.h.b16 %v780
  %v2221 = vpack.c.b16 %v1973, %v1965
  %v2222 = vpack.c.b16 %v1974, %v1966
  %v2223 = vpack.c.b16 %v1975, %v1967
  %v2224 = vpack.c.b16 %v1976, %v1968
  %v2225 = vpack.c.b16 %v1977, %v1969
  %v2226 = vpack.c.b16 %v1978, %v1970
  %v2227 = vpack.c.b16 %v1979, %v1971
  %v2228 = vpack.c.b16 %v1980, %v1972
  %v2229 = vpack.c.b16 %v1989, %v1981
  %v2230 = vpack.c.b16 %v1990, %v1982
  %v2231 = vpack.c.b16 %v1991, %v1983
  %v2232 = vpack.c.b16 %v1992, %v1984
  %v2233 = vpack.c.b16 %v1993, %v1985
  %v2234 = vpack.c.b16 %v1994, %v1986
  %v2235 = vpack.c.b16 %v1995, %v1987
  %v2236 = vpack.c.b16 %v1996, %v1988
  %v2237 = vpack.c.b16 %v2005, %v1997
  %v2238 = vpack.c.b16 %v2006, %v1998
  %v2239 = vpack.c.b16 %v2007, %v1999
  %v2240 = vpack.c.b16 %v2008, %v2000
  %v2241 = vpack.c.b16 %v2009, %v2001
  %v2242 = vpack.c.b16 %v2010, %v2002
  %v2243 = vpack.c.b16 %v2011, %v2003
  %v2244 = vpack.c.b16 %v2012, %v2004
  %v2245 = vpack.c.b16 %v2021, %v2013
  %v2246 = vpack.c.b16 %v2022, %v2014
  %v2247 = vpack.c.b16 %v2023, %v2015
  %v2248 = vpack.c.b16 %v2024, %v2016
  %v2249 = vpack.c.b16 %v2025, %v2017
  %v2250 = vpack.c.b16 %v2026, %v2018
  %v2251 = vpack.c.b16 %v2027, %v2019
  %v2252 = vpack.c.b16 %v2028, %v2020
  %v2253 = vpack.c.b16 %v2037, %v2029
  %v2254 = vpack.c.b16 %v2038, %v2030
  %v2255 = vpack.c.b16 %v2039, %v2031
  %v2256 = vpack.c.b16 %v2040, %v2032
  %v2257 = vpack.c.b16 %v2041, %v2033
  %v2258 = vpack.c.b16 %v2042, %v2034
  %v2259 = vpack.c.b16 %v2043, %v2035
  %v2260 = vpack.c.b16 %v2044, %v2036
  %v2261 = vpack.c.b16 %v2053, %v2045
  %v2262 = vpack.c.b16 %v2054, %v2046
  %v2263 = vpack.c.b16 %v2055, %v2047
  %v2264 = vpack.c.b16 %v2056, %v2048
  %v2265 = vpack.c.b16 %v2057, %v2049
  %v2266 = vpack.c.b16 %v2058, %v2050
  %v2267 = vpack.c.b16 %v2059, %v2051
  %v2268 = vpack.c.b16 %v2060, %v2052
  %v2269 = vpack.c.b16 %v2069, %v2061
  %v2270 = vpack.c.b16 %v2070, %v2062
  %v2271 = vpack.c.b16 %v2071, %v2063
  %v2272 = vpack.c.b16 %v2072, %v2064
  %v2273 = vpack.c.b16 %v2073, %v2065
  %v2274 = vpack.c.b16 %v2074, %v2066
  %v2275 = vpack.c.b16 %v2075, %v2067
  %v2276 = vpack.c.b16 %v2076, %v2068
  %v2277 = vpack.c.b16 %v2085, %v2077
  %v2278 = vpack.c.b16 %v2086, %v2078
  %v2279 = vpack.c.b16 %v2087, %v2079
  %v2280 = vpack.c.b16 %v2088, %v2080
  %v2281 = vpack.c.b16 %v2089, %v2081
  %v2282 = vpack.c.b16 %v2090, %v2082
  %v2283 = vpack.c.b16 %v2091, %v2083
  %v2284 = vpack.c.b16 %v2092, %v2084
  %v2285 = vpack.c.b16 %v2101, %v2093
  %v2286 = vpack.c.b16 %v2102, %v2094
  %v2287 = vpack.c.b16 %v2103, %v2095
  %v2288 = vpack.c.b16 %v2104, %v2096
  %v2289 = vpack.c.b16 %v2105, %v2097
  %v2290 = vpack.c.b16 %v2106, %v2098
  %v2291 = vpack.c.b16 %v2107, %v2099
  %v2292 = vpack.c.b16 %v2108, %v2100
  %v2293 = vpack.c.b16 %v2117, %v2109
  %v2294 = vpack.c.b16 %v2118, %v2110
  %v2295 = vpack.c.b16 %v2119, %v2111
  %v2296 = vpack.c.b16 %v2120, %v2112
  %v2297 = vpack.c.b16 %v2121, %v2113
  %v2298 = vpack.c.b16 %v2122, %v2114
  %v2299 = vpack.c.b16 %v2123, %v2115
  %v2300 = vpack.c.b16 %v2124, %v2116
  %v2301 = vpack.c.b16 %v2133, %v2125
  %v2302 = vpack.c.b16 %v2134, %v2126
  %v2303 = vpack.c.b16 %v2135, %v2127
  %v2304 = vpack.c.b16 %v2136, %v2128
  %v2305 = vpack.c.b16 %v2137, %v2129
  %v2306 = vpack.c.b16 %v2138, %v2130
  %v2307 = vpack.c.b16 %v2139, %v2131
  %v2308 = vpack.c.b16 %v2140, %v2132
  %v2309 = vpack.c.b16 %v2149, %v2141
  %v2310 = vpack.c.b16 %v2150, %v2142
  %v2311 = vpack.c.b16 %v2151, %v2143
  %v2312 = vpack.c.b16 %v2152, %v2144
  %v2313 = vpack.c.b16 %v2153, %v2145
  %v2314 = vpack.c.b16 %v2154, %v2146
  %v2315 = vpack.c.b16 %v2155, %v2147
  %v2316 = vpack.c.b16 %v2156, %v2148
  %v2317 = vpack.c.b16 %v2165, %v2157
  %v2318 = vpack.c.b16 %v2166, %v2158
  %v2319 = vpack.c.b16 %v2167, %v2159
  %v2320 = vpack.c.b16 %v2168, %v2160
  %v2321 = vpack.c.b16 %v2169, %v2161
  %v2322 = vpack.c.b16 %v2170, %v2162
  %v2323 = vpack.c.b16 %v2171, %v2163
  %v2324 = vpack.c.b16 %v2172, %v2164
  %v2325 = vpack.c.b16 %v2181, %v2173
  %v2326 = vpack.c.b16 %v2182, %v2174
  %v2327 = vpack.c.b16 %v2183, %v2175
  %v2328 = vpack.c.b16 %v2184, %v2176
  %v2329 = vpack.c.b16 %v2185, %v2177
  %v2330 = vpack.c.b16 %v2186, %v2178
  %v2331 = vpack.c.b16 %v2187, %v2179
  %v2332 = vpack.c.b16 %v2188, %v2180
  %v2333 = vpack.c.b16 %v2197, %v2189
  %v2334 = vpack.c.b16 %v2198, %v2190
  %v2335 = vpack.c.b16 %v2199, %v2191
  %v2336 = vpack.c.b16 %v2200, %v2192
  %v2337 = vpack.c.b16 %v2201, %v2193
  %v2338 = vpack.c.b16 %v2202, %v2194
  %v2339 = vpack.c.b16 %v2203, %v2195
  %v2340 = vpack.c.b16 %v2204, %v2196
  %v2341 = vpack.c.b16 %v2213, %v2205
  %v2342 = vpack.c.b16 %v2214, %v2206
  %v2343 = vpack.c.b16 %v2215, %v2207
  %v2344 = vpack.c.b16 %v2216, %v2208
  %v2345 = vpack.c.b16 %v2217, %v2209
  %v2346 = vpack.c.b16 %v2218, %v2210
  %v2347 = vpack.c.b16 %v2219, %v2211
  %v2348 = vpack.c.b16 %v2220, %v2212
  %2477 = vmatpush.bf16.msra.mxu0 %v2277
  %2478 = vmatpush.bf16.msra.mxu0 %v2269
  %2479 = vmatpush.bf16.msra.mxu0 %v2261
  %2480 = vmatpush.bf16.msra.mxu0 %v2253
  %2481 = vmatpush.bf16.msra.mxu0 %v2245
  %2482 = vmatpush.bf16.msra.mxu0 %v2237
  %2483 = vmatpush.bf16.msra.mxu0 %v2229
  %2484 = vmatpush.bf16.msra.mxu0 %v2221
  %2485 = vmatmul.bf16.gmra.mxu0 %v987
  %v2486 = vpop.f32.mrf.mxu0
  %v2487 = vadd.f32 0.0, %v2486
  %v2488 = vpop.f32.mrf.mxu0
  %2489 = vdwg.mxu0
  %2490 = vmatpush.bf16.msra.mxu0 %v2341
  %2491 = vmatpush.bf16.msra.mxu0 %v2333
  %2492 = vmatpush.bf16.msra.mxu0 %v2325
  %2493 = vmatpush.bf16.msra.mxu0 %v2317
  %2494 = vmatpush.bf16.msra.mxu0 %v2309
  %2495 = vmatpush.bf16.msra.mxu0 %v2301
  %2496 = vmatpush.bf16.msra.mxu0 %v2293
  %2497 = vmatpush.bf16.msra.mxu0 %v2285
  %2498 = vmatmul.bf16.gmra.mxu0 %v988
  %v2499 = vpop.f32.mrf.mxu0
  %v2500 = vadd.f32 %v2487, %v2499
  %v2501 = vpop.f32.mrf.mxu0
  %2502 = vdwg.mxu0
  %2503 = vmatpush.bf16.msra.mxu0 %v2278
  %2504 = vmatpush.bf16.msra.mxu0 %v2270
  %2505 = vmatpush.bf16.msra.mxu0 %v2262
  %2506 = vmatpush.bf16.msra.mxu0 %v2254
  %2507 = vmatpush.bf16.msra.mxu0 %v2246
  %2508 = vmatpush.bf16.msra.mxu0 %v2238
  %2509 = vmatpush.bf16.msra.mxu0 %v2230
  %2510 = vmatpush.bf16.msra.mxu0 %v2222
  %2511 = vmatmul.bf16.gmra.mxu0 %v987
  %v2512 = vpop.f32.mrf.mxu0
  %v2513 = vadd.f32 0.0, %v2512
  %v2514 = vpop.f32.mrf.mxu0
  %2515 = vdwg.mxu0
  %2516 = vmatpush.bf16.msra.mxu0 %v2342
  %2517 = vmatpush.bf16.msra.mxu0 %v2334
  %2518 = vmatpush.bf16.msra.mxu0 %v2326
  %2519 = vmatpush.bf16.msra.mxu0 %v2318
  %2520 = vmatpush.bf16.msra.mxu0 %v2310
  %2521 = vmatpush.bf16.msra.mxu0 %v2302
  %2522 = vmatpush.bf16.msra.mxu0 %v2294
  %2523 = vmatpush.bf16.msra.mxu0 %v2286
  %2524 = vmatmul.bf16.gmra.mxu0 %v988
  %v2525 = vpop.f32.mrf.mxu0
  %v2526 = vadd.f32 %v2513, %v2525
  %v2527 = vpop.f32.mrf.mxu0
  %2528 = vdwg.mxu0
  %2529 = vmatpush.bf16.msra.mxu0 %v2279
  %2530 = vmatpush.bf16.msra.mxu0 %v2271
  %2531 = vmatpush.bf16.msra.mxu0 %v2263
  %2532 = vmatpush.bf16.msra.mxu0 %v2255
  %2533 = vmatpush.bf16.msra.mxu0 %v2247
  %2534 = vmatpush.bf16.msra.mxu0 %v2239
  %2535 = vmatpush.bf16.msra.mxu0 %v2231
  %2536 = vmatpush.bf16.msra.mxu0 %v2223
  %2537 = vmatmul.bf16.gmra.mxu0 %v987
  %v2538 = vpop.f32.mrf.mxu0
  %v2539 = vadd.f32 0.0, %v2538
  %v2540 = vpop.f32.mrf.mxu0
  %2541 = vdwg.mxu0
  %2542 = vmatpush.bf16.msra.mxu0 %v2343
  %2543 = vmatpush.bf16.msra.mxu0 %v2335
  %2544 = vmatpush.bf16.msra.mxu0 %v2327
  %2545 = vmatpush.bf16.msra.mxu0 %v2319
  %2546 = vmatpush.bf16.msra.mxu0 %v2311
  %2547 = vmatpush.bf16.msra.mxu0 %v2303
  %2548 = vmatpush.bf16.msra.mxu0 %v2295
  %2549 = vmatpush.bf16.msra.mxu0 %v2287
  %2550 = vmatmul.bf16.gmra.mxu0 %v988
  %v2551 = vpop.f32.mrf.mxu0
  %v2552 = vadd.f32 %v2539, %v2551
  %v2553 = vpop.f32.mrf.mxu0
  %2554 = vdwg.mxu0
  %2555 = vmatpush.bf16.msra.mxu0 %v2280
  %2556 = vmatpush.bf16.msra.mxu0 %v2272
  %2557 = vmatpush.bf16.msra.mxu0 %v2264
  %2558 = vmatpush.bf16.msra.mxu0 %v2256
  %2559 = vmatpush.bf16.msra.mxu0 %v2248
  %2560 = vmatpush.bf16.msra.mxu0 %v2240
  %2561 = vmatpush.bf16.msra.mxu0 %v2232
  %2562 = vmatpush.bf16.msra.mxu0 %v2224
  %2563 = vmatmul.bf16.gmra.mxu0 %v987
  %v2564 = vpop.f32.mrf.mxu0
  %v2565 = vadd.f32 0.0, %v2564
  %v2566 = vpop.f32.mrf.mxu0
  %2567 = vdwg.mxu0
  %2568 = vmatpush.bf16.msra.mxu0 %v2344
  %2569 = vmatpush.bf16.msra.mxu0 %v2336
  %2570 = vmatpush.bf16.msra.mxu0 %v2328
  %2571 = vmatpush.bf16.msra.mxu0 %v2320
  %2572 = vmatpush.bf16.msra.mxu0 %v2312
  %2573 = vmatpush.bf16.msra.mxu0 %v2304
  %2574 = vmatpush.bf16.msra.mxu0 %v2296
  %2575 = vmatpush.bf16.msra.mxu0 %v2288
  %2576 = vmatmul.bf16.gmra.mxu0 %v988
  %v2577 = vpop.f32.mrf.mxu0
  %v2578 = vadd.f32 %v2565, %v2577
  %v2579 = vpop.f32.mrf.mxu0
  %2580 = vdwg.mxu0
  %2581 = vmatpush.bf16.msra.mxu0 %v2281
  %2582 = vmatpush.bf16.msra.mxu0 %v2273
  %2583 = vmatpush.bf16.msra.mxu0 %v2265
  %2584 = vmatpush.bf16.msra.mxu0 %v2257
  %2585 = vmatpush.bf16.msra.mxu0 %v2249
  %2586 = vmatpush.bf16.msra.mxu0 %v2241
  %2587 = vmatpush.bf16.msra.mxu0 %v2233
  %2588 = vmatpush.bf16.msra.mxu0 %v2225
  %2589 = vmatmul.bf16.gmra.mxu0 %v987
  %v2590 = vpop.f32.mrf.mxu0
  %v2591 = vadd.f32 0.0, %v2590
  %v2592 = vpop.f32.mrf.mxu0
  %2593 = vdwg.mxu0
  %2594 = vmatpush.bf16.msra.mxu0 %v2345
  %2595 = vmatpush.bf16.msra.mxu0 %v2337
  %2596 = vmatpush.bf16.msra.mxu0 %v2329
  %2597 = vmatpush.bf16.msra.mxu0 %v2321
  %2598 = vmatpush.bf16.msra.mxu0 %v2313
  %2599 = vmatpush.bf16.msra.mxu0 %v2305
  %2600 = vmatpush.bf16.msra.mxu0 %v2297
  %2601 = vmatpush.bf16.msra.mxu0 %v2289
  %2602 = vmatmul.bf16.gmra.mxu0 %v988
  %v2603 = vpop.f32.mrf.mxu0
  %v2604 = vadd.f32 %v2591, %v2603
  %v2605 = vpop.f32.mrf.mxu0
  %2606 = vdwg.mxu0
  %2607 = vmatpush.bf16.msra.mxu0 %v2282
  %2608 = vmatpush.bf16.msra.mxu0 %v2274
  %2609 = vmatpush.bf16.msra.mxu0 %v2266
  %2610 = vmatpush.bf16.msra.mxu0 %v2258
  %2611 = vmatpush.bf16.msra.mxu0 %v2250
  %2612 = vmatpush.bf16.msra.mxu0 %v2242
  %2613 = vmatpush.bf16.msra.mxu0 %v2234
  %2614 = vmatpush.bf16.msra.mxu0 %v2226
  %2615 = vmatmul.bf16.gmra.mxu0 %v987
  %v2616 = vpop.f32.mrf.mxu0
  %v2617 = vadd.f32 0.0, %v2616
  %v2618 = vpop.f32.mrf.mxu0
  %2619 = vdwg.mxu0
  %2620 = vmatpush.bf16.msra.mxu0 %v2346
  %2621 = vmatpush.bf16.msra.mxu0 %v2338
  %2622 = vmatpush.bf16.msra.mxu0 %v2330
  %2623 = vmatpush.bf16.msra.mxu0 %v2322
  %2624 = vmatpush.bf16.msra.mxu0 %v2314
  %2625 = vmatpush.bf16.msra.mxu0 %v2306
  %2626 = vmatpush.bf16.msra.mxu0 %v2298
  %2627 = vmatpush.bf16.msra.mxu0 %v2290
  %2628 = vmatmul.bf16.gmra.mxu0 %v988
  %v2629 = vpop.f32.mrf.mxu0
  %v2630 = vadd.f32 %v2617, %v2629
  %v2631 = vpop.f32.mrf.mxu0
  %2632 = vdwg.mxu0
  %2633 = vmatpush.bf16.msra.mxu0 %v2283
  %2634 = vmatpush.bf16.msra.mxu0 %v2275
  %2635 = vmatpush.bf16.msra.mxu0 %v2267
  %2636 = vmatpush.bf16.msra.mxu0 %v2259
  %2637 = vmatpush.bf16.msra.mxu0 %v2251
  %2638 = vmatpush.bf16.msra.mxu0 %v2243
  %2639 = vmatpush.bf16.msra.mxu0 %v2235
  %2640 = vmatpush.bf16.msra.mxu0 %v2227
  %2641 = vmatmul.bf16.gmra.mxu0 %v987
  %v2642 = vpop.f32.mrf.mxu0
  %v2643 = vadd.f32 0.0, %v2642
  %v2644 = vpop.f32.mrf.mxu0
  %2645 = vdwg.mxu0
  %2646 = vmatpush.bf16.msra.mxu0 %v2347
  %2647 = vmatpush.bf16.msra.mxu0 %v2339
  %2648 = vmatpush.bf16.msra.mxu0 %v2331
  %2649 = vmatpush.bf16.msra.mxu0 %v2323
  %2650 = vmatpush.bf16.msra.mxu0 %v2315
  %2651 = vmatpush.bf16.msra.mxu0 %v2307
  %2652 = vmatpush.bf16.msra.mxu0 %v2299
  %2653 = vmatpush.bf16.msra.mxu0 %v2291
  %2654 = vmatmul.bf16.gmra.mxu0 %v988
  %v2655 = vpop.f32.mrf.mxu0
  %v2656 = vadd.f32 %v2643, %v2655
  %v2657 = vpop.f32.mrf.mxu0
  %2658 = vdwg.mxu0
  %2659 = vmatpush.bf16.msra.mxu0 %v2284
  %2660 = vmatpush.bf16.msra.mxu0 %v2276
  %2661 = vmatpush.bf16.msra.mxu0 %v2268
  %2662 = vmatpush.bf16.msra.mxu0 %v2260
  %2663 = vmatpush.bf16.msra.mxu0 %v2252
  %2664 = vmatpush.bf16.msra.mxu0 %v2244
  %2665 = vmatpush.bf16.msra.mxu0 %v2236
  %2666 = vmatpush.bf16.msra.mxu0 %v2228
  %2667 = vmatmul.bf16.gmra.mxu0 %v987
  %v2668 = vpop.f32.mrf.mxu0
  %v2669 = vadd.f32 0.0, %v2668
  %v2670 = vpop.f32.mrf.mxu0
  %2671 = vdwg.mxu0
  %2672 = vmatpush.bf16.msra.mxu0 %v2348
  %2673 = vmatpush.bf16.msra.mxu0 %v2340
  %2674 = vmatpush.bf16.msra.mxu0 %v2332
  %2675 = vmatpush.bf16.msra.mxu0 %v2324
  %2676 = vmatpush.bf16.msra.mxu0 %v2316
  %2677 = vmatpush.bf16.msra.mxu0 %v2308
  %2678 = vmatpush.bf16.msra.mxu0 %v2300
  %2679 = vmatpush.bf16.msra.mxu0 %v2292
  %2680 = vmatmul.bf16.gmra.mxu0 %v988
  %v2681 = vpop.f32.mrf.mxu0
  %v2682 = vadd.f32 %v2669, %v2681
  %v2683 = vpop.f32.mrf.mxu0
  %2684 = vdwg.mxu0
  %v2685 = vadd.f32 %v911, %v2500
  %v2686 = vadd.f32 %v912, %v2526
  %v2687 = vadd.f32 %v913, %v2552
  %v2688 = vadd.f32 %v914, %v2578
  %v2689 = vadd.f32 %v915, %v2604
  %v2690 = vadd.f32 %v916, %v2630
  %v2691 = vadd.f32 %v917, %v2656
  %v2692 = vadd.f32 %v918, %v2682
  %v2693 = vxor.u32 %v2685, 2147483648
  %v2694 = vxor.u32 %v2686, 2147483648
  %v2695 = vxor.u32 %v2687, 2147483648
  %v2696 = vxor.u32 %v2688, 2147483648
  %v2697 = vxor.u32 %v2689, 2147483648
  %v2698 = vxor.u32 %v2690, 2147483648
  %v2699 = vmul.f32 %v2693, 1.442695
  %v2700 = vpow.pop %v2699
  %v2701 = vmul.f32 %v2694, 1.442695
  %v2702 = vpow.pop %v2701
  %v2703 = vmul.f32 %v2695, 1.442695
  %v2704 = vpow.pop %v2703
  %v2705 = vmul.f32 %v2696, 1.442695
  %v2706 = vpow.pop %v2705
  %v2707 = vmul.f32 %v2697, 1.442695
  %v2708 = vpow.pop %v2707
  %v2709 = vmul.f32 %v2698, 1.442695
  %v2710 = vpow.pop %v2709
  %v2711 = vadd.f32 %v2700, 1.0
  %v2712 = vadd.f32 %v2702, 1.0
  %v2713 = vadd.f32 %v2704, 1.0
  %v2714 = vadd.f32 %v2706, 1.0
  %v2715 = vadd.f32 %v2708, 1.0
  %v2716 = vadd.f32 %v2710, 1.0
  %v2717 = vrcp.pop %v2711
  %v2718 = vmul.f32 %v2711, %v2717
  %v2719 = vsub.f32 1.0, %v2718
  %v2720 = vmul.f32 %v2717, %v2719
  %v2721 = vadd.f32 %v2717, %v2720
  %vm2722 = vweird.f32 %v2711
  %vm2723 = vweird.f32 %v2717
  %vm2724 = vmor %vm2722, %vm2723
  %v2725 = vsel %vm2724, %v2717, %v2721
  %v2726 = vand.u32 2147483647, %v2711
  %vm2727 = vcmp.eq.f32.partialorder %v2726, 8.507059e+37
  %v2728 = vand.u32 %v2711, 2147483648
  %v2729 = vor.u32 1.1754944e-38, %v2728
  %v2730 = vsel %vm2727, %v2729, %v2725
  %v2731 = vmul.f32 1.0, %v2730
  %v2732 = vrcp.pop %v2712
  %v2733 = vmul.f32 %v2712, %v2732
  %v2734 = vsub.f32 1.0, %v2733
  %v2735 = vmul.f32 %v2732, %v2734
  %v2736 = vadd.f32 %v2732, %v2735
  %vm2737 = vweird.f32 %v2712
  %vm2738 = vweird.f32 %v2732
  %vm2739 = vmor %vm2737, %vm2738
  %v2740 = vsel %vm2739, %v2732, %v2736
  %v2741 = vand.u32 2147483647, %v2712
  %vm2742 = vcmp.eq.f32.partialorder %v2741, 8.507059e+37
  %v2743 = vand.u32 %v2712, 2147483648
  %v2744 = vor.u32 1.1754944e-38, %v2743
  %v2745 = vsel %vm2742, %v2744, %v2740
  %v2746 = vmul.f32 1.0, %v2745
  %v2747 = vrcp.pop %v2713
  %v2748 = vmul.f32 %v2713, %v2747
  %v2749 = vsub.f32 1.0, %v2748
  %v2750 = vmul.f32 %v2747, %v2749
  %v2751 = vadd.f32 %v2747, %v2750
  %vm2752 = vweird.f32 %v2713
  %vm2753 = vweird.f32 %v2747
  %vm2754 = vmor %vm2752, %vm2753
  %v2755 = vsel %vm2754, %v2747, %v2751
  %v2756 = vand.u32 2147483647, %v2713
  %vm2757 = vcmp.eq.f32.partialorder %v2756, 8.507059e+37
  %v2758 = vand.u32 %v2713, 2147483648
  %v2759 = vor.u32 1.1754944e-38, %v2758
  %v2760 = vsel %vm2757, %v2759, %v2755
  %v2761 = vmul.f32 1.0, %v2760
  %v2762 = vrcp.pop %v2714
  %v2763 = vmul.f32 %v2714, %v2762
  %v2764 = vsub.f32 1.0, %v2763
  %v2765 = vmul.f32 %v2762, %v2764
  %v2766 = vadd.f32 %v2762, %v2765
  %vm2767 = vweird.f32 %v2714
  %vm2768 = vweird.f32 %v2762
  %vm2769 = vmor %vm2767, %vm2768
  %v2770 = vsel %vm2769, %v2762, %v2766
  %v2771 = vand.u32 2147483647, %v2714
  %vm2772 = vcmp.eq.f32.partialorder %v2771, 8.507059e+37
  %v2773 = vand.u32 %v2714, 2147483648
  %v2774 = vor.u32 1.1754944e-38, %v2773
  %v2775 = vsel %vm2772, %v2774, %v2770
  %v2776 = vmul.f32 1.0, %v2775
  %v2777 = vrcp.pop %v2715
  %v2778 = vmul.f32 %v2715, %v2777
  %v2779 = vsub.f32 1.0, %v2778
  %v2780 = vmul.f32 %v2777, %v2779
  %v2781 = vadd.f32 %v2777, %v2780
  %vm2782 = vweird.f32 %v2715
  %vm2783 = vweird.f32 %v2777
  %vm2784 = vmor %vm2782, %vm2783
  %v2785 = vsel %vm2784, %v2777, %v2781
  %v2786 = vand.u32 2147483647, %v2715
  %vm2787 = vcmp.eq.f32.partialorder %v2786, 8.507059e+37
  %v2788 = vand.u32 %v2715, 2147483648
  %v2789 = vor.u32 1.1754944e-38, %v2788
  %v2790 = vsel %vm2787, %v2789, %v2785
  %v2791 = vmul.f32 1.0, %v2790
  %v2792 = vrcp.pop %v2716
  %v2793 = vmul.f32 %v2716, %v2792
  %v2794 = vsub.f32 1.0, %v2793
  %v2795 = vmul.f32 %v2792, %v2794
  %v2796 = vadd.f32 %v2792, %v2795
  %vm2797 = vweird.f32 %v2716
  %vm2798 = vweird.f32 %v2792
  %vm2799 = vmor %vm2797, %vm2798
  %v2800 = vsel %vm2799, %v2792, %v2796
  %v2801 = vand.u32 2147483647, %v2716
  %vm2802 = vcmp.eq.f32.partialorder %v2801, 8.507059e+37
  %v2803 = vand.u32 %v2716, 2147483648
  %v2804 = vor.u32 1.1754944e-38, %v2803
  %v2805 = vsel %vm2802, %v2804, %v2800
  %v2806 = vmul.f32 1.0, %v2805
  %v2807 = vtanh.pop %v2691
  %v2808 = vtanh.pop %v2692
  %v2809 = vmul.f32 %v2761, 0.0
  %v2810 = vmul.f32 %v2776, 0.0
  %v2811 = vmul.f32 %v2731, %v2807
  %v2812 = vmul.f32 %v2746, %v2808
  %v2813 = vadd.f32 %v2809, %v2811
  %v2814 = vadd.f32 %v2810, %v2812
  %v2815 = vtanh.pop %v2813
  %v2816 = vtanh.pop %v2814
  %v2817 = vmul.f32 %v2791, %v2815
  %v2818 = vmul.f32 %v2806, %v2816
  %2821 = vst [vmem:[#allocation1] sm:$0xff] %v2817
  %2822 = vst [vmem:[#allocation1 + $0x9] sm:$0xff] %v2818
  %s2823 = scalar_lea.vmem [#allocation1], 1
  %v2824 = vld [vmem:[%s2823] ss:$9 sm:$0xff]
  %v2826 = vlaneseq
  %vm2827 = vcmp.ge.s32.totalorder %v2826, 0
  %vm2828 = vcmp.lt.s32.totalorder %v2826, 256
  %vm2829 = vmand %vm2827, %vm2828
  %2830 = vst.msk [vmem:[#allocation3] ss:$8 sm:$0x3] %vm2829, %v2824
  %2831 = vst.msk [vmem:[#allocation3] ss:$8 sm:$0x0] %vm2829, %v2824
  %v2832 = vpack.c.bf16 %v2817, %v2817
  %v2833 = vpack.c.bf16 %v2818, %v2818
  %v2962 = vunpack.c.l.b16 %v781
  %v2963 = vunpack.c.h.b16 %v781
  %v2964 = vunpack.c.l.b16 %v782
  %v2965 = vunpack.c.h.b16 %v782
  %v2966 = vunpack.c.l.b16 %v783
  %v2967 = vunpack.c.h.b16 %v783
  %v2968 = vunpack.c.l.b16 %v784
  %v2969 = vunpack.c.h.b16 %v784
  %v2970 = vunpack.c.l.b16 %v785
  %v2971 = vunpack.c.h.b16 %v785
  %v2972 = vunpack.c.l.b16 %v786
  %v2973 = vunpack.c.h.b16 %v786
  %v2974 = vunpack.c.l.b16 %v787
  %v2975 = vunpack.c.h.b16 %v787
  %v2976 = vunpack.c.l.b16 %v788
  %v2977 = vunpack.c.h.b16 %v788
  %v2978 = vunpack.c.l.b16 %v789
  %v2979 = vunpack.c.h.b16 %v789
  %v2980 = vunpack.c.l.b16 %v790
  %v2981 = vunpack.c.h.b16 %v790
  %v2982 = vunpack.c.l.b16 %v791
  %v2983 = vunpack.c.h.b16 %v791
  %v2984 = vunpack.c.l.b16 %v792
  %v2985 = vunpack.c.h.b16 %v792
  %v2986 = vunpack.c.l.b16 %v793
  %v2987 = vunpack.c.h.b16 %v793
  %v2988 = vunpack.c.l.b16 %v794
  %v2989 = vunpack.c.h.b16 %v794
  %v2990 = vunpack.c.l.b16 %v795
  %v2991 = vunpack.c.h.b16 %v795
  %v2992 = vunpack.c.l.b16 %v796
  %v2993 = vunpack.c.h.b16 %v796
  %v2994 = vunpack.c.l.b16 %v797
  %v2995 = vunpack.c.h.b16 %v797
  %v2996 = vunpack.c.l.b16 %v798
  %v2997 = vunpack.c.h.b16 %v798
  %v2998 = vunpack.c.l.b16 %v799
  %v2999 = vunpack.c.h.b16 %v799
  %v3000 = vunpack.c.l.b16 %v800
  %v3001 = vunpack.c.h.b16 %v800
  %v3002 = vunpack.c.l.b16 %v801
  %v3003 = vunpack.c.h.b16 %v801
  %v3004 = vunpack.c.l.b16 %v802
  %v3005 = vunpack.c.h.b16 %v802
  %v3006 = vunpack.c.l.b16 %v803
  %v3007 = vunpack.c.h.b16 %v803
  %v3008 = vunpack.c.l.b16 %v804
  %v3009 = vunpack.c.h.b16 %v804
  %v3010 = vunpack.c.l.b16 %v805
  %v3011 = vunpack.c.h.b16 %v805
  %v3012 = vunpack.c.l.b16 %v806
  %v3013 = vunpack.c.h.b16 %v806
  %v3014 = vunpack.c.l.b16 %v807
  %v3015 = vunpack.c.h.b16 %v807
  %v3016 = vunpack.c.l.b16 %v808
  %v3017 = vunpack.c.h.b16 %v808
  %v3018 = vunpack.c.l.b16 %v809
  %v3019 = vunpack.c.h.b16 %v809
  %v3020 = vunpack.c.l.b16 %v810
  %v3021 = vunpack.c.h.b16 %v810
  %v3022 = vunpack.c.l.b16 %v811
  %v3023 = vunpack.c.h.b16 %v811
  %v3024 = vunpack.c.l.b16 %v812
  %v3025 = vunpack.c.h.b16 %v812
  %v3026 = vunpack.c.l.b16 %v813
  %v3027 = vunpack.c.h.b16 %v813
  %v3028 = vunpack.c.l.b16 %v814
  %v3029 = vunpack.c.h.b16 %v814
  %v3030 = vunpack.c.l.b16 %v815
  %v3031 = vunpack.c.h.b16 %v815
  %v3032 = vunpack.c.l.b16 %v816
  %v3033 = vunpack.c.h.b16 %v816
  %v3034 = vunpack.c.l.b16 %v817
  %v3035 = vunpack.c.h.b16 %v817
  %v3036 = vunpack.c.l.b16 %v818
  %v3037 = vunpack.c.h.b16 %v818
  %v3038 = vunpack.c.l.b16 %v819
  %v3039 = vunpack.c.h.b16 %v819
  %v3040 = vunpack.c.l.b16 %v820
  %v3041 = vunpack.c.h.b16 %v820
  %v3042 = vunpack.c.l.b16 %v821
  %v3043 = vunpack.c.h.b16 %v821
  %v3044 = vunpack.c.l.b16 %v822
  %v3045 = vunpack.c.h.b16 %v822
  %v3046 = vunpack.c.l.b16 %v823
  %v3047 = vunpack.c.h.b16 %v823
  %v3048 = vunpack.c.l.b16 %v824
  %v3049 = vunpack.c.h.b16 %v824
  %v3050 = vunpack.c.l.b16 %v825
  %v3051 = vunpack.c.h.b16 %v825
  %v3052 = vunpack.c.l.b16 %v826
  %v3053 = vunpack.c.h.b16 %v826
  %v3054 = vunpack.c.l.b16 %v827
  %v3055 = vunpack.c.h.b16 %v827
  %v3056 = vunpack.c.l.b16 %v828
  %v3057 = vunpack.c.h.b16 %v828
  %v3058 = vunpack.c.l.b16 %v829
  %v3059 = vunpack.c.h.b16 %v829
  %v3060 = vunpack.c.l.b16 %v830
  %v3061 = vunpack.c.h.b16 %v830
  %v3062 = vunpack.c.l.b16 %v831
  %v3063 = vunpack.c.h.b16 %v831
  %v3064 = vunpack.c.l.b16 %v832
  %v3065 = vunpack.c.h.b16 %v832
  %v3066 = vunpack.c.l.b16 %v833
  %v3067 = vunpack.c.h.b16 %v833
  %v3068 = vunpack.c.l.b16 %v834
  %v3069 = vunpack.c.h.b16 %v834
  %v3070 = vunpack.c.l.b16 %v835
  %v3071 = vunpack.c.h.b16 %v835
  %v3072 = vunpack.c.l.b16 %v836
  %v3073 = vunpack.c.h.b16 %v836
  %v3074 = vunpack.c.l.b16 %v837
  %v3075 = vunpack.c.h.b16 %v837
  %v3076 = vunpack.c.l.b16 %v838
  %v3077 = vunpack.c.h.b16 %v838
  %v3078 = vunpack.c.l.b16 %v839
  %v3079 = vunpack.c.h.b16 %v839
  %v3080 = vunpack.c.l.b16 %v840
  %v3081 = vunpack.c.h.b16 %v840
  %v3082 = vunpack.c.l.b16 %v841
  %v3083 = vunpack.c.h.b16 %v841
  %v3084 = vunpack.c.l.b16 %v842
  %v3085 = vunpack.c.h.b16 %v842
  %v3086 = vunpack.c.l.b16 %v843
  %v3087 = vunpack.c.h.b16 %v843
  %v3088 = vunpack.c.l.b16 %v844
  %v3089 = vunpack.c.h.b16 %v844
  %v3090 = vunpack.c.l.b16 %v845
  %v3091 = vunpack.c.h.b16 %v845
  %v3092 = vunpack.c.l.b16 %v846
  %v3093 = vunpack.c.h.b16 %v846
  %v3094 = vunpack.c.l.b16 %v847
  %v3095 = vunpack.c.h.b16 %v847
  %v3096 = vunpack.c.l.b16 %v848
  %v3097 = vunpack.c.h.b16 %v848
  %v3098 = vunpack.c.l.b16 %v849
  %v3099 = vunpack.c.h.b16 %v849
  %v3100 = vunpack.c.l.b16 %v850
  %v3101 = vunpack.c.h.b16 %v850
  %v3102 = vunpack.c.l.b16 %v851
  %v3103 = vunpack.c.h.b16 %v851
  %v3104 = vunpack.c.l.b16 %v852
  %v3105 = vunpack.c.h.b16 %v852
  %v3106 = vunpack.c.l.b16 %v853
  %v3107 = vunpack.c.h.b16 %v853
  %v3108 = vunpack.c.l.b16 %v854
  %v3109 = vunpack.c.h.b16 %v854
  %v3110 = vunpack.c.l.b16 %v855
  %v3111 = vunpack.c.h.b16 %v855
  %v3112 = vunpack.c.l.b16 %v856
  %v3113 = vunpack.c.h.b16 %v856
  %v3114 = vunpack.c.l.b16 %v857
  %v3115 = vunpack.c.h.b16 %v857
  %v3116 = vunpack.c.l.b16 %v858
  %v3117 = vunpack.c.h.b16 %v858
  %v3118 = vunpack.c.l.b16 %v859
  %v3119 = vunpack.c.h.b16 %v859
  %v3120 = vunpack.c.l.b16 %v860
  %v3121 = vunpack.c.h.b16 %v860
  %v3122 = vunpack.c.l.b16 %v861
  %v3123 = vunpack.c.h.b16 %v861
  %v3124 = vunpack.c.l.b16 %v862
  %v3125 = vunpack.c.h.b16 %v862
  %v3126 = vunpack.c.l.b16 %v863
  %v3127 = vunpack.c.h.b16 %v863
  %v3128 = vunpack.c.l.b16 %v864
  %v3129 = vunpack.c.h.b16 %v864
  %v3130 = vunpack.c.l.b16 %v865
  %v3131 = vunpack.c.h.b16 %v865
  %v3132 = vunpack.c.l.b16 %v866
  %v3133 = vunpack.c.h.b16 %v866
  %v3134 = vunpack.c.l.b16 %v867
  %v3135 = vunpack.c.h.b16 %v867
  %v3136 = vunpack.c.l.b16 %v868
  %v3137 = vunpack.c.h.b16 %v868
  %v3138 = vunpack.c.l.b16 %v869
  %v3139 = vunpack.c.h.b16 %v869
  %v3140 = vunpack.c.l.b16 %v870
  %v3141 = vunpack.c.h.b16 %v870
  %v3142 = vunpack.c.l.b16 %v871
  %v3143 = vunpack.c.h.b16 %v871
  %v3144 = vunpack.c.l.b16 %v872
  %v3145 = vunpack.c.h.b16 %v872
  %v3146 = vunpack.c.l.b16 %v873
  %v3147 = vunpack.c.h.b16 %v873
  %v3148 = vunpack.c.l.b16 %v874
  %v3149 = vunpack.c.h.b16 %v874
  %v3150 = vunpack.c.l.b16 %v875
  %v3151 = vunpack.c.h.b16 %v875
  %v3152 = vunpack.c.l.b16 %v876
  %v3153 = vunpack.c.h.b16 %v876
  %v3154 = vunpack.c.l.b16 %v877
  %v3155 = vunpack.c.h.b16 %v877
  %v3156 = vunpack.c.l.b16 %v878
  %v3157 = vunpack.c.h.b16 %v878
  %v3158 = vunpack.c.l.b16 %v879
  %v3159 = vunpack.c.h.b16 %v879
  %v3160 = vunpack.c.l.b16 %v880
  %v3161 = vunpack.c.h.b16 %v880
  %v3162 = vunpack.c.l.b16 %v881
  %v3163 = vunpack.c.h.b16 %v881
  %v3164 = vunpack.c.l.b16 %v882
  %v3165 = vunpack.c.h.b16 %v882
  %v3166 = vunpack.c.l.b16 %v883
  %v3167 = vunpack.c.h.b16 %v883
  %v3168 = vunpack.c.l.b16 %v884
  %v3169 = vunpack.c.h.b16 %v884
  %v3170 = vunpack.c.l.b16 %v885
  %v3171 = vunpack.c.h.b16 %v885
  %v3172 = vunpack.c.l.b16 %v886
  %v3173 = vunpack.c.h.b16 %v886
  %v3174 = vunpack.c.l.b16 %v887
  %v3175 = vunpack.c.h.b16 %v887
  %v3176 = vunpack.c.l.b16 %v888
  %v3177 = vunpack.c.h.b16 %v888
  %v3178 = vunpack.c.l.b16 %v889
  %v3179 = vunpack.c.h.b16 %v889
  %v3180 = vunpack.c.l.b16 %v890
  %v3181 = vunpack.c.h.b16 %v890
  %v3182 = vunpack.c.l.b16 %v891
  %v3183 = vunpack.c.h.b16 %v891
  %v3184 = vunpack.c.l.b16 %v892
  %v3185 = vunpack.c.h.b16 %v892
  %v3186 = vunpack.c.l.b16 %v893
  %v3187 = vunpack.c.h.b16 %v893
  %v3188 = vunpack.c.l.b16 %v894
  %v3189 = vunpack.c.h.b16 %v894
  %v3190 = vunpack.c.l.b16 %v895
  %v3191 = vunpack.c.h.b16 %v895
  %v3192 = vunpack.c.l.b16 %v896
  %v3193 = vunpack.c.h.b16 %v896
  %v3194 = vunpack.c.l.b16 %v897
  %v3195 = vunpack.c.h.b16 %v897
  %v3196 = vunpack.c.l.b16 %v898
  %v3197 = vunpack.c.h.b16 %v898
  %v3198 = vunpack.c.l.b16 %v899
  %v3199 = vunpack.c.h.b16 %v899
  %v3200 = vunpack.c.l.b16 %v900
  %v3201 = vunpack.c.h.b16 %v900
  %v3202 = vunpack.c.l.b16 %v901
  %v3203 = vunpack.c.h.b16 %v901
  %v3204 = vunpack.c.l.b16 %v902
  %v3205 = vunpack.c.h.b16 %v902
  %v3206 = vunpack.c.l.b16 %v903
  %v3207 = vunpack.c.h.b16 %v903
  %v3208 = vunpack.c.l.b16 %v904
  %v3209 = vunpack.c.h.b16 %v904
  %v3210 = vunpack.c.l.b16 %v905
  %v3211 = vunpack.c.h.b16 %v905
  %v3212 = vunpack.c.l.b16 %v906
  %v3213 = vunpack.c.h.b16 %v906
  %v3214 = vunpack.c.l.b16 %v907
  %v3215 = vunpack.c.h.b16 %v907
  %v3216 = vunpack.c.l.b16 %v908
  %v3217 = vunpack.c.h.b16 %v908
  %v3218 = vpack.c.b16 %v2970, %v2962
  %v3219 = vpack.c.b16 %v2971, %v2963
  %v3220 = vpack.c.b16 %v2972, %v2964
  %v3221 = vpack.c.b16 %v2973, %v2965
  %v3222 = vpack.c.b16 %v2974, %v2966
  %v3223 = vpack.c.b16 %v2975, %v2967
  %v3224 = vpack.c.b16 %v2976, %v2968
  %v3225 = vpack.c.b16 %v2977, %v2969
  %v3226 = vpack.c.b16 %v2986, %v2978
  %v3227 = vpack.c.b16 %v2987, %v2979
  %v3228 = vpack.c.b16 %v2988, %v2980
  %v3229 = vpack.c.b16 %v2989, %v2981
  %v3230 = vpack.c.b16 %v2990, %v2982
  %v3231 = vpack.c.b16 %v2991, %v2983
  %v3232 = vpack.c.b16 %v2992, %v2984
  %v3233 = vpack.c.b16 %v2993, %v2985
  %v3234 = vpack.c.b16 %v3002, %v2994
  %v3235 = vpack.c.b16 %v3003, %v2995
  %v3236 = vpack.c.b16 %v3004, %v2996
  %v3237 = vpack.c.b16 %v3005, %v2997
  %v3238 = vpack.c.b16 %v3006, %v2998
  %v3239 = vpack.c.b16 %v3007, %v2999
  %v3240 = vpack.c.b16 %v3008, %v3000
  %v3241 = vpack.c.b16 %v3009, %v3001
  %v3242 = vpack.c.b16 %v3018, %v3010
  %v3243 = vpack.c.b16 %v3019, %v3011
  %v3244 = vpack.c.b16 %v3020, %v3012
  %v3245 = vpack.c.b16 %v3021, %v3013
  %v3246 = vpack.c.b16 %v3022, %v3014
  %v3247 = vpack.c.b16 %v3023, %v3015
  %v3248 = vpack.c.b16 %v3024, %v3016
  %v3249 = vpack.c.b16 %v3025, %v3017
  %v3250 = vpack.c.b16 %v3034, %v3026
  %v3251 = vpack.c.b16 %v3035, %v3027
  %v3252 = vpack.c.b16 %v3036, %v3028
  %v3253 = vpack.c.b16 %v3037, %v3029
  %v3254 = vpack.c.b16 %v3038, %v3030
  %v3255 = vpack.c.b16 %v3039, %v3031
  %v3256 = vpack.c.b16 %v3040, %v3032
  %v3257 = vpack.c.b16 %v3041, %v3033
  %v3258 = vpack.c.b16 %v3050, %v3042
  %v3259 = vpack.c.b16 %v3051, %v3043
  %v3260 = vpack.c.b16 %v3052, %v3044
  %v3261 = vpack.c.b16 %v3053, %v3045
  %v3262 = vpack.c.b16 %v3054, %v3046
  %v3263 = vpack.c.b16 %v3055, %v3047
  %v3264 = vpack.c.b16 %v3056, %v3048
  %v3265 = vpack.c.b16 %v3057, %v3049
  %v3266 = vpack.c.b16 %v3066, %v3058
  %v3267 = vpack.c.b16 %v3067, %v3059
  %v3268 = vpack.c.b16 %v3068, %v3060
  %v3269 = vpack.c.b16 %v3069, %v3061
  %v3270 = vpack.c.b16 %v3070, %v3062
  %v3271 = vpack.c.b16 %v3071, %v3063
  %v3272 = vpack.c.b16 %v3072, %v3064
  %v3273 = vpack.c.b16 %v3073, %v3065
  %v3274 = vpack.c.b16 %v3082, %v3074
  %v3275 = vpack.c.b16 %v3083, %v3075
  %v3276 = vpack.c.b16 %v3084, %v3076
  %v3277 = vpack.c.b16 %v3085, %v3077
  %v3278 = vpack.c.b16 %v3086, %v3078
  %v3279 = vpack.c.b16 %v3087, %v3079
  %v3280 = vpack.c.b16 %v3088, %v3080
  %v3281 = vpack.c.b16 %v3089, %v3081
  %v3282 = vpack.c.b16 %v3098, %v3090
  %v3283 = vpack.c.b16 %v3099, %v3091
  %v3284 = vpack.c.b16 %v3100, %v3092
  %v3285 = vpack.c.b16 %v3101, %v3093
  %v3286 = vpack.c.b16 %v3102, %v3094
  %v3287 = vpack.c.b16 %v3103, %v3095
  %v3288 = vpack.c.b16 %v3104, %v3096
  %v3289 = vpack.c.b16 %v3105, %v3097
  %v3290 = vpack.c.b16 %v3114, %v3106
  %v3291 = vpack.c.b16 %v3115, %v3107
  %v3292 = vpack.c.b16 %v3116, %v3108
  %v3293 = vpack.c.b16 %v3117, %v3109
  %v3294 = vpack.c.b16 %v3118, %v3110
  %v3295 = vpack.c.b16 %v3119, %v3111
  %v3296 = vpack.c.b16 %v3120, %v3112
  %v3297 = vpack.c.b16 %v3121, %v3113
  %v3298 = vpack.c.b16 %v3130, %v3122
  %v3299 = vpack.c.b16 %v3131, %v3123
  %v3300 = vpack.c.b16 %v3132, %v3124
  %v3301 = vpack.c.b16 %v3133, %v3125
  %v3302 = vpack.c.b16 %v3134, %v3126
  %v3303 = vpack.c.b16 %v3135, %v3127
  %v3304 = vpack.c.b16 %v3136, %v3128
  %v3305 = vpack.c.b16 %v3137, %v3129
  %v3306 = vpack.c.b16 %v3146, %v3138
  %v3307 = vpack.c.b16 %v3147, %v3139
  %v3308 = vpack.c.b16 %v3148, %v3140
  %v3309 = vpack.c.b16 %v3149, %v3141
  %v3310 = vpack.c.b16 %v3150, %v3142
  %v3311 = vpack.c.b16 %v3151, %v3143
  %v3312 = vpack.c.b16 %v3152, %v3144
  %v3313 = vpack.c.b16 %v3153, %v3145
  %v3314 = vpack.c.b16 %v3162, %v3154
  %v3315 = vpack.c.b16 %v3163, %v3155
  %v3316 = vpack.c.b16 %v3164, %v3156
  %v3317 = vpack.c.b16 %v3165, %v3157
  %v3318 = vpack.c.b16 %v3166, %v3158
  %v3319 = vpack.c.b16 %v3167, %v3159
  %v3320 = vpack.c.b16 %v3168, %v3160
  %v3321 = vpack.c.b16 %v3169, %v3161
  %v3322 = vpack.c.b16 %v3178, %v3170
  %v3323 = vpack.c.b16 %v3179, %v3171
  %v3324 = vpack.c.b16 %v3180, %v3172
  %v3325 = vpack.c.b16 %v3181, %v3173
  %v3326 = vpack.c.b16 %v3182, %v3174
  %v3327 = vpack.c.b16 %v3183, %v3175
  %v3328 = vpack.c.b16 %v3184, %v3176
  %v3329 = vpack.c.b16 %v3185, %v3177
  %v3330 = vpack.c.b16 %v3194, %v3186
  %v3331 = vpack.c.b16 %v3195, %v3187
  %v3332 = vpack.c.b16 %v3196, %v3188
  %v3333 = vpack.c.b16 %v3197, %v3189
  %v3334 = vpack.c.b16 %v3198, %v3190
  %v3335 = vpack.c.b16 %v3199, %v3191
  %v3336 = vpack.c.b16 %v3200, %v3192
  %v3337 = vpack.c.b16 %v3201, %v3193
  %v3338 = vpack.c.b16 %v3210, %v3202
  %v3339 = vpack.c.b16 %v3211, %v3203
  %v3340 = vpack.c.b16 %v3212, %v3204
  %v3341 = vpack.c.b16 %v3213, %v3205
  %v3342 = vpack.c.b16 %v3214, %v3206
  %v3343 = vpack.c.b16 %v3215, %v3207
  %v3344 = vpack.c.b16 %v3216, %v3208
  %v3345 = vpack.c.b16 %v3217, %v3209
  %3474 = vmatpush.bf16.msra.mxu0 %v3274
  %3475 = vmatpush.bf16.msra.mxu0 %v3266
  %3476 = vmatpush.bf16.msra.mxu0 %v3258
  %3477 = vmatpush.bf16.msra.mxu0 %v3250
  %3478 = vmatpush.bf16.msra.mxu0 %v3242
  %3479 = vmatpush.bf16.msra.mxu0 %v3234
  %3480 = vmatpush.bf16.msra.mxu0 %v3226
  %3481 = vmatpush.bf16.msra.mxu0 %v3218
  %3482 = vmatmul.bf16.gmra.mxu0 %v2832
  %v3483 = vpop.f32.mrf.mxu0
  %v3484 = vadd.f32 %v911, %v3483
  %v3485 = vpop.f32.mrf.mxu0
  %3486 = vdwg.mxu0
  %3487 = vmatpush.bf16.msra.mxu0 %v3338
  %3488 = vmatpush.bf16.msra.mxu0 %v3330
  %3489 = vmatpush.bf16.msra.mxu0 %v3322
  %3490 = vmatpush.bf16.msra.mxu0 %v3314
  %3491 = vmatpush.bf16.msra.mxu0 %v3306
  %3492 = vmatpush.bf16.msra.mxu0 %v3298
  %3493 = vmatpush.bf16.msra.mxu0 %v3290
  %3494 = vmatpush.bf16.msra.mxu0 %v3282
  %3495 = vmatmul.bf16.gmra.mxu0 %v2833
  %v3496 = vpop.f32.mrf.mxu0
  %v3497 = vadd.f32 %v3484, %v3496
  %v3498 = vpop.f32.mrf.mxu0
  %3499 = vdwg.mxu0
  %3500 = vmatpush.bf16.msra.mxu0 %v3275
  %3501 = vmatpush.bf16.msra.mxu0 %v3267
  %3502 = vmatpush.bf16.msra.mxu0 %v3259
  %3503 = vmatpush.bf16.msra.mxu0 %v3251
  %3504 = vmatpush.bf16.msra.mxu0 %v3243
  %3505 = vmatpush.bf16.msra.mxu0 %v3235
  %3506 = vmatpush.bf16.msra.mxu0 %v3227
  %3507 = vmatpush.bf16.msra.mxu0 %v3219
  %3508 = vmatmul.bf16.gmra.mxu0 %v2832
  %v3509 = vpop.f32.mrf.mxu0
  %v3510 = vadd.f32 %v912, %v3509
  %v3511 = vpop.f32.mrf.mxu0
  %3512 = vdwg.mxu0
  %3513 = vmatpush.bf16.msra.mxu0 %v3339
  %3514 = vmatpush.bf16.msra.mxu0 %v3331
  %3515 = vmatpush.bf16.msra.mxu0 %v3323
  %3516 = vmatpush.bf16.msra.mxu0 %v3315
  %3517 = vmatpush.bf16.msra.mxu0 %v3307
  %3518 = vmatpush.bf16.msra.mxu0 %v3299
  %3519 = vmatpush.bf16.msra.mxu0 %v3291
  %3520 = vmatpush.bf16.msra.mxu0 %v3283
  %3521 = vmatmul.bf16.gmra.mxu0 %v2833
  %v3522 = vpop.f32.mrf.mxu0
  %v3523 = vadd.f32 %v3510, %v3522
  %v3524 = vpop.f32.mrf.mxu0
  %3525 = vdwg.mxu0
  %3526 = vmatpush.bf16.msra.mxu0 %v3276
  %3527 = vmatpush.bf16.msra.mxu0 %v3268
  %3528 = vmatpush.bf16.msra.mxu0 %v3260
  %3529 = vmatpush.bf16.msra.mxu0 %v3252
  %3530 = vmatpush.bf16.msra.mxu0 %v3244
  %3531 = vmatpush.bf16.msra.mxu0 %v3236
  %3532 = vmatpush.bf16.msra.mxu0 %v3228
  %3533 = vmatpush.bf16.msra.mxu0 %v3220
  %3534 = vmatmul.bf16.gmra.mxu0 %v2832
  %v3535 = vpop.f32.mrf.mxu0
  %v3536 = vadd.f32 %v913, %v3535
  %v3537 = vpop.f32.mrf.mxu0
  %3538 = vdwg.mxu0
  %3539 = vmatpush.bf16.msra.mxu0 %v3340
  %3540 = vmatpush.bf16.msra.mxu0 %v3332
  %3541 = vmatpush.bf16.msra.mxu0 %v3324
  %3542 = vmatpush.bf16.msra.mxu0 %v3316
  %3543 = vmatpush.bf16.msra.mxu0 %v3308
  %3544 = vmatpush.bf16.msra.mxu0 %v3300
  %3545 = vmatpush.bf16.msra.mxu0 %v3292
  %3546 = vmatpush.bf16.msra.mxu0 %v3284
  %3547 = vmatmul.bf16.gmra.mxu0 %v2833
  %v3548 = vpop.f32.mrf.mxu0
  %v3549 = vadd.f32 %v3536, %v3548
  %v3550 = vpop.f32.mrf.mxu0
  %3551 = vdwg.mxu0
  %3552 = vmatpush.bf16.msra.mxu0 %v3277
  %3553 = vmatpush.bf16.msra.mxu0 %v3269
  %3554 = vmatpush.bf16.msra.mxu0 %v3261
  %3555 = vmatpush.bf16.msra.mxu0 %v3253
  %3556 = vmatpush.bf16.msra.mxu0 %v3245
  %3557 = vmatpush.bf16.msra.mxu0 %v3237
  %3558 = vmatpush.bf16.msra.mxu0 %v3229
  %3559 = vmatpush.bf16.msra.mxu0 %v3221
  %3560 = vmatmul.bf16.gmra.mxu0 %v2832
  %v3561 = vpop.f32.mrf.mxu0
  %v3562 = vadd.f32 %v914, %v3561
  %v3563 = vpop.f32.mrf.mxu0
  %3564 = vdwg.mxu0
  %3565 = vmatpush.bf16.msra.mxu0 %v3341
  %3566 = vmatpush.bf16.msra.mxu0 %v3333
  %3567 = vmatpush.bf16.msra.mxu0 %v3325
  %3568 = vmatpush.bf16.msra.mxu0 %v3317
  %3569 = vmatpush.bf16.msra.mxu0 %v3309
  %3570 = vmatpush.bf16.msra.mxu0 %v3301
  %3571 = vmatpush.bf16.msra.mxu0 %v3293
  %3572 = vmatpush.bf16.msra.mxu0 %v3285
  %3573 = vmatmul.bf16.gmra.mxu0 %v2833
  %v3574 = vpop.f32.mrf.mxu0
  %v3575 = vadd.f32 %v3562, %v3574
  %v3576 = vpop.f32.mrf.mxu0
  %3577 = vdwg.mxu0
  %3578 = vmatpush.bf16.msra.mxu0 %v3278
  %3579 = vmatpush.bf16.msra.mxu0 %v3270
  %3580 = vmatpush.bf16.msra.mxu0 %v3262
  %3581 = vmatpush.bf16.msra.mxu0 %v3254
  %3582 = vmatpush.bf16.msra.mxu0 %v3246
  %3583 = vmatpush.bf16.msra.mxu0 %v3238
  %3584 = vmatpush.bf16.msra.mxu0 %v3230
  %3585 = vmatpush.bf16.msra.mxu0 %v3222
  %3586 = vmatmul.bf16.gmra.mxu0 %v2832
  %v3587 = vpop.f32.mrf.mxu0
  %v3588 = vadd.f32 %v915, %v3587
  %v3589 = vpop.f32.mrf.mxu0
  %3590 = vdwg.mxu0
  %3591 = vmatpush.bf16.msra.mxu0 %v3342
  %3592 = vmatpush.bf16.msra.mxu0 %v3334
  %3593 = vmatpush.bf16.msra.mxu0 %v3326
  %3594 = vmatpush.bf16.msra.mxu0 %v3318
  %3595 = vmatpush.bf16.msra.mxu0 %v3310
  %3596 = vmatpush.bf16.msra.mxu0 %v3302
  %3597 = vmatpush.bf16.msra.mxu0 %v3294
  %3598 = vmatpush.bf16.msra.mxu0 %v3286
  %3599 = vmatmul.bf16.gmra.mxu0 %v2833
  %v3600 = vpop.f32.mrf.mxu0
  %v3601 = vadd.f32 %v3588, %v3600
  %v3602 = vpop.f32.mrf.mxu0
  %3603 = vdwg.mxu0
  %3604 = vmatpush.bf16.msra.mxu0 %v3279
  %3605 = vmatpush.bf16.msra.mxu0 %v3271
  %3606 = vmatpush.bf16.msra.mxu0 %v3263
  %3607 = vmatpush.bf16.msra.mxu0 %v3255
  %3608 = vmatpush.bf16.msra.mxu0 %v3247
  %3609 = vmatpush.bf16.msra.mxu0 %v3239
  %3610 = vmatpush.bf16.msra.mxu0 %v3231
  %3611 = vmatpush.bf16.msra.mxu0 %v3223
  %3612 = vmatmul.bf16.gmra.mxu0 %v2832
  %v3613 = vpop.f32.mrf.mxu0
  %v3614 = vadd.f32 %v916, %v3613
  %v3615 = vpop.f32.mrf.mxu0
  %3616 = vdwg.mxu0
  %3617 = vmatpush.bf16.msra.mxu0 %v3343
  %3618 = vmatpush.bf16.msra.mxu0 %v3335
  %3619 = vmatpush.bf16.msra.mxu0 %v3327
  %3620 = vmatpush.bf16.msra.mxu0 %v3319
  %3621 = vmatpush.bf16.msra.mxu0 %v3311
  %3622 = vmatpush.bf16.msra.mxu0 %v3303
  %3623 = vmatpush.bf16.msra.mxu0 %v3295
  %3624 = vmatpush.bf16.msra.mxu0 %v3287
  %3625 = vmatmul.bf16.gmra.mxu0 %v2833
  %v3626 = vpop.f32.mrf.mxu0
  %v3627 = vadd.f32 %v3614, %v3626
  %v3628 = vpop.f32.mrf.mxu0
  %3629 = vdwg.mxu0
  %3630 = vmatpush.bf16.msra.mxu0 %v3280
  %3631 = vmatpush.bf16.msra.mxu0 %v3272
  %3632 = vmatpush.bf16.msra.mxu0 %v3264
  %3633 = vmatpush.bf16.msra.mxu0 %v3256
  %3634 = vmatpush.bf16.msra.mxu0 %v3248
  %3635 = vmatpush.bf16.msra.mxu0 %v3240
  %3636 = vmatpush.bf16.msra.mxu0 %v3232
  %3637 = vmatpush.bf16.msra.mxu0 %v3224
  %3638 = vmatmul.bf16.gmra.mxu0 %v2832
  %v3639 = vpop.f32.mrf.mxu0
  %v3640 = vadd.f32 %v917, %v3639
  %v3641 = vpop.f32.mrf.mxu0
  %3642 = vdwg.mxu0
  %3643 = vmatpush.bf16.msra.mxu0 %v3344
  %3644 = vmatpush.bf16.msra.mxu0 %v3336
  %3645 = vmatpush.bf16.msra.mxu0 %v3328
  %3646 = vmatpush.bf16.msra.mxu0 %v3320
  %3647 = vmatpush.bf16.msra.mxu0 %v3312
  %3648 = vmatpush.bf16.msra.mxu0 %v3304
  %3649 = vmatpush.bf16.msra.mxu0 %v3296
  %3650 = vmatpush.bf16.msra.mxu0 %v3288
  %3651 = vmatmul.bf16.gmra.mxu0 %v2833
  %v3652 = vpop.f32.mrf.mxu0
  %v3653 = vadd.f32 %v3640, %v3652
  %v3654 = vpop.f32.mrf.mxu0
  %3655 = vdwg.mxu0
  %3656 = vmatpush.bf16.msra.mxu0 %v3281
  %3657 = vmatpush.bf16.msra.mxu0 %v3273
  %3658 = vmatpush.bf16.msra.mxu0 %v3265
  %3659 = vmatpush.bf16.msra.mxu0 %v3257
  %3660 = vmatpush.bf16.msra.mxu0 %v3249
  %3661 = vmatpush.bf16.msra.mxu0 %v3241
  %3662 = vmatpush.bf16.msra.mxu0 %v3233
  %3663 = vmatpush.bf16.msra.mxu0 %v3225
  %3664 = vmatmul.bf16.gmra.mxu0 %v2832
  %v3665 = vpop.f32.mrf.mxu0
  %v3666 = vadd.f32 %v918, %v3665
  %v3667 = vpop.f32.mrf.mxu0
  %3668 = vdwg.mxu0
  %3669 = vmatpush.bf16.msra.mxu0 %v3345
  %3670 = vmatpush.bf16.msra.mxu0 %v3337
  %3671 = vmatpush.bf16.msra.mxu0 %v3329
  %3672 = vmatpush.bf16.msra.mxu0 %v3321
  %3673 = vmatpush.bf16.msra.mxu0 %v3313
  %3674 = vmatpush.bf16.msra.mxu0 %v3305
  %3675 = vmatpush.bf16.msra.mxu0 %v3297
  %3676 = vmatpush.bf16.msra.mxu0 %v3289
  %3677 = vmatmul.bf16.gmra.mxu0 %v2833
  %v3678 = vpop.f32.mrf.mxu0
  %v3679 = vadd.f32 %v3666, %v3678
  %v3680 = vpop.f32.mrf.mxu0
  %3681 = vdwg.mxu0
  %v3682 = vld [vmem:[%s412] sm:$0xff]
  %v3683 = vld [vmem:[%s412 + $0x8] sm:$0xff]
  %v3692 = vrot.slane %v1678, 6
  %v3693 = vrot.slane %v1704, 4
  %v3694 = vrot.slane %v1730, 2
  %v3695 = vrot.slane %v1782, 6
  %v3696 = vrot.slane %v1808, 4
  %v3697 = vrot.slane %v1834, 2
  %v3698 = vsel %vm385, %v1652, %v3692
  %v3699 = vsel %vm387, %v3693, %v3694
  %v3700 = vsel %vm389, %v3698, %v3699
  %v3701 = vsel %vm385, %v1756, %v3695
  %v3702 = vsel %vm387, %v3696, %v3697
  %v3703 = vsel %vm389, %v3701, %v3702
  %v3706 = vadd.f32 %v3682, %v3700
  %v3707 = vadd.f32 %v3683, %v3703
  %v3708 = vxor.u32 %v3706, 2147483648
  %v3709 = vxor.u32 %v3707, 2147483648
  %v3710 = vmul.f32 %v3708, 1.442695
  %v3711 = vpow.pop %v3710
  %v3712 = vmul.f32 %v3709, 1.442695
  %v3713 = vpow.pop %v3712
  %v3714 = vadd.f32 %v3711, 1.0
  %v3715 = vadd.f32 %v3713, 1.0
  %v3716 = vrcp.pop %v3714
  %v3717 = vmul.f32 %v3714, %v3716
  %v3718 = vsub.f32 1.0, %v3717
  %v3719 = vmul.f32 %v3716, %v3718
  %v3720 = vadd.f32 %v3716, %v3719
  %vm3721 = vweird.f32 %v3714
  %vm3722 = vweird.f32 %v3716
  %vm3723 = vmor %vm3721, %vm3722
  %v3724 = vsel %vm3723, %v3716, %v3720
  %v3725 = vand.u32 2147483647, %v3714
  %vm3726 = vcmp.eq.f32.partialorder %v3725, 8.507059e+37
  %v3727 = vand.u32 %v3714, 2147483648
  %v3728 = vor.u32 1.1754944e-38, %v3727
  %v3729 = vsel %vm3726, %v3728, %v3724
  %v3730 = vmul.f32 1.0, %v3729
  %v3731 = vrcp.pop %v3715
  %v3732 = vmul.f32 %v3715, %v3731
  %v3733 = vsub.f32 1.0, %v3732
  %v3734 = vmul.f32 %v3731, %v3733
  %v3735 = vadd.f32 %v3731, %v3734
  %vm3736 = vweird.f32 %v3715
  %vm3737 = vweird.f32 %v3731
  %vm3738 = vmor %vm3736, %vm3737
  %v3739 = vsel %vm3738, %v3731, %v3735
  %v3740 = vand.u32 2147483647, %v3715
  %vm3741 = vcmp.eq.f32.partialorder %v3740, 8.507059e+37
  %v3742 = vand.u32 %v3715, 2147483648
  %v3743 = vor.u32 1.1754944e-38, %v3742
  %v3744 = vsel %vm3741, %v3743, %v3739
  %v3745 = vmul.f32 1.0, %v3744
  %v3747 = vrot.slane %v3707, 4
  %v3749 = vtanh.pop %v3747
  %v3751 = vrot.slane %v3730, 4
  %v3753 = vmul.f32 %v3751, %v978
  %v3754 = vmul.f32 %v3730, %v3749
  %v3755 = vadd.f32 %v3753, %v3754
  %v3756 = vtanh.pop %v3755
  %v3757 = vmul.f32 %v3745, %v3756
  %3759 = vst [vmem:[#allocation1] ss:$4 sm:$0xff] %v3757
  %v3760 = vld.sshfl [vmem:[#allocation1] sm:$0xff pattern:$0x73625140]
  %v3761 = vld.sshfl [vmem:[#allocation1 + $0x8] sm:$0xff pattern:$0x73625140]
  %v3764 = vpack.c.bf16 %v3760, %v3760
  %v3765 = vpack.c.bf16 %v3761, %v3761
  %3766 = vmatpush.bf16.msra.mxu0 %v1429
  %3767 = vmatpush.bf16.msra.mxu0 %v1421
  %3768 = vmatpush.bf16.msra.mxu0 %v1413
  %3769 = vmatpush.bf16.msra.mxu0 %v1405
  %3770 = vmatpush.bf16.msra.mxu0 %v1397
  %3771 = vmatpush.bf16.msra.mxu0 %v1389
  %3772 = vmatpush.bf16.msra.mxu0 %v1381
  %3773 = vmatpush.bf16.msra.mxu0 %v1373
  %3774 = vmatmul.bf16.gmra.mxu0 %v3764
  %v3775 = vpop.f32.mrf.mxu0
  %v3776 = vadd.f32 0.0, %v3775
  %v3777 = vpop.f32.mrf.mxu0
  %3778 = vdwg.mxu0
  %3779 = vmatpush.bf16.msra.mxu0 %v1493
  %3780 = vmatpush.bf16.msra.mxu0 %v1485
  %3781 = vmatpush.bf16.msra.mxu0 %v1477
  %3782 = vmatpush.bf16.msra.mxu0 %v1469
  %3783 = vmatpush.bf16.msra.mxu0 %v1461
  %3784 = vmatpush.bf16.msra.mxu0 %v1453
  %3785 = vmatpush.bf16.msra.mxu0 %v1445
  %3786 = vmatpush.bf16.msra.mxu0 %v1437
  %3787 = vmatmul.bf16.gmra.mxu0 %v3765
  %v3788 = vpop.f32.mrf.mxu0
  %v3789 = vadd.f32 %v3776, %v3788
  %v3790 = vpop.f32.mrf.mxu0
  %3791 = vdwg.mxu0
  %3792 = vmatpush.bf16.msra.mxu0 %v1430
  %3793 = vmatpush.bf16.msra.mxu0 %v1422
  %3794 = vmatpush.bf16.msra.mxu0 %v1414
  %3795 = vmatpush.bf16.msra.mxu0 %v1406
  %3796 = vmatpush.bf16.msra.mxu0 %v1398
  %3797 = vmatpush.bf16.msra.mxu0 %v1390
  %3798 = vmatpush.bf16.msra.mxu0 %v1382
  %3799 = vmatpush.bf16.msra.mxu0 %v1374
  %3800 = vmatmul.bf16.gmra.mxu0 %v3764
  %v3801 = vpop.f32.mrf.mxu0
  %v3802 = vadd.f32 0.0, %v3801
  %v3803 = vpop.f32.mrf.mxu0
  %3804 = vdwg.mxu0
  %3805 = vmatpush.bf16.msra.mxu0 %v1494
  %3806 = vmatpush.bf16.msra.mxu0 %v1486
  %3807 = vmatpush.bf16.msra.mxu0 %v1478
  %3808 = vmatpush.bf16.msra.mxu0 %v1470
  %3809 = vmatpush.bf16.msra.mxu0 %v1462
  %3810 = vmatpush.bf16.msra.mxu0 %v1454
  %3811 = vmatpush.bf16.msra.mxu0 %v1446
  %3812 = vmatpush.bf16.msra.mxu0 %v1438
  %3813 = vmatmul.bf16.gmra.mxu0 %v3765
  %v3814 = vpop.f32.mrf.mxu0
  %v3815 = vadd.f32 %v3802, %v3814
  %v3816 = vpop.f32.mrf.mxu0
  %3817 = vdwg.mxu0
  %3818 = vmatpush.bf16.msra.mxu0 %v1431
  %3819 = vmatpush.bf16.msra.mxu0 %v1423
  %3820 = vmatpush.bf16.msra.mxu0 %v1415
  %3821 = vmatpush.bf16.msra.mxu0 %v1407
  %3822 = vmatpush.bf16.msra.mxu0 %v1399
  %3823 = vmatpush.bf16.msra.mxu0 %v1391
  %3824 = vmatpush.bf16.msra.mxu0 %v1383
  %3825 = vmatpush.bf16.msra.mxu0 %v1375
  %3826 = vmatmul.bf16.gmra.mxu0 %v3764
  %v3827 = vpop.f32.mrf.mxu0
  %v3828 = vadd.f32 0.0, %v3827
  %v3829 = vpop.f32.mrf.mxu0
  %3830 = vdwg.mxu0
  %3831 = vmatpush.bf16.msra.mxu0 %v1495
  %3832 = vmatpush.bf16.msra.mxu0 %v1487
  %3833 = vmatpush.bf16.msra.mxu0 %v1479
  %3834 = vmatpush.bf16.msra.mxu0 %v1471
  %3835 = vmatpush.bf16.msra.mxu0 %v1463
  %3836 = vmatpush.bf16.msra.mxu0 %v1455
  %3837 = vmatpush.bf16.msra.mxu0 %v1447
  %3838 = vmatpush.bf16.msra.mxu0 %v1439
  %3839 = vmatmul.bf16.gmra.mxu0 %v3765
  %v3840 = vpop.f32.mrf.mxu0
  %v3841 = vadd.f32 %v3828, %v3840
  %v3842 = vpop.f32.mrf.mxu0
  %3843 = vdwg.mxu0
  %3844 = vmatpush.bf16.msra.mxu0 %v1432
  %3845 = vmatpush.bf16.msra.mxu0 %v1424
  %3846 = vmatpush.bf16.msra.mxu0 %v1416
  %3847 = vmatpush.bf16.msra.mxu0 %v1408
  %3848 = vmatpush.bf16.msra.mxu0 %v1400
  %3849 = vmatpush.bf16.msra.mxu0 %v1392
  %3850 = vmatpush.bf16.msra.mxu0 %v1384
  %3851 = vmatpush.bf16.msra.mxu0 %v1376
  %3852 = vmatmul.bf16.gmra.mxu0 %v3764
  %v3853 = vpop.f32.mrf.mxu0
  %v3854 = vadd.f32 0.0, %v3853
  %v3855 = vpop.f32.mrf.mxu0
  %3856 = vdwg.mxu0
  %3857 = vmatpush.bf16.msra.mxu0 %v1496
  %3858 = vmatpush.bf16.msra.mxu0 %v1488
  %3859 = vmatpush.bf16.msra.mxu0 %v1480
  %3860 = vmatpush.bf16.msra.mxu0 %v1472
  %3861 = vmatpush.bf16.msra.mxu0 %v1464
  %3862 = vmatpush.bf16.msra.mxu0 %v1456
  %3863 = vmatpush.bf16.msra.mxu0 %v1448
  %3864 = vmatpush.bf16.msra.mxu0 %v1440
  %3865 = vmatmul.bf16.gmra.mxu0 %v3765
  %v3866 = vpop.f32.mrf.mxu0
  %v3867 = vadd.f32 %v3854, %v3866
  %v3868 = vpop.f32.mrf.mxu0
  %3869 = vdwg.mxu0
  %3870 = vmatpush.bf16.msra.mxu0 %v1433
  %3871 = vmatpush.bf16.msra.mxu0 %v1425
  %3872 = vmatpush.bf16.msra.mxu0 %v1417
  %3873 = vmatpush.bf16.msra.mxu0 %v1409
  %3874 = vmatpush.bf16.msra.mxu0 %v1401
  %3875 = vmatpush.bf16.msra.mxu0 %v1393
  %3876 = vmatpush.bf16.msra.mxu0 %v1385
  %3877 = vmatpush.bf16.msra.mxu0 %v1377
  %3878 = vmatmul.bf16.gmra.mxu0 %v3764
  %v3879 = vpop.f32.mrf.mxu0
  %v3880 = vadd.f32 0.0, %v3879
  %v3881 = vpop.f32.mrf.mxu0
  %3882 = vdwg.mxu0
  %3883 = vmatpush.bf16.msra.mxu0 %v1497
  %3884 = vmatpush.bf16.msra.mxu0 %v1489
  %3885 = vmatpush.bf16.msra.mxu0 %v1481
  %3886 = vmatpush.bf16.msra.mxu0 %v1473
  %3887 = vmatpush.bf16.msra.mxu0 %v1465
  %3888 = vmatpush.bf16.msra.mxu0 %v1457
  %3889 = vmatpush.bf16.msra.mxu0 %v1449
  %3890 = vmatpush.bf16.msra.mxu0 %v1441
  %3891 = vmatmul.bf16.gmra.mxu0 %v3765
  %v3892 = vpop.f32.mrf.mxu0
  %v3893 = vadd.f32 %v3880, %v3892
  %v3894 = vpop.f32.mrf.mxu0
  %3895 = vdwg.mxu0
  %3896 = vmatpush.bf16.msra.mxu0 %v1434
  %3897 = vmatpush.bf16.msra.mxu0 %v1426
  %3898 = vmatpush.bf16.msra.mxu0 %v1418
  %3899 = vmatpush.bf16.msra.mxu0 %v1410
  %3900 = vmatpush.bf16.msra.mxu0 %v1402
  %3901 = vmatpush.bf16.msra.mxu0 %v1394
  %3902 = vmatpush.bf16.msra.mxu0 %v1386
  %3903 = vmatpush.bf16.msra.mxu0 %v1378
  %3904 = vmatmul.bf16.gmra.mxu0 %v3764
  %v3905 = vpop.f32.mrf.mxu0
  %v3906 = vadd.f32 0.0, %v3905
  %v3907 = vpop.f32.mrf.mxu0
  %3908 = vdwg.mxu0
  %3909 = vmatpush.bf16.msra.mxu0 %v1498
  %3910 = vmatpush.bf16.msra.mxu0 %v1490
  %3911 = vmatpush.bf16.msra.mxu0 %v1482
  %3912 = vmatpush.bf16.msra.mxu0 %v1474
  %3913 = vmatpush.bf16.msra.mxu0 %v1466
  %3914 = vmatpush.bf16.msra.mxu0 %v1458
  %3915 = vmatpush.bf16.msra.mxu0 %v1450
  %3916 = vmatpush.bf16.msra.mxu0 %v1442
  %3917 = vmatmul.bf16.gmra.mxu0 %v3765
  %v3918 = vpop.f32.mrf.mxu0
  %v3919 = vadd.f32 %v3906, %v3918
  %v3920 = vpop.f32.mrf.mxu0
  %3921 = vdwg.mxu0
  %3922 = vmatpush.bf16.msra.mxu0 %v1435
  %3923 = vmatpush.bf16.msra.mxu0 %v1427
  %3924 = vmatpush.bf16.msra.mxu0 %v1419
  %3925 = vmatpush.bf16.msra.mxu0 %v1411
  %3926 = vmatpush.bf16.msra.mxu0 %v1403
  %3927 = vmatpush.bf16.msra.mxu0 %v1395
  %3928 = vmatpush.bf16.msra.mxu0 %v1387
  %3929 = vmatpush.bf16.msra.mxu0 %v1379
  %3930 = vmatmul.bf16.gmra.mxu0 %v3764
  %v3931 = vpop.f32.mrf.mxu0
  %v3932 = vadd.f32 0.0, %v3931
  %v3933 = vpop.f32.mrf.mxu0
  %3934 = vdwg.mxu0
  %3935 = vmatpush.bf16.msra.mxu0 %v1499
  %3936 = vmatpush.bf16.msra.mxu0 %v1491
  %3937 = vmatpush.bf16.msra.mxu0 %v1483
  %3938 = vmatpush.bf16.msra.mxu0 %v1475
  %3939 = vmatpush.bf16.msra.mxu0 %v1467
  %3940 = vmatpush.bf16.msra.mxu0 %v1459
  %3941 = vmatpush.bf16.msra.mxu0 %v1451
  %3942 = vmatpush.bf16.msra.mxu0 %v1443
  %3943 = vmatmul.bf16.gmra.mxu0 %v3765
  %v3944 = vpop.f32.mrf.mxu0
  %v3945 = vadd.f32 %v3932, %v3944
  %v3946 = vpop.f32.mrf.mxu0
  %3947 = vdwg.mxu0
  %3948 = vmatpush.bf16.msra.mxu0 %v1436
  %3949 = vmatpush.bf16.msra.mxu0 %v1428
  %3950 = vmatpush.bf16.msra.mxu0 %v1420
  %3951 = vmatpush.bf16.msra.mxu0 %v1412
  %3952 = vmatpush.bf16.msra.mxu0 %v1404
  %3953 = vmatpush.bf16.msra.mxu0 %v1396
  %3954 = vmatpush.bf16.msra.mxu0 %v1388
  %3955 = vmatpush.bf16.msra.mxu0 %v1380
  %3956 = vmatmul.bf16.gmra.mxu0 %v3764
  %v3957 = vpop.f32.mrf.mxu0
  %v3958 = vadd.f32 0.0, %v3957
  %v3959 = vpop.f32.mrf.mxu0
  %3960 = vdwg.mxu0
  %3961 = vmatpush.bf16.msra.mxu0 %v1500
  %3962 = vmatpush.bf16.msra.mxu0 %v1492
  %3963 = vmatpush.bf16.msra.mxu0 %v1484
  %3964 = vmatpush.bf16.msra.mxu0 %v1476
  %3965 = vmatpush.bf16.msra.mxu0 %v1468
  %3966 = vmatpush.bf16.msra.mxu0 %v1460
  %3967 = vmatpush.bf16.msra.mxu0 %v1452
  %3968 = vmatpush.bf16.msra.mxu0 %v1444
  %3969 = vmatmul.bf16.gmra.mxu0 %v3765
  %v3970 = vpop.f32.mrf.mxu0
  %v3971 = vadd.f32 %v3958, %v3970
  %v3972 = vpop.f32.mrf.mxu0
  %3973 = vdwg.mxu0
  %3974 = vmatpush.bf16.msra.mxu0 %v2277
  %3975 = vmatpush.bf16.msra.mxu0 %v2269
  %3976 = vmatpush.bf16.msra.mxu0 %v2261
  %3977 = vmatpush.bf16.msra.mxu0 %v2253
  %3978 = vmatpush.bf16.msra.mxu0 %v2245
  %3979 = vmatpush.bf16.msra.mxu0 %v2237
  %3980 = vmatpush.bf16.msra.mxu0 %v2229
  %3981 = vmatpush.bf16.msra.mxu0 %v2221
  %3982 = vmatmul.bf16.gmra.mxu0 %v3764
  %v3983 = vpop.f32.mrf.mxu0
  %v3984 = vadd.f32 0.0, %v3983
  %v3985 = vpop.f32.mrf.mxu0
  %3986 = vdwg.mxu0
  %3987 = vmatpush.bf16.msra.mxu0 %v2341
  %3988 = vmatpush.bf16.msra.mxu0 %v2333
  %3989 = vmatpush.bf16.msra.mxu0 %v2325
  %3990 = vmatpush.bf16.msra.mxu0 %v2317
  %3991 = vmatpush.bf16.msra.mxu0 %v2309
  %3992 = vmatpush.bf16.msra.mxu0 %v2301
  %3993 = vmatpush.bf16.msra.mxu0 %v2293
  %3994 = vmatpush.bf16.msra.mxu0 %v2285
  %3995 = vmatmul.bf16.gmra.mxu0 %v3765
  %v3996 = vpop.f32.mrf.mxu0
  %v3997 = vadd.f32 %v3984, %v3996
  %v3998 = vpop.f32.mrf.mxu0
  %3999 = vdwg.mxu0
  %4000 = vmatpush.bf16.msra.mxu0 %v2278
  %4001 = vmatpush.bf16.msra.mxu0 %v2270
  %4002 = vmatpush.bf16.msra.mxu0 %v2262
  %4003 = vmatpush.bf16.msra.mxu0 %v2254
  %4004 = vmatpush.bf16.msra.mxu0 %v2246
  %4005 = vmatpush.bf16.msra.mxu0 %v2238
  %4006 = vmatpush.bf16.msra.mxu0 %v2230
  %4007 = vmatpush.bf16.msra.mxu0 %v2222
  %4008 = vmatmul.bf16.gmra.mxu0 %v3764
  %v4009 = vpop.f32.mrf.mxu0
  %v4010 = vadd.f32 0.0, %v4009
  %v4011 = vpop.f32.mrf.mxu0
  %4012 = vdwg.mxu0
  %4013 = vmatpush.bf16.msra.mxu0 %v2342
  %4014 = vmatpush.bf16.msra.mxu0 %v2334
  %4015 = vmatpush.bf16.msra.mxu0 %v2326
  %4016 = vmatpush.bf16.msra.mxu0 %v2318
  %4017 = vmatpush.bf16.msra.mxu0 %v2310
  %4018 = vmatpush.bf16.msra.mxu0 %v2302
  %4019 = vmatpush.bf16.msra.mxu0 %v2294
  %4020 = vmatpush.bf16.msra.mxu0 %v2286
  %4021 = vmatmul.bf16.gmra.mxu0 %v3765
  %v4022 = vpop.f32.mrf.mxu0
  %v4023 = vadd.f32 %v4010, %v4022
  %v4024 = vpop.f32.mrf.mxu0
  %4025 = vdwg.mxu0
  %4026 = vmatpush.bf16.msra.mxu0 %v2279
  %4027 = vmatpush.bf16.msra.mxu0 %v2271
  %4028 = vmatpush.bf16.msra.mxu0 %v2263
  %4029 = vmatpush.bf16.msra.mxu0 %v2255
  %4030 = vmatpush.bf16.msra.mxu0 %v2247
  %4031 = vmatpush.bf16.msra.mxu0 %v2239
  %4032 = vmatpush.bf16.msra.mxu0 %v2231
  %4033 = vmatpush.bf16.msra.mxu0 %v2223
  %4034 = vmatmul.bf16.gmra.mxu0 %v3764
  %v4035 = vpop.f32.mrf.mxu0
  %v4036 = vadd.f32 0.0, %v4035
  %v4037 = vpop.f32.mrf.mxu0
  %4038 = vdwg.mxu0
  %4039 = vmatpush.bf16.msra.mxu0 %v2343
  %4040 = vmatpush.bf16.msra.mxu0 %v2335
  %4041 = vmatpush.bf16.msra.mxu0 %v2327
  %4042 = vmatpush.bf16.msra.mxu0 %v2319
  %4043 = vmatpush.bf16.msra.mxu0 %v2311
  %4044 = vmatpush.bf16.msra.mxu0 %v2303
  %4045 = vmatpush.bf16.msra.mxu0 %v2295
  %4046 = vmatpush.bf16.msra.mxu0 %v2287
  %4047 = vmatmul.bf16.gmra.mxu0 %v3765
  %v4048 = vpop.f32.mrf.mxu0
  %v4049 = vadd.f32 %v4036, %v4048
  %v4050 = vpop.f32.mrf.mxu0
  %4051 = vdwg.mxu0
  %4052 = vmatpush.bf16.msra.mxu0 %v2280
  %4053 = vmatpush.bf16.msra.mxu0 %v2272
  %4054 = vmatpush.bf16.msra.mxu0 %v2264
  %4055 = vmatpush.bf16.msra.mxu0 %v2256
  %4056 = vmatpush.bf16.msra.mxu0 %v2248
  %4057 = vmatpush.bf16.msra.mxu0 %v2240
  %4058 = vmatpush.bf16.msra.mxu0 %v2232
  %4059 = vmatpush.bf16.msra.mxu0 %v2224
  %4060 = vmatmul.bf16.gmra.mxu0 %v3764
  %v4061 = vpop.f32.mrf.mxu0
  %v4062 = vadd.f32 0.0, %v4061
  %v4063 = vpop.f32.mrf.mxu0
  %4064 = vdwg.mxu0
  %4065 = vmatpush.bf16.msra.mxu0 %v2344
  %4066 = vmatpush.bf16.msra.mxu0 %v2336
  %4067 = vmatpush.bf16.msra.mxu0 %v2328
  %4068 = vmatpush.bf16.msra.mxu0 %v2320
  %4069 = vmatpush.bf16.msra.mxu0 %v2312
  %4070 = vmatpush.bf16.msra.mxu0 %v2304
  %4071 = vmatpush.bf16.msra.mxu0 %v2296
  %4072 = vmatpush.bf16.msra.mxu0 %v2288
  %4073 = vmatmul.bf16.gmra.mxu0 %v3765
  %v4074 = vpop.f32.mrf.mxu0
  %v4075 = vadd.f32 %v4062, %v4074
  %v4076 = vpop.f32.mrf.mxu0
  %4077 = vdwg.mxu0
  %4078 = vmatpush.bf16.msra.mxu0 %v2281
  %4079 = vmatpush.bf16.msra.mxu0 %v2273
  %4080 = vmatpush.bf16.msra.mxu0 %v2265
  %4081 = vmatpush.bf16.msra.mxu0 %v2257
  %4082 = vmatpush.bf16.msra.mxu0 %v2249
  %4083 = vmatpush.bf16.msra.mxu0 %v2241
  %4084 = vmatpush.bf16.msra.mxu0 %v2233
  %4085 = vmatpush.bf16.msra.mxu0 %v2225
  %4086 = vmatmul.bf16.gmra.mxu0 %v3764
  %v4087 = vpop.f32.mrf.mxu0
  %v4088 = vadd.f32 0.0, %v4087
  %v4089 = vpop.f32.mrf.mxu0
  %4090 = vdwg.mxu0
  %4091 = vmatpush.bf16.msra.mxu0 %v2345
  %4092 = vmatpush.bf16.msra.mxu0 %v2337
  %4093 = vmatpush.bf16.msra.mxu0 %v2329
  %4094 = vmatpush.bf16.msra.mxu0 %v2321
  %4095 = vmatpush.bf16.msra.mxu0 %v2313
  %4096 = vmatpush.bf16.msra.mxu0 %v2305
  %4097 = vmatpush.bf16.msra.mxu0 %v2297
  %4098 = vmatpush.bf16.msra.mxu0 %v2289
  %4099 = vmatmul.bf16.gmra.mxu0 %v3765
  %v4100 = vpop.f32.mrf.mxu0
  %v4101 = vadd.f32 %v4088, %v4100
  %v4102 = vpop.f32.mrf.mxu0
  %4103 = vdwg.mxu0
  %4104 = vmatpush.bf16.msra.mxu0 %v2282
  %4105 = vmatpush.bf16.msra.mxu0 %v2274
  %4106 = vmatpush.bf16.msra.mxu0 %v2266
  %4107 = vmatpush.bf16.msra.mxu0 %v2258
  %4108 = vmatpush.bf16.msra.mxu0 %v2250
  %4109 = vmatpush.bf16.msra.mxu0 %v2242
  %4110 = vmatpush.bf16.msra.mxu0 %v2234
  %4111 = vmatpush.bf16.msra.mxu0 %v2226
  %4112 = vmatmul.bf16.gmra.mxu0 %v3764
  %v4113 = vpop.f32.mrf.mxu0
  %v4114 = vadd.f32 0.0, %v4113
  %v4115 = vpop.f32.mrf.mxu0
  %4116 = vdwg.mxu0
  %4117 = vmatpush.bf16.msra.mxu0 %v2346
  %4118 = vmatpush.bf16.msra.mxu0 %v2338
  %4119 = vmatpush.bf16.msra.mxu0 %v2330
  %4120 = vmatpush.bf16.msra.mxu0 %v2322
  %4121 = vmatpush.bf16.msra.mxu0 %v2314
  %4122 = vmatpush.bf16.msra.mxu0 %v2306
  %4123 = vmatpush.bf16.msra.mxu0 %v2298
  %4124 = vmatpush.bf16.msra.mxu0 %v2290
  %4125 = vmatmul.bf16.gmra.mxu0 %v3765
  %v4126 = vpop.f32.mrf.mxu0
  %v4127 = vadd.f32 %v4114, %v4126
  %v4128 = vpop.f32.mrf.mxu0
  %4129 = vdwg.mxu0
  %4130 = vmatpush.bf16.msra.mxu0 %v2283
  %4131 = vmatpush.bf16.msra.mxu0 %v2275
  %4132 = vmatpush.bf16.msra.mxu0 %v2267
  %4133 = vmatpush.bf16.msra.mxu0 %v2259
  %4134 = vmatpush.bf16.msra.mxu0 %v2251
  %4135 = vmatpush.bf16.msra.mxu0 %v2243
  %4136 = vmatpush.bf16.msra.mxu0 %v2235
  %4137 = vmatpush.bf16.msra.mxu0 %v2227
  %4138 = vmatmul.bf16.gmra.mxu0 %v3764
  %v4139 = vpop.f32.mrf.mxu0
  %v4140 = vadd.f32 0.0, %v4139
  %v4141 = vpop.f32.mrf.mxu0
  %4142 = vdwg.mxu0
  %4143 = vmatpush.bf16.msra.mxu0 %v2347
  %4144 = vmatpush.bf16.msra.mxu0 %v2339
  %4145 = vmatpush.bf16.msra.mxu0 %v2331
  %4146 = vmatpush.bf16.msra.mxu0 %v2323
  %4147 = vmatpush.bf16.msra.mxu0 %v2315
  %4148 = vmatpush.bf16.msra.mxu0 %v2307
  %4149 = vmatpush.bf16.msra.mxu0 %v2299
  %4150 = vmatpush.bf16.msra.mxu0 %v2291
  %4151 = vmatmul.bf16.gmra.mxu0 %v3765
  %v4152 = vpop.f32.mrf.mxu0
  %v4153 = vadd.f32 %v4140, %v4152
  %v4154 = vpop.f32.mrf.mxu0
  %4155 = vdwg.mxu0
  %4156 = vmatpush.bf16.msra.mxu0 %v2284
  %4157 = vmatpush.bf16.msra.mxu0 %v2276
  %4158 = vmatpush.bf16.msra.mxu0 %v2268
  %4159 = vmatpush.bf16.msra.mxu0 %v2260
  %4160 = vmatpush.bf16.msra.mxu0 %v2252
  %4161 = vmatpush.bf16.msra.mxu0 %v2244
  %4162 = vmatpush.bf16.msra.mxu0 %v2236
  %4163 = vmatpush.bf16.msra.mxu0 %v2228
  %4164 = vmatmul.bf16.gmra.mxu0 %v3764
  %v4165 = vpop.f32.mrf.mxu0
  %v4166 = vadd.f32 0.0, %v4165
  %v4167 = vpop.f32.mrf.mxu0
  %4168 = vdwg.mxu0
  %4169 = vmatpush.bf16.msra.mxu0 %v2348
  %4170 = vmatpush.bf16.msra.mxu0 %v2340
  %4171 = vmatpush.bf16.msra.mxu0 %v2332
  %4172 = vmatpush.bf16.msra.mxu0 %v2324
  %4173 = vmatpush.bf16.msra.mxu0 %v2316
  %4174 = vmatpush.bf16.msra.mxu0 %v2308
  %4175 = vmatpush.bf16.msra.mxu0 %v2300
  %4176 = vmatpush.bf16.msra.mxu0 %v2292
  %4177 = vmatmul.bf16.gmra.mxu0 %v3765
  %v4178 = vpop.f32.mrf.mxu0
  %v4179 = vadd.f32 %v4166, %v4178
  %v4180 = vpop.f32.mrf.mxu0
  %4181 = vdwg.mxu0
  %v4182 = vadd.f32 %v3497, %v3997
  %v4183 = vadd.f32 %v3523, %v4023
  %v4184 = vadd.f32 %v3549, %v4049
  %v4185 = vadd.f32 %v3575, %v4075
  %v4186 = vadd.f32 %v3601, %v4101
  %v4187 = vadd.f32 %v3627, %v4127
  %v4188 = vadd.f32 %v3653, %v4153
  %v4189 = vadd.f32 %v3679, %v4179
  %v4190 = vxor.u32 %v4182, 2147483648
  %v4191 = vxor.u32 %v4183, 2147483648
  %v4192 = vxor.u32 %v4184, 2147483648
  %v4193 = vxor.u32 %v4185, 2147483648
  %v4194 = vxor.u32 %v4186, 2147483648
  %v4195 = vxor.u32 %v4187, 2147483648
  %v4196 = vmul.f32 %v4190, 1.442695
  %v4197 = vpow.pop %v4196
  %v4198 = vmul.f32 %v4191, 1.442695
  %v4199 = vpow.pop %v4198
  %v4200 = vmul.f32 %v4192, 1.442695
  %v4201 = vpow.pop %v4200
  %v4202 = vmul.f32 %v4193, 1.442695
  %v4203 = vpow.pop %v4202
  %v4204 = vmul.f32 %v4194, 1.442695
  %v4205 = vpow.pop %v4204
  %v4206 = vmul.f32 %v4195, 1.442695
  %v4207 = vpow.pop %v4206
  %v4208 = vadd.f32 %v4197, 1.0
  %v4209 = vadd.f32 %v4199, 1.0
  %v4210 = vadd.f32 %v4201, 1.0
  %v4211 = vadd.f32 %v4203, 1.0
  %v4212 = vadd.f32 %v4205, 1.0
  %v4213 = vadd.f32 %v4207, 1.0
  %v4214 = vrcp.pop %v4208
  %v4215 = vmul.f32 %v4208, %v4214
  %v4216 = vsub.f32 1.0, %v4215
  %v4217 = vmul.f32 %v4214, %v4216
  %v4218 = vadd.f32 %v4214, %v4217
  %vm4219 = vweird.f32 %v4208
  %vm4220 = vweird.f32 %v4214
  %vm4221 = vmor %vm4219, %vm4220
  %v4222 = vsel %vm4221, %v4214, %v4218
  %v4223 = vand.u32 2147483647, %v4208
  %vm4224 = vcmp.eq.f32.partialorder %v4223, 8.507059e+37
  %v4225 = vand.u32 %v4208, 2147483648
  %v4226 = vor.u32 1.1754944e-38, %v4225
  %v4227 = vsel %vm4224, %v4226, %v4222
  %v4228 = vmul.f32 1.0, %v4227
  %v4229 = vrcp.pop %v4209
  %v4230 = vmul.f32 %v4209, %v4229
  %v4231 = vsub.f32 1.0, %v4230
  %v4232 = vmul.f32 %v4229, %v4231
  %v4233 = vadd.f32 %v4229, %v4232
  %vm4234 = vweird.f32 %v4209
  %vm4235 = vweird.f32 %v4229
  %vm4236 = vmor %vm4234, %vm4235
  %v4237 = vsel %vm4236, %v4229, %v4233
  %v4238 = vand.u32 2147483647, %v4209
  %vm4239 = vcmp.eq.f32.partialorder %v4238, 8.507059e+37
  %v4240 = vand.u32 %v4209, 2147483648
  %v4241 = vor.u32 1.1754944e-38, %v4240
  %v4242 = vsel %vm4239, %v4241, %v4237
  %v4243 = vmul.f32 1.0, %v4242
  %v4244 = vrcp.pop %v4210
  %v4245 = vmul.f32 %v4210, %v4244
  %v4246 = vsub.f32 1.0, %v4245
  %v4247 = vmul.f32 %v4244, %v4246
  %v4248 = vadd.f32 %v4244, %v4247
  %vm4249 = vweird.f32 %v4210
  %vm4250 = vweird.f32 %v4244
  %vm4251 = vmor %vm4249, %vm4250
  %v4252 = vsel %vm4251, %v4244, %v4248
  %v4253 = vand.u32 2147483647, %v4210
  %vm4254 = vcmp.eq.f32.partialorder %v4253, 8.507059e+37
  %v4255 = vand.u32 %v4210, 2147483648
  %v4256 = vor.u32 1.1754944e-38, %v4255
  %v4257 = vsel %vm4254, %v4256, %v4252
  %v4258 = vmul.f32 1.0, %v4257
  %v4259 = vrcp.pop %v4211
  %v4260 = vmul.f32 %v4211, %v4259
  %v4261 = vsub.f32 1.0, %v4260
  %v4262 = vmul.f32 %v4259, %v4261
  %v4263 = vadd.f32 %v4259, %v4262
  %vm4264 = vweird.f32 %v4211
  %vm4265 = vweird.f32 %v4259
  %vm4266 = vmor %vm4264, %vm4265
  %v4267 = vsel %vm4266, %v4259, %v4263
  %v4268 = vand.u32 2147483647, %v4211
  %vm4269 = vcmp.eq.f32.partialorder %v4268, 8.507059e+37
  %v4270 = vand.u32 %v4211, 2147483648
  %v4271 = vor.u32 1.1754944e-38, %v4270
  %v4272 = vsel %vm4269, %v4271, %v4267
  %v4273 = vmul.f32 1.0, %v4272
  %v4274 = vrcp.pop %v4212
  %v4275 = vmul.f32 %v4212, %v4274
  %v4276 = vsub.f32 1.0, %v4275
  %v4277 = vmul.f32 %v4274, %v4276
  %v4278 = vadd.f32 %v4274, %v4277
  %vm4279 = vweird.f32 %v4212
  %vm4280 = vweird.f32 %v4274
  %vm4281 = vmor %vm4279, %vm4280
  %v4282 = vsel %vm4281, %v4274, %v4278
  %v4283 = vand.u32 2147483647, %v4212
  %vm4284 = vcmp.eq.f32.partialorder %v4283, 8.507059e+37
  %v4285 = vand.u32 %v4212, 2147483648
  %v4286 = vor.u32 1.1754944e-38, %v4285
  %v4287 = vsel %vm4284, %v4286, %v4282
  %v4288 = vmul.f32 1.0, %v4287
  %v4289 = vrcp.pop %v4213
  %v4290 = vmul.f32 %v4213, %v4289
  %v4291 = vsub.f32 1.0, %v4290
  %v4292 = vmul.f32 %v4289, %v4291
  %v4293 = vadd.f32 %v4289, %v4292
  %vm4294 = vweird.f32 %v4213
  %vm4295 = vweird.f32 %v4289
  %vm4296 = vmor %vm4294, %vm4295
  %v4297 = vsel %vm4296, %v4289, %v4293
  %v4298 = vand.u32 2147483647, %v4213
  %vm4299 = vcmp.eq.f32.partialorder %v4298, 8.507059e+37
  %v4300 = vand.u32 %v4213, 2147483648
  %v4301 = vor.u32 1.1754944e-38, %v4300
  %v4302 = vsel %vm4299, %v4301, %v4297
  %v4303 = vmul.f32 1.0, %v4302
  %v4304 = vtanh.pop %v4188
  %v4305 = vtanh.pop %v4189
  %v4306 = vmul.f32 %v4258, %v2813
  %v4307 = vmul.f32 %v4273, %v2814
  %v4308 = vmul.f32 %v4228, %v4304
  %v4309 = vmul.f32 %v4243, %v4305
  %v4310 = vadd.f32 %v4306, %v4308
  %v4311 = vadd.f32 %v4307, %v4309
  %v4312 = vtanh.pop %v4310
  %v4313 = vtanh.pop %v4311
  %v4314 = vmul.f32 %v4288, %v4312
  %v4315 = vmul.f32 %v4303, %v4313
  %4318 = vst [vmem:[#allocation1] sm:$0xff] %v4314
  %4319 = vst [vmem:[#allocation1 + $0x9] sm:$0xff] %v4315
  %s4320 = scalar_lea.vmem [#allocation1], 1
  %v4321 = vld [vmem:[%s4320] ss:$9 sm:$0xff]
  %s4323 = scalar_lea.vmem [#allocation3], 1
  %4324 = vst.msk [vmem:[%s4323] ss:$8 sm:$0x3] %vm2829, %v4321
  %4325 = vst.msk [vmem:[%s4323] ss:$8 sm:$0x0] %vm2829, %v4321
  %v4326 = vpack.c.bf16 %v4314, %v4314
  %v4327 = vpack.c.bf16 %v4315, %v4315
  %4328 = vmatpush.bf16.msra.mxu0 %v3274
  %4329 = vmatpush.bf16.msra.mxu0 %v3266
  %4330 = vmatpush.bf16.msra.mxu0 %v3258
  %4331 = vmatpush.bf16.msra.mxu0 %v3250
  %4332 = vmatpush.bf16.msra.mxu0 %v3242
  %4333 = vmatpush.bf16.msra.mxu0 %v3234
  %4334 = vmatpush.bf16.msra.mxu0 %v3226
  %4335 = vmatpush.bf16.msra.mxu0 %v3218
  %4336 = vmatmul.bf16.gmra.mxu0 %v4326
  %v4337 = vpop.f32.mrf.mxu0
  %v4338 = vadd.f32 %v911, %v4337
  %v4339 = vpop.f32.mrf.mxu0
  %4340 = vdwg.mxu0
  %4341 = vmatpush.bf16.msra.mxu0 %v3338
  %4342 = vmatpush.bf16.msra.mxu0 %v3330
  %4343 = vmatpush.bf16.msra.mxu0 %v3322
  %4344 = vmatpush.bf16.msra.mxu0 %v3314
  %4345 = vmatpush.bf16.msra.mxu0 %v3306
  %4346 = vmatpush.bf16.msra.mxu0 %v3298
  %4347 = vmatpush.bf16.msra.mxu0 %v3290
  %4348 = vmatpush.bf16.msra.mxu0 %v3282
  %4349 = vmatmul.bf16.gmra.mxu0 %v4327
  %v4350 = vpop.f32.mrf.mxu0
  %v4351 = vadd.f32 %v4338, %v4350
  %v4352 = vpop.f32.mrf.mxu0
  %4353 = vdwg.mxu0
  %4354 = vmatpush.bf16.msra.mxu0 %v3275
  %4355 = vmatpush.bf16.msra.mxu0 %v3267
  %4356 = vmatpush.bf16.msra.mxu0 %v3259
  %4357 = vmatpush.bf16.msra.mxu0 %v3251
  %4358 = vmatpush.bf16.msra.mxu0 %v3243
  %4359 = vmatpush.bf16.msra.mxu0 %v3235
  %4360 = vmatpush.bf16.msra.mxu0 %v3227
  %4361 = vmatpush.bf16.msra.mxu0 %v3219
  %4362 = vmatmul.bf16.gmra.mxu0 %v4326
  %v4363 = vpop.f32.mrf.mxu0
  %v4364 = vadd.f32 %v912, %v4363
  %v4365 = vpop.f32.mrf.mxu0
  %4366 = vdwg.mxu0
  %4367 = vmatpush.bf16.msra.mxu0 %v3339
  %4368 = vmatpush.bf16.msra.mxu0 %v3331
  %4369 = vmatpush.bf16.msra.mxu0 %v3323
  %4370 = vmatpush.bf16.msra.mxu0 %v3315
  %4371 = vmatpush.bf16.msra.mxu0 %v3307
  %4372 = vmatpush.bf16.msra.mxu0 %v3299
  %4373 = vmatpush.bf16.msra.mxu0 %v3291
  %4374 = vmatpush.bf16.msra.mxu0 %v3283
  %4375 = vmatmul.bf16.gmra.mxu0 %v4327
  %v4376 = vpop.f32.mrf.mxu0
  %v4377 = vadd.f32 %v4364, %v4376
  %v4378 = vpop.f32.mrf.mxu0
  %4379 = vdwg.mxu0
  %4380 = vmatpush.bf16.msra.mxu0 %v3276
  %4381 = vmatpush.bf16.msra.mxu0 %v3268
  %4382 = vmatpush.bf16.msra.mxu0 %v3260
  %4383 = vmatpush.bf16.msra.mxu0 %v3252
  %4384 = vmatpush.bf16.msra.mxu0 %v3244
  %4385 = vmatpush.bf16.msra.mxu0 %v3236
  %4386 = vmatpush.bf16.msra.mxu0 %v3228
  %4387 = vmatpush.bf16.msra.mxu0 %v3220
  %4388 = vmatmul.bf16.gmra.mxu0 %v4326
  %v4389 = vpop.f32.mrf.mxu0
  %v4390 = vadd.f32 %v913, %v4389
  %v4391 = vpop.f32.mrf.mxu0
  %4392 = vdwg.mxu0
  %4393 = vmatpush.bf16.msra.mxu0 %v3340
  %4394 = vmatpush.bf16.msra.mxu0 %v3332
  %4395 = vmatpush.bf16.msra.mxu0 %v3324
  %4396 = vmatpush.bf16.msra.mxu0 %v3316
  %4397 = vmatpush.bf16.msra.mxu0 %v3308
  %4398 = vmatpush.bf16.msra.mxu0 %v3300
  %4399 = vmatpush.bf16.msra.mxu0 %v3292
  %4400 = vmatpush.bf16.msra.mxu0 %v3284
  %4401 = vmatmul.bf16.gmra.mxu0 %v4327
  %v4402 = vpop.f32.mrf.mxu0
  %v4403 = vadd.f32 %v4390, %v4402
  %v4404 = vpop.f32.mrf.mxu0
  %4405 = vdwg.mxu0
  %4406 = vmatpush.bf16.msra.mxu0 %v3277
  %4407 = vmatpush.bf16.msra.mxu0 %v3269
  %4408 = vmatpush.bf16.msra.mxu0 %v3261
  %4409 = vmatpush.bf16.msra.mxu0 %v3253
  %4410 = vmatpush.bf16.msra.mxu0 %v3245
  %4411 = vmatpush.bf16.msra.mxu0 %v3237
  %4412 = vmatpush.bf16.msra.mxu0 %v3229
  %4413 = vmatpush.bf16.msra.mxu0 %v3221
  %4414 = vmatmul.bf16.gmra.mxu0 %v4326
  %v4415 = vpop.f32.mrf.mxu0
  %v4416 = vadd.f32 %v914, %v4415
  %v4417 = vpop.f32.mrf.mxu0
  %4418 = vdwg.mxu0
  %4419 = vmatpush.bf16.msra.mxu0 %v3341
  %4420 = vmatpush.bf16.msra.mxu0 %v3333
  %4421 = vmatpush.bf16.msra.mxu0 %v3325
  %4422 = vmatpush.bf16.msra.mxu0 %v3317
  %4423 = vmatpush.bf16.msra.mxu0 %v3309
  %4424 = vmatpush.bf16.msra.mxu0 %v3301
  %4425 = vmatpush.bf16.msra.mxu0 %v3293
  %4426 = vmatpush.bf16.msra.mxu0 %v3285
  %4427 = vmatmul.bf16.gmra.mxu0 %v4327
  %v4428 = vpop.f32.mrf.mxu0
  %v4429 = vadd.f32 %v4416, %v4428
  %v4430 = vpop.f32.mrf.mxu0
  %4431 = vdwg.mxu0
  %4432 = vmatpush.bf16.msra.mxu0 %v3278
  %4433 = vmatpush.bf16.msra.mxu0 %v3270
  %4434 = vmatpush.bf16.msra.mxu0 %v3262
  %4435 = vmatpush.bf16.msra.mxu0 %v3254
  %4436 = vmatpush.bf16.msra.mxu0 %v3246
  %4437 = vmatpush.bf16.msra.mxu0 %v3238
  %4438 = vmatpush.bf16.msra.mxu0 %v3230
  %4439 = vmatpush.bf16.msra.mxu0 %v3222
  %4440 = vmatmul.bf16.gmra.mxu0 %v4326
  %v4441 = vpop.f32.mrf.mxu0
  %v4442 = vadd.f32 %v915, %v4441
  %v4443 = vpop.f32.mrf.mxu0
  %4444 = vdwg.mxu0
  %4445 = vmatpush.bf16.msra.mxu0 %v3342
  %4446 = vmatpush.bf16.msra.mxu0 %v3334
  %4447 = vmatpush.bf16.msra.mxu0 %v3326
  %4448 = vmatpush.bf16.msra.mxu0 %v3318
  %4449 = vmatpush.bf16.msra.mxu0 %v3310
  %4450 = vmatpush.bf16.msra.mxu0 %v3302
  %4451 = vmatpush.bf16.msra.mxu0 %v3294
  %4452 = vmatpush.bf16.msra.mxu0 %v3286
  %4453 = vmatmul.bf16.gmra.mxu0 %v4327
  %v4454 = vpop.f32.mrf.mxu0
  %v4455 = vadd.f32 %v4442, %v4454
  %v4456 = vpop.f32.mrf.mxu0
  %4457 = vdwg.mxu0
  %4458 = vmatpush.bf16.msra.mxu0 %v3279
  %4459 = vmatpush.bf16.msra.mxu0 %v3271
  %4460 = vmatpush.bf16.msra.mxu0 %v3263
  %4461 = vmatpush.bf16.msra.mxu0 %v3255
  %4462 = vmatpush.bf16.msra.mxu0 %v3247
  %4463 = vmatpush.bf16.msra.mxu0 %v3239
  %4464 = vmatpush.bf16.msra.mxu0 %v3231
  %4465 = vmatpush.bf16.msra.mxu0 %v3223
  %4466 = vmatmul.bf16.gmra.mxu0 %v4326
  %v4467 = vpop.f32.mrf.mxu0
  %v4468 = vadd.f32 %v916, %v4467
  %v4469 = vpop.f32.mrf.mxu0
  %4470 = vdwg.mxu0
  %4471 = vmatpush.bf16.msra.mxu0 %v3343
  %4472 = vmatpush.bf16.msra.mxu0 %v3335
  %4473 = vmatpush.bf16.msra.mxu0 %v3327
  %4474 = vmatpush.bf16.msra.mxu0 %v3319
  %4475 = vmatpush.bf16.msra.mxu0 %v3311
  %4476 = vmatpush.bf16.msra.mxu0 %v3303
  %4477 = vmatpush.bf16.msra.mxu0 %v3295
  %4478 = vmatpush.bf16.msra.mxu0 %v3287
  %4479 = vmatmul.bf16.gmra.mxu0 %v4327
  %v4480 = vpop.f32.mrf.mxu0
  %v4481 = vadd.f32 %v4468, %v4480
  %v4482 = vpop.f32.mrf.mxu0
  %4483 = vdwg.mxu0
  %4484 = vmatpush.bf16.msra.mxu0 %v3280
  %4485 = vmatpush.bf16.msra.mxu0 %v3272
  %4486 = vmatpush.bf16.msra.mxu0 %v3264
  %4487 = vmatpush.bf16.msra.mxu0 %v3256
  %4488 = vmatpush.bf16.msra.mxu0 %v3248
  %4489 = vmatpush.bf16.msra.mxu0 %v3240
  %4490 = vmatpush.bf16.msra.mxu0 %v3232
  %4491 = vmatpush.bf16.msra.mxu0 %v3224
  %4492 = vmatmul.bf16.gmra.mxu0 %v4326
  %v4493 = vpop.f32.mrf.mxu0
  %v4494 = vadd.f32 %v917, %v4493
  %v4495 = vpop.f32.mrf.mxu0
  %4496 = vdwg.mxu0
  %4497 = vmatpush.bf16.msra.mxu0 %v3344
  %4498 = vmatpush.bf16.msra.mxu0 %v3336
  %4499 = vmatpush.bf16.msra.mxu0 %v3328
  %4500 = vmatpush.bf16.msra.mxu0 %v3320
  %4501 = vmatpush.bf16.msra.mxu0 %v3312
  %4502 = vmatpush.bf16.msra.mxu0 %v3304
  %4503 = vmatpush.bf16.msra.mxu0 %v3296
  %4504 = vmatpush.bf16.msra.mxu0 %v3288
  %4505 = vmatmul.bf16.gmra.mxu0 %v4327
  %v4506 = vpop.f32.mrf.mxu0
  %v4507 = vadd.f32 %v4494, %v4506
  %v4508 = vpop.f32.mrf.mxu0
  %4509 = vdwg.mxu0
  %4510 = vmatpush.bf16.msra.mxu0 %v3281
  %4511 = vmatpush.bf16.msra.mxu0 %v3273
  %4512 = vmatpush.bf16.msra.mxu0 %v3265
  %4513 = vmatpush.bf16.msra.mxu0 %v3257
  %4514 = vmatpush.bf16.msra.mxu0 %v3249
  %4515 = vmatpush.bf16.msra.mxu0 %v3241
  %4516 = vmatpush.bf16.msra.mxu0 %v3233
  %4517 = vmatpush.bf16.msra.mxu0 %v3225
  %4518 = vmatmul.bf16.gmra.mxu0 %v4326
  %v4519 = vpop.f32.mrf.mxu0
  %v4520 = vadd.f32 %v918, %v4519
  %v4521 = vpop.f32.mrf.mxu0
  %4522 = vdwg.mxu0
  %4523 = vmatpush.bf16.msra.mxu0 %v3345
  %4524 = vmatpush.bf16.msra.mxu0 %v3337
  %4525 = vmatpush.bf16.msra.mxu0 %v3329
  %4526 = vmatpush.bf16.msra.mxu0 %v3321
  %4527 = vmatpush.bf16.msra.mxu0 %v3313
  %4528 = vmatpush.bf16.msra.mxu0 %v3305
  %4529 = vmatpush.bf16.msra.mxu0 %v3297
  %4530 = vmatpush.bf16.msra.mxu0 %v3289
  %4531 = vmatmul.bf16.gmra.mxu0 %v4327
  %v4532 = vpop.f32.mrf.mxu0
  %v4533 = vadd.f32 %v4520, %v4532
  %v4534 = vpop.f32.mrf.mxu0
  %4535 = vdwg.mxu0
  %v4536 = vld [vmem:[%s429] sm:$0xff]
  %v4537 = vld [vmem:[%s429 + $0x8] sm:$0xff]
  %v4546 = vrot.slane %v3815, 6
  %v4547 = vrot.slane %v3841, 4
  %v4548 = vrot.slane %v3867, 2
  %v4549 = vrot.slane %v3919, 6
  %v4550 = vrot.slane %v3945, 4
  %v4551 = vrot.slane %v3971, 2
  %v4552 = vsel %vm385, %v3789, %v4546
  %v4553 = vsel %vm387, %v4547, %v4548
  %v4554 = vsel %vm389, %v4552, %v4553
  %v4555 = vsel %vm385, %v3893, %v4549
  %v4556 = vsel %vm387, %v4550, %v4551
  %v4557 = vsel %vm389, %v4555, %v4556
  %v4560 = vadd.f32 %v4536, %v4554
  %v4561 = vadd.f32 %v4537, %v4557
  %v4562 = vxor.u32 %v4560, 2147483648
  %v4563 = vxor.u32 %v4561, 2147483648
  %v4564 = vmul.f32 %v4562, 1.442695
  %v4565 = vpow.pop %v4564
  %v4566 = vmul.f32 %v4563, 1.442695
  %v4567 = vpow.pop %v4566
  %v4568 = vadd.f32 %v4565, 1.0
  %v4569 = vadd.f32 %v4567, 1.0
  %v4570 = vrcp.pop %v4568
  %v4571 = vmul.f32 %v4568, %v4570
  %v4572 = vsub.f32 1.0, %v4571
  %v4573 = vmul.f32 %v4570, %v4572
  %v4574 = vadd.f32 %v4570, %v4573
  %vm4575 = vweird.f32 %v4568
  %vm4576 = vweird.f32 %v4570
  %vm4577 = vmor %vm4575, %vm4576
  %v4578 = vsel %vm4577, %v4570, %v4574
  %v4579 = vand.u32 2147483647, %v4568
  %vm4580 = vcmp.eq.f32.partialorder %v4579, 8.507059e+37
  %v4581 = vand.u32 %v4568, 2147483648
  %v4582 = vor.u32 1.1754944e-38, %v4581
  %v4583 = vsel %vm4580, %v4582, %v4578
  %v4584 = vmul.f32 1.0, %v4583
  %v4585 = vrcp.pop %v4569
  %v4586 = vmul.f32 %v4569, %v4585
  %v4587 = vsub.f32 1.0, %v4586
  %v4588 = vmul.f32 %v4585, %v4587
  %v4589 = vadd.f32 %v4585, %v4588
  %vm4590 = vweird.f32 %v4569
  %vm4591 = vweird.f32 %v4585
  %vm4592 = vmor %vm4590, %vm4591
  %v4593 = vsel %vm4592, %v4585, %v4589
  %v4594 = vand.u32 2147483647, %v4569
  %vm4595 = vcmp.eq.f32.partialorder %v4594, 8.507059e+37
  %v4596 = vand.u32 %v4569, 2147483648
  %v4597 = vor.u32 1.1754944e-38, %v4596
  %v4598 = vsel %vm4595, %v4597, %v4593
  %v4599 = vmul.f32 1.0, %v4598
  %v4601 = vrot.slane %v4561, 4
  %v4603 = vtanh.pop %v4601
  %v4605 = vrot.slane %v4584, 4
  %v4607 = vmul.f32 %v4605, %v3755
  %v4608 = vmul.f32 %v4584, %v4603
  %v4609 = vadd.f32 %v4607, %v4608
  %v4610 = vtanh.pop %v4609
  %v4611 = vmul.f32 %v4599, %v4610
  %4613 = vst [vmem:[#allocation1] ss:$4 sm:$0xff] %v4611
  %v4614 = vld.sshfl [vmem:[#allocation1] sm:$0xff pattern:$0x73625140]
  %v4615 = vld.sshfl [vmem:[#allocation1 + $0x8] sm:$0xff pattern:$0x73625140]
  %v4618 = vpack.c.bf16 %v4614, %v4614
  %v4619 = vpack.c.bf16 %v4615, %v4615
  %4620 = vmatpush.bf16.msra.mxu0 %v1429
  %4621 = vmatpush.bf16.msra.mxu0 %v1421
  %4622 = vmatpush.bf16.msra.mxu0 %v1413
  %4623 = vmatpush.bf16.msra.mxu0 %v1405
  %4624 = vmatpush.bf16.msra.mxu0 %v1397
  %4625 = vmatpush.bf16.msra.mxu0 %v1389
  %4626 = vmatpush.bf16.msra.mxu0 %v1381
  %4627 = vmatpush.bf16.msra.mxu0 %v1373
  %4628 = vmatmul.bf16.gmra.mxu0 %v4618
  %v4629 = vpop.f32.mrf.mxu0
  %v4630 = vadd.f32 0.0, %v4629
  %v4631 = vpop.f32.mrf.mxu0
  %4632 = vdwg.mxu0
  %4633 = vmatpush.bf16.msra.mxu0 %v1493
  %4634 = vmatpush.bf16.msra.mxu0 %v1485
  %4635 = vmatpush.bf16.msra.mxu0 %v1477
  %4636 = vmatpush.bf16.msra.mxu0 %v1469
  %4637 = vmatpush.bf16.msra.mxu0 %v1461
  %4638 = vmatpush.bf16.msra.mxu0 %v1453
  %4639 = vmatpush.bf16.msra.mxu0 %v1445
  %4640 = vmatpush.bf16.msra.mxu0 %v1437
  %4641 = vmatmul.bf16.gmra.mxu0 %v4619
  %v4642 = vpop.f32.mrf.mxu0
  %v4643 = vadd.f32 %v4630, %v4642
  %v4644 = vpop.f32.mrf.mxu0
  %4645 = vdwg.mxu0
  %4646 = vmatpush.bf16.msra.mxu0 %v1430
  %4647 = vmatpush.bf16.msra.mxu0 %v1422
  %4648 = vmatpush.bf16.msra.mxu0 %v1414
  %4649 = vmatpush.bf16.msra.mxu0 %v1406
  %4650 = vmatpush.bf16.msra.mxu0 %v1398
  %4651 = vmatpush.bf16.msra.mxu0 %v1390
  %4652 = vmatpush.bf16.msra.mxu0 %v1382
  %4653 = vmatpush.bf16.msra.mxu0 %v1374
  %4654 = vmatmul.bf16.gmra.mxu0 %v4618
  %v4655 = vpop.f32.mrf.mxu0
  %v4656 = vadd.f32 0.0, %v4655
  %v4657 = vpop.f32.mrf.mxu0
  %4658 = vdwg.mxu0
  %4659 = vmatpush.bf16.msra.mxu0 %v1494
  %4660 = vmatpush.bf16.msra.mxu0 %v1486
  %4661 = vmatpush.bf16.msra.mxu0 %v1478
  %4662 = vmatpush.bf16.msra.mxu0 %v1470
  %4663 = vmatpush.bf16.msra.mxu0 %v1462
  %4664 = vmatpush.bf16.msra.mxu0 %v1454
  %4665 = vmatpush.bf16.msra.mxu0 %v1446
  %4666 = vmatpush.bf16.msra.mxu0 %v1438
  %4667 = vmatmul.bf16.gmra.mxu0 %v4619
  %v4668 = vpop.f32.mrf.mxu0
  %v4669 = vadd.f32 %v4656, %v4668
  %v4670 = vpop.f32.mrf.mxu0
  %4671 = vdwg.mxu0
  %4672 = vmatpush.bf16.msra.mxu0 %v1431
  %4673 = vmatpush.bf16.msra.mxu0 %v1423
  %4674 = vmatpush.bf16.msra.mxu0 %v1415
  %4675 = vmatpush.bf16.msra.mxu0 %v1407
  %4676 = vmatpush.bf16.msra.mxu0 %v1399
  %4677 = vmatpush.bf16.msra.mxu0 %v1391
  %4678 = vmatpush.bf16.msra.mxu0 %v1383
  %4679 = vmatpush.bf16.msra.mxu0 %v1375
  %4680 = vmatmul.bf16.gmra.mxu0 %v4618
  %v4681 = vpop.f32.mrf.mxu0
  %v4682 = vadd.f32 0.0, %v4681
  %v4683 = vpop.f32.mrf.mxu0
  %4684 = vdwg.mxu0
  %4685 = vmatpush.bf16.msra.mxu0 %v1495
  %4686 = vmatpush.bf16.msra.mxu0 %v1487
  %4687 = vmatpush.bf16.msra.mxu0 %v1479
  %4688 = vmatpush.bf16.msra.mxu0 %v1471
  %4689 = vmatpush.bf16.msra.mxu0 %v1463
  %4690 = vmatpush.bf16.msra.mxu0 %v1455
  %4691 = vmatpush.bf16.msra.mxu0 %v1447
  %4692 = vmatpush.bf16.msra.mxu0 %v1439
  %4693 = vmatmul.bf16.gmra.mxu0 %v4619
  %v4694 = vpop.f32.mrf.mxu0
  %v4695 = vadd.f32 %v4682, %v4694
  %v4696 = vpop.f32.mrf.mxu0
  %4697 = vdwg.mxu0
  %4698 = vmatpush.bf16.msra.mxu0 %v1432
  %4699 = vmatpush.bf16.msra.mxu0 %v1424
  %4700 = vmatpush.bf16.msra.mxu0 %v1416
  %4701 = vmatpush.bf16.msra.mxu0 %v1408
  %4702 = vmatpush.bf16.msra.mxu0 %v1400
  %4703 = vmatpush.bf16.msra.mxu0 %v1392
  %4704 = vmatpush.bf16.msra.mxu0 %v1384
  %4705 = vmatpush.bf16.msra.mxu0 %v1376
  %4706 = vmatmul.bf16.gmra.mxu0 %v4618
  %v4707 = vpop.f32.mrf.mxu0
  %v4708 = vadd.f32 0.0, %v4707
  %v4709 = vpop.f32.mrf.mxu0
  %4710 = vdwg.mxu0
  %4711 = vmatpush.bf16.msra.mxu0 %v1496
  %4712 = vmatpush.bf16.msra.mxu0 %v1488
  %4713 = vmatpush.bf16.msra.mxu0 %v1480
  %4714 = vmatpush.bf16.msra.mxu0 %v1472
  %4715 = vmatpush.bf16.msra.mxu0 %v1464
  %4716 = vmatpush.bf16.msra.mxu0 %v1456
  %4717 = vmatpush.bf16.msra.mxu0 %v1448
  %4718 = vmatpush.bf16.msra.mxu0 %v1440
  %4719 = vmatmul.bf16.gmra.mxu0 %v4619
  %v4720 = vpop.f32.mrf.mxu0
  %v4721 = vadd.f32 %v4708, %v4720
  %v4722 = vpop.f32.mrf.mxu0
  %4723 = vdwg.mxu0
  %4724 = vmatpush.bf16.msra.mxu0 %v1433
  %4725 = vmatpush.bf16.msra.mxu0 %v1425
  %4726 = vmatpush.bf16.msra.mxu0 %v1417
  %4727 = vmatpush.bf16.msra.mxu0 %v1409
  %4728 = vmatpush.bf16.msra.mxu0 %v1401
  %4729 = vmatpush.bf16.msra.mxu0 %v1393
  %4730 = vmatpush.bf16.msra.mxu0 %v1385
  %4731 = vmatpush.bf16.msra.mxu0 %v1377
  %4732 = vmatmul.bf16.gmra.mxu0 %v4618
  %v4733 = vpop.f32.mrf.mxu0
  %v4734 = vadd.f32 0.0, %v4733
  %v4735 = vpop.f32.mrf.mxu0
  %4736 = vdwg.mxu0
  %4737 = vmatpush.bf16.msra.mxu0 %v1497
  %4738 = vmatpush.bf16.msra.mxu0 %v1489
  %4739 = vmatpush.bf16.msra.mxu0 %v1481
  %4740 = vmatpush.bf16.msra.mxu0 %v1473
  %4741 = vmatpush.bf16.msra.mxu0 %v1465
  %4742 = vmatpush.bf16.msra.mxu0 %v1457
  %4743 = vmatpush.bf16.msra.mxu0 %v1449
  %4744 = vmatpush.bf16.msra.mxu0 %v1441
  %4745 = vmatmul.bf16.gmra.mxu0 %v4619
  %v4746 = vpop.f32.mrf.mxu0
  %v4747 = vadd.f32 %v4734, %v4746
  %v4748 = vpop.f32.mrf.mxu0
  %4749 = vdwg.mxu0
  %4750 = vmatpush.bf16.msra.mxu0 %v1434
  %4751 = vmatpush.bf16.msra.mxu0 %v1426
  %4752 = vmatpush.bf16.msra.mxu0 %v1418
  %4753 = vmatpush.bf16.msra.mxu0 %v1410
  %4754 = vmatpush.bf16.msra.mxu0 %v1402
  %4755 = vmatpush.bf16.msra.mxu0 %v1394
  %4756 = vmatpush.bf16.msra.mxu0 %v1386
  %4757 = vmatpush.bf16.msra.mxu0 %v1378
  %4758 = vmatmul.bf16.gmra.mxu0 %v4618
  %v4759 = vpop.f32.mrf.mxu0
  %v4760 = vadd.f32 0.0, %v4759
  %v4761 = vpop.f32.mrf.mxu0
  %4762 = vdwg.mxu0
  %4763 = vmatpush.bf16.msra.mxu0 %v1498
  %4764 = vmatpush.bf16.msra.mxu0 %v1490
  %4765 = vmatpush.bf16.msra.mxu0 %v1482
  %4766 = vmatpush.bf16.msra.mxu0 %v1474
  %4767 = vmatpush.bf16.msra.mxu0 %v1466
  %4768 = vmatpush.bf16.msra.mxu0 %v1458
  %4769 = vmatpush.bf16.msra.mxu0 %v1450
  %4770 = vmatpush.bf16.msra.mxu0 %v1442
  %4771 = vmatmul.bf16.gmra.mxu0 %v4619
  %v4772 = vpop.f32.mrf.mxu0
  %v4773 = vadd.f32 %v4760, %v4772
  %v4774 = vpop.f32.mrf.mxu0
  %4775 = vdwg.mxu0
  %4776 = vmatpush.bf16.msra.mxu0 %v1435
  %4777 = vmatpush.bf16.msra.mxu0 %v1427
  %4778 = vmatpush.bf16.msra.mxu0 %v1419
  %4779 = vmatpush.bf16.msra.mxu0 %v1411
  %4780 = vmatpush.bf16.msra.mxu0 %v1403
  %4781 = vmatpush.bf16.msra.mxu0 %v1395
  %4782 = vmatpush.bf16.msra.mxu0 %v1387
  %4783 = vmatpush.bf16.msra.mxu0 %v1379
  %4784 = vmatmul.bf16.gmra.mxu0 %v4618
  %v4785 = vpop.f32.mrf.mxu0
  %v4786 = vadd.f32 0.0, %v4785
  %v4787 = vpop.f32.mrf.mxu0
  %4788 = vdwg.mxu0
  %4789 = vmatpush.bf16.msra.mxu0 %v1499
  %4790 = vmatpush.bf16.msra.mxu0 %v1491
  %4791 = vmatpush.bf16.msra.mxu0 %v1483
  %4792 = vmatpush.bf16.msra.mxu0 %v1475
  %4793 = vmatpush.bf16.msra.mxu0 %v1467
  %4794 = vmatpush.bf16.msra.mxu0 %v1459
  %4795 = vmatpush.bf16.msra.mxu0 %v1451
  %4796 = vmatpush.bf16.msra.mxu0 %v1443
  %4797 = vmatmul.bf16.gmra.mxu0 %v4619
  %v4798 = vpop.f32.mrf.mxu0
  %v4799 = vadd.f32 %v4786, %v4798
  %v4800 = vpop.f32.mrf.mxu0
  %4801 = vdwg.mxu0
  %4802 = vmatpush.bf16.msra.mxu0 %v1436
  %4803 = vmatpush.bf16.msra.mxu0 %v1428
  %4804 = vmatpush.bf16.msra.mxu0 %v1420
  %4805 = vmatpush.bf16.msra.mxu0 %v1412
  %4806 = vmatpush.bf16.msra.mxu0 %v1404
  %4807 = vmatpush.bf16.msra.mxu0 %v1396
  %4808 = vmatpush.bf16.msra.mxu0 %v1388
  %4809 = vmatpush.bf16.msra.mxu0 %v1380
  %4810 = vmatmul.bf16.gmra.mxu0 %v4618
  %v4811 = vpop.f32.mrf.mxu0
  %v4812 = vadd.f32 0.0, %v4811
  %v4813 = vpop.f32.mrf.mxu0
  %4814 = vdwg.mxu0
  %4815 = vmatpush.bf16.msra.mxu0 %v1500
  %4816 = vmatpush.bf16.msra.mxu0 %v1492
  %4817 = vmatpush.bf16.msra.mxu0 %v1484
  %4818 = vmatpush.bf16.msra.mxu0 %v1476
  %4819 = vmatpush.bf16.msra.mxu0 %v1468
  %4820 = vmatpush.bf16.msra.mxu0 %v1460
  %4821 = vmatpush.bf16.msra.mxu0 %v1452
  %4822 = vmatpush.bf16.msra.mxu0 %v1444
  %4823 = vmatmul.bf16.gmra.mxu0 %v4619
  %v4824 = vpop.f32.mrf.mxu0
  %v4825 = vadd.f32 %v4812, %v4824
  %v4826 = vpop.f32.mrf.mxu0
  %4827 = vdwg.mxu0
  %4828 = vmatpush.bf16.msra.mxu0 %v2277
  %4829 = vmatpush.bf16.msra.mxu0 %v2269
  %4830 = vmatpush.bf16.msra.mxu0 %v2261
  %4831 = vmatpush.bf16.msra.mxu0 %v2253
  %4832 = vmatpush.bf16.msra.mxu0 %v2245
  %4833 = vmatpush.bf16.msra.mxu0 %v2237
  %4834 = vmatpush.bf16.msra.mxu0 %v2229
  %4835 = vmatpush.bf16.msra.mxu0 %v2221
  %4836 = vmatmul.bf16.gmra.mxu0 %v4618
  %v4837 = vpop.f32.mrf.mxu0
  %v4838 = vadd.f32 0.0, %v4837
  %v4839 = vpop.f32.mrf.mxu0
  %4840 = vdwg.mxu0
  %4841 = vmatpush.bf16.msra.mxu0 %v2341
  %4842 = vmatpush.bf16.msra.mxu0 %v2333
  %4843 = vmatpush.bf16.msra.mxu0 %v2325
  %4844 = vmatpush.bf16.msra.mxu0 %v2317
  %4845 = vmatpush.bf16.msra.mxu0 %v2309
  %4846 = vmatpush.bf16.msra.mxu0 %v2301
  %4847 = vmatpush.bf16.msra.mxu0 %v2293
  %4848 = vmatpush.bf16.msra.mxu0 %v2285
  %4849 = vmatmul.bf16.gmra.mxu0 %v4619
  %v4850 = vpop.f32.mrf.mxu0
  %v4851 = vadd.f32 %v4838, %v4850
  %v4852 = vpop.f32.mrf.mxu0
  %4853 = vdwg.mxu0
  %4854 = vmatpush.bf16.msra.mxu0 %v2278
  %4855 = vmatpush.bf16.msra.mxu0 %v2270
  %4856 = vmatpush.bf16.msra.mxu0 %v2262
  %4857 = vmatpush.bf16.msra.mxu0 %v2254
  %4858 = vmatpush.bf16.msra.mxu0 %v2246
  %4859 = vmatpush.bf16.msra.mxu0 %v2238
  %4860 = vmatpush.bf16.msra.mxu0 %v2230
  %4861 = vmatpush.bf16.msra.mxu0 %v2222
  %4862 = vmatmul.bf16.gmra.mxu0 %v4618
  %v4863 = vpop.f32.mrf.mxu0
  %v4864 = vadd.f32 0.0, %v4863
  %v4865 = vpop.f32.mrf.mxu0
  %4866 = vdwg.mxu0
  %4867 = vmatpush.bf16.msra.mxu0 %v2342
  %4868 = vmatpush.bf16.msra.mxu0 %v2334
  %4869 = vmatpush.bf16.msra.mxu0 %v2326
  %4870 = vmatpush.bf16.msra.mxu0 %v2318
  %4871 = vmatpush.bf16.msra.mxu0 %v2310
  %4872 = vmatpush.bf16.msra.mxu0 %v2302
  %4873 = vmatpush.bf16.msra.mxu0 %v2294
  %4874 = vmatpush.bf16.msra.mxu0 %v2286
  %4875 = vmatmul.bf16.gmra.mxu0 %v4619
  %v4876 = vpop.f32.mrf.mxu0
  %v4877 = vadd.f32 %v4864, %v4876
  %v4878 = vpop.f32.mrf.mxu0
  %4879 = vdwg.mxu0
  %4880 = vmatpush.bf16.msra.mxu0 %v2279
  %4881 = vmatpush.bf16.msra.mxu0 %v2271
  %4882 = vmatpush.bf16.msra.mxu0 %v2263
  %4883 = vmatpush.bf16.msra.mxu0 %v2255
  %4884 = vmatpush.bf16.msra.mxu0 %v2247
  %4885 = vmatpush.bf16.msra.mxu0 %v2239
  %4886 = vmatpush.bf16.msra.mxu0 %v2231
  %4887 = vmatpush.bf16.msra.mxu0 %v2223
  %4888 = vmatmul.bf16.gmra.mxu0 %v4618
  %v4889 = vpop.f32.mrf.mxu0
  %v4890 = vadd.f32 0.0, %v4889
  %v4891 = vpop.f32.mrf.mxu0
  %4892 = vdwg.mxu0
  %4893 = vmatpush.bf16.msra.mxu0 %v2343
  %4894 = vmatpush.bf16.msra.mxu0 %v2335
  %4895 = vmatpush.bf16.msra.mxu0 %v2327
  %4896 = vmatpush.bf16.msra.mxu0 %v2319
  %4897 = vmatpush.bf16.msra.mxu0 %v2311
  %4898 = vmatpush.bf16.msra.mxu0 %v2303
  %4899 = vmatpush.bf16.msra.mxu0 %v2295
  %4900 = vmatpush.bf16.msra.mxu0 %v2287
  %4901 = vmatmul.bf16.gmra.mxu0 %v4619
  %v4902 = vpop.f32.mrf.mxu0
  %v4903 = vadd.f32 %v4890, %v4902
  %v4904 = vpop.f32.mrf.mxu0
  %4905 = vdwg.mxu0
  %4906 = vmatpush.bf16.msra.mxu0 %v2280
  %4907 = vmatpush.bf16.msra.mxu0 %v2272
  %4908 = vmatpush.bf16.msra.mxu0 %v2264
  %4909 = vmatpush.bf16.msra.mxu0 %v2256
  %4910 = vmatpush.bf16.msra.mxu0 %v2248
  %4911 = vmatpush.bf16.msra.mxu0 %v2240
  %4912 = vmatpush.bf16.msra.mxu0 %v2232
  %4913 = vmatpush.bf16.msra.mxu0 %v2224
  %4914 = vmatmul.bf16.gmra.mxu0 %v4618
  %v4915 = vpop.f32.mrf.mxu0
  %v4916 = vadd.f32 0.0, %v4915
  %v4917 = vpop.f32.mrf.mxu0
  %4918 = vdwg.mxu0
  %4919 = vmatpush.bf16.msra.mxu0 %v2344
  %4920 = vmatpush.bf16.msra.mxu0 %v2336
  %4921 = vmatpush.bf16.msra.mxu0 %v2328
  %4922 = vmatpush.bf16.msra.mxu0 %v2320
  %4923 = vmatpush.bf16.msra.mxu0 %v2312
  %4924 = vmatpush.bf16.msra.mxu0 %v2304
  %4925 = vmatpush.bf16.msra.mxu0 %v2296
  %4926 = vmatpush.bf16.msra.mxu0 %v2288
  %4927 = vmatmul.bf16.gmra.mxu0 %v4619
  %v4928 = vpop.f32.mrf.mxu0
  %v4929 = vadd.f32 %v4916, %v4928
  %v4930 = vpop.f32.mrf.mxu0
  %4931 = vdwg.mxu0
  %4932 = vmatpush.bf16.msra.mxu0 %v2281
  %4933 = vmatpush.bf16.msra.mxu0 %v2273
  %4934 = vmatpush.bf16.msra.mxu0 %v2265
  %4935 = vmatpush.bf16.msra.mxu0 %v2257
  %4936 = vmatpush.bf16.msra.mxu0 %v2249
  %4937 = vmatpush.bf16.msra.mxu0 %v2241
  %4938 = vmatpush.bf16.msra.mxu0 %v2233
  %4939 = vmatpush.bf16.msra.mxu0 %v2225
  %4940 = vmatmul.bf16.gmra.mxu0 %v4618
  %v4941 = vpop.f32.mrf.mxu0
  %v4942 = vadd.f32 0.0, %v4941
  %v4943 = vpop.f32.mrf.mxu0
  %4944 = vdwg.mxu0
  %4945 = vmatpush.bf16.msra.mxu0 %v2345
  %4946 = vmatpush.bf16.msra.mxu0 %v2337
  %4947 = vmatpush.bf16.msra.mxu0 %v2329
  %4948 = vmatpush.bf16.msra.mxu0 %v2321
  %4949 = vmatpush.bf16.msra.mxu0 %v2313
  %4950 = vmatpush.bf16.msra.mxu0 %v2305
  %4951 = vmatpush.bf16.msra.mxu0 %v2297
  %4952 = vmatpush.bf16.msra.mxu0 %v2289
  %4953 = vmatmul.bf16.gmra.mxu0 %v4619
  %v4954 = vpop.f32.mrf.mxu0
  %v4955 = vadd.f32 %v4942, %v4954
  %v4956 = vpop.f32.mrf.mxu0
  %4957 = vdwg.mxu0
  %4958 = vmatpush.bf16.msra.mxu0 %v2282
  %4959 = vmatpush.bf16.msra.mxu0 %v2274
  %4960 = vmatpush.bf16.msra.mxu0 %v2266
  %4961 = vmatpush.bf16.msra.mxu0 %v2258
  %4962 = vmatpush.bf16.msra.mxu0 %v2250
  %4963 = vmatpush.bf16.msra.mxu0 %v2242
  %4964 = vmatpush.bf16.msra.mxu0 %v2234
  %4965 = vmatpush.bf16.msra.mxu0 %v2226
  %4966 = vmatmul.bf16.gmra.mxu0 %v4618
  %v4967 = vpop.f32.mrf.mxu0
  %v4968 = vadd.f32 0.0, %v4967
  %v4969 = vpop.f32.mrf.mxu0
  %4970 = vdwg.mxu0
  %4971 = vmatpush.bf16.msra.mxu0 %v2346
  %4972 = vmatpush.bf16.msra.mxu0 %v2338
  %4973 = vmatpush.bf16.msra.mxu0 %v2330
  %4974 = vmatpush.bf16.msra.mxu0 %v2322
  %4975 = vmatpush.bf16.msra.mxu0 %v2314
  %4976 = vmatpush.bf16.msra.mxu0 %v2306
  %4977 = vmatpush.bf16.msra.mxu0 %v2298
  %4978 = vmatpush.bf16.msra.mxu0 %v2290
  %4979 = vmatmul.bf16.gmra.mxu0 %v4619
  %v4980 = vpop.f32.mrf.mxu0
  %v4981 = vadd.f32 %v4968, %v4980
  %v4982 = vpop.f32.mrf.mxu0
  %4983 = vdwg.mxu0
  %4984 = vmatpush.bf16.msra.mxu0 %v2283
  %4985 = vmatpush.bf16.msra.mxu0 %v2275
  %4986 = vmatpush.bf16.msra.mxu0 %v2267
  %4987 = vmatpush.bf16.msra.mxu0 %v2259
  %4988 = vmatpush.bf16.msra.mxu0 %v2251
  %4989 = vmatpush.bf16.msra.mxu0 %v2243
  %4990 = vmatpush.bf16.msra.mxu0 %v2235
  %4991 = vmatpush.bf16.msra.mxu0 %v2227
  %4992 = vmatmul.bf16.gmra.mxu0 %v4618
  %v4993 = vpop.f32.mrf.mxu0
  %v4994 = vadd.f32 0.0, %v4993
  %v4995 = vpop.f32.mrf.mxu0
  %4996 = vdwg.mxu0
  %4997 = vmatpush.bf16.msra.mxu0 %v2347
  %4998 = vmatpush.bf16.msra.mxu0 %v2339
  %4999 = vmatpush.bf16.msra.mxu0 %v2331
  %5000 = vmatpush.bf16.msra.mxu0 %v2323
  %5001 = vmatpush.bf16.msra.mxu0 %v2315
  %5002 = vmatpush.bf16.msra.mxu0 %v2307
  %5003 = vmatpush.bf16.msra.mxu0 %v2299
  %5004 = vmatpush.bf16.msra.mxu0 %v2291
  %5005 = vmatmul.bf16.gmra.mxu0 %v4619
  %v5006 = vpop.f32.mrf.mxu0
  %v5007 = vadd.f32 %v4994, %v5006
  %v5008 = vpop.f32.mrf.mxu0
  %5009 = vdwg.mxu0
  %5010 = vmatpush.bf16.msra.mxu0 %v2284
  %5011 = vmatpush.bf16.msra.mxu0 %v2276
  %5012 = vmatpush.bf16.msra.mxu0 %v2268
  %5013 = vmatpush.bf16.msra.mxu0 %v2260
  %5014 = vmatpush.bf16.msra.mxu0 %v2252
  %5015 = vmatpush.bf16.msra.mxu0 %v2244
  %5016 = vmatpush.bf16.msra.mxu0 %v2236
  %5017 = vmatpush.bf16.msra.mxu0 %v2228
  %5018 = vmatmul.bf16.gmra.mxu0 %v4618
  %v5019 = vpop.f32.mrf.mxu0
  %v5020 = vadd.f32 0.0, %v5019
  %v5021 = vpop.f32.mrf.mxu0
  %5022 = vdwg.mxu0
  %5023 = vmatpush.bf16.msra.mxu0 %v2348
  %5024 = vmatpush.bf16.msra.mxu0 %v2340
  %5025 = vmatpush.bf16.msra.mxu0 %v2332
  %5026 = vmatpush.bf16.msra.mxu0 %v2324
  %5027 = vmatpush.bf16.msra.mxu0 %v2316
  %5028 = vmatpush.bf16.msra.mxu0 %v2308
  %5029 = vmatpush.bf16.msra.mxu0 %v2300
  %5030 = vmatpush.bf16.msra.mxu0 %v2292
  %5031 = vmatmul.bf16.gmra.mxu0 %v4619
  %v5032 = vpop.f32.mrf.mxu0
  %v5033 = vadd.f32 %v5020, %v5032
  %v5034 = vpop.f32.mrf.mxu0
  %5035 = vdwg.mxu0
  %v5036 = vadd.f32 %v4351, %v4851
  %v5037 = vadd.f32 %v4377, %v4877
  %v5038 = vadd.f32 %v4403, %v4903
  %v5039 = vadd.f32 %v4429, %v4929
  %v5040 = vadd.f32 %v4455, %v4955
  %v5041 = vadd.f32 %v4481, %v4981
  %v5042 = vadd.f32 %v4507, %v5007
  %v5043 = vadd.f32 %v4533, %v5033
  %v5044 = vxor.u32 %v5036, 2147483648
  %v5045 = vxor.u32 %v5037, 2147483648
  %v5046 = vxor.u32 %v5038, 2147483648
  %v5047 = vxor.u32 %v5039, 2147483648
  %v5048 = vxor.u32 %v5040, 2147483648
  %v5049 = vxor.u32 %v5041, 2147483648
  %v5050 = vmul.f32 %v5044, 1.442695
  %v5051 = vpow.pop %v5050
  %v5052 = vmul.f32 %v5045, 1.442695
  %v5053 = vpow.pop %v5052
  %v5054 = vmul.f32 %v5046, 1.442695
  %v5055 = vpow.pop %v5054
  %v5056 = vmul.f32 %v5047, 1.442695
  %v5057 = vpow.pop %v5056
  %v5058 = vmul.f32 %v5048, 1.442695
  %v5059 = vpow.pop %v5058
  %v5060 = vmul.f32 %v5049, 1.442695
  %v5061 = vpow.pop %v5060
  %v5062 = vadd.f32 %v5051, 1.0
  %v5063 = vadd.f32 %v5053, 1.0
  %v5064 = vadd.f32 %v5055, 1.0
  %v5065 = vadd.f32 %v5057, 1.0
  %v5066 = vadd.f32 %v5059, 1.0
  %v5067 = vadd.f32 %v5061, 1.0
  %v5068 = vrcp.pop %v5062
  %v5069 = vmul.f32 %v5062, %v5068
  %v5070 = vsub.f32 1.0, %v5069
  %v5071 = vmul.f32 %v5068, %v5070
  %v5072 = vadd.f32 %v5068, %v5071
  %vm5073 = vweird.f32 %v5062
  %vm5074 = vweird.f32 %v5068
  %vm5075 = vmor %vm5073, %vm5074
  %v5076 = vsel %vm5075, %v5068, %v5072
  %v5077 = vand.u32 2147483647, %v5062
  %vm5078 = vcmp.eq.f32.partialorder %v5077, 8.507059e+37
  %v5079 = vand.u32 %v5062, 2147483648
  %v5080 = vor.u32 1.1754944e-38, %v5079
  %v5081 = vsel %vm5078, %v5080, %v5076
  %v5082 = vmul.f32 1.0, %v5081
  %v5083 = vrcp.pop %v5063
  %v5084 = vmul.f32 %v5063, %v5083
  %v5085 = vsub.f32 1.0, %v5084
  %v5086 = vmul.f32 %v5083, %v5085
  %v5087 = vadd.f32 %v5083, %v5086
  %vm5088 = vweird.f32 %v5063
  %vm5089 = vweird.f32 %v5083
  %vm5090 = vmor %vm5088, %vm5089
  %v5091 = vsel %vm5090, %v5083, %v5087
  %v5092 = vand.u32 2147483647, %v5063
  %vm5093 = vcmp.eq.f32.partialorder %v5092, 8.507059e+37
  %v5094 = vand.u32 %v5063, 2147483648
  %v5095 = vor.u32 1.1754944e-38, %v5094
  %v5096 = vsel %vm5093, %v5095, %v5091
  %v5097 = vmul.f32 1.0, %v5096
  %v5098 = vrcp.pop %v5064
  %v5099 = vmul.f32 %v5064, %v5098
  %v5100 = vsub.f32 1.0, %v5099
  %v5101 = vmul.f32 %v5098, %v5100
  %v5102 = vadd.f32 %v5098, %v5101
  %vm5103 = vweird.f32 %v5064
  %vm5104 = vweird.f32 %v5098
  %vm5105 = vmor %vm5103, %vm5104
  %v5106 = vsel %vm5105, %v5098, %v5102
  %v5107 = vand.u32 2147483647, %v5064
  %vm5108 = vcmp.eq.f32.partialorder %v5107, 8.507059e+37
  %v5109 = vand.u32 %v5064, 2147483648
  %v5110 = vor.u32 1.1754944e-38, %v5109
  %v5111 = vsel %vm5108, %v5110, %v5106
  %v5112 = vmul.f32 1.0, %v5111
  %v5113 = vrcp.pop %v5065
  %v5114 = vmul.f32 %v5065, %v5113
  %v5115 = vsub.f32 1.0, %v5114
  %v5116 = vmul.f32 %v5113, %v5115
  %v5117 = vadd.f32 %v5113, %v5116
  %vm5118 = vweird.f32 %v5065
  %vm5119 = vweird.f32 %v5113
  %vm5120 = vmor %vm5118, %vm5119
  %v5121 = vsel %vm5120, %v5113, %v5117
  %v5122 = vand.u32 2147483647, %v5065
  %vm5123 = vcmp.eq.f32.partialorder %v5122, 8.507059e+37
  %v5124 = vand.u32 %v5065, 2147483648
  %v5125 = vor.u32 1.1754944e-38, %v5124
  %v5126 = vsel %vm5123, %v5125, %v5121
  %v5127 = vmul.f32 1.0, %v5126
  %v5128 = vrcp.pop %v5066
  %v5129 = vmul.f32 %v5066, %v5128
  %v5130 = vsub.f32 1.0, %v5129
  %v5131 = vmul.f32 %v5128, %v5130
  %v5132 = vadd.f32 %v5128, %v5131
  %vm5133 = vweird.f32 %v5066
  %vm5134 = vweird.f32 %v5128
  %vm5135 = vmor %vm5133, %vm5134
  %v5136 = vsel %vm5135, %v5128, %v5132
  %v5137 = vand.u32 2147483647, %v5066
  %vm5138 = vcmp.eq.f32.partialorder %v5137, 8.507059e+37
  %v5139 = vand.u32 %v5066, 2147483648
  %v5140 = vor.u32 1.1754944e-38, %v5139
  %v5141 = vsel %vm5138, %v5140, %v5136
  %v5142 = vmul.f32 1.0, %v5141
  %v5143 = vrcp.pop %v5067
  %v5144 = vmul.f32 %v5067, %v5143
  %v5145 = vsub.f32 1.0, %v5144
  %v5146 = vmul.f32 %v5143, %v5145
  %v5147 = vadd.f32 %v5143, %v5146
  %vm5148 = vweird.f32 %v5067
  %vm5149 = vweird.f32 %v5143
  %vm5150 = vmor %vm5148, %vm5149
  %v5151 = vsel %vm5150, %v5143, %v5147
  %v5152 = vand.u32 2147483647, %v5067
  %vm5153 = vcmp.eq.f32.partialorder %v5152, 8.507059e+37
  %v5154 = vand.u32 %v5067, 2147483648
  %v5155 = vor.u32 1.1754944e-38, %v5154
  %v5156 = vsel %vm5153, %v5155, %v5151
  %v5157 = vmul.f32 1.0, %v5156
  %v5158 = vtanh.pop %v5042
  %v5159 = vtanh.pop %v5043
  %v5160 = vmul.f32 %v5112, %v4310
  %v5161 = vmul.f32 %v5127, %v4311
  %v5162 = vmul.f32 %v5082, %v5158
  %v5163 = vmul.f32 %v5097, %v5159
  %v5164 = vadd.f32 %v5160, %v5162
  %v5165 = vadd.f32 %v5161, %v5163
  %v5166 = vtanh.pop %v5164
  %v5167 = vtanh.pop %v5165
  %v5168 = vmul.f32 %v5142, %v5166
  %v5169 = vmul.f32 %v5157, %v5167
  %5172 = vst [vmem:[#allocation1] sm:$0xff] %v5168
  %5173 = vst [vmem:[#allocation1 + $0x9] sm:$0xff] %v5169
  %s5174 = scalar_lea.vmem [#allocation1], 1
  %v5175 = vld [vmem:[%s5174] ss:$9 sm:$0xff]
  %s5177 = scalar_lea.vmem [#allocation3], 2
  %5178 = vst.msk [vmem:[%s5177] ss:$8 sm:$0x3] %vm2829, %v5175
  %5179 = vst.msk [vmem:[%s5177] ss:$8 sm:$0x0] %vm2829, %v5175
  %v5180 = vpack.c.bf16 %v5168, %v5168
  %v5181 = vpack.c.bf16 %v5169, %v5169
  %5182 = vmatpush.bf16.msra.mxu0 %v3274
  %5183 = vmatpush.bf16.msra.mxu0 %v3266
  %5184 = vmatpush.bf16.msra.mxu0 %v3258
  %5185 = vmatpush.bf16.msra.mxu0 %v3250
  %5186 = vmatpush.bf16.msra.mxu0 %v3242
  %5187 = vmatpush.bf16.msra.mxu0 %v3234
  %5188 = vmatpush.bf16.msra.mxu0 %v3226
  %5189 = vmatpush.bf16.msra.mxu0 %v3218
  %5190 = vmatmul.bf16.gmra.mxu0 %v5180
  %v5191 = vpop.f32.mrf.mxu0
  %v5192 = vadd.f32 %v911, %v5191
  %v5193 = vpop.f32.mrf.mxu0
  %5194 = vdwg.mxu0
  %5195 = vmatpush.bf16.msra.mxu0 %v3338
  %5196 = vmatpush.bf16.msra.mxu0 %v3330
  %5197 = vmatpush.bf16.msra.mxu0 %v3322
  %5198 = vmatpush.bf16.msra.mxu0 %v3314
  %5199 = vmatpush.bf16.msra.mxu0 %v3306
  %5200 = vmatpush.bf16.msra.mxu0 %v3298
  %5201 = vmatpush.bf16.msra.mxu0 %v3290
  %5202 = vmatpush.bf16.msra.mxu0 %v3282
  %5203 = vmatmul.bf16.gmra.mxu0 %v5181
  %v5204 = vpop.f32.mrf.mxu0
  %v5205 = vadd.f32 %v5192, %v5204
  %v5206 = vpop.f32.mrf.mxu0
  %5207 = vdwg.mxu0
  %5208 = vmatpush.bf16.msra.mxu0 %v3275
  %5209 = vmatpush.bf16.msra.mxu0 %v3267
  %5210 = vmatpush.bf16.msra.mxu0 %v3259
  %5211 = vmatpush.bf16.msra.mxu0 %v3251
  %5212 = vmatpush.bf16.msra.mxu0 %v3243
  %5213 = vmatpush.bf16.msra.mxu0 %v3235
  %5214 = vmatpush.bf16.msra.mxu0 %v3227
  %5215 = vmatpush.bf16.msra.mxu0 %v3219
  %5216 = vmatmul.bf16.gmra.mxu0 %v5180
  %v5217 = vpop.f32.mrf.mxu0
  %v5218 = vadd.f32 %v912, %v5217
  %v5219 = vpop.f32.mrf.mxu0
  %5220 = vdwg.mxu0
  %5221 = vmatpush.bf16.msra.mxu0 %v3339
  %5222 = vmatpush.bf16.msra.mxu0 %v3331
  %5223 = vmatpush.bf16.msra.mxu0 %v3323
  %5224 = vmatpush.bf16.msra.mxu0 %v3315
  %5225 = vmatpush.bf16.msra.mxu0 %v3307
  %5226 = vmatpush.bf16.msra.mxu0 %v3299
  %5227 = vmatpush.bf16.msra.mxu0 %v3291
  %5228 = vmatpush.bf16.msra.mxu0 %v3283
  %5229 = vmatmul.bf16.gmra.mxu0 %v5181
  %v5230 = vpop.f32.mrf.mxu0
  %v5231 = vadd.f32 %v5218, %v5230
  %v5232 = vpop.f32.mrf.mxu0
  %5233 = vdwg.mxu0
  %5234 = vmatpush.bf16.msra.mxu0 %v3276
  %5235 = vmatpush.bf16.msra.mxu0 %v3268
  %5236 = vmatpush.bf16.msra.mxu0 %v3260
  %5237 = vmatpush.bf16.msra.mxu0 %v3252
  %5238 = vmatpush.bf16.msra.mxu0 %v3244
  %5239 = vmatpush.bf16.msra.mxu0 %v3236
  %5240 = vmatpush.bf16.msra.mxu0 %v3228
  %5241 = vmatpush.bf16.msra.mxu0 %v3220
  %5242 = vmatmul.bf16.gmra.mxu0 %v5180
  %v5243 = vpop.f32.mrf.mxu0
  %v5244 = vadd.f32 %v913, %v5243
  %v5245 = vpop.f32.mrf.mxu0
  %5246 = vdwg.mxu0
  %5247 = vmatpush.bf16.msra.mxu0 %v3340
  %5248 = vmatpush.bf16.msra.mxu0 %v3332
  %5249 = vmatpush.bf16.msra.mxu0 %v3324
  %5250 = vmatpush.bf16.msra.mxu0 %v3316
  %5251 = vmatpush.bf16.msra.mxu0 %v3308
  %5252 = vmatpush.bf16.msra.mxu0 %v3300
  %5253 = vmatpush.bf16.msra.mxu0 %v3292
  %5254 = vmatpush.bf16.msra.mxu0 %v3284
  %5255 = vmatmul.bf16.gmra.mxu0 %v5181
  %v5256 = vpop.f32.mrf.mxu0
  %v5257 = vadd.f32 %v5244, %v5256
  %v5258 = vpop.f32.mrf.mxu0
  %5259 = vdwg.mxu0
  %5260 = vmatpush.bf16.msra.mxu0 %v3277
  %5261 = vmatpush.bf16.msra.mxu0 %v3269
  %5262 = vmatpush.bf16.msra.mxu0 %v3261
  %5263 = vmatpush.bf16.msra.mxu0 %v3253
  %5264 = vmatpush.bf16.msra.mxu0 %v3245
  %5265 = vmatpush.bf16.msra.mxu0 %v3237
  %5266 = vmatpush.bf16.msra.mxu0 %v3229
  %5267 = vmatpush.bf16.msra.mxu0 %v3221
  %5268 = vmatmul.bf16.gmra.mxu0 %v5180
  %v5269 = vpop.f32.mrf.mxu0
  %v5270 = vadd.f32 %v914, %v5269
  %v5271 = vpop.f32.mrf.mxu0
  %5272 = vdwg.mxu0
  %5273 = vmatpush.bf16.msra.mxu0 %v3341
  %5274 = vmatpush.bf16.msra.mxu0 %v3333
  %5275 = vmatpush.bf16.msra.mxu0 %v3325
  %5276 = vmatpush.bf16.msra.mxu0 %v3317
  %5277 = vmatpush.bf16.msra.mxu0 %v3309
  %5278 = vmatpush.bf16.msra.mxu0 %v3301
  %5279 = vmatpush.bf16.msra.mxu0 %v3293
  %5280 = vmatpush.bf16.msra.mxu0 %v3285
  %5281 = vmatmul.bf16.gmra.mxu0 %v5181
  %v5282 = vpop.f32.mrf.mxu0
  %v5283 = vadd.f32 %v5270, %v5282
  %v5284 = vpop.f32.mrf.mxu0
  %5285 = vdwg.mxu0
  %5286 = vmatpush.bf16.msra.mxu0 %v3278
  %5287 = vmatpush.bf16.msra.mxu0 %v3270
  %5288 = vmatpush.bf16.msra.mxu0 %v3262
  %5289 = vmatpush.bf16.msra.mxu0 %v3254
  %5290 = vmatpush.bf16.msra.mxu0 %v3246
  %5291 = vmatpush.bf16.msra.mxu0 %v3238
  %5292 = vmatpush.bf16.msra.mxu0 %v3230
  %5293 = vmatpush.bf16.msra.mxu0 %v3222
  %5294 = vmatmul.bf16.gmra.mxu0 %v5180
  %v5295 = vpop.f32.mrf.mxu0
  %v5296 = vadd.f32 %v915, %v5295
  %v5297 = vpop.f32.mrf.mxu0
  %5298 = vdwg.mxu0
  %5299 = vmatpush.bf16.msra.mxu0 %v3342
  %5300 = vmatpush.bf16.msra.mxu0 %v3334
  %5301 = vmatpush.bf16.msra.mxu0 %v3326
  %5302 = vmatpush.bf16.msra.mxu0 %v3318
  %5303 = vmatpush.bf16.msra.mxu0 %v3310
  %5304 = vmatpush.bf16.msra.mxu0 %v3302
  %5305 = vmatpush.bf16.msra.mxu0 %v3294
  %5306 = vmatpush.bf16.msra.mxu0 %v3286
  %5307 = vmatmul.bf16.gmra.mxu0 %v5181
  %v5308 = vpop.f32.mrf.mxu0
  %v5309 = vadd.f32 %v5296, %v5308
  %v5310 = vpop.f32.mrf.mxu0
  %5311 = vdwg.mxu0
  %5312 = vmatpush.bf16.msra.mxu0 %v3279
  %5313 = vmatpush.bf16.msra.mxu0 %v3271
  %5314 = vmatpush.bf16.msra.mxu0 %v3263
  %5315 = vmatpush.bf16.msra.mxu0 %v3255
  %5316 = vmatpush.bf16.msra.mxu0 %v3247
  %5317 = vmatpush.bf16.msra.mxu0 %v3239
  %5318 = vmatpush.bf16.msra.mxu0 %v3231
  %5319 = vmatpush.bf16.msra.mxu0 %v3223
  %5320 = vmatmul.bf16.gmra.mxu0 %v5180
  %v5321 = vpop.f32.mrf.mxu0
  %v5322 = vadd.f32 %v916, %v5321
  %v5323 = vpop.f32.mrf.mxu0
  %5324 = vdwg.mxu0
  %5325 = vmatpush.bf16.msra.mxu0 %v3343
  %5326 = vmatpush.bf16.msra.mxu0 %v3335
  %5327 = vmatpush.bf16.msra.mxu0 %v3327
  %5328 = vmatpush.bf16.msra.mxu0 %v3319
  %5329 = vmatpush.bf16.msra.mxu0 %v3311
  %5330 = vmatpush.bf16.msra.mxu0 %v3303
  %5331 = vmatpush.bf16.msra.mxu0 %v3295
  %5332 = vmatpush.bf16.msra.mxu0 %v3287
  %5333 = vmatmul.bf16.gmra.mxu0 %v5181
  %v5334 = vpop.f32.mrf.mxu0
  %v5335 = vadd.f32 %v5322, %v5334
  %v5336 = vpop.f32.mrf.mxu0
  %5337 = vdwg.mxu0
  %5338 = vmatpush.bf16.msra.mxu0 %v3280
  %5339 = vmatpush.bf16.msra.mxu0 %v3272
  %5340 = vmatpush.bf16.msra.mxu0 %v3264
  %5341 = vmatpush.bf16.msra.mxu0 %v3256
  %5342 = vmatpush.bf16.msra.mxu0 %v3248
  %5343 = vmatpush.bf16.msra.mxu0 %v3240
  %5344 = vmatpush.bf16.msra.mxu0 %v3232
  %5345 = vmatpush.bf16.msra.mxu0 %v3224
  %5346 = vmatmul.bf16.gmra.mxu0 %v5180
  %v5347 = vpop.f32.mrf.mxu0
  %v5348 = vadd.f32 %v917, %v5347
  %v5349 = vpop.f32.mrf.mxu0
  %5350 = vdwg.mxu0
  %5351 = vmatpush.bf16.msra.mxu0 %v3344
  %5352 = vmatpush.bf16.msra.mxu0 %v3336
  %5353 = vmatpush.bf16.msra.mxu0 %v3328
  %5354 = vmatpush.bf16.msra.mxu0 %v3320
  %5355 = vmatpush.bf16.msra.mxu0 %v3312
  %5356 = vmatpush.bf16.msra.mxu0 %v3304
  %5357 = vmatpush.bf16.msra.mxu0 %v3296
  %5358 = vmatpush.bf16.msra.mxu0 %v3288
  %5359 = vmatmul.bf16.gmra.mxu0 %v5181
  %v5360 = vpop.f32.mrf.mxu0
  %v5361 = vadd.f32 %v5348, %v5360
  %v5362 = vpop.f32.mrf.mxu0
  %5363 = vdwg.mxu0
  %5364 = vmatpush.bf16.msra.mxu0 %v3281
  %5365 = vmatpush.bf16.msra.mxu0 %v3273
  %5366 = vmatpush.bf16.msra.mxu0 %v3265
  %5367 = vmatpush.bf16.msra.mxu0 %v3257
  %5368 = vmatpush.bf16.msra.mxu0 %v3249
  %5369 = vmatpush.bf16.msra.mxu0 %v3241
  %5370 = vmatpush.bf16.msra.mxu0 %v3233
  %5371 = vmatpush.bf16.msra.mxu0 %v3225
  %5372 = vmatmul.bf16.gmra.mxu0 %v5180
  %v5373 = vpop.f32.mrf.mxu0
  %v5374 = vadd.f32 %v918, %v5373
  %v5375 = vpop.f32.mrf.mxu0
  %5376 = vdwg.mxu0
  %5377 = vmatpush.bf16.msra.mxu0 %v3345
  %5378 = vmatpush.bf16.msra.mxu0 %v3337
  %5379 = vmatpush.bf16.msra.mxu0 %v3329
  %5380 = vmatpush.bf16.msra.mxu0 %v3321
  %5381 = vmatpush.bf16.msra.mxu0 %v3313
  %5382 = vmatpush.bf16.msra.mxu0 %v3305
  %5383 = vmatpush.bf16.msra.mxu0 %v3297
  %5384 = vmatpush.bf16.msra.mxu0 %v3289
  %5385 = vmatmul.bf16.gmra.mxu0 %v5181
  %v5386 = vpop.f32.mrf.mxu0
  %v5387 = vadd.f32 %v5374, %v5386
  %v5388 = vpop.f32.mrf.mxu0
  %5389 = vdwg.mxu0
  %v5390 = vld [vmem:[%s446] sm:$0xff]
  %v5391 = vld [vmem:[%s446 + $0x8] sm:$0xff]
  %v5400 = vrot.slane %v4669, 6
  %v5401 = vrot.slane %v4695, 4
  %v5402 = vrot.slane %v4721, 2
  %v5403 = vrot.slane %v4773, 6
  %v5404 = vrot.slane %v4799, 4
  %v5405 = vrot.slane %v4825, 2
  %v5406 = vsel %vm385, %v4643, %v5400
  %v5407 = vsel %vm387, %v5401, %v5402
  %v5408 = vsel %vm389, %v5406, %v5407
  %v5409 = vsel %vm385, %v4747, %v5403
  %v5410 = vsel %vm387, %v5404, %v5405
  %v5411 = vsel %vm389, %v5409, %v5410
  %v5414 = vadd.f32 %v5390, %v5408
  %v5415 = vadd.f32 %v5391, %v5411
  %v5416 = vxor.u32 %v5414, 2147483648
  %v5417 = vxor.u32 %v5415, 2147483648
  %v5418 = vmul.f32 %v5416, 1.442695
  %v5419 = vpow.pop %v5418
  %v5420 = vmul.f32 %v5417, 1.442695
  %v5421 = vpow.pop %v5420
  %v5422 = vadd.f32 %v5419, 1.0
  %v5423 = vadd.f32 %v5421, 1.0
  %v5424 = vrcp.pop %v5422
  %v5425 = vmul.f32 %v5422, %v5424
  %v5426 = vsub.f32 1.0, %v5425
  %v5427 = vmul.f32 %v5424, %v5426
  %v5428 = vadd.f32 %v5424, %v5427
  %vm5429 = vweird.f32 %v5422
  %vm5430 = vweird.f32 %v5424
  %vm5431 = vmor %vm5429, %vm5430
  %v5432 = vsel %vm5431, %v5424, %v5428
  %v5433 = vand.u32 2147483647, %v5422
  %vm5434 = vcmp.eq.f32.partialorder %v5433, 8.507059e+37
  %v5435 = vand.u32 %v5422, 2147483648
  %v5436 = vor.u32 1.1754944e-38, %v5435
  %v5437 = vsel %vm5434, %v5436, %v5432
  %v5438 = vmul.f32 1.0, %v5437
  %v5439 = vrcp.pop %v5423
  %v5440 = vmul.f32 %v5423, %v5439
  %v5441 = vsub.f32 1.0, %v5440
  %v5442 = vmul.f32 %v5439, %v5441
  %v5443 = vadd.f32 %v5439, %v5442
  %vm5444 = vweird.f32 %v5423
  %vm5445 = vweird.f32 %v5439
  %vm5446 = vmor %vm5444, %vm5445
  %v5447 = vsel %vm5446, %v5439, %v5443
  %v5448 = vand.u32 2147483647, %v5423
  %vm5449 = vcmp.eq.f32.partialorder %v5448, 8.507059e+37
  %v5450 = vand.u32 %v5423, 2147483648
  %v5451 = vor.u32 1.1754944e-38, %v5450
  %v5452 = vsel %vm5449, %v5451, %v5447
  %v5453 = vmul.f32 1.0, %v5452
  %v5455 = vrot.slane %v5415, 4
  %v5457 = vtanh.pop %v5455
  %v5459 = vrot.slane %v5438, 4
  %v5461 = vmul.f32 %v5459, %v4609
  %v5462 = vmul.f32 %v5438, %v5457
  %v5463 = vadd.f32 %v5461, %v5462
  %v5464 = vtanh.pop %v5463
  %v5465 = vmul.f32 %v5453, %v5464
  %5467 = vst [vmem:[#allocation1] ss:$4 sm:$0xff] %v5465
  %v5468 = vld.sshfl [vmem:[#allocation1] sm:$0xff pattern:$0x73625140]
  %v5469 = vld.sshfl [vmem:[#allocation1 + $0x8] sm:$0xff pattern:$0x73625140]
  %v5472 = vpack.c.bf16 %v5468, %v5468
  %v5473 = vpack.c.bf16 %v5469, %v5469
  %5474 = vmatpush.bf16.msra.mxu0 %v1429
  %5475 = vmatpush.bf16.msra.mxu0 %v1421
  %5476 = vmatpush.bf16.msra.mxu0 %v1413
  %5477 = vmatpush.bf16.msra.mxu0 %v1405
  %5478 = vmatpush.bf16.msra.mxu0 %v1397
  %5479 = vmatpush.bf16.msra.mxu0 %v1389
  %5480 = vmatpush.bf16.msra.mxu0 %v1381
  %5481 = vmatpush.bf16.msra.mxu0 %v1373
  %5482 = vmatmul.bf16.gmra.mxu0 %v5472
  %v5483 = vpop.f32.mrf.mxu0
  %v5484 = vadd.f32 0.0, %v5483
  %v5485 = vpop.f32.mrf.mxu0
  %5486 = vdwg.mxu0
  %5487 = vmatpush.bf16.msra.mxu0 %v1493
  %5488 = vmatpush.bf16.msra.mxu0 %v1485
  %5489 = vmatpush.bf16.msra.mxu0 %v1477
  %5490 = vmatpush.bf16.msra.mxu0 %v1469
  %5491 = vmatpush.bf16.msra.mxu0 %v1461
  %5492 = vmatpush.bf16.msra.mxu0 %v1453
  %5493 = vmatpush.bf16.msra.mxu0 %v1445
  %5494 = vmatpush.bf16.msra.mxu0 %v1437
  %5495 = vmatmul.bf16.gmra.mxu0 %v5473
  %v5496 = vpop.f32.mrf.mxu0
  %v5497 = vadd.f32 %v5484, %v5496
  %v5498 = vpop.f32.mrf.mxu0
  %5499 = vdwg.mxu0
  %5500 = vmatpush.bf16.msra.mxu0 %v1430
  %5501 = vmatpush.bf16.msra.mxu0 %v1422
  %5502 = vmatpush.bf16.msra.mxu0 %v1414
  %5503 = vmatpush.bf16.msra.mxu0 %v1406
  %5504 = vmatpush.bf16.msra.mxu0 %v1398
  %5505 = vmatpush.bf16.msra.mxu0 %v1390
  %5506 = vmatpush.bf16.msra.mxu0 %v1382
  %5507 = vmatpush.bf16.msra.mxu0 %v1374
  %5508 = vmatmul.bf16.gmra.mxu0 %v5472
  %v5509 = vpop.f32.mrf.mxu0
  %v5510 = vadd.f32 0.0, %v5509
  %v5511 = vpop.f32.mrf.mxu0
  %5512 = vdwg.mxu0
  %5513 = vmatpush.bf16.msra.mxu0 %v1494
  %5514 = vmatpush.bf16.msra.mxu0 %v1486
  %5515 = vmatpush.bf16.msra.mxu0 %v1478
  %5516 = vmatpush.bf16.msra.mxu0 %v1470
  %5517 = vmatpush.bf16.msra.mxu0 %v1462
  %5518 = vmatpush.bf16.msra.mxu0 %v1454
  %5519 = vmatpush.bf16.msra.mxu0 %v1446
  %5520 = vmatpush.bf16.msra.mxu0 %v1438
  %5521 = vmatmul.bf16.gmra.mxu0 %v5473
  %v5522 = vpop.f32.mrf.mxu0
  %v5523 = vadd.f32 %v5510, %v5522
  %v5524 = vpop.f32.mrf.mxu0
  %5525 = vdwg.mxu0
  %5526 = vmatpush.bf16.msra.mxu0 %v1431
  %5527 = vmatpush.bf16.msra.mxu0 %v1423
  %5528 = vmatpush.bf16.msra.mxu0 %v1415
  %5529 = vmatpush.bf16.msra.mxu0 %v1407
  %5530 = vmatpush.bf16.msra.mxu0 %v1399
  %5531 = vmatpush.bf16.msra.mxu0 %v1391
  %5532 = vmatpush.bf16.msra.mxu0 %v1383
  %5533 = vmatpush.bf16.msra.mxu0 %v1375
  %5534 = vmatmul.bf16.gmra.mxu0 %v5472
  %v5535 = vpop.f32.mrf.mxu0
  %v5536 = vadd.f32 0.0, %v5535
  %v5537 = vpop.f32.mrf.mxu0
  %5538 = vdwg.mxu0
  %5539 = vmatpush.bf16.msra.mxu0 %v1495
  %5540 = vmatpush.bf16.msra.mxu0 %v1487
  %5541 = vmatpush.bf16.msra.mxu0 %v1479
  %5542 = vmatpush.bf16.msra.mxu0 %v1471
  %5543 = vmatpush.bf16.msra.mxu0 %v1463
  %5544 = vmatpush.bf16.msra.mxu0 %v1455
  %5545 = vmatpush.bf16.msra.mxu0 %v1447
  %5546 = vmatpush.bf16.msra.mxu0 %v1439
  %5547 = vmatmul.bf16.gmra.mxu0 %v5473
  %v5548 = vpop.f32.mrf.mxu0
  %v5549 = vadd.f32 %v5536, %v5548
  %v5550 = vpop.f32.mrf.mxu0
  %5551 = vdwg.mxu0
  %5552 = vmatpush.bf16.msra.mxu0 %v1432
  %5553 = vmatpush.bf16.msra.mxu0 %v1424
  %5554 = vmatpush.bf16.msra.mxu0 %v1416
  %5555 = vmatpush.bf16.msra.mxu0 %v1408
  %5556 = vmatpush.bf16.msra.mxu0 %v1400
  %5557 = vmatpush.bf16.msra.mxu0 %v1392
  %5558 = vmatpush.bf16.msra.mxu0 %v1384
  %5559 = vmatpush.bf16.msra.mxu0 %v1376
  %5560 = vmatmul.bf16.gmra.mxu0 %v5472
  %v5561 = vpop.f32.mrf.mxu0
  %v5562 = vadd.f32 0.0, %v5561
  %v5563 = vpop.f32.mrf.mxu0
  %5564 = vdwg.mxu0
  %5565 = vmatpush.bf16.msra.mxu0 %v1496
  %5566 = vmatpush.bf16.msra.mxu0 %v1488
  %5567 = vmatpush.bf16.msra.mxu0 %v1480
  %5568 = vmatpush.bf16.msra.mxu0 %v1472
  %5569 = vmatpush.bf16.msra.mxu0 %v1464
  %5570 = vmatpush.bf16.msra.mxu0 %v1456
  %5571 = vmatpush.bf16.msra.mxu0 %v1448
  %5572 = vmatpush.bf16.msra.mxu0 %v1440
  %5573 = vmatmul.bf16.gmra.mxu0 %v5473
  %v5574 = vpop.f32.mrf.mxu0
  %v5575 = vadd.f32 %v5562, %v5574
  %v5576 = vpop.f32.mrf.mxu0
  %5577 = vdwg.mxu0
  %5578 = vmatpush.bf16.msra.mxu0 %v1433
  %5579 = vmatpush.bf16.msra.mxu0 %v1425
  %5580 = vmatpush.bf16.msra.mxu0 %v1417
  %5581 = vmatpush.bf16.msra.mxu0 %v1409
  %5582 = vmatpush.bf16.msra.mxu0 %v1401
  %5583 = vmatpush.bf16.msra.mxu0 %v1393
  %5584 = vmatpush.bf16.msra.mxu0 %v1385
  %5585 = vmatpush.bf16.msra.mxu0 %v1377
  %5586 = vmatmul.bf16.gmra.mxu0 %v5472
  %v5587 = vpop.f32.mrf.mxu0
  %v5588 = vadd.f32 0.0, %v5587
  %v5589 = vpop.f32.mrf.mxu0
  %5590 = vdwg.mxu0
  %5591 = vmatpush.bf16.msra.mxu0 %v1497
  %5592 = vmatpush.bf16.msra.mxu0 %v1489
  %5593 = vmatpush.bf16.msra.mxu0 %v1481
  %5594 = vmatpush.bf16.msra.mxu0 %v1473
  %5595 = vmatpush.bf16.msra.mxu0 %v1465
  %5596 = vmatpush.bf16.msra.mxu0 %v1457
  %5597 = vmatpush.bf16.msra.mxu0 %v1449
  %5598 = vmatpush.bf16.msra.mxu0 %v1441
  %5599 = vmatmul.bf16.gmra.mxu0 %v5473
  %v5600 = vpop.f32.mrf.mxu0
  %v5601 = vadd.f32 %v5588, %v5600
  %v5602 = vpop.f32.mrf.mxu0
  %5603 = vdwg.mxu0
  %5604 = vmatpush.bf16.msra.mxu0 %v1434
  %5605 = vmatpush.bf16.msra.mxu0 %v1426
  %5606 = vmatpush.bf16.msra.mxu0 %v1418
  %5607 = vmatpush.bf16.msra.mxu0 %v1410
  %5608 = vmatpush.bf16.msra.mxu0 %v1402
  %5609 = vmatpush.bf16.msra.mxu0 %v1394
  %5610 = vmatpush.bf16.msra.mxu0 %v1386
  %5611 = vmatpush.bf16.msra.mxu0 %v1378
  %5612 = vmatmul.bf16.gmra.mxu0 %v5472
  %v5613 = vpop.f32.mrf.mxu0
  %v5614 = vadd.f32 0.0, %v5613
  %v5615 = vpop.f32.mrf.mxu0
  %5616 = vdwg.mxu0
  %5617 = vmatpush.bf16.msra.mxu0 %v1498
  %5618 = vmatpush.bf16.msra.mxu0 %v1490
  %5619 = vmatpush.bf16.msra.mxu0 %v1482
  %5620 = vmatpush.bf16.msra.mxu0 %v1474
  %5621 = vmatpush.bf16.msra.mxu0 %v1466
  %5622 = vmatpush.bf16.msra.mxu0 %v1458
  %5623 = vmatpush.bf16.msra.mxu0 %v1450
  %5624 = vmatpush.bf16.msra.mxu0 %v1442
  %5625 = vmatmul.bf16.gmra.mxu0 %v5473
  %v5626 = vpop.f32.mrf.mxu0
  %v5627 = vadd.f32 %v5614, %v5626
  %v5628 = vpop.f32.mrf.mxu0
  %5629 = vdwg.mxu0
  %5630 = vmatpush.bf16.msra.mxu0 %v1435
  %5631 = vmatpush.bf16.msra.mxu0 %v1427
  %5632 = vmatpush.bf16.msra.mxu0 %v1419
  %5633 = vmatpush.bf16.msra.mxu0 %v1411
  %5634 = vmatpush.bf16.msra.mxu0 %v1403
  %5635 = vmatpush.bf16.msra.mxu0 %v1395
  %5636 = vmatpush.bf16.msra.mxu0 %v1387
  %5637 = vmatpush.bf16.msra.mxu0 %v1379
  %5638 = vmatmul.bf16.gmra.mxu0 %v5472
  %v5639 = vpop.f32.mrf.mxu0
  %v5640 = vadd.f32 0.0, %v5639
  %v5641 = vpop.f32.mrf.mxu0
  %5642 = vdwg.mxu0
  %5643 = vmatpush.bf16.msra.mxu0 %v1499
  %5644 = vmatpush.bf16.msra.mxu0 %v1491
  %5645 = vmatpush.bf16.msra.mxu0 %v1483
  %5646 = vmatpush.bf16.msra.mxu0 %v1475
  %5647 = vmatpush.bf16.msra.mxu0 %v1467
  %5648 = vmatpush.bf16.msra.mxu0 %v1459
  %5649 = vmatpush.bf16.msra.mxu0 %v1451
  %5650 = vmatpush.bf16.msra.mxu0 %v1443
  %5651 = vmatmul.bf16.gmra.mxu0 %v5473
  %v5652 = vpop.f32.mrf.mxu0
  %v5653 = vadd.f32 %v5640, %v5652
  %v5654 = vpop.f32.mrf.mxu0
  %5655 = vdwg.mxu0
  %5656 = vmatpush.bf16.msra.mxu0 %v1436
  %5657 = vmatpush.bf16.msra.mxu0 %v1428
  %5658 = vmatpush.bf16.msra.mxu0 %v1420
  %5659 = vmatpush.bf16.msra.mxu0 %v1412
  %5660 = vmatpush.bf16.msra.mxu0 %v1404
  %5661 = vmatpush.bf16.msra.mxu0 %v1396
  %5662 = vmatpush.bf16.msra.mxu0 %v1388
  %5663 = vmatpush.bf16.msra.mxu0 %v1380
  %5664 = vmatmul.bf16.gmra.mxu0 %v5472
  %v5665 = vpop.f32.mrf.mxu0
  %v5666 = vadd.f32 0.0, %v5665
  %v5667 = vpop.f32.mrf.mxu0
  %5668 = vdwg.mxu0
  %5669 = vmatpush.bf16.msra.mxu0 %v1500
  %5670 = vmatpush.bf16.msra.mxu0 %v1492
  %5671 = vmatpush.bf16.msra.mxu0 %v1484
  %5672 = vmatpush.bf16.msra.mxu0 %v1476
  %5673 = vmatpush.bf16.msra.mxu0 %v1468
  %5674 = vmatpush.bf16.msra.mxu0 %v1460
  %5675 = vmatpush.bf16.msra.mxu0 %v1452
  %5676 = vmatpush.bf16.msra.mxu0 %v1444
  %5677 = vmatmul.bf16.gmra.mxu0 %v5473
  %v5678 = vpop.f32.mrf.mxu0
  %v5679 = vadd.f32 %v5666, %v5678
  %v5680 = vpop.f32.mrf.mxu0
  %5681 = vdwg.mxu0
  %5682 = vmatpush.bf16.msra.mxu0 %v2277
  %5683 = vmatpush.bf16.msra.mxu0 %v2269
  %5684 = vmatpush.bf16.msra.mxu0 %v2261
  %5685 = vmatpush.bf16.msra.mxu0 %v2253
  %5686 = vmatpush.bf16.msra.mxu0 %v2245
  %5687 = vmatpush.bf16.msra.mxu0 %v2237
  %5688 = vmatpush.bf16.msra.mxu0 %v2229
  %5689 = vmatpush.bf16.msra.mxu0 %v2221
  %5690 = vmatmul.bf16.gmra.mxu0 %v5472
  %v5691 = vpop.f32.mrf.mxu0
  %v5692 = vadd.f32 0.0, %v5691
  %v5693 = vpop.f32.mrf.mxu0
  %5694 = vdwg.mxu0
  %5695 = vmatpush.bf16.msra.mxu0 %v2341
  %5696 = vmatpush.bf16.msra.mxu0 %v2333
  %5697 = vmatpush.bf16.msra.mxu0 %v2325
  %5698 = vmatpush.bf16.msra.mxu0 %v2317
  %5699 = vmatpush.bf16.msra.mxu0 %v2309
  %5700 = vmatpush.bf16.msra.mxu0 %v2301
  %5701 = vmatpush.bf16.msra.mxu0 %v2293
  %5702 = vmatpush.bf16.msra.mxu0 %v2285
  %5703 = vmatmul.bf16.gmra.mxu0 %v5473
  %v5704 = vpop.f32.mrf.mxu0
  %v5705 = vadd.f32 %v5692, %v5704
  %v5706 = vpop.f32.mrf.mxu0
  %5707 = vdwg.mxu0
  %5708 = vmatpush.bf16.msra.mxu0 %v2278
  %5709 = vmatpush.bf16.msra.mxu0 %v2270
  %5710 = vmatpush.bf16.msra.mxu0 %v2262
  %5711 = vmatpush.bf16.msra.mxu0 %v2254
  %5712 = vmatpush.bf16.msra.mxu0 %v2246
  %5713 = vmatpush.bf16.msra.mxu0 %v2238
  %5714 = vmatpush.bf16.msra.mxu0 %v2230
  %5715 = vmatpush.bf16.msra.mxu0 %v2222
  %5716 = vmatmul.bf16.gmra.mxu0 %v5472
  %v5717 = vpop.f32.mrf.mxu0
  %v5718 = vadd.f32 0.0, %v5717
  %v5719 = vpop.f32.mrf.mxu0
  %5720 = vdwg.mxu0
  %5721 = vmatpush.bf16.msra.mxu0 %v2342
  %5722 = vmatpush.bf16.msra.mxu0 %v2334
  %5723 = vmatpush.bf16.msra.mxu0 %v2326
  %5724 = vmatpush.bf16.msra.mxu0 %v2318
  %5725 = vmatpush.bf16.msra.mxu0 %v2310
  %5726 = vmatpush.bf16.msra.mxu0 %v2302
  %5727 = vmatpush.bf16.msra.mxu0 %v2294
  %5728 = vmatpush.bf16.msra.mxu0 %v2286
  %5729 = vmatmul.bf16.gmra.mxu0 %v5473
  %v5730 = vpop.f32.mrf.mxu0
  %v5731 = vadd.f32 %v5718, %v5730
  %v5732 = vpop.f32.mrf.mxu0
  %5733 = vdwg.mxu0
  %5734 = vmatpush.bf16.msra.mxu0 %v2279
  %5735 = vmatpush.bf16.msra.mxu0 %v2271
  %5736 = vmatpush.bf16.msra.mxu0 %v2263
  %5737 = vmatpush.bf16.msra.mxu0 %v2255
  %5738 = vmatpush.bf16.msra.mxu0 %v2247
  %5739 = vmatpush.bf16.msra.mxu0 %v2239
  %5740 = vmatpush.bf16.msra.mxu0 %v2231
  %5741 = vmatpush.bf16.msra.mxu0 %v2223
  %5742 = vmatmul.bf16.gmra.mxu0 %v5472
  %v5743 = vpop.f32.mrf.mxu0
  %v5744 = vadd.f32 0.0, %v5743
  %v5745 = vpop.f32.mrf.mxu0
  %5746 = vdwg.mxu0
  %5747 = vmatpush.bf16.msra.mxu0 %v2343
  %5748 = vmatpush.bf16.msra.mxu0 %v2335
  %5749 = vmatpush.bf16.msra.mxu0 %v2327
  %5750 = vmatpush.bf16.msra.mxu0 %v2319
  %5751 = vmatpush.bf16.msra.mxu0 %v2311
  %5752 = vmatpush.bf16.msra.mxu0 %v2303
  %5753 = vmatpush.bf16.msra.mxu0 %v2295
  %5754 = vmatpush.bf16.msra.mxu0 %v2287
  %5755 = vmatmul.bf16.gmra.mxu0 %v5473
  %v5756 = vpop.f32.mrf.mxu0
  %v5757 = vadd.f32 %v5744, %v5756
  %v5758 = vpop.f32.mrf.mxu0
  %5759 = vdwg.mxu0
  %5760 = vmatpush.bf16.msra.mxu0 %v2280
  %5761 = vmatpush.bf16.msra.mxu0 %v2272
  %5762 = vmatpush.bf16.msra.mxu0 %v2264
  %5763 = vmatpush.bf16.msra.mxu0 %v2256
  %5764 = vmatpush.bf16.msra.mxu0 %v2248
  %5765 = vmatpush.bf16.msra.mxu0 %v2240
  %5766 = vmatpush.bf16.msra.mxu0 %v2232
  %5767 = vmatpush.bf16.msra.mxu0 %v2224
  %5768 = vmatmul.bf16.gmra.mxu0 %v5472
  %v5769 = vpop.f32.mrf.mxu0
  %v5770 = vadd.f32 0.0, %v5769
  %v5771 = vpop.f32.mrf.mxu0
  %5772 = vdwg.mxu0
  %5773 = vmatpush.bf16.msra.mxu0 %v2344
  %5774 = vmatpush.bf16.msra.mxu0 %v2336
  %5775 = vmatpush.bf16.msra.mxu0 %v2328
  %5776 = vmatpush.bf16.msra.mxu0 %v2320
  %5777 = vmatpush.bf16.msra.mxu0 %v2312
  %5778 = vmatpush.bf16.msra.mxu0 %v2304
  %5779 = vmatpush.bf16.msra.mxu0 %v2296
  %5780 = vmatpush.bf16.msra.mxu0 %v2288
  %5781 = vmatmul.bf16.gmra.mxu0 %v5473
  %v5782 = vpop.f32.mrf.mxu0
  %v5783 = vadd.f32 %v5770, %v5782
  %v5784 = vpop.f32.mrf.mxu0
  %5785 = vdwg.mxu0
  %5786 = vmatpush.bf16.msra.mxu0 %v2281
  %5787 = vmatpush.bf16.msra.mxu0 %v2273
  %5788 = vmatpush.bf16.msra.mxu0 %v2265
  %5789 = vmatpush.bf16.msra.mxu0 %v2257
  %5790 = vmatpush.bf16.msra.mxu0 %v2249
  %5791 = vmatpush.bf16.msra.mxu0 %v2241
  %5792 = vmatpush.bf16.msra.mxu0 %v2233
  %5793 = vmatpush.bf16.msra.mxu0 %v2225
  %5794 = vmatmul.bf16.gmra.mxu0 %v5472
  %v5795 = vpop.f32.mrf.mxu0
  %v5796 = vadd.f32 0.0, %v5795
  %v5797 = vpop.f32.mrf.mxu0
  %5798 = vdwg.mxu0
  %5799 = vmatpush.bf16.msra.mxu0 %v2345
  %5800 = vmatpush.bf16.msra.mxu0 %v2337
  %5801 = vmatpush.bf16.msra.mxu0 %v2329
  %5802 = vmatpush.bf16.msra.mxu0 %v2321
  %5803 = vmatpush.bf16.msra.mxu0 %v2313
  %5804 = vmatpush.bf16.msra.mxu0 %v2305
  %5805 = vmatpush.bf16.msra.mxu0 %v2297
  %5806 = vmatpush.bf16.msra.mxu0 %v2289
  %5807 = vmatmul.bf16.gmra.mxu0 %v5473
  %v5808 = vpop.f32.mrf.mxu0
  %v5809 = vadd.f32 %v5796, %v5808
  %v5810 = vpop.f32.mrf.mxu0
  %5811 = vdwg.mxu0
  %5812 = vmatpush.bf16.msra.mxu0 %v2282
  %5813 = vmatpush.bf16.msra.mxu0 %v2274
  %5814 = vmatpush.bf16.msra.mxu0 %v2266
  %5815 = vmatpush.bf16.msra.mxu0 %v2258
  %5816 = vmatpush.bf16.msra.mxu0 %v2250
  %5817 = vmatpush.bf16.msra.mxu0 %v2242
  %5818 = vmatpush.bf16.msra.mxu0 %v2234
  %5819 = vmatpush.bf16.msra.mxu0 %v2226
  %5820 = vmatmul.bf16.gmra.mxu0 %v5472
  %v5821 = vpop.f32.mrf.mxu0
  %v5822 = vadd.f32 0.0, %v5821
  %v5823 = vpop.f32.mrf.mxu0
  %5824 = vdwg.mxu0
  %5825 = vmatpush.bf16.msra.mxu0 %v2346
  %5826 = vmatpush.bf16.msra.mxu0 %v2338
  %5827 = vmatpush.bf16.msra.mxu0 %v2330
  %5828 = vmatpush.bf16.msra.mxu0 %v2322
  %5829 = vmatpush.bf16.msra.mxu0 %v2314
  %5830 = vmatpush.bf16.msra.mxu0 %v2306
  %5831 = vmatpush.bf16.msra.mxu0 %v2298
  %5832 = vmatpush.bf16.msra.mxu0 %v2290
  %5833 = vmatmul.bf16.gmra.mxu0 %v5473
  %v5834 = vpop.f32.mrf.mxu0
  %v5835 = vadd.f32 %v5822, %v5834
  %v5836 = vpop.f32.mrf.mxu0
  %5837 = vdwg.mxu0
  %5838 = vmatpush.bf16.msra.mxu0 %v2283
  %5839 = vmatpush.bf16.msra.mxu0 %v2275
  %5840 = vmatpush.bf16.msra.mxu0 %v2267
  %5841 = vmatpush.bf16.msra.mxu0 %v2259
  %5842 = vmatpush.bf16.msra.mxu0 %v2251
  %5843 = vmatpush.bf16.msra.mxu0 %v2243
  %5844 = vmatpush.bf16.msra.mxu0 %v2235
  %5845 = vmatpush.bf16.msra.mxu0 %v2227
  %5846 = vmatmul.bf16.gmra.mxu0 %v5472
  %v5847 = vpop.f32.mrf.mxu0
  %v5848 = vadd.f32 0.0, %v5847
  %v5849 = vpop.f32.mrf.mxu0
  %5850 = vdwg.mxu0
  %5851 = vmatpush.bf16.msra.mxu0 %v2347
  %5852 = vmatpush.bf16.msra.mxu0 %v2339
  %5853 = vmatpush.bf16.msra.mxu0 %v2331
  %5854 = vmatpush.bf16.msra.mxu0 %v2323
  %5855 = vmatpush.bf16.msra.mxu0 %v2315
  %5856 = vmatpush.bf16.msra.mxu0 %v2307
  %5857 = vmatpush.bf16.msra.mxu0 %v2299
  %5858 = vmatpush.bf16.msra.mxu0 %v2291
  %5859 = vmatmul.bf16.gmra.mxu0 %v5473
  %v5860 = vpop.f32.mrf.mxu0
  %v5861 = vadd.f32 %v5848, %v5860
  %v5862 = vpop.f32.mrf.mxu0
  %5863 = vdwg.mxu0
  %5864 = vmatpush.bf16.msra.mxu0 %v2284
  %5865 = vmatpush.bf16.msra.mxu0 %v2276
  %5866 = vmatpush.bf16.msra.mxu0 %v2268
  %5867 = vmatpush.bf16.msra.mxu0 %v2260
  %5868 = vmatpush.bf16.msra.mxu0 %v2252
  %5869 = vmatpush.bf16.msra.mxu0 %v2244
  %5870 = vmatpush.bf16.msra.mxu0 %v2236
  %5871 = vmatpush.bf16.msra.mxu0 %v2228
  %5872 = vmatmul.bf16.gmra.mxu0 %v5472
  %v5873 = vpop.f32.mrf.mxu0
  %v5874 = vadd.f32 0.0, %v5873
  %v5875 = vpop.f32.mrf.mxu0
  %5876 = vdwg.mxu0
  %5877 = vmatpush.bf16.msra.mxu0 %v2348
  %5878 = vmatpush.bf16.msra.mxu0 %v2340
  %5879 = vmatpush.bf16.msra.mxu0 %v2332
  %5880 = vmatpush.bf16.msra.mxu0 %v2324
  %5881 = vmatpush.bf16.msra.mxu0 %v2316
  %5882 = vmatpush.bf16.msra.mxu0 %v2308
  %5883 = vmatpush.bf16.msra.mxu0 %v2300
  %5884 = vmatpush.bf16.msra.mxu0 %v2292
  %5885 = vmatmul.bf16.gmra.mxu0 %v5473
  %v5886 = vpop.f32.mrf.mxu0
  %v5887 = vadd.f32 %v5874, %v5886
  %v5888 = vpop.f32.mrf.mxu0
  %5889 = vdwg.mxu0
  %v5890 = vadd.f32 %v5205, %v5705
  %v5891 = vadd.f32 %v5231, %v5731
  %v5892 = vadd.f32 %v5257, %v5757
  %v5893 = vadd.f32 %v5283, %v5783
  %v5894 = vadd.f32 %v5309, %v5809
  %v5895 = vadd.f32 %v5335, %v5835
  %v5896 = vadd.f32 %v5361, %v5861
  %v5897 = vadd.f32 %v5387, %v5887
  %v5898 = vxor.u32 %v5890, 2147483648
  %v5899 = vxor.u32 %v5891, 2147483648
  %v5900 = vxor.u32 %v5892, 2147483648
  %v5901 = vxor.u32 %v5893, 2147483648
  %v5902 = vxor.u32 %v5894, 2147483648
  %v5903 = vxor.u32 %v5895, 2147483648
  %v5904 = vmul.f32 %v5898, 1.442695
  %v5905 = vpow.pop %v5904
  %v5906 = vmul.f32 %v5899, 1.442695
  %v5907 = vpow.pop %v5906
  %v5908 = vmul.f32 %v5900, 1.442695
  %v5909 = vpow.pop %v5908
  %v5910 = vmul.f32 %v5901, 1.442695
  %v5911 = vpow.pop %v5910
  %v5912 = vmul.f32 %v5902, 1.442695
  %v5913 = vpow.pop %v5912
  %v5914 = vmul.f32 %v5903, 1.442695
  %v5915 = vpow.pop %v5914
  %v5916 = vadd.f32 %v5905, 1.0
  %v5917 = vadd.f32 %v5907, 1.0
  %v5918 = vadd.f32 %v5909, 1.0
  %v5919 = vadd.f32 %v5911, 1.0
  %v5920 = vadd.f32 %v5913, 1.0
  %v5921 = vadd.f32 %v5915, 1.0
  %v5922 = vrcp.pop %v5916
  %v5923 = vmul.f32 %v5916, %v5922
  %v5924 = vsub.f32 1.0, %v5923
  %v5925 = vmul.f32 %v5922, %v5924
  %v5926 = vadd.f32 %v5922, %v5925
  %vm5927 = vweird.f32 %v5916
  %vm5928 = vweird.f32 %v5922
  %vm5929 = vmor %vm5927, %vm5928
  %v5930 = vsel %vm5929, %v5922, %v5926
  %v5931 = vand.u32 2147483647, %v5916
  %vm5932 = vcmp.eq.f32.partialorder %v5931, 8.507059e+37
  %v5933 = vand.u32 %v5916, 2147483648
  %v5934 = vor.u32 1.1754944e-38, %v5933
  %v5935 = vsel %vm5932, %v5934, %v5930
  %v5936 = vmul.f32 1.0, %v5935
  %v5937 = vrcp.pop %v5917
  %v5938 = vmul.f32 %v5917, %v5937
  %v5939 = vsub.f32 1.0, %v5938
  %v5940 = vmul.f32 %v5937, %v5939
  %v5941 = vadd.f32 %v5937, %v5940
  %vm5942 = vweird.f32 %v5917
  %vm5943 = vweird.f32 %v5937
  %vm5944 = vmor %vm5942, %vm5943
  %v5945 = vsel %vm5944, %v5937, %v5941
  %v5946 = vand.u32 2147483647, %v5917
  %vm5947 = vcmp.eq.f32.partialorder %v5946, 8.507059e+37
  %v5948 = vand.u32 %v5917, 2147483648
  %v5949 = vor.u32 1.1754944e-38, %v5948
  %v5950 = vsel %vm5947, %v5949, %v5945
  %v5951 = vmul.f32 1.0, %v5950
  %v5952 = vrcp.pop %v5918
  %v5953 = vmul.f32 %v5918, %v5952
  %v5954 = vsub.f32 1.0, %v5953
  %v5955 = vmul.f32 %v5952, %v5954
  %v5956 = vadd.f32 %v5952, %v5955
  %vm5957 = vweird.f32 %v5918
  %vm5958 = vweird.f32 %v5952
  %vm5959 = vmor %vm5957, %vm5958
  %v5960 = vsel %vm5959, %v5952, %v5956
  %v5961 = vand.u32 2147483647, %v5918
  %vm5962 = vcmp.eq.f32.partialorder %v5961, 8.507059e+37
  %v5963 = vand.u32 %v5918, 2147483648
  %v5964 = vor.u32 1.1754944e-38, %v5963
  %v5965 = vsel %vm5962, %v5964, %v5960
  %v5966 = vmul.f32 1.0, %v5965
  %v5967 = vrcp.pop %v5919
  %v5968 = vmul.f32 %v5919, %v5967
  %v5969 = vsub.f32 1.0, %v5968
  %v5970 = vmul.f32 %v5967, %v5969
  %v5971 = vadd.f32 %v5967, %v5970
  %vm5972 = vweird.f32 %v5919
  %vm5973 = vweird.f32 %v5967
  %vm5974 = vmor %vm5972, %vm5973
  %v5975 = vsel %vm5974, %v5967, %v5971
  %v5976 = vand.u32 2147483647, %v5919
  %vm5977 = vcmp.eq.f32.partialorder %v5976, 8.507059e+37
  %v5978 = vand.u32 %v5919, 2147483648
  %v5979 = vor.u32 1.1754944e-38, %v5978
  %v5980 = vsel %vm5977, %v5979, %v5975
  %v5981 = vmul.f32 1.0, %v5980
  %v5982 = vrcp.pop %v5920
  %v5983 = vmul.f32 %v5920, %v5982
  %v5984 = vsub.f32 1.0, %v5983
  %v5985 = vmul.f32 %v5982, %v5984
  %v5986 = vadd.f32 %v5982, %v5985
  %vm5987 = vweird.f32 %v5920
  %vm5988 = vweird.f32 %v5982
  %vm5989 = vmor %vm5987, %vm5988
  %v5990 = vsel %vm5989, %v5982, %v5986
  %v5991 = vand.u32 2147483647, %v5920
  %vm5992 = vcmp.eq.f32.partialorder %v5991, 8.507059e+37
  %v5993 = vand.u32 %v5920, 2147483648
  %v5994 = vor.u32 1.1754944e-38, %v5993
  %v5995 = vsel %vm5992, %v5994, %v5990
  %v5996 = vmul.f32 1.0, %v5995
  %v5997 = vrcp.pop %v5921
  %v5998 = vmul.f32 %v5921, %v5997
  %v5999 = vsub.f32 1.0, %v5998
  %v6000 = vmul.f32 %v5997, %v5999
  %v6001 = vadd.f32 %v5997, %v6000
  %vm6002 = vweird.f32 %v5921
  %vm6003 = vweird.f32 %v5997
  %vm6004 = vmor %vm6002, %vm6003
  %v6005 = vsel %vm6004, %v5997, %v6001
  %v6006 = vand.u32 2147483647, %v5921
  %vm6007 = vcmp.eq.f32.partialorder %v6006, 8.507059e+37
  %v6008 = vand.u32 %v5921, 2147483648
  %v6009 = vor.u32 1.1754944e-38, %v6008
  %v6010 = vsel %vm6007, %v6009, %v6005
  %v6011 = vmul.f32 1.0, %v6010
  %v6012 = vtanh.pop %v5896
  %v6013 = vtanh.pop %v5897
  %v6014 = vmul.f32 %v5966, %v5164
  %v6015 = vmul.f32 %v5981, %v5165
  %v6016 = vmul.f32 %v5936, %v6012
  %v6017 = vmul.f32 %v5951, %v6013
  %v6018 = vadd.f32 %v6014, %v6016
  %v6019 = vadd.f32 %v6015, %v6017
  %v6020 = vtanh.pop %v6018
  %v6021 = vtanh.pop %v6019
  %v6022 = vmul.f32 %v5996, %v6020
  %v6023 = vmul.f32 %v6011, %v6021
  %6026 = vst [vmem:[#allocation1] sm:$0xff] %v6022
  %6027 = vst [vmem:[#allocation1 + $0x9] sm:$0xff] %v6023
  %s6028 = scalar_lea.vmem [#allocation1], 1
  %v6029 = vld [vmem:[%s6028] ss:$9 sm:$0xff]
  %s6031 = scalar_lea.vmem [#allocation3], 3
  %6032 = vst.msk [vmem:[%s6031] ss:$8 sm:$0x3] %vm2829, %v6029
  %6033 = vst.msk [vmem:[%s6031] ss:$8 sm:$0x0] %vm2829, %v6029
  %v6034 = vpack.c.bf16 %v6022, %v6022
  %v6035 = vpack.c.bf16 %v6023, %v6023
  %6036 = vmatpush.bf16.msra.mxu0 %v3274
  %6037 = vmatpush.bf16.msra.mxu0 %v3266
  %6038 = vmatpush.bf16.msra.mxu0 %v3258
  %6039 = vmatpush.bf16.msra.mxu0 %v3250
  %6040 = vmatpush.bf16.msra.mxu0 %v3242
  %6041 = vmatpush.bf16.msra.mxu0 %v3234
  %6042 = vmatpush.bf16.msra.mxu0 %v3226
  %6043 = vmatpush.bf16.msra.mxu0 %v3218
  %6044 = vmatmul.bf16.gmra.mxu0 %v6034
  %v6045 = vpop.f32.mrf.mxu0
  %v6046 = vadd.f32 %v911, %v6045
  %v6047 = vpop.f32.mrf.mxu0
  %6048 = vdwg.mxu0
  %6049 = vmatpush.bf16.msra.mxu0 %v3338
  %6050 = vmatpush.bf16.msra.mxu0 %v3330
  %6051 = vmatpush.bf16.msra.mxu0 %v3322
  %6052 = vmatpush.bf16.msra.mxu0 %v3314
  %6053 = vmatpush.bf16.msra.mxu0 %v3306
  %6054 = vmatpush.bf16.msra.mxu0 %v3298
  %6055 = vmatpush.bf16.msra.mxu0 %v3290
  %6056 = vmatpush.bf16.msra.mxu0 %v3282
  %6057 = vmatmul.bf16.gmra.mxu0 %v6035
  %v6058 = vpop.f32.mrf.mxu0
  %v6059 = vadd.f32 %v6046, %v6058
  %v6060 = vpop.f32.mrf.mxu0
  %6061 = vdwg.mxu0
  %6062 = vmatpush.bf16.msra.mxu0 %v3275
  %6063 = vmatpush.bf16.msra.mxu0 %v3267
  %6064 = vmatpush.bf16.msra.mxu0 %v3259
  %6065 = vmatpush.bf16.msra.mxu0 %v3251
  %6066 = vmatpush.bf16.msra.mxu0 %v3243
  %6067 = vmatpush.bf16.msra.mxu0 %v3235
  %6068 = vmatpush.bf16.msra.mxu0 %v3227
  %6069 = vmatpush.bf16.msra.mxu0 %v3219
  %6070 = vmatmul.bf16.gmra.mxu0 %v6034
  %v6071 = vpop.f32.mrf.mxu0
  %v6072 = vadd.f32 %v912, %v6071
  %v6073 = vpop.f32.mrf.mxu0
  %6074 = vdwg.mxu0
  %6075 = vmatpush.bf16.msra.mxu0 %v3339
  %6076 = vmatpush.bf16.msra.mxu0 %v3331
  %6077 = vmatpush.bf16.msra.mxu0 %v3323
  %6078 = vmatpush.bf16.msra.mxu0 %v3315
  %6079 = vmatpush.bf16.msra.mxu0 %v3307
  %6080 = vmatpush.bf16.msra.mxu0 %v3299
  %6081 = vmatpush.bf16.msra.mxu0 %v3291
  %6082 = vmatpush.bf16.msra.mxu0 %v3283
  %6083 = vmatmul.bf16.gmra.mxu0 %v6035
  %v6084 = vpop.f32.mrf.mxu0
  %v6085 = vadd.f32 %v6072, %v6084
  %v6086 = vpop.f32.mrf.mxu0
  %6087 = vdwg.mxu0
  %6088 = vmatpush.bf16.msra.mxu0 %v3276
  %6089 = vmatpush.bf16.msra.mxu0 %v3268
  %6090 = vmatpush.bf16.msra.mxu0 %v3260
  %6091 = vmatpush.bf16.msra.mxu0 %v3252
  %6092 = vmatpush.bf16.msra.mxu0 %v3244
  %6093 = vmatpush.bf16.msra.mxu0 %v3236
  %6094 = vmatpush.bf16.msra.mxu0 %v3228
  %6095 = vmatpush.bf16.msra.mxu0 %v3220
  %6096 = vmatmul.bf16.gmra.mxu0 %v6034
  %v6097 = vpop.f32.mrf.mxu0
  %v6098 = vadd.f32 %v913, %v6097
  %v6099 = vpop.f32.mrf.mxu0
  %6100 = vdwg.mxu0
  %6101 = vmatpush.bf16.msra.mxu0 %v3340
  %6102 = vmatpush.bf16.msra.mxu0 %v3332
  %6103 = vmatpush.bf16.msra.mxu0 %v3324
  %6104 = vmatpush.bf16.msra.mxu0 %v3316
  %6105 = vmatpush.bf16.msra.mxu0 %v3308
  %6106 = vmatpush.bf16.msra.mxu0 %v3300
  %6107 = vmatpush.bf16.msra.mxu0 %v3292
  %6108 = vmatpush.bf16.msra.mxu0 %v3284
  %6109 = vmatmul.bf16.gmra.mxu0 %v6035
  %v6110 = vpop.f32.mrf.mxu0
  %v6111 = vadd.f32 %v6098, %v6110
  %v6112 = vpop.f32.mrf.mxu0
  %6113 = vdwg.mxu0
  %6114 = vmatpush.bf16.msra.mxu0 %v3277
  %6115 = vmatpush.bf16.msra.mxu0 %v3269
  %6116 = vmatpush.bf16.msra.mxu0 %v3261
  %6117 = vmatpush.bf16.msra.mxu0 %v3253
  %6118 = vmatpush.bf16.msra.mxu0 %v3245
  %6119 = vmatpush.bf16.msra.mxu0 %v3237
  %6120 = vmatpush.bf16.msra.mxu0 %v3229
  %6121 = vmatpush.bf16.msra.mxu0 %v3221
  %6122 = vmatmul.bf16.gmra.mxu0 %v6034
  %v6123 = vpop.f32.mrf.mxu0
  %v6124 = vadd.f32 %v914, %v6123
  %v6125 = vpop.f32.mrf.mxu0
  %6126 = vdwg.mxu0
  %6127 = vmatpush.bf16.msra.mxu0 %v3341
  %6128 = vmatpush.bf16.msra.mxu0 %v3333
  %6129 = vmatpush.bf16.msra.mxu0 %v3325
  %6130 = vmatpush.bf16.msra.mxu0 %v3317
  %6131 = vmatpush.bf16.msra.mxu0 %v3309
  %6132 = vmatpush.bf16.msra.mxu0 %v3301
  %6133 = vmatpush.bf16.msra.mxu0 %v3293
  %6134 = vmatpush.bf16.msra.mxu0 %v3285
  %6135 = vmatmul.bf16.gmra.mxu0 %v6035
  %v6136 = vpop.f32.mrf.mxu0
  %v6137 = vadd.f32 %v6124, %v6136
  %v6138 = vpop.f32.mrf.mxu0
  %6139 = vdwg.mxu0
  %6140 = vmatpush.bf16.msra.mxu0 %v3278
  %6141 = vmatpush.bf16.msra.mxu0 %v3270
  %6142 = vmatpush.bf16.msra.mxu0 %v3262
  %6143 = vmatpush.bf16.msra.mxu0 %v3254
  %6144 = vmatpush.bf16.msra.mxu0 %v3246
  %6145 = vmatpush.bf16.msra.mxu0 %v3238
  %6146 = vmatpush.bf16.msra.mxu0 %v3230
  %6147 = vmatpush.bf16.msra.mxu0 %v3222
  %6148 = vmatmul.bf16.gmra.mxu0 %v6034
  %v6149 = vpop.f32.mrf.mxu0
  %v6150 = vadd.f32 %v915, %v6149
  %v6151 = vpop.f32.mrf.mxu0
  %6152 = vdwg.mxu0
  %6153 = vmatpush.bf16.msra.mxu0 %v3342
  %6154 = vmatpush.bf16.msra.mxu0 %v3334
  %6155 = vmatpush.bf16.msra.mxu0 %v3326
  %6156 = vmatpush.bf16.msra.mxu0 %v3318
  %6157 = vmatpush.bf16.msra.mxu0 %v3310
  %6158 = vmatpush.bf16.msra.mxu0 %v3302
  %6159 = vmatpush.bf16.msra.mxu0 %v3294
  %6160 = vmatpush.bf16.msra.mxu0 %v3286
  %6161 = vmatmul.bf16.gmra.mxu0 %v6035
  %v6162 = vpop.f32.mrf.mxu0
  %v6163 = vadd.f32 %v6150, %v6162
  %v6164 = vpop.f32.mrf.mxu0
  %6165 = vdwg.mxu0
  %6166 = vmatpush.bf16.msra.mxu0 %v3279
  %6167 = vmatpush.bf16.msra.mxu0 %v3271
  %6168 = vmatpush.bf16.msra.mxu0 %v3263
  %6169 = vmatpush.bf16.msra.mxu0 %v3255
  %6170 = vmatpush.bf16.msra.mxu0 %v3247
  %6171 = vmatpush.bf16.msra.mxu0 %v3239
  %6172 = vmatpush.bf16.msra.mxu0 %v3231
  %6173 = vmatpush.bf16.msra.mxu0 %v3223
  %6174 = vmatmul.bf16.gmra.mxu0 %v6034
  %v6175 = vpop.f32.mrf.mxu0
  %v6176 = vadd.f32 %v916, %v6175
  %v6177 = vpop.f32.mrf.mxu0
  %6178 = vdwg.mxu0
  %6179 = vmatpush.bf16.msra.mxu0 %v3343
  %6180 = vmatpush.bf16.msra.mxu0 %v3335
  %6181 = vmatpush.bf16.msra.mxu0 %v3327
  %6182 = vmatpush.bf16.msra.mxu0 %v3319
  %6183 = vmatpush.bf16.msra.mxu0 %v3311
  %6184 = vmatpush.bf16.msra.mxu0 %v3303
  %6185 = vmatpush.bf16.msra.mxu0 %v3295
  %6186 = vmatpush.bf16.msra.mxu0 %v3287
  %6187 = vmatmul.bf16.gmra.mxu0 %v6035
  %v6188 = vpop.f32.mrf.mxu0
  %v6189 = vadd.f32 %v6176, %v6188
  %v6190 = vpop.f32.mrf.mxu0
  %6191 = vdwg.mxu0
  %6192 = vmatpush.bf16.msra.mxu0 %v3280
  %6193 = vmatpush.bf16.msra.mxu0 %v3272
  %6194 = vmatpush.bf16.msra.mxu0 %v3264
  %6195 = vmatpush.bf16.msra.mxu0 %v3256
  %6196 = vmatpush.bf16.msra.mxu0 %v3248
  %6197 = vmatpush.bf16.msra.mxu0 %v3240
  %6198 = vmatpush.bf16.msra.mxu0 %v3232
  %6199 = vmatpush.bf16.msra.mxu0 %v3224
  %6200 = vmatmul.bf16.gmra.mxu0 %v6034
  %v6201 = vpop.f32.mrf.mxu0
  %v6202 = vadd.f32 %v917, %v6201
  %v6203 = vpop.f32.mrf.mxu0
  %6204 = vdwg.mxu0
  %6205 = vmatpush.bf16.msra.mxu0 %v3344
  %6206 = vmatpush.bf16.msra.mxu0 %v3336
  %6207 = vmatpush.bf16.msra.mxu0 %v3328
  %6208 = vmatpush.bf16.msra.mxu0 %v3320
  %6209 = vmatpush.bf16.msra.mxu0 %v3312
  %6210 = vmatpush.bf16.msra.mxu0 %v3304
  %6211 = vmatpush.bf16.msra.mxu0 %v3296
  %6212 = vmatpush.bf16.msra.mxu0 %v3288
  %6213 = vmatmul.bf16.gmra.mxu0 %v6035
  %v6214 = vpop.f32.mrf.mxu0
  %v6215 = vadd.f32 %v6202, %v6214
  %v6216 = vpop.f32.mrf.mxu0
  %6217 = vdwg.mxu0
  %6218 = vmatpush.bf16.msra.mxu0 %v3281
  %6219 = vmatpush.bf16.msra.mxu0 %v3273
  %6220 = vmatpush.bf16.msra.mxu0 %v3265
  %6221 = vmatpush.bf16.msra.mxu0 %v3257
  %6222 = vmatpush.bf16.msra.mxu0 %v3249
  %6223 = vmatpush.bf16.msra.mxu0 %v3241
  %6224 = vmatpush.bf16.msra.mxu0 %v3233
  %6225 = vmatpush.bf16.msra.mxu0 %v3225
  %6226 = vmatmul.bf16.gmra.mxu0 %v6034
  %v6227 = vpop.f32.mrf.mxu0
  %v6228 = vadd.f32 %v918, %v6227
  %v6229 = vpop.f32.mrf.mxu0
  %6230 = vdwg.mxu0
  %6231 = vmatpush.bf16.msra.mxu0 %v3345
  %6232 = vmatpush.bf16.msra.mxu0 %v3337
  %6233 = vmatpush.bf16.msra.mxu0 %v3329
  %6234 = vmatpush.bf16.msra.mxu0 %v3321
  %6235 = vmatpush.bf16.msra.mxu0 %v3313
  %6236 = vmatpush.bf16.msra.mxu0 %v3305
  %6237 = vmatpush.bf16.msra.mxu0 %v3297
  %6238 = vmatpush.bf16.msra.mxu0 %v3289
  %6239 = vmatmul.bf16.gmra.mxu0 %v6035
  %v6240 = vpop.f32.mrf.mxu0
  %v6241 = vadd.f32 %v6228, %v6240
  %v6242 = vpop.f32.mrf.mxu0
  %6243 = vdwg.mxu0
  %v6244 = vld [vmem:[%s471] sm:$0xff]
  %v6245 = vld [vmem:[%s471 + $0x8] sm:$0xff]
  %v6254 = vrot.slane %v5523, 6
  %v6255 = vrot.slane %v5549, 4
  %v6256 = vrot.slane %v5575, 2
  %v6257 = vrot.slane %v5627, 6
  %v6258 = vrot.slane %v5653, 4
  %v6259 = vrot.slane %v5679, 2
  %v6260 = vsel %vm385, %v5497, %v6254
  %v6261 = vsel %vm387, %v6255, %v6256
  %v6262 = vsel %vm389, %v6260, %v6261
  %v6263 = vsel %vm385, %v5601, %v6257
  %v6264 = vsel %vm387, %v6258, %v6259
  %v6265 = vsel %vm389, %v6263, %v6264
  %v6268 = vadd.f32 %v6244, %v6262
  %v6269 = vadd.f32 %v6245, %v6265
  %v6270 = vxor.u32 %v6268, 2147483648
  %v6271 = vxor.u32 %v6269, 2147483648
  %v6272 = vmul.f32 %v6270, 1.442695
  %v6273 = vpow.pop %v6272
  %v6274 = vmul.f32 %v6271, 1.442695
  %v6275 = vpow.pop %v6274
  %v6276 = vadd.f32 %v6273, 1.0
  %v6277 = vadd.f32 %v6275, 1.0
  %v6278 = vrcp.pop %v6276
  %v6279 = vmul.f32 %v6276, %v6278
  %v6280 = vsub.f32 1.0, %v6279
  %v6281 = vmul.f32 %v6278, %v6280
  %v6282 = vadd.f32 %v6278, %v6281
  %vm6283 = vweird.f32 %v6276
  %vm6284 = vweird.f32 %v6278
  %vm6285 = vmor %vm6283, %vm6284
  %v6286 = vsel %vm6285, %v6278, %v6282
  %v6287 = vand.u32 2147483647, %v6276
  %vm6288 = vcmp.eq.f32.partialorder %v6287, 8.507059e+37
  %v6289 = vand.u32 %v6276, 2147483648
  %v6290 = vor.u32 1.1754944e-38, %v6289
  %v6291 = vsel %vm6288, %v6290, %v6286
  %v6292 = vmul.f32 1.0, %v6291
  %v6293 = vrcp.pop %v6277
  %v6294 = vmul.f32 %v6277, %v6293
  %v6295 = vsub.f32 1.0, %v6294
  %v6296 = vmul.f32 %v6293, %v6295
  %v6297 = vadd.f32 %v6293, %v6296
  %vm6298 = vweird.f32 %v6277
  %vm6299 = vweird.f32 %v6293
  %vm6300 = vmor %vm6298, %vm6299
  %v6301 = vsel %vm6300, %v6293, %v6297
  %v6302 = vand.u32 2147483647, %v6277
  %vm6303 = vcmp.eq.f32.partialorder %v6302, 8.507059e+37
  %v6304 = vand.u32 %v6277, 2147483648
  %v6305 = vor.u32 1.1754944e-38, %v6304
  %v6306 = vsel %vm6303, %v6305, %v6301
  %v6307 = vmul.f32 1.0, %v6306
  %v6309 = vrot.slane %v6269, 4
  %v6311 = vtanh.pop %v6309
  %v6313 = vrot.slane %v6292, 4
  %v6315 = vmul.f32 %v6313, %v5463
  %v6316 = vmul.f32 %v6292, %v6311
  %v6317 = vadd.f32 %v6315, %v6316
  %v6318 = vtanh.pop %v6317
  %v6319 = vmul.f32 %v6307, %v6318
  %6321 = vst [vmem:[#allocation1] ss:$4 sm:$0xff] %v6319
  %v6322 = vld.sshfl [vmem:[#allocation1] sm:$0xff pattern:$0x73625140]
  %v6323 = vld.sshfl [vmem:[#allocation1 + $0x8] sm:$0xff pattern:$0x73625140]
  %v6326 = vpack.c.bf16 %v6322, %v6322
  %v6327 = vpack.c.bf16 %v6323, %v6323
  %6328 = vmatpush.bf16.msra.mxu0 %v1429
  %6329 = vmatpush.bf16.msra.mxu0 %v1421
  %6330 = vmatpush.bf16.msra.mxu0 %v1413
  %6331 = vmatpush.bf16.msra.mxu0 %v1405
  %6332 = vmatpush.bf16.msra.mxu0 %v1397
  %6333 = vmatpush.bf16.msra.mxu0 %v1389
  %6334 = vmatpush.bf16.msra.mxu0 %v1381
  %6335 = vmatpush.bf16.msra.mxu0 %v1373
  %6336 = vmatmul.bf16.gmra.mxu0 %v6326
  %v6337 = vpop.f32.mrf.mxu0
  %v6338 = vadd.f32 0.0, %v6337
  %v6339 = vpop.f32.mrf.mxu0
  %6340 = vdwg.mxu0
  %6341 = vmatpush.bf16.msra.mxu0 %v1493
  %6342 = vmatpush.bf16.msra.mxu0 %v1485
  %6343 = vmatpush.bf16.msra.mxu0 %v1477
  %6344 = vmatpush.bf16.msra.mxu0 %v1469
  %6345 = vmatpush.bf16.msra.mxu0 %v1461
  %6346 = vmatpush.bf16.msra.mxu0 %v1453
  %6347 = vmatpush.bf16.msra.mxu0 %v1445
  %6348 = vmatpush.bf16.msra.mxu0 %v1437
  %6349 = vmatmul.bf16.gmra.mxu0 %v6327
  %v6350 = vpop.f32.mrf.mxu0
  %v6351 = vadd.f32 %v6338, %v6350
  %v6352 = vpop.f32.mrf.mxu0
  %6353 = vdwg.mxu0
  %6354 = vmatpush.bf16.msra.mxu0 %v1430
  %6355 = vmatpush.bf16.msra.mxu0 %v1422
  %6356 = vmatpush.bf16.msra.mxu0 %v1414
  %6357 = vmatpush.bf16.msra.mxu0 %v1406
  %6358 = vmatpush.bf16.msra.mxu0 %v1398
  %6359 = vmatpush.bf16.msra.mxu0 %v1390
  %6360 = vmatpush.bf16.msra.mxu0 %v1382
  %6361 = vmatpush.bf16.msra.mxu0 %v1374
  %6362 = vmatmul.bf16.gmra.mxu0 %v6326
  %v6363 = vpop.f32.mrf.mxu0
  %v6364 = vadd.f32 0.0, %v6363
  %v6365 = vpop.f32.mrf.mxu0
  %6366 = vdwg.mxu0
  %6367 = vmatpush.bf16.msra.mxu0 %v1494
  %6368 = vmatpush.bf16.msra.mxu0 %v1486
  %6369 = vmatpush.bf16.msra.mxu0 %v1478
  %6370 = vmatpush.bf16.msra.mxu0 %v1470
  %6371 = vmatpush.bf16.msra.mxu0 %v1462
  %6372 = vmatpush.bf16.msra.mxu0 %v1454
  %6373 = vmatpush.bf16.msra.mxu0 %v1446
  %6374 = vmatpush.bf16.msra.mxu0 %v1438
  %6375 = vmatmul.bf16.gmra.mxu0 %v6327
  %v6376 = vpop.f32.mrf.mxu0
  %v6377 = vadd.f32 %v6364, %v6376
  %v6378 = vpop.f32.mrf.mxu0
  %6379 = vdwg.mxu0
  %6380 = vmatpush.bf16.msra.mxu0 %v1431
  %6381 = vmatpush.bf16.msra.mxu0 %v1423
  %6382 = vmatpush.bf16.msra.mxu0 %v1415
  %6383 = vmatpush.bf16.msra.mxu0 %v1407
  %6384 = vmatpush.bf16.msra.mxu0 %v1399
  %6385 = vmatpush.bf16.msra.mxu0 %v1391
  %6386 = vmatpush.bf16.msra.mxu0 %v1383
  %6387 = vmatpush.bf16.msra.mxu0 %v1375
  %6388 = vmatmul.bf16.gmra.mxu0 %v6326
  %v6389 = vpop.f32.mrf.mxu0
  %v6390 = vadd.f32 0.0, %v6389
  %v6391 = vpop.f32.mrf.mxu0
  %6392 = vdwg.mxu0
  %6393 = vmatpush.bf16.msra.mxu0 %v1495
  %6394 = vmatpush.bf16.msra.mxu0 %v1487
  %6395 = vmatpush.bf16.msra.mxu0 %v1479
  %6396 = vmatpush.bf16.msra.mxu0 %v1471
  %6397 = vmatpush.bf16.msra.mxu0 %v1463
  %6398 = vmatpush.bf16.msra.mxu0 %v1455
  %6399 = vmatpush.bf16.msra.mxu0 %v1447
  %6400 = vmatpush.bf16.msra.mxu0 %v1439
  %6401 = vmatmul.bf16.gmra.mxu0 %v6327
  %v6402 = vpop.f32.mrf.mxu0
  %v6403 = vadd.f32 %v6390, %v6402
  %v6404 = vpop.f32.mrf.mxu0
  %6405 = vdwg.mxu0
  %6406 = vmatpush.bf16.msra.mxu0 %v1432
  %6407 = vmatpush.bf16.msra.mxu0 %v1424
  %6408 = vmatpush.bf16.msra.mxu0 %v1416
  %6409 = vmatpush.bf16.msra.mxu0 %v1408
  %6410 = vmatpush.bf16.msra.mxu0 %v1400
  %6411 = vmatpush.bf16.msra.mxu0 %v1392
  %6412 = vmatpush.bf16.msra.mxu0 %v1384
  %6413 = vmatpush.bf16.msra.mxu0 %v1376
  %6414 = vmatmul.bf16.gmra.mxu0 %v6326
  %v6415 = vpop.f32.mrf.mxu0
  %v6416 = vadd.f32 0.0, %v6415
  %v6417 = vpop.f32.mrf.mxu0
  %6418 = vdwg.mxu0
  %6419 = vmatpush.bf16.msra.mxu0 %v1496
  %6420 = vmatpush.bf16.msra.mxu0 %v1488
  %6421 = vmatpush.bf16.msra.mxu0 %v1480
  %6422 = vmatpush.bf16.msra.mxu0 %v1472
  %6423 = vmatpush.bf16.msra.mxu0 %v1464
  %6424 = vmatpush.bf16.msra.mxu0 %v1456
  %6425 = vmatpush.bf16.msra.mxu0 %v1448
  %6426 = vmatpush.bf16.msra.mxu0 %v1440
  %6427 = vmatmul.bf16.gmra.mxu0 %v6327
  %v6428 = vpop.f32.mrf.mxu0
  %v6429 = vadd.f32 %v6416, %v6428
  %v6430 = vpop.f32.mrf.mxu0
  %6431 = vdwg.mxu0
  %6432 = vmatpush.bf16.msra.mxu0 %v1433
  %6433 = vmatpush.bf16.msra.mxu0 %v1425
  %6434 = vmatpush.bf16.msra.mxu0 %v1417
  %6435 = vmatpush.bf16.msra.mxu0 %v1409
  %6436 = vmatpush.bf16.msra.mxu0 %v1401
  %6437 = vmatpush.bf16.msra.mxu0 %v1393
  %6438 = vmatpush.bf16.msra.mxu0 %v1385
  %6439 = vmatpush.bf16.msra.mxu0 %v1377
  %6440 = vmatmul.bf16.gmra.mxu0 %v6326
  %v6441 = vpop.f32.mrf.mxu0
  %v6442 = vadd.f32 0.0, %v6441
  %v6443 = vpop.f32.mrf.mxu0
  %6444 = vdwg.mxu0
  %6445 = vmatpush.bf16.msra.mxu0 %v1497
  %6446 = vmatpush.bf16.msra.mxu0 %v1489
  %6447 = vmatpush.bf16.msra.mxu0 %v1481
  %6448 = vmatpush.bf16.msra.mxu0 %v1473
  %6449 = vmatpush.bf16.msra.mxu0 %v1465
  %6450 = vmatpush.bf16.msra.mxu0 %v1457
  %6451 = vmatpush.bf16.msra.mxu0 %v1449
  %6452 = vmatpush.bf16.msra.mxu0 %v1441
  %6453 = vmatmul.bf16.gmra.mxu0 %v6327
  %v6454 = vpop.f32.mrf.mxu0
  %v6455 = vadd.f32 %v6442, %v6454
  %v6456 = vpop.f32.mrf.mxu0
  %6457 = vdwg.mxu0
  %6458 = vmatpush.bf16.msra.mxu0 %v1434
  %6459 = vmatpush.bf16.msra.mxu0 %v1426
  %6460 = vmatpush.bf16.msra.mxu0 %v1418
  %6461 = vmatpush.bf16.msra.mxu0 %v1410
  %6462 = vmatpush.bf16.msra.mxu0 %v1402
  %6463 = vmatpush.bf16.msra.mxu0 %v1394
  %6464 = vmatpush.bf16.msra.mxu0 %v1386
  %6465 = vmatpush.bf16.msra.mxu0 %v1378
  %6466 = vmatmul.bf16.gmra.mxu0 %v6326
  %v6467 = vpop.f32.mrf.mxu0
  %v6468 = vadd.f32 0.0, %v6467
  %v6469 = vpop.f32.mrf.mxu0
  %6470 = vdwg.mxu0
  %6471 = vmatpush.bf16.msra.mxu0 %v1498
  %6472 = vmatpush.bf16.msra.mxu0 %v1490
  %6473 = vmatpush.bf16.msra.mxu0 %v1482
  %6474 = vmatpush.bf16.msra.mxu0 %v1474
  %6475 = vmatpush.bf16.msra.mxu0 %v1466
  %6476 = vmatpush.bf16.msra.mxu0 %v1458
  %6477 = vmatpush.bf16.msra.mxu0 %v1450
  %6478 = vmatpush.bf16.msra.mxu0 %v1442
  %6479 = vmatmul.bf16.gmra.mxu0 %v6327
  %v6480 = vpop.f32.mrf.mxu0
  %v6481 = vadd.f32 %v6468, %v6480
  %v6482 = vpop.f32.mrf.mxu0
  %6483 = vdwg.mxu0
  %6484 = vmatpush.bf16.msra.mxu0 %v1435
  %6485 = vmatpush.bf16.msra.mxu0 %v1427
  %6486 = vmatpush.bf16.msra.mxu0 %v1419
  %6487 = vmatpush.bf16.msra.mxu0 %v1411
  %6488 = vmatpush.bf16.msra.mxu0 %v1403
  %6489 = vmatpush.bf16.msra.mxu0 %v1395
  %6490 = vmatpush.bf16.msra.mxu0 %v1387
  %6491 = vmatpush.bf16.msra.mxu0 %v1379
  %6492 = vmatmul.bf16.gmra.mxu0 %v6326
  %v6493 = vpop.f32.mrf.mxu0
  %v6494 = vadd.f32 0.0, %v6493
  %v6495 = vpop.f32.mrf.mxu0
  %6496 = vdwg.mxu0
  %6497 = vmatpush.bf16.msra.mxu0 %v1499
  %6498 = vmatpush.bf16.msra.mxu0 %v1491
  %6499 = vmatpush.bf16.msra.mxu0 %v1483
  %6500 = vmatpush.bf16.msra.mxu0 %v1475
  %6501 = vmatpush.bf16.msra.mxu0 %v1467
  %6502 = vmatpush.bf16.msra.mxu0 %v1459
  %6503 = vmatpush.bf16.msra.mxu0 %v1451
  %6504 = vmatpush.bf16.msra.mxu0 %v1443
  %6505 = vmatmul.bf16.gmra.mxu0 %v6327
  %v6506 = vpop.f32.mrf.mxu0
  %v6507 = vadd.f32 %v6494, %v6506
  %v6508 = vpop.f32.mrf.mxu0
  %6509 = vdwg.mxu0
  %6510 = vmatpush.bf16.msra.mxu0 %v1436
  %6511 = vmatpush.bf16.msra.mxu0 %v1428
  %6512 = vmatpush.bf16.msra.mxu0 %v1420
  %6513 = vmatpush.bf16.msra.mxu0 %v1412
  %6514 = vmatpush.bf16.msra.mxu0 %v1404
  %6515 = vmatpush.bf16.msra.mxu0 %v1396
  %6516 = vmatpush.bf16.msra.mxu0 %v1388
  %6517 = vmatpush.bf16.msra.mxu0 %v1380
  %6518 = vmatmul.bf16.gmra.mxu0 %v6326
  %v6519 = vpop.f32.mrf.mxu0
  %v6520 = vadd.f32 0.0, %v6519
  %v6521 = vpop.f32.mrf.mxu0
  %6522 = vdwg.mxu0
  %6523 = vmatpush.bf16.msra.mxu0 %v1500
  %6524 = vmatpush.bf16.msra.mxu0 %v1492
  %6525 = vmatpush.bf16.msra.mxu0 %v1484
  %6526 = vmatpush.bf16.msra.mxu0 %v1476
  %6527 = vmatpush.bf16.msra.mxu0 %v1468
  %6528 = vmatpush.bf16.msra.mxu0 %v1460
  %6529 = vmatpush.bf16.msra.mxu0 %v1452
  %6530 = vmatpush.bf16.msra.mxu0 %v1444
  %6531 = vmatmul.bf16.gmra.mxu0 %v6327
  %v6532 = vpop.f32.mrf.mxu0
  %v6533 = vadd.f32 %v6520, %v6532
  %v6534 = vpop.f32.mrf.mxu0
  %6535 = vdwg.mxu0
  %6536 = vmatpush.bf16.msra.mxu0 %v2277
  %6537 = vmatpush.bf16.msra.mxu0 %v2269
  %6538 = vmatpush.bf16.msra.mxu0 %v2261
  %6539 = vmatpush.bf16.msra.mxu0 %v2253
  %6540 = vmatpush.bf16.msra.mxu0 %v2245
  %6541 = vmatpush.bf16.msra.mxu0 %v2237
  %6542 = vmatpush.bf16.msra.mxu0 %v2229
  %6543 = vmatpush.bf16.msra.mxu0 %v2221
  %6544 = vmatmul.bf16.gmra.mxu0 %v6326
  %v6545 = vpop.f32.mrf.mxu0
  %v6546 = vadd.f32 0.0, %v6545
  %v6547 = vpop.f32.mrf.mxu0
  %6548 = vdwg.mxu0
  %6549 = vmatpush.bf16.msra.mxu0 %v2341
  %6550 = vmatpush.bf16.msra.mxu0 %v2333
  %6551 = vmatpush.bf16.msra.mxu0 %v2325
  %6552 = vmatpush.bf16.msra.mxu0 %v2317
  %6553 = vmatpush.bf16.msra.mxu0 %v2309
  %6554 = vmatpush.bf16.msra.mxu0 %v2301
  %6555 = vmatpush.bf16.msra.mxu0 %v2293
  %6556 = vmatpush.bf16.msra.mxu0 %v2285
  %6557 = vmatmul.bf16.gmra.mxu0 %v6327
  %v6558 = vpop.f32.mrf.mxu0
  %v6559 = vadd.f32 %v6546, %v6558
  %v6560 = vpop.f32.mrf.mxu0
  %6561 = vdwg.mxu0
  %6562 = vmatpush.bf16.msra.mxu0 %v2278
  %6563 = vmatpush.bf16.msra.mxu0 %v2270
  %6564 = vmatpush.bf16.msra.mxu0 %v2262
  %6565 = vmatpush.bf16.msra.mxu0 %v2254
  %6566 = vmatpush.bf16.msra.mxu0 %v2246
  %6567 = vmatpush.bf16.msra.mxu0 %v2238
  %6568 = vmatpush.bf16.msra.mxu0 %v2230
  %6569 = vmatpush.bf16.msra.mxu0 %v2222
  %6570 = vmatmul.bf16.gmra.mxu0 %v6326
  %v6571 = vpop.f32.mrf.mxu0
  %v6572 = vadd.f32 0.0, %v6571
  %v6573 = vpop.f32.mrf.mxu0
  %6574 = vdwg.mxu0
  %6575 = vmatpush.bf16.msra.mxu0 %v2342
  %6576 = vmatpush.bf16.msra.mxu0 %v2334
  %6577 = vmatpush.bf16.msra.mxu0 %v2326
  %6578 = vmatpush.bf16.msra.mxu0 %v2318
  %6579 = vmatpush.bf16.msra.mxu0 %v2310
  %6580 = vmatpush.bf16.msra.mxu0 %v2302
  %6581 = vmatpush.bf16.msra.mxu0 %v2294
  %6582 = vmatpush.bf16.msra.mxu0 %v2286
  %6583 = vmatmul.bf16.gmra.mxu0 %v6327
  %v6584 = vpop.f32.mrf.mxu0
  %v6585 = vadd.f32 %v6572, %v6584
  %v6586 = vpop.f32.mrf.mxu0
  %6587 = vdwg.mxu0
  %6588 = vmatpush.bf16.msra.mxu0 %v2279
  %6589 = vmatpush.bf16.msra.mxu0 %v2271
  %6590 = vmatpush.bf16.msra.mxu0 %v2263
  %6591 = vmatpush.bf16.msra.mxu0 %v2255
  %6592 = vmatpush.bf16.msra.mxu0 %v2247
  %6593 = vmatpush.bf16.msra.mxu0 %v2239
  %6594 = vmatpush.bf16.msra.mxu0 %v2231
  %6595 = vmatpush.bf16.msra.mxu0 %v2223
  %6596 = vmatmul.bf16.gmra.mxu0 %v6326
  %v6597 = vpop.f32.mrf.mxu0
  %v6598 = vadd.f32 0.0, %v6597
  %v6599 = vpop.f32.mrf.mxu0
  %6600 = vdwg.mxu0
  %6601 = vmatpush.bf16.msra.mxu0 %v2343
  %6602 = vmatpush.bf16.msra.mxu0 %v2335
  %6603 = vmatpush.bf16.msra.mxu0 %v2327
  %6604 = vmatpush.bf16.msra.mxu0 %v2319
  %6605 = vmatpush.bf16.msra.mxu0 %v2311
  %6606 = vmatpush.bf16.msra.mxu0 %v2303
  %6607 = vmatpush.bf16.msra.mxu0 %v2295
  %6608 = vmatpush.bf16.msra.mxu0 %v2287
  %6609 = vmatmul.bf16.gmra.mxu0 %v6327
  %v6610 = vpop.f32.mrf.mxu0
  %v6611 = vadd.f32 %v6598, %v6610
  %v6612 = vpop.f32.mrf.mxu0
  %6613 = vdwg.mxu0
  %6614 = vmatpush.bf16.msra.mxu0 %v2280
  %6615 = vmatpush.bf16.msra.mxu0 %v2272
  %6616 = vmatpush.bf16.msra.mxu0 %v2264
  %6617 = vmatpush.bf16.msra.mxu0 %v2256
  %6618 = vmatpush.bf16.msra.mxu0 %v2248
  %6619 = vmatpush.bf16.msra.mxu0 %v2240
  %6620 = vmatpush.bf16.msra.mxu0 %v2232
  %6621 = vmatpush.bf16.msra.mxu0 %v2224
  %6622 = vmatmul.bf16.gmra.mxu0 %v6326
  %v6623 = vpop.f32.mrf.mxu0
  %v6624 = vadd.f32 0.0, %v6623
  %v6625 = vpop.f32.mrf.mxu0
  %6626 = vdwg.mxu0
  %6627 = vmatpush.bf16.msra.mxu0 %v2344
  %6628 = vmatpush.bf16.msra.mxu0 %v2336
  %6629 = vmatpush.bf16.msra.mxu0 %v2328
  %6630 = vmatpush.bf16.msra.mxu0 %v2320
  %6631 = vmatpush.bf16.msra.mxu0 %v2312
  %6632 = vmatpush.bf16.msra.mxu0 %v2304
  %6633 = vmatpush.bf16.msra.mxu0 %v2296
  %6634 = vmatpush.bf16.msra.mxu0 %v2288
  %6635 = vmatmul.bf16.gmra.mxu0 %v6327
  %v6636 = vpop.f32.mrf.mxu0
  %v6637 = vadd.f32 %v6624, %v6636
  %v6638 = vpop.f32.mrf.mxu0
  %6639 = vdwg.mxu0
  %6640 = vmatpush.bf16.msra.mxu0 %v2281
  %6641 = vmatpush.bf16.msra.mxu0 %v2273
  %6642 = vmatpush.bf16.msra.mxu0 %v2265
  %6643 = vmatpush.bf16.msra.mxu0 %v2257
  %6644 = vmatpush.bf16.msra.mxu0 %v2249
  %6645 = vmatpush.bf16.msra.mxu0 %v2241
  %6646 = vmatpush.bf16.msra.mxu0 %v2233
  %6647 = vmatpush.bf16.msra.mxu0 %v2225
  %6648 = vmatmul.bf16.gmra.mxu0 %v6326
  %v6649 = vpop.f32.mrf.mxu0
  %v6650 = vadd.f32 0.0, %v6649
  %v6651 = vpop.f32.mrf.mxu0
  %6652 = vdwg.mxu0
  %6653 = vmatpush.bf16.msra.mxu0 %v2345
  %6654 = vmatpush.bf16.msra.mxu0 %v2337
  %6655 = vmatpush.bf16.msra.mxu0 %v2329
  %6656 = vmatpush.bf16.msra.mxu0 %v2321
  %6657 = vmatpush.bf16.msra.mxu0 %v2313
  %6658 = vmatpush.bf16.msra.mxu0 %v2305
  %6659 = vmatpush.bf16.msra.mxu0 %v2297
  %6660 = vmatpush.bf16.msra.mxu0 %v2289
  %6661 = vmatmul.bf16.gmra.mxu0 %v6327
  %v6662 = vpop.f32.mrf.mxu0
  %v6663 = vadd.f32 %v6650, %v6662
  %v6664 = vpop.f32.mrf.mxu0
  %6665 = vdwg.mxu0
  %6666 = vmatpush.bf16.msra.mxu0 %v2282
  %6667 = vmatpush.bf16.msra.mxu0 %v2274
  %6668 = vmatpush.bf16.msra.mxu0 %v2266
  %6669 = vmatpush.bf16.msra.mxu0 %v2258
  %6670 = vmatpush.bf16.msra.mxu0 %v2250
  %6671 = vmatpush.bf16.msra.mxu0 %v2242
  %6672 = vmatpush.bf16.msra.mxu0 %v2234
  %6673 = vmatpush.bf16.msra.mxu0 %v2226
  %6674 = vmatmul.bf16.gmra.mxu0 %v6326
  %v6675 = vpop.f32.mrf.mxu0
  %v6676 = vadd.f32 0.0, %v6675
  %v6677 = vpop.f32.mrf.mxu0
  %6678 = vdwg.mxu0
  %6679 = vmatpush.bf16.msra.mxu0 %v2346
  %6680 = vmatpush.bf16.msra.mxu0 %v2338
  %6681 = vmatpush.bf16.msra.mxu0 %v2330
  %6682 = vmatpush.bf16.msra.mxu0 %v2322
  %6683 = vmatpush.bf16.msra.mxu0 %v2314
  %6684 = vmatpush.bf16.msra.mxu0 %v2306
  %6685 = vmatpush.bf16.msra.mxu0 %v2298
  %6686 = vmatpush.bf16.msra.mxu0 %v2290
  %6687 = vmatmul.bf16.gmra.mxu0 %v6327
  %v6688 = vpop.f32.mrf.mxu0
  %v6689 = vadd.f32 %v6676, %v6688
  %v6690 = vpop.f32.mrf.mxu0
  %6691 = vdwg.mxu0
  %6692 = vmatpush.bf16.msra.mxu0 %v2283
  %6693 = vmatpush.bf16.msra.mxu0 %v2275
  %6694 = vmatpush.bf16.msra.mxu0 %v2267
  %6695 = vmatpush.bf16.msra.mxu0 %v2259
  %6696 = vmatpush.bf16.msra.mxu0 %v2251
  %6697 = vmatpush.bf16.msra.mxu0 %v2243
  %6698 = vmatpush.bf16.msra.mxu0 %v2235
  %6699 = vmatpush.bf16.msra.mxu0 %v2227
  %6700 = vmatmul.bf16.gmra.mxu0 %v6326
  %v6701 = vpop.f32.mrf.mxu0
  %v6702 = vadd.f32 0.0, %v6701
  %v6703 = vpop.f32.mrf.mxu0
  %6704 = vdwg.mxu0
  %6705 = vmatpush.bf16.msra.mxu0 %v2347
  %6706 = vmatpush.bf16.msra.mxu0 %v2339
  %6707 = vmatpush.bf16.msra.mxu0 %v2331
  %6708 = vmatpush.bf16.msra.mxu0 %v2323
  %6709 = vmatpush.bf16.msra.mxu0 %v2315
  %6710 = vmatpush.bf16.msra.mxu0 %v2307
  %6711 = vmatpush.bf16.msra.mxu0 %v2299
  %6712 = vmatpush.bf16.msra.mxu0 %v2291
  %6713 = vmatmul.bf16.gmra.mxu0 %v6327
  %v6714 = vpop.f32.mrf.mxu0
  %v6715 = vadd.f32 %v6702, %v6714
  %v6716 = vpop.f32.mrf.mxu0
  %6717 = vdwg.mxu0
  %6718 = vmatpush.bf16.msra.mxu0 %v2284
  %6719 = vmatpush.bf16.msra.mxu0 %v2276
  %6720 = vmatpush.bf16.msra.mxu0 %v2268
  %6721 = vmatpush.bf16.msra.mxu0 %v2260
  %6722 = vmatpush.bf16.msra.mxu0 %v2252
  %6723 = vmatpush.bf16.msra.mxu0 %v2244
  %6724 = vmatpush.bf16.msra.mxu0 %v2236
  %6725 = vmatpush.bf16.msra.mxu0 %v2228
  %6726 = vmatmul.bf16.gmra.mxu0 %v6326
  %v6727 = vpop.f32.mrf.mxu0
  %v6728 = vadd.f32 0.0, %v6727
  %v6729 = vpop.f32.mrf.mxu0
  %6730 = vdwg.mxu0
  %6731 = vmatpush.bf16.msra.mxu0 %v2348
  %6732 = vmatpush.bf16.msra.mxu0 %v2340
  %6733 = vmatpush.bf16.msra.mxu0 %v2332
  %6734 = vmatpush.bf16.msra.mxu0 %v2324
  %6735 = vmatpush.bf16.msra.mxu0 %v2316
  %6736 = vmatpush.bf16.msra.mxu0 %v2308
  %6737 = vmatpush.bf16.msra.mxu0 %v2300
  %6738 = vmatpush.bf16.msra.mxu0 %v2292
  %6739 = vmatmul.bf16.gmra.mxu0 %v6327
  %v6740 = vpop.f32.mrf.mxu0
  %v6741 = vadd.f32 %v6728, %v6740
  %v6742 = vpop.f32.mrf.mxu0
  %6743 = vdwg.mxu0
  %v6744 = vadd.f32 %v6059, %v6559
  %v6745 = vadd.f32 %v6085, %v6585
  %v6746 = vadd.f32 %v6111, %v6611
  %v6747 = vadd.f32 %v6137, %v6637
  %v6748 = vadd.f32 %v6163, %v6663
  %v6749 = vadd.f32 %v6189, %v6689
  %v6750 = vadd.f32 %v6215, %v6715
  %v6751 = vadd.f32 %v6241, %v6741
  %v6752 = vxor.u32 %v6744, 2147483648
  %v6753 = vxor.u32 %v6745, 2147483648
  %v6754 = vxor.u32 %v6746, 2147483648
  %v6755 = vxor.u32 %v6747, 2147483648
  %v6756 = vxor.u32 %v6748, 2147483648
  %v6757 = vxor.u32 %v6749, 2147483648
  %v6758 = vmul.f32 %v6752, 1.442695
  %v6759 = vpow.pop %v6758
  %v6760 = vmul.f32 %v6753, 1.442695
  %v6761 = vpow.pop %v6760
  %v6762 = vmul.f32 %v6754, 1.442695
  %v6763 = vpow.pop %v6762
  %v6764 = vmul.f32 %v6755, 1.442695
  %v6765 = vpow.pop %v6764
  %v6766 = vmul.f32 %v6756, 1.442695
  %v6767 = vpow.pop %v6766
  %v6768 = vmul.f32 %v6757, 1.442695
  %v6769 = vpow.pop %v6768
  %v6770 = vadd.f32 %v6759, 1.0
  %v6771 = vadd.f32 %v6761, 1.0
  %v6772 = vadd.f32 %v6763, 1.0
  %v6773 = vadd.f32 %v6765, 1.0
  %v6774 = vadd.f32 %v6767, 1.0
  %v6775 = vadd.f32 %v6769, 1.0
  %v6776 = vrcp.pop %v6770
  %v6777 = vmul.f32 %v6770, %v6776
  %v6778 = vsub.f32 1.0, %v6777
  %v6779 = vmul.f32 %v6776, %v6778
  %v6780 = vadd.f32 %v6776, %v6779
  %vm6781 = vweird.f32 %v6770
  %vm6782 = vweird.f32 %v6776
  %vm6783 = vmor %vm6781, %vm6782
  %v6784 = vsel %vm6783, %v6776, %v6780
  %v6785 = vand.u32 2147483647, %v6770
  %vm6786 = vcmp.eq.f32.partialorder %v6785, 8.507059e+37
  %v6787 = vand.u32 %v6770, 2147483648
  %v6788 = vor.u32 1.1754944e-38, %v6787
  %v6789 = vsel %vm6786, %v6788, %v6784
  %v6790 = vmul.f32 1.0, %v6789
  %v6791 = vrcp.pop %v6771
  %v6792 = vmul.f32 %v6771, %v6791
  %v6793 = vsub.f32 1.0, %v6792
  %v6794 = vmul.f32 %v6791, %v6793
  %v6795 = vadd.f32 %v6791, %v6794
  %vm6796 = vweird.f32 %v6771
  %vm6797 = vweird.f32 %v6791
  %vm6798 = vmor %vm6796, %vm6797
  %v6799 = vsel %vm6798, %v6791, %v6795
  %v6800 = vand.u32 2147483647, %v6771
  %vm6801 = vcmp.eq.f32.partialorder %v6800, 8.507059e+37
  %v6802 = vand.u32 %v6771, 2147483648
  %v6803 = vor.u32 1.1754944e-38, %v6802
  %v6804 = vsel %vm6801, %v6803, %v6799
  %v6805 = vmul.f32 1.0, %v6804
  %v6806 = vrcp.pop %v6772
  %v6807 = vmul.f32 %v6772, %v6806
  %v6808 = vsub.f32 1.0, %v6807
  %v6809 = vmul.f32 %v6806, %v6808
  %v6810 = vadd.f32 %v6806, %v6809
  %vm6811 = vweird.f32 %v6772
  %vm6812 = vweird.f32 %v6806
  %vm6813 = vmor %vm6811, %vm6812
  %v6814 = vsel %vm6813, %v6806, %v6810
  %v6815 = vand.u32 2147483647, %v6772
  %vm6816 = vcmp.eq.f32.partialorder %v6815, 8.507059e+37
  %v6817 = vand.u32 %v6772, 2147483648
  %v6818 = vor.u32 1.1754944e-38, %v6817
  %v6819 = vsel %vm6816, %v6818, %v6814
  %v6820 = vmul.f32 1.0, %v6819
  %v6821 = vrcp.pop %v6773
  %v6822 = vmul.f32 %v6773, %v6821
  %v6823 = vsub.f32 1.0, %v6822
  %v6824 = vmul.f32 %v6821, %v6823
  %v6825 = vadd.f32 %v6821, %v6824
  %vm6826 = vweird.f32 %v6773
  %vm6827 = vweird.f32 %v6821
  %vm6828 = vmor %vm6826, %vm6827
  %v6829 = vsel %vm6828, %v6821, %v6825
  %v6830 = vand.u32 2147483647, %v6773
  %vm6831 = vcmp.eq.f32.partialorder %v6830, 8.507059e+37
  %v6832 = vand.u32 %v6773, 2147483648
  %v6833 = vor.u32 1.1754944e-38, %v6832
  %v6834 = vsel %vm6831, %v6833, %v6829
  %v6835 = vmul.f32 1.0, %v6834
  %v6836 = vrcp.pop %v6774
  %v6837 = vmul.f32 %v6774, %v6836
  %v6838 = vsub.f32 1.0, %v6837
  %v6839 = vmul.f32 %v6836, %v6838
  %v6840 = vadd.f32 %v6836, %v6839
  %vm6841 = vweird.f32 %v6774
  %vm6842 = vweird.f32 %v6836
  %vm6843 = vmor %vm6841, %vm6842
  %v6844 = vsel %vm6843, %v6836, %v6840
  %v6845 = vand.u32 2147483647, %v6774
  %vm6846 = vcmp.eq.f32.partialorder %v6845, 8.507059e+37
  %v6847 = vand.u32 %v6774, 2147483648
  %v6848 = vor.u32 1.1754944e-38, %v6847
  %v6849 = vsel %vm6846, %v6848, %v6844
  %v6850 = vmul.f32 1.0, %v6849
  %v6851 = vrcp.pop %v6775
  %v6852 = vmul.f32 %v6775, %v6851
  %v6853 = vsub.f32 1.0, %v6852
  %v6854 = vmul.f32 %v6851, %v6853
  %v6855 = vadd.f32 %v6851, %v6854
  %vm6856 = vweird.f32 %v6775
  %vm6857 = vweird.f32 %v6851
  %vm6858 = vmor %vm6856, %vm6857
  %v6859 = vsel %vm6858, %v6851, %v6855
  %v6860 = vand.u32 2147483647, %v6775
  %vm6861 = vcmp.eq.f32.partialorder %v6860, 8.507059e+37
  %v6862 = vand.u32 %v6775, 2147483648
  %v6863 = vor.u32 1.1754944e-38, %v6862
  %v6864 = vsel %vm6861, %v6863, %v6859
  %v6865 = vmul.f32 1.0, %v6864
  %v6866 = vtanh.pop %v6750
  %v6867 = vtanh.pop %v6751
  %v6868 = vmul.f32 %v6820, %v6018
  %v6869 = vmul.f32 %v6835, %v6019
  %v6870 = vmul.f32 %v6790, %v6866
  %v6871 = vmul.f32 %v6805, %v6867
  %v6872 = vadd.f32 %v6868, %v6870
  %v6873 = vadd.f32 %v6869, %v6871
  %v6874 = vtanh.pop %v6872
  %v6875 = vtanh.pop %v6873
  %v6876 = vmul.f32 %v6850, %v6874
  %v6877 = vmul.f32 %v6865, %v6875
  %6880 = vst [vmem:[#allocation1] sm:$0xff] %v6876
  %6881 = vst [vmem:[#allocation1 + $0x9] sm:$0xff] %v6877
  %s6882 = scalar_lea.vmem [#allocation1], 1
  %v6883 = vld [vmem:[%s6882] ss:$9 sm:$0xff]
  %s6885 = scalar_lea.vmem [#allocation3], 4
  %6886 = vst.msk [vmem:[%s6885] ss:$8 sm:$0x3] %vm2829, %v6883
  %6887 = vst.msk [vmem:[%s6885] ss:$8 sm:$0x0] %vm2829, %v6883
  %v6888 = vpack.c.bf16 %v6876, %v6876
  %v6889 = vpack.c.bf16 %v6877, %v6877
  %6890 = vmatpush.bf16.msra.mxu0 %v3274
  %6891 = vmatpush.bf16.msra.mxu0 %v3266
  %6892 = vmatpush.bf16.msra.mxu0 %v3258
  %6893 = vmatpush.bf16.msra.mxu0 %v3250
  %6894 = vmatpush.bf16.msra.mxu0 %v3242
  %6895 = vmatpush.bf16.msra.mxu0 %v3234
  %6896 = vmatpush.bf16.msra.mxu0 %v3226
  %6897 = vmatpush.bf16.msra.mxu0 %v3218
  %6898 = vmatmul.bf16.gmra.mxu0 %v6888
  %v6899 = vpop.f32.mrf.mxu0
  %v6900 = vadd.f32 %v911, %v6899
  %v6901 = vpop.f32.mrf.mxu0
  %6902 = vdwg.mxu0
  %6903 = vmatpush.bf16.msra.mxu0 %v3338
  %6904 = vmatpush.bf16.msra.mxu0 %v3330
  %6905 = vmatpush.bf16.msra.mxu0 %v3322
  %6906 = vmatpush.bf16.msra.mxu0 %v3314
  %6907 = vmatpush.bf16.msra.mxu0 %v3306
  %6908 = vmatpush.bf16.msra.mxu0 %v3298
  %6909 = vmatpush.bf16.msra.mxu0 %v3290
  %6910 = vmatpush.bf16.msra.mxu0 %v3282
  %6911 = vmatmul.bf16.gmra.mxu0 %v6889
  %v6912 = vpop.f32.mrf.mxu0
  %v6913 = vadd.f32 %v6900, %v6912
  %v6914 = vpop.f32.mrf.mxu0
  %6915 = vdwg.mxu0
  %6916 = vmatpush.bf16.msra.mxu0 %v3275
  %6917 = vmatpush.bf16.msra.mxu0 %v3267
  %6918 = vmatpush.bf16.msra.mxu0 %v3259
  %6919 = vmatpush.bf16.msra.mxu0 %v3251
  %6920 = vmatpush.bf16.msra.mxu0 %v3243
  %6921 = vmatpush.bf16.msra.mxu0 %v3235
  %6922 = vmatpush.bf16.msra.mxu0 %v3227
  %6923 = vmatpush.bf16.msra.mxu0 %v3219
  %6924 = vmatmul.bf16.gmra.mxu0 %v6888
  %v6925 = vpop.f32.mrf.mxu0
  %v6926 = vadd.f32 %v912, %v6925
  %v6927 = vpop.f32.mrf.mxu0
  %6928 = vdwg.mxu0
  %6929 = vmatpush.bf16.msra.mxu0 %v3339
  %6930 = vmatpush.bf16.msra.mxu0 %v3331
  %6931 = vmatpush.bf16.msra.mxu0 %v3323
  %6932 = vmatpush.bf16.msra.mxu0 %v3315
  %6933 = vmatpush.bf16.msra.mxu0 %v3307
  %6934 = vmatpush.bf16.msra.mxu0 %v3299
  %6935 = vmatpush.bf16.msra.mxu0 %v3291
  %6936 = vmatpush.bf16.msra.mxu0 %v3283
  %6937 = vmatmul.bf16.gmra.mxu0 %v6889
  %v6938 = vpop.f32.mrf.mxu0
  %v6939 = vadd.f32 %v6926, %v6938
  %v6940 = vpop.f32.mrf.mxu0
  %6941 = vdwg.mxu0
  %6942 = vmatpush.bf16.msra.mxu0 %v3276
  %6943 = vmatpush.bf16.msra.mxu0 %v3268
  %6944 = vmatpush.bf16.msra.mxu0 %v3260
  %6945 = vmatpush.bf16.msra.mxu0 %v3252
  %6946 = vmatpush.bf16.msra.mxu0 %v3244
  %6947 = vmatpush.bf16.msra.mxu0 %v3236
  %6948 = vmatpush.bf16.msra.mxu0 %v3228
  %6949 = vmatpush.bf16.msra.mxu0 %v3220
  %6950 = vmatmul.bf16.gmra.mxu0 %v6888
  %v6951 = vpop.f32.mrf.mxu0
  %v6952 = vadd.f32 %v913, %v6951
  %v6953 = vpop.f32.mrf.mxu0
  %6954 = vdwg.mxu0
  %6955 = vmatpush.bf16.msra.mxu0 %v3340
  %6956 = vmatpush.bf16.msra.mxu0 %v3332
  %6957 = vmatpush.bf16.msra.mxu0 %v3324
  %6958 = vmatpush.bf16.msra.mxu0 %v3316
  %6959 = vmatpush.bf16.msra.mxu0 %v3308
  %6960 = vmatpush.bf16.msra.mxu0 %v3300
  %6961 = vmatpush.bf16.msra.mxu0 %v3292
  %6962 = vmatpush.bf16.msra.mxu0 %v3284
  %6963 = vmatmul.bf16.gmra.mxu0 %v6889
  %v6964 = vpop.f32.mrf.mxu0
  %v6965 = vadd.f32 %v6952, %v6964
  %v6966 = vpop.f32.mrf.mxu0
  %6967 = vdwg.mxu0
  %6968 = vmatpush.bf16.msra.mxu0 %v3277
  %6969 = vmatpush.bf16.msra.mxu0 %v3269
  %6970 = vmatpush.bf16.msra.mxu0 %v3261
  %6971 = vmatpush.bf16.msra.mxu0 %v3253
  %6972 = vmatpush.bf16.msra.mxu0 %v3245
  %6973 = vmatpush.bf16.msra.mxu0 %v3237
  %6974 = vmatpush.bf16.msra.mxu0 %v3229
  %6975 = vmatpush.bf16.msra.mxu0 %v3221
  %6976 = vmatmul.bf16.gmra.mxu0 %v6888
  %v6977 = vpop.f32.mrf.mxu0
  %v6978 = vadd.f32 %v914, %v6977
  %v6979 = vpop.f32.mrf.mxu0
  %6980 = vdwg.mxu0
  %6981 = vmatpush.bf16.msra.mxu0 %v3341
  %6982 = vmatpush.bf16.msra.mxu0 %v3333
  %6983 = vmatpush.bf16.msra.mxu0 %v3325
  %6984 = vmatpush.bf16.msra.mxu0 %v3317
  %6985 = vmatpush.bf16.msra.mxu0 %v3309
  %6986 = vmatpush.bf16.msra.mxu0 %v3301
  %6987 = vmatpush.bf16.msra.mxu0 %v3293
  %6988 = vmatpush.bf16.msra.mxu0 %v3285
  %6989 = vmatmul.bf16.gmra.mxu0 %v6889
  %v6990 = vpop.f32.mrf.mxu0
  %v6991 = vadd.f32 %v6978, %v6990
  %v6992 = vpop.f32.mrf.mxu0
  %6993 = vdwg.mxu0
  %6994 = vmatpush.bf16.msra.mxu0 %v3278
  %6995 = vmatpush.bf16.msra.mxu0 %v3270
  %6996 = vmatpush.bf16.msra.mxu0 %v3262
  %6997 = vmatpush.bf16.msra.mxu0 %v3254
  %6998 = vmatpush.bf16.msra.mxu0 %v3246
  %6999 = vmatpush.bf16.msra.mxu0 %v3238
  %7000 = vmatpush.bf16.msra.mxu0 %v3230
  %7001 = vmatpush.bf16.msra.mxu0 %v3222
  %7002 = vmatmul.bf16.gmra.mxu0 %v6888
  %v7003 = vpop.f32.mrf.mxu0
  %v7004 = vadd.f32 %v915, %v7003
  %v7005 = vpop.f32.mrf.mxu0
  %7006 = vdwg.mxu0
  %7007 = vmatpush.bf16.msra.mxu0 %v3342
  %7008 = vmatpush.bf16.msra.mxu0 %v3334
  %7009 = vmatpush.bf16.msra.mxu0 %v3326
  %7010 = vmatpush.bf16.msra.mxu0 %v3318
  %7011 = vmatpush.bf16.msra.mxu0 %v3310
  %7012 = vmatpush.bf16.msra.mxu0 %v3302
  %7013 = vmatpush.bf16.msra.mxu0 %v3294
  %7014 = vmatpush.bf16.msra.mxu0 %v3286
  %7015 = vmatmul.bf16.gmra.mxu0 %v6889
  %v7016 = vpop.f32.mrf.mxu0
  %v7017 = vadd.f32 %v7004, %v7016
  %v7018 = vpop.f32.mrf.mxu0
  %7019 = vdwg.mxu0
  %7020 = vmatpush.bf16.msra.mxu0 %v3279
  %7021 = vmatpush.bf16.msra.mxu0 %v3271
  %7022 = vmatpush.bf16.msra.mxu0 %v3263
  %7023 = vmatpush.bf16.msra.mxu0 %v3255
  %7024 = vmatpush.bf16.msra.mxu0 %v3247
  %7025 = vmatpush.bf16.msra.mxu0 %v3239
  %7026 = vmatpush.bf16.msra.mxu0 %v3231
  %7027 = vmatpush.bf16.msra.mxu0 %v3223
  %7028 = vmatmul.bf16.gmra.mxu0 %v6888
  %v7029 = vpop.f32.mrf.mxu0
  %v7030 = vadd.f32 %v916, %v7029
  %v7031 = vpop.f32.mrf.mxu0
  %7032 = vdwg.mxu0
  %7033 = vmatpush.bf16.msra.mxu0 %v3343
  %7034 = vmatpush.bf16.msra.mxu0 %v3335
  %7035 = vmatpush.bf16.msra.mxu0 %v3327
  %7036 = vmatpush.bf16.msra.mxu0 %v3319
  %7037 = vmatpush.bf16.msra.mxu0 %v3311
  %7038 = vmatpush.bf16.msra.mxu0 %v3303
  %7039 = vmatpush.bf16.msra.mxu0 %v3295
  %7040 = vmatpush.bf16.msra.mxu0 %v3287
  %7041 = vmatmul.bf16.gmra.mxu0 %v6889
  %v7042 = vpop.f32.mrf.mxu0
  %v7043 = vadd.f32 %v7030, %v7042
  %v7044 = vpop.f32.mrf.mxu0
  %7045 = vdwg.mxu0
  %7046 = vmatpush.bf16.msra.mxu0 %v3280
  %7047 = vmatpush.bf16.msra.mxu0 %v3272
  %7048 = vmatpush.bf16.msra.mxu0 %v3264
  %7049 = vmatpush.bf16.msra.mxu0 %v3256
  %7050 = vmatpush.bf16.msra.mxu0 %v3248
  %7051 = vmatpush.bf16.msra.mxu0 %v3240
  %7052 = vmatpush.bf16.msra.mxu0 %v3232
  %7053 = vmatpush.bf16.msra.mxu0 %v3224
  %7054 = vmatmul.bf16.gmra.mxu0 %v6888
  %v7055 = vpop.f32.mrf.mxu0
  %v7056 = vadd.f32 %v917, %v7055
  %v7057 = vpop.f32.mrf.mxu0
  %7058 = vdwg.mxu0
  %7059 = vmatpush.bf16.msra.mxu0 %v3344
  %7060 = vmatpush.bf16.msra.mxu0 %v3336
  %7061 = vmatpush.bf16.msra.mxu0 %v3328
  %7062 = vmatpush.bf16.msra.mxu0 %v3320
  %7063 = vmatpush.bf16.msra.mxu0 %v3312
  %7064 = vmatpush.bf16.msra.mxu0 %v3304
  %7065 = vmatpush.bf16.msra.mxu0 %v3296
  %7066 = vmatpush.bf16.msra.mxu0 %v3288
  %7067 = vmatmul.bf16.gmra.mxu0 %v6889
  %v7068 = vpop.f32.mrf.mxu0
  %v7069 = vadd.f32 %v7056, %v7068
  %v7070 = vpop.f32.mrf.mxu0
  %7071 = vdwg.mxu0
  %7072 = vmatpush.bf16.msra.mxu0 %v3281
  %7073 = vmatpush.bf16.msra.mxu0 %v3273
  %7074 = vmatpush.bf16.msra.mxu0 %v3265
  %7075 = vmatpush.bf16.msra.mxu0 %v3257
  %7076 = vmatpush.bf16.msra.mxu0 %v3249
  %7077 = vmatpush.bf16.msra.mxu0 %v3241
  %7078 = vmatpush.bf16.msra.mxu0 %v3233
  %7079 = vmatpush.bf16.msra.mxu0 %v3225
  %7080 = vmatmul.bf16.gmra.mxu0 %v6888
  %v7081 = vpop.f32.mrf.mxu0
  %v7082 = vadd.f32 %v918, %v7081
  %v7083 = vpop.f32.mrf.mxu0
  %7084 = vdwg.mxu0
  %7085 = vmatpush.bf16.msra.mxu0 %v3345
  %7086 = vmatpush.bf16.msra.mxu0 %v3337
  %7087 = vmatpush.bf16.msra.mxu0 %v3329
  %7088 = vmatpush.bf16.msra.mxu0 %v3321
  %7089 = vmatpush.bf16.msra.mxu0 %v3313
  %7090 = vmatpush.bf16.msra.mxu0 %v3305
  %7091 = vmatpush.bf16.msra.mxu0 %v3297
  %7092 = vmatpush.bf16.msra.mxu0 %v3289
  %7093 = vmatmul.bf16.gmra.mxu0 %v6889
  %v7094 = vpop.f32.mrf.mxu0
  %v7095 = vadd.f32 %v7082, %v7094
  %v7096 = vpop.f32.mrf.mxu0
  %7097 = vdwg.mxu0
  %v7098 = vld [vmem:[%s488] sm:$0xff]
  %v7099 = vld [vmem:[%s488 + $0x8] sm:$0xff]
  %v7108 = vrot.slane %v6377, 6
  %v7109 = vrot.slane %v6403, 4
  %v7110 = vrot.slane %v6429, 2
  %v7111 = vrot.slane %v6481, 6
  %v7112 = vrot.slane %v6507, 4
  %v7113 = vrot.slane %v6533, 2
  %v7114 = vsel %vm385, %v6351, %v7108
  %v7115 = vsel %vm387, %v7109, %v7110
  %v7116 = vsel %vm389, %v7114, %v7115
  %v7117 = vsel %vm385, %v6455, %v7111
  %v7118 = vsel %vm387, %v7112, %v7113
  %v7119 = vsel %vm389, %v7117, %v7118
  %v7122 = vadd.f32 %v7098, %v7116
  %v7123 = vadd.f32 %v7099, %v7119
  %v7124 = vxor.u32 %v7122, 2147483648
  %v7125 = vxor.u32 %v7123, 2147483648
  %v7126 = vmul.f32 %v7124, 1.442695
  %v7127 = vpow.pop %v7126
  %v7128 = vmul.f32 %v7125, 1.442695
  %v7129 = vpow.pop %v7128
  %v7130 = vadd.f32 %v7127, 1.0
  %v7131 = vadd.f32 %v7129, 1.0
  %v7132 = vrcp.pop %v7130
  %v7133 = vmul.f32 %v7130, %v7132
  %v7134 = vsub.f32 1.0, %v7133
  %v7135 = vmul.f32 %v7132, %v7134
  %v7136 = vadd.f32 %v7132, %v7135
  %vm7137 = vweird.f32 %v7130
  %vm7138 = vweird.f32 %v7132
  %vm7139 = vmor %vm7137, %vm7138
  %v7140 = vsel %vm7139, %v7132, %v7136
  %v7141 = vand.u32 2147483647, %v7130
  %vm7142 = vcmp.eq.f32.partialorder %v7141, 8.507059e+37
  %v7143 = vand.u32 %v7130, 2147483648
  %v7144 = vor.u32 1.1754944e-38, %v7143
  %v7145 = vsel %vm7142, %v7144, %v7140
  %v7146 = vmul.f32 1.0, %v7145
  %v7147 = vrcp.pop %v7131
  %v7148 = vmul.f32 %v7131, %v7147
  %v7149 = vsub.f32 1.0, %v7148
  %v7150 = vmul.f32 %v7147, %v7149
  %v7151 = vadd.f32 %v7147, %v7150
  %vm7152 = vweird.f32 %v7131
  %vm7153 = vweird.f32 %v7147
  %vm7154 = vmor %vm7152, %vm7153
  %v7155 = vsel %vm7154, %v7147, %v7151
  %v7156 = vand.u32 2147483647, %v7131
  %vm7157 = vcmp.eq.f32.partialorder %v7156, 8.507059e+37
  %v7158 = vand.u32 %v7131, 2147483648
  %v7159 = vor.u32 1.1754944e-38, %v7158
  %v7160 = vsel %vm7157, %v7159, %v7155
  %v7161 = vmul.f32 1.0, %v7160
  %v7163 = vrot.slane %v7123, 4
  %v7165 = vtanh.pop %v7163
  %v7167 = vrot.slane %v7146, 4
  %v7169 = vmul.f32 %v7167, %v6317
  %v7170 = vmul.f32 %v7146, %v7165
  %v7171 = vadd.f32 %v7169, %v7170
  %v7172 = vtanh.pop %v7171
  %v7173 = vmul.f32 %v7161, %v7172
  %7175 = vst [vmem:[#allocation1] ss:$4 sm:$0xff] %v7173
  %v7176 = vld.sshfl [vmem:[#allocation1] sm:$0xff pattern:$0x73625140]
  %v7177 = vld.sshfl [vmem:[#allocation1 + $0x8] sm:$0xff pattern:$0x73625140]
  %v7180 = vpack.c.bf16 %v7176, %v7176
  %v7181 = vpack.c.bf16 %v7177, %v7177
  %7182 = vmatpush.bf16.msra.mxu0 %v1429
  %7183 = vmatpush.bf16.msra.mxu0 %v1421
  %7184 = vmatpush.bf16.msra.mxu0 %v1413
  %7185 = vmatpush.bf16.msra.mxu0 %v1405
  %7186 = vmatpush.bf16.msra.mxu0 %v1397
  %7187 = vmatpush.bf16.msra.mxu0 %v1389
  %7188 = vmatpush.bf16.msra.mxu0 %v1381
  %7189 = vmatpush.bf16.msra.mxu0 %v1373
  %7190 = vmatmul.bf16.gmra.mxu0 %v7180
  %v7191 = vpop.f32.mrf.mxu0
  %v7192 = vadd.f32 0.0, %v7191
  %v7193 = vpop.f32.mrf.mxu0
  %7194 = vdwg.mxu0
  %7195 = vmatpush.bf16.msra.mxu0 %v1493
  %7196 = vmatpush.bf16.msra.mxu0 %v1485
  %7197 = vmatpush.bf16.msra.mxu0 %v1477
  %7198 = vmatpush.bf16.msra.mxu0 %v1469
  %7199 = vmatpush.bf16.msra.mxu0 %v1461
  %7200 = vmatpush.bf16.msra.mxu0 %v1453
  %7201 = vmatpush.bf16.msra.mxu0 %v1445
  %7202 = vmatpush.bf16.msra.mxu0 %v1437
  %7203 = vmatmul.bf16.gmra.mxu0 %v7181
  %v7204 = vpop.f32.mrf.mxu0
  %v7205 = vadd.f32 %v7192, %v7204
  %v7206 = vpop.f32.mrf.mxu0
  %7207 = vdwg.mxu0
  %7208 = vmatpush.bf16.msra.mxu0 %v1430
  %7209 = vmatpush.bf16.msra.mxu0 %v1422
  %7210 = vmatpush.bf16.msra.mxu0 %v1414
  %7211 = vmatpush.bf16.msra.mxu0 %v1406
  %7212 = vmatpush.bf16.msra.mxu0 %v1398
  %7213 = vmatpush.bf16.msra.mxu0 %v1390
  %7214 = vmatpush.bf16.msra.mxu0 %v1382
  %7215 = vmatpush.bf16.msra.mxu0 %v1374
  %7216 = vmatmul.bf16.gmra.mxu0 %v7180
  %v7217 = vpop.f32.mrf.mxu0
  %v7218 = vadd.f32 0.0, %v7217
  %v7219 = vpop.f32.mrf.mxu0
  %7220 = vdwg.mxu0
  %7221 = vmatpush.bf16.msra.mxu0 %v1494
  %7222 = vmatpush.bf16.msra.mxu0 %v1486
  %7223 = vmatpush.bf16.msra.mxu0 %v1478
  %7224 = vmatpush.bf16.msra.mxu0 %v1470
  %7225 = vmatpush.bf16.msra.mxu0 %v1462
  %7226 = vmatpush.bf16.msra.mxu0 %v1454
  %7227 = vmatpush.bf16.msra.mxu0 %v1446
  %7228 = vmatpush.bf16.msra.mxu0 %v1438
  %7229 = vmatmul.bf16.gmra.mxu0 %v7181
  %v7230 = vpop.f32.mrf.mxu0
  %v7231 = vadd.f32 %v7218, %v7230
  %v7232 = vpop.f32.mrf.mxu0
  %7233 = vdwg.mxu0
  %7234 = vmatpush.bf16.msra.mxu0 %v1431
  %7235 = vmatpush.bf16.msra.mxu0 %v1423
  %7236 = vmatpush.bf16.msra.mxu0 %v1415
  %7237 = vmatpush.bf16.msra.mxu0 %v1407
  %7238 = vmatpush.bf16.msra.mxu0 %v1399
  %7239 = vmatpush.bf16.msra.mxu0 %v1391
  %7240 = vmatpush.bf16.msra.mxu0 %v1383
  %7241 = vmatpush.bf16.msra.mxu0 %v1375
  %7242 = vmatmul.bf16.gmra.mxu0 %v7180
  %v7243 = vpop.f32.mrf.mxu0
  %v7244 = vadd.f32 0.0, %v7243
  %v7245 = vpop.f32.mrf.mxu0
  %7246 = vdwg.mxu0
  %7247 = vmatpush.bf16.msra.mxu0 %v1495
  %7248 = vmatpush.bf16.msra.mxu0 %v1487
  %7249 = vmatpush.bf16.msra.mxu0 %v1479
  %7250 = vmatpush.bf16.msra.mxu0 %v1471
  %7251 = vmatpush.bf16.msra.mxu0 %v1463
  %7252 = vmatpush.bf16.msra.mxu0 %v1455
  %7253 = vmatpush.bf16.msra.mxu0 %v1447
  %7254 = vmatpush.bf16.msra.mxu0 %v1439
  %7255 = vmatmul.bf16.gmra.mxu0 %v7181
  %v7256 = vpop.f32.mrf.mxu0
  %v7257 = vadd.f32 %v7244, %v7256
  %v7258 = vpop.f32.mrf.mxu0
  %7259 = vdwg.mxu0
  %7260 = vmatpush.bf16.msra.mxu0 %v1432
  %7261 = vmatpush.bf16.msra.mxu0 %v1424
  %7262 = vmatpush.bf16.msra.mxu0 %v1416
  %7263 = vmatpush.bf16.msra.mxu0 %v1408
  %7264 = vmatpush.bf16.msra.mxu0 %v1400
  %7265 = vmatpush.bf16.msra.mxu0 %v1392
  %7266 = vmatpush.bf16.msra.mxu0 %v1384
  %7267 = vmatpush.bf16.msra.mxu0 %v1376
  %7268 = vmatmul.bf16.gmra.mxu0 %v7180
  %v7269 = vpop.f32.mrf.mxu0
  %v7270 = vadd.f32 0.0, %v7269
  %v7271 = vpop.f32.mrf.mxu0
  %7272 = vdwg.mxu0
  %7273 = vmatpush.bf16.msra.mxu0 %v1496
  %7274 = vmatpush.bf16.msra.mxu0 %v1488
  %7275 = vmatpush.bf16.msra.mxu0 %v1480
  %7276 = vmatpush.bf16.msra.mxu0 %v1472
  %7277 = vmatpush.bf16.msra.mxu0 %v1464
  %7278 = vmatpush.bf16.msra.mxu0 %v1456
  %7279 = vmatpush.bf16.msra.mxu0 %v1448
  %7280 = vmatpush.bf16.msra.mxu0 %v1440
  %7281 = vmatmul.bf16.gmra.mxu0 %v7181
  %v7282 = vpop.f32.mrf.mxu0
  %v7283 = vadd.f32 %v7270, %v7282
  %v7284 = vpop.f32.mrf.mxu0
  %7285 = vdwg.mxu0
  %7286 = vmatpush.bf16.msra.mxu0 %v1433
  %7287 = vmatpush.bf16.msra.mxu0 %v1425
  %7288 = vmatpush.bf16.msra.mxu0 %v1417
  %7289 = vmatpush.bf16.msra.mxu0 %v1409
  %7290 = vmatpush.bf16.msra.mxu0 %v1401
  %7291 = vmatpush.bf16.msra.mxu0 %v1393
  %7292 = vmatpush.bf16.msra.mxu0 %v1385
  %7293 = vmatpush.bf16.msra.mxu0 %v1377
  %7294 = vmatmul.bf16.gmra.mxu0 %v7180
  %v7295 = vpop.f32.mrf.mxu0
  %v7296 = vadd.f32 0.0, %v7295
  %v7297 = vpop.f32.mrf.mxu0
  %7298 = vdwg.mxu0
  %7299 = vmatpush.bf16.msra.mxu0 %v1497
  %7300 = vmatpush.bf16.msra.mxu0 %v1489
  %7301 = vmatpush.bf16.msra.mxu0 %v1481
  %7302 = vmatpush.bf16.msra.mxu0 %v1473
  %7303 = vmatpush.bf16.msra.mxu0 %v1465
  %7304 = vmatpush.bf16.msra.mxu0 %v1457
  %7305 = vmatpush.bf16.msra.mxu0 %v1449
  %7306 = vmatpush.bf16.msra.mxu0 %v1441
  %7307 = vmatmul.bf16.gmra.mxu0 %v7181
  %v7308 = vpop.f32.mrf.mxu0
  %v7309 = vadd.f32 %v7296, %v7308
  %v7310 = vpop.f32.mrf.mxu0
  %7311 = vdwg.mxu0
  %7312 = vmatpush.bf16.msra.mxu0 %v1434
  %7313 = vmatpush.bf16.msra.mxu0 %v1426
  %7314 = vmatpush.bf16.msra.mxu0 %v1418
  %7315 = vmatpush.bf16.msra.mxu0 %v1410
  %7316 = vmatpush.bf16.msra.mxu0 %v1402
  %7317 = vmatpush.bf16.msra.mxu0 %v1394
  %7318 = vmatpush.bf16.msra.mxu0 %v1386
  %7319 = vmatpush.bf16.msra.mxu0 %v1378
  %7320 = vmatmul.bf16.gmra.mxu0 %v7180
  %v7321 = vpop.f32.mrf.mxu0
  %v7322 = vadd.f32 0.0, %v7321
  %v7323 = vpop.f32.mrf.mxu0
  %7324 = vdwg.mxu0
  %7325 = vmatpush.bf16.msra.mxu0 %v1498
  %7326 = vmatpush.bf16.msra.mxu0 %v1490
  %7327 = vmatpush.bf16.msra.mxu0 %v1482
  %7328 = vmatpush.bf16.msra.mxu0 %v1474
  %7329 = vmatpush.bf16.msra.mxu0 %v1466
  %7330 = vmatpush.bf16.msra.mxu0 %v1458
  %7331 = vmatpush.bf16.msra.mxu0 %v1450
  %7332 = vmatpush.bf16.msra.mxu0 %v1442
  %7333 = vmatmul.bf16.gmra.mxu0 %v7181
  %v7334 = vpop.f32.mrf.mxu0
  %v7335 = vadd.f32 %v7322, %v7334
  %v7336 = vpop.f32.mrf.mxu0
  %7337 = vdwg.mxu0
  %7338 = vmatpush.bf16.msra.mxu0 %v1435
  %7339 = vmatpush.bf16.msra.mxu0 %v1427
  %7340 = vmatpush.bf16.msra.mxu0 %v1419
  %7341 = vmatpush.bf16.msra.mxu0 %v1411
  %7342 = vmatpush.bf16.msra.mxu0 %v1403
  %7343 = vmatpush.bf16.msra.mxu0 %v1395
  %7344 = vmatpush.bf16.msra.mxu0 %v1387
  %7345 = vmatpush.bf16.msra.mxu0 %v1379
  %7346 = vmatmul.bf16.gmra.mxu0 %v7180
  %v7347 = vpop.f32.mrf.mxu0
  %v7348 = vadd.f32 0.0, %v7347
  %v7349 = vpop.f32.mrf.mxu0
  %7350 = vdwg.mxu0
  %7351 = vmatpush.bf16.msra.mxu0 %v1499
  %7352 = vmatpush.bf16.msra.mxu0 %v1491
  %7353 = vmatpush.bf16.msra.mxu0 %v1483
  %7354 = vmatpush.bf16.msra.mxu0 %v1475
  %7355 = vmatpush.bf16.msra.mxu0 %v1467
  %7356 = vmatpush.bf16.msra.mxu0 %v1459
  %7357 = vmatpush.bf16.msra.mxu0 %v1451
  %7358 = vmatpush.bf16.msra.mxu0 %v1443
  %7359 = vmatmul.bf16.gmra.mxu0 %v7181
  %v7360 = vpop.f32.mrf.mxu0
  %v7361 = vadd.f32 %v7348, %v7360
  %v7362 = vpop.f32.mrf.mxu0
  %7363 = vdwg.mxu0
  %7364 = vmatpush.bf16.msra.mxu0 %v1436
  %7365 = vmatpush.bf16.msra.mxu0 %v1428
  %7366 = vmatpush.bf16.msra.mxu0 %v1420
  %7367 = vmatpush.bf16.msra.mxu0 %v1412
  %7368 = vmatpush.bf16.msra.mxu0 %v1404
  %7369 = vmatpush.bf16.msra.mxu0 %v1396
  %7370 = vmatpush.bf16.msra.mxu0 %v1388
  %7371 = vmatpush.bf16.msra.mxu0 %v1380
  %7372 = vmatmul.bf16.gmra.mxu0 %v7180
  %v7373 = vpop.f32.mrf.mxu0
  %v7374 = vadd.f32 0.0, %v7373
  %v7375 = vpop.f32.mrf.mxu0
  %7376 = vdwg.mxu0
  %7377 = vmatpush.bf16.msra.mxu0 %v1500
  %7378 = vmatpush.bf16.msra.mxu0 %v1492
  %7379 = vmatpush.bf16.msra.mxu0 %v1484
  %7380 = vmatpush.bf16.msra.mxu0 %v1476
  %7381 = vmatpush.bf16.msra.mxu0 %v1468
  %7382 = vmatpush.bf16.msra.mxu0 %v1460
  %7383 = vmatpush.bf16.msra.mxu0 %v1452
  %7384 = vmatpush.bf16.msra.mxu0 %v1444
  %7385 = vmatmul.bf16.gmra.mxu0 %v7181
  %v7386 = vpop.f32.mrf.mxu0
  %v7387 = vadd.f32 %v7374, %v7386
  %v7388 = vpop.f32.mrf.mxu0
  %7389 = vdwg.mxu0
  %7390 = vmatpush.bf16.msra.mxu0 %v2277
  %7391 = vmatpush.bf16.msra.mxu0 %v2269
  %7392 = vmatpush.bf16.msra.mxu0 %v2261
  %7393 = vmatpush.bf16.msra.mxu0 %v2253
  %7394 = vmatpush.bf16.msra.mxu0 %v2245
  %7395 = vmatpush.bf16.msra.mxu0 %v2237
  %7396 = vmatpush.bf16.msra.mxu0 %v2229
  %7397 = vmatpush.bf16.msra.mxu0 %v2221
  %7398 = vmatmul.bf16.gmra.mxu0 %v7180
  %v7399 = vpop.f32.mrf.mxu0
  %v7400 = vadd.f32 0.0, %v7399
  %v7401 = vpop.f32.mrf.mxu0
  %7402 = vdwg.mxu0
  %7403 = vmatpush.bf16.msra.mxu0 %v2341
  %7404 = vmatpush.bf16.msra.mxu0 %v2333
  %7405 = vmatpush.bf16.msra.mxu0 %v2325
  %7406 = vmatpush.bf16.msra.mxu0 %v2317
  %7407 = vmatpush.bf16.msra.mxu0 %v2309
  %7408 = vmatpush.bf16.msra.mxu0 %v2301
  %7409 = vmatpush.bf16.msra.mxu0 %v2293
  %7410 = vmatpush.bf16.msra.mxu0 %v2285
  %7411 = vmatmul.bf16.gmra.mxu0 %v7181
  %v7412 = vpop.f32.mrf.mxu0
  %v7413 = vadd.f32 %v7400, %v7412
  %v7414 = vpop.f32.mrf.mxu0
  %7415 = vdwg.mxu0
  %7416 = vmatpush.bf16.msra.mxu0 %v2278
  %7417 = vmatpush.bf16.msra.mxu0 %v2270
  %7418 = vmatpush.bf16.msra.mxu0 %v2262
  %7419 = vmatpush.bf16.msra.mxu0 %v2254
  %7420 = vmatpush.bf16.msra.mxu0 %v2246
  %7421 = vmatpush.bf16.msra.mxu0 %v2238
  %7422 = vmatpush.bf16.msra.mxu0 %v2230
  %7423 = vmatpush.bf16.msra.mxu0 %v2222
  %7424 = vmatmul.bf16.gmra.mxu0 %v7180
  %v7425 = vpop.f32.mrf.mxu0
  %v7426 = vadd.f32 0.0, %v7425
  %v7427 = vpop.f32.mrf.mxu0
  %7428 = vdwg.mxu0
  %7429 = vmatpush.bf16.msra.mxu0 %v2342
  %7430 = vmatpush.bf16.msra.mxu0 %v2334
  %7431 = vmatpush.bf16.msra.mxu0 %v2326
  %7432 = vmatpush.bf16.msra.mxu0 %v2318
  %7433 = vmatpush.bf16.msra.mxu0 %v2310
  %7434 = vmatpush.bf16.msra.mxu0 %v2302
  %7435 = vmatpush.bf16.msra.mxu0 %v2294
  %7436 = vmatpush.bf16.msra.mxu0 %v2286
  %7437 = vmatmul.bf16.gmra.mxu0 %v7181
  %v7438 = vpop.f32.mrf.mxu0
  %v7439 = vadd.f32 %v7426, %v7438
  %v7440 = vpop.f32.mrf.mxu0
  %7441 = vdwg.mxu0
  %7442 = vmatpush.bf16.msra.mxu0 %v2279
  %7443 = vmatpush.bf16.msra.mxu0 %v2271
  %7444 = vmatpush.bf16.msra.mxu0 %v2263
  %7445 = vmatpush.bf16.msra.mxu0 %v2255
  %7446 = vmatpush.bf16.msra.mxu0 %v2247
  %7447 = vmatpush.bf16.msra.mxu0 %v2239
  %7448 = vmatpush.bf16.msra.mxu0 %v2231
  %7449 = vmatpush.bf16.msra.mxu0 %v2223
  %7450 = vmatmul.bf16.gmra.mxu0 %v7180
  %v7451 = vpop.f32.mrf.mxu0
  %v7452 = vadd.f32 0.0, %v7451
  %v7453 = vpop.f32.mrf.mxu0
  %7454 = vdwg.mxu0
  %7455 = vmatpush.bf16.msra.mxu0 %v2343
  %7456 = vmatpush.bf16.msra.mxu0 %v2335
  %7457 = vmatpush.bf16.msra.mxu0 %v2327
  %7458 = vmatpush.bf16.msra.mxu0 %v2319
  %7459 = vmatpush.bf16.msra.mxu0 %v2311
  %7460 = vmatpush.bf16.msra.mxu0 %v2303
  %7461 = vmatpush.bf16.msra.mxu0 %v2295
  %7462 = vmatpush.bf16.msra.mxu0 %v2287
  %7463 = vmatmul.bf16.gmra.mxu0 %v7181
  %v7464 = vpop.f32.mrf.mxu0
  %v7465 = vadd.f32 %v7452, %v7464
  %v7466 = vpop.f32.mrf.mxu0
  %7467 = vdwg.mxu0
  %7468 = vmatpush.bf16.msra.mxu0 %v2280
  %7469 = vmatpush.bf16.msra.mxu0 %v2272
  %7470 = vmatpush.bf16.msra.mxu0 %v2264
  %7471 = vmatpush.bf16.msra.mxu0 %v2256
  %7472 = vmatpush.bf16.msra.mxu0 %v2248
  %7473 = vmatpush.bf16.msra.mxu0 %v2240
  %7474 = vmatpush.bf16.msra.mxu0 %v2232
  %7475 = vmatpush.bf16.msra.mxu0 %v2224
  %7476 = vmatmul.bf16.gmra.mxu0 %v7180
  %v7477 = vpop.f32.mrf.mxu0
  %v7478 = vadd.f32 0.0, %v7477
  %v7479 = vpop.f32.mrf.mxu0
  %7480 = vdwg.mxu0
  %7481 = vmatpush.bf16.msra.mxu0 %v2344
  %7482 = vmatpush.bf16.msra.mxu0 %v2336
  %7483 = vmatpush.bf16.msra.mxu0 %v2328
  %7484 = vmatpush.bf16.msra.mxu0 %v2320
  %7485 = vmatpush.bf16.msra.mxu0 %v2312
  %7486 = vmatpush.bf16.msra.mxu0 %v2304
  %7487 = vmatpush.bf16.msra.mxu0 %v2296
  %7488 = vmatpush.bf16.msra.mxu0 %v2288
  %7489 = vmatmul.bf16.gmra.mxu0 %v7181
  %v7490 = vpop.f32.mrf.mxu0
  %v7491 = vadd.f32 %v7478, %v7490
  %v7492 = vpop.f32.mrf.mxu0
  %7493 = vdwg.mxu0
  %7494 = vmatpush.bf16.msra.mxu0 %v2281
  %7495 = vmatpush.bf16.msra.mxu0 %v2273
  %7496 = vmatpush.bf16.msra.mxu0 %v2265
  %7497 = vmatpush.bf16.msra.mxu0 %v2257
  %7498 = vmatpush.bf16.msra.mxu0 %v2249
  %7499 = vmatpush.bf16.msra.mxu0 %v2241
  %7500 = vmatpush.bf16.msra.mxu0 %v2233
  %7501 = vmatpush.bf16.msra.mxu0 %v2225
  %7502 = vmatmul.bf16.gmra.mxu0 %v7180
  %v7503 = vpop.f32.mrf.mxu0
  %v7504 = vadd.f32 0.0, %v7503
  %v7505 = vpop.f32.mrf.mxu0
  %7506 = vdwg.mxu0
  %7507 = vmatpush.bf16.msra.mxu0 %v2345
  %7508 = vmatpush.bf16.msra.mxu0 %v2337
  %7509 = vmatpush.bf16.msra.mxu0 %v2329
  %7510 = vmatpush.bf16.msra.mxu0 %v2321
  %7511 = vmatpush.bf16.msra.mxu0 %v2313
  %7512 = vmatpush.bf16.msra.mxu0 %v2305
  %7513 = vmatpush.bf16.msra.mxu0 %v2297
  %7514 = vmatpush.bf16.msra.mxu0 %v2289
  %7515 = vmatmul.bf16.gmra.mxu0 %v7181
  %v7516 = vpop.f32.mrf.mxu0
  %v7517 = vadd.f32 %v7504, %v7516
  %v7518 = vpop.f32.mrf.mxu0
  %7519 = vdwg.mxu0
  %7520 = vmatpush.bf16.msra.mxu0 %v2282
  %7521 = vmatpush.bf16.msra.mxu0 %v2274
  %7522 = vmatpush.bf16.msra.mxu0 %v2266
  %7523 = vmatpush.bf16.msra.mxu0 %v2258
  %7524 = vmatpush.bf16.msra.mxu0 %v2250
  %7525 = vmatpush.bf16.msra.mxu0 %v2242
  %7526 = vmatpush.bf16.msra.mxu0 %v2234
  %7527 = vmatpush.bf16.msra.mxu0 %v2226
  %7528 = vmatmul.bf16.gmra.mxu0 %v7180
  %v7529 = vpop.f32.mrf.mxu0
  %v7530 = vadd.f32 0.0, %v7529
  %v7531 = vpop.f32.mrf.mxu0
  %7532 = vdwg.mxu0
  %7533 = vmatpush.bf16.msra.mxu0 %v2346
  %7534 = vmatpush.bf16.msra.mxu0 %v2338
  %7535 = vmatpush.bf16.msra.mxu0 %v2330
  %7536 = vmatpush.bf16.msra.mxu0 %v2322
  %7537 = vmatpush.bf16.msra.mxu0 %v2314
  %7538 = vmatpush.bf16.msra.mxu0 %v2306
  %7539 = vmatpush.bf16.msra.mxu0 %v2298
  %7540 = vmatpush.bf16.msra.mxu0 %v2290
  %7541 = vmatmul.bf16.gmra.mxu0 %v7181
  %v7542 = vpop.f32.mrf.mxu0
  %v7543 = vadd.f32 %v7530, %v7542
  %v7544 = vpop.f32.mrf.mxu0
  %7545 = vdwg.mxu0
  %7546 = vmatpush.bf16.msra.mxu0 %v2283
  %7547 = vmatpush.bf16.msra.mxu0 %v2275
  %7548 = vmatpush.bf16.msra.mxu0 %v2267
  %7549 = vmatpush.bf16.msra.mxu0 %v2259
  %7550 = vmatpush.bf16.msra.mxu0 %v2251
  %7551 = vmatpush.bf16.msra.mxu0 %v2243
  %7552 = vmatpush.bf16.msra.mxu0 %v2235
  %7553 = vmatpush.bf16.msra.mxu0 %v2227
  %7554 = vmatmul.bf16.gmra.mxu0 %v7180
  %v7555 = vpop.f32.mrf.mxu0
  %v7556 = vadd.f32 0.0, %v7555
  %v7557 = vpop.f32.mrf.mxu0
  %7558 = vdwg.mxu0
  %7559 = vmatpush.bf16.msra.mxu0 %v2347
  %7560 = vmatpush.bf16.msra.mxu0 %v2339
  %7561 = vmatpush.bf16.msra.mxu0 %v2331
  %7562 = vmatpush.bf16.msra.mxu0 %v2323
  %7563 = vmatpush.bf16.msra.mxu0 %v2315
  %7564 = vmatpush.bf16.msra.mxu0 %v2307
  %7565 = vmatpush.bf16.msra.mxu0 %v2299
  %7566 = vmatpush.bf16.msra.mxu0 %v2291
  %7567 = vmatmul.bf16.gmra.mxu0 %v7181
  %v7568 = vpop.f32.mrf.mxu0
  %v7569 = vadd.f32 %v7556, %v7568
  %v7570 = vpop.f32.mrf.mxu0
  %7571 = vdwg.mxu0
  %7572 = vmatpush.bf16.msra.mxu0 %v2284
  %7573 = vmatpush.bf16.msra.mxu0 %v2276
  %7574 = vmatpush.bf16.msra.mxu0 %v2268
  %7575 = vmatpush.bf16.msra.mxu0 %v2260
  %7576 = vmatpush.bf16.msra.mxu0 %v2252
  %7577 = vmatpush.bf16.msra.mxu0 %v2244
  %7578 = vmatpush.bf16.msra.mxu0 %v2236
  %7579 = vmatpush.bf16.msra.mxu0 %v2228
  %7580 = vmatmul.bf16.gmra.mxu0 %v7180
  %v7581 = vpop.f32.mrf.mxu0
  %v7582 = vadd.f32 0.0, %v7581
  %v7583 = vpop.f32.mrf.mxu0
  %7584 = vdwg.mxu0
  %7585 = vmatpush.bf16.msra.mxu0 %v2348
  %7586 = vmatpush.bf16.msra.mxu0 %v2340
  %7587 = vmatpush.bf16.msra.mxu0 %v2332
  %7588 = vmatpush.bf16.msra.mxu0 %v2324
  %7589 = vmatpush.bf16.msra.mxu0 %v2316
  %7590 = vmatpush.bf16.msra.mxu0 %v2308
  %7591 = vmatpush.bf16.msra.mxu0 %v2300
  %7592 = vmatpush.bf16.msra.mxu0 %v2292
  %7593 = vmatmul.bf16.gmra.mxu0 %v7181
  %v7594 = vpop.f32.mrf.mxu0
  %v7595 = vadd.f32 %v7582, %v7594
  %v7596 = vpop.f32.mrf.mxu0
  %7597 = vdwg.mxu0
  %v7598 = vadd.f32 %v6913, %v7413
  %v7599 = vadd.f32 %v6939, %v7439
  %v7600 = vadd.f32 %v6965, %v7465
  %v7601 = vadd.f32 %v6991, %v7491
  %v7602 = vadd.f32 %v7017, %v7517
  %v7603 = vadd.f32 %v7043, %v7543
  %v7604 = vadd.f32 %v7069, %v7569
  %v7605 = vadd.f32 %v7095, %v7595
  %v7606 = vxor.u32 %v7598, 2147483648
  %v7607 = vxor.u32 %v7599, 2147483648
  %v7608 = vxor.u32 %v7600, 2147483648
  %v7609 = vxor.u32 %v7601, 2147483648
  %v7610 = vxor.u32 %v7602, 2147483648
  %v7611 = vxor.u32 %v7603, 2147483648
  %v7612 = vmul.f32 %v7606, 1.442695
  %v7613 = vpow.pop %v7612
  %v7614 = vmul.f32 %v7607, 1.442695
  %v7615 = vpow.pop %v7614
  %v7616 = vmul.f32 %v7608, 1.442695
  %v7617 = vpow.pop %v7616
  %v7618 = vmul.f32 %v7609, 1.442695
  %v7619 = vpow.pop %v7618
  %v7620 = vmul.f32 %v7610, 1.442695
  %v7621 = vpow.pop %v7620
  %v7622 = vmul.f32 %v7611, 1.442695
  %v7623 = vpow.pop %v7622
  %v7624 = vadd.f32 %v7613, 1.0
  %v7625 = vadd.f32 %v7615, 1.0
  %v7626 = vadd.f32 %v7617, 1.0
  %v7627 = vadd.f32 %v7619, 1.0
  %v7628 = vadd.f32 %v7621, 1.0
  %v7629 = vadd.f32 %v7623, 1.0
  %v7630 = vrcp.pop %v7624
  %v7631 = vmul.f32 %v7624, %v7630
  %v7632 = vsub.f32 1.0, %v7631
  %v7633 = vmul.f32 %v7630, %v7632
  %v7634 = vadd.f32 %v7630, %v7633
  %vm7635 = vweird.f32 %v7624
  %vm7636 = vweird.f32 %v7630
  %vm7637 = vmor %vm7635, %vm7636
  %v7638 = vsel %vm7637, %v7630, %v7634
  %v7639 = vand.u32 2147483647, %v7624
  %vm7640 = vcmp.eq.f32.partialorder %v7639, 8.507059e+37
  %v7641 = vand.u32 %v7624, 2147483648
  %v7642 = vor.u32 1.1754944e-38, %v7641
  %v7643 = vsel %vm7640, %v7642, %v7638
  %v7644 = vmul.f32 1.0, %v7643
  %v7645 = vrcp.pop %v7625
  %v7646 = vmul.f32 %v7625, %v7645
  %v7647 = vsub.f32 1.0, %v7646
  %v7648 = vmul.f32 %v7645, %v7647
  %v7649 = vadd.f32 %v7645, %v7648
  %vm7650 = vweird.f32 %v7625
  %vm7651 = vweird.f32 %v7645
  %vm7652 = vmor %vm7650, %vm7651
  %v7653 = vsel %vm7652, %v7645, %v7649
  %v7654 = vand.u32 2147483647, %v7625
  %vm7655 = vcmp.eq.f32.partialorder %v7654, 8.507059e+37
  %v7656 = vand.u32 %v7625, 2147483648
  %v7657 = vor.u32 1.1754944e-38, %v7656
  %v7658 = vsel %vm7655, %v7657, %v7653
  %v7659 = vmul.f32 1.0, %v7658
  %v7660 = vrcp.pop %v7626
  %v7661 = vmul.f32 %v7626, %v7660
  %v7662 = vsub.f32 1.0, %v7661
  %v7663 = vmul.f32 %v7660, %v7662
  %v7664 = vadd.f32 %v7660, %v7663
  %vm7665 = vweird.f32 %v7626
  %vm7666 = vweird.f32 %v7660
  %vm7667 = vmor %vm7665, %vm7666
  %v7668 = vsel %vm7667, %v7660, %v7664
  %v7669 = vand.u32 2147483647, %v7626
  %vm7670 = vcmp.eq.f32.partialorder %v7669, 8.507059e+37
  %v7671 = vand.u32 %v7626, 2147483648
  %v7672 = vor.u32 1.1754944e-38, %v7671
  %v7673 = vsel %vm7670, %v7672, %v7668
  %v7674 = vmul.f32 1.0, %v7673
  %v7675 = vrcp.pop %v7627
  %v7676 = vmul.f32 %v7627, %v7675
  %v7677 = vsub.f32 1.0, %v7676
  %v7678 = vmul.f32 %v7675, %v7677
  %v7679 = vadd.f32 %v7675, %v7678
  %vm7680 = vweird.f32 %v7627
  %vm7681 = vweird.f32 %v7675
  %vm7682 = vmor %vm7680, %vm7681
  %v7683 = vsel %vm7682, %v7675, %v7679
  %v7684 = vand.u32 2147483647, %v7627
  %vm7685 = vcmp.eq.f32.partialorder %v7684, 8.507059e+37
  %v7686 = vand.u32 %v7627, 2147483648
  %v7687 = vor.u32 1.1754944e-38, %v7686
  %v7688 = vsel %vm7685, %v7687, %v7683
  %v7689 = vmul.f32 1.0, %v7688
  %v7690 = vrcp.pop %v7628
  %v7691 = vmul.f32 %v7628, %v7690
  %v7692 = vsub.f32 1.0, %v7691
  %v7693 = vmul.f32 %v7690, %v7692
  %v7694 = vadd.f32 %v7690, %v7693
  %vm7695 = vweird.f32 %v7628
  %vm7696 = vweird.f32 %v7690
  %vm7697 = vmor %vm7695, %vm7696
  %v7698 = vsel %vm7697, %v7690, %v7694
  %v7699 = vand.u32 2147483647, %v7628
  %vm7700 = vcmp.eq.f32.partialorder %v7699, 8.507059e+37
  %v7701 = vand.u32 %v7628, 2147483648
  %v7702 = vor.u32 1.1754944e-38, %v7701
  %v7703 = vsel %vm7700, %v7702, %v7698
  %v7704 = vmul.f32 1.0, %v7703
  %v7705 = vrcp.pop %v7629
  %v7706 = vmul.f32 %v7629, %v7705
  %v7707 = vsub.f32 1.0, %v7706
  %v7708 = vmul.f32 %v7705, %v7707
  %v7709 = vadd.f32 %v7705, %v7708
  %vm7710 = vweird.f32 %v7629
  %vm7711 = vweird.f32 %v7705
  %vm7712 = vmor %vm7710, %vm7711
  %v7713 = vsel %vm7712, %v7705, %v7709
  %v7714 = vand.u32 2147483647, %v7629
  %vm7715 = vcmp.eq.f32.partialorder %v7714, 8.507059e+37
  %v7716 = vand.u32 %v7629, 2147483648
  %v7717 = vor.u32 1.1754944e-38, %v7716
  %v7718 = vsel %vm7715, %v7717, %v7713
  %v7719 = vmul.f32 1.0, %v7718
  %v7720 = vtanh.pop %v7604
  %v7721 = vtanh.pop %v7605
  %v7722 = vmul.f32 %v7674, %v6872
  %v7723 = vmul.f32 %v7689, %v6873
  %v7724 = vmul.f32 %v7644, %v7720
  %v7725 = vmul.f32 %v7659, %v7721
  %v7726 = vadd.f32 %v7722, %v7724
  %v7727 = vadd.f32 %v7723, %v7725
  %v7728 = vtanh.pop %v7726
  %v7729 = vtanh.pop %v7727
  %v7730 = vmul.f32 %v7704, %v7728
  %v7731 = vmul.f32 %v7719, %v7729
  %7734 = vst [vmem:[#allocation1] sm:$0xff] %v7730
  %7735 = vst [vmem:[#allocation1 + $0x9] sm:$0xff] %v7731
  %s7736 = scalar_lea.vmem [#allocation1], 1
  %v7737 = vld [vmem:[%s7736] ss:$9 sm:$0xff]
  %s7739 = scalar_lea.vmem [#allocation3], 5
  %7740 = vst.msk [vmem:[%s7739] ss:$8 sm:$0x3] %vm2829, %v7737
  %7741 = vst.msk [vmem:[%s7739] ss:$8 sm:$0x0] %vm2829, %v7737
  %v7742 = vpack.c.bf16 %v7730, %v7730
  %v7743 = vpack.c.bf16 %v7731, %v7731
  %7744 = vmatpush.bf16.msra.mxu0 %v3274
  %7745 = vmatpush.bf16.msra.mxu0 %v3266
  %7746 = vmatpush.bf16.msra.mxu0 %v3258
  %7747 = vmatpush.bf16.msra.mxu0 %v3250
  %7748 = vmatpush.bf16.msra.mxu0 %v3242
  %7749 = vmatpush.bf16.msra.mxu0 %v3234
  %7750 = vmatpush.bf16.msra.mxu0 %v3226
  %7751 = vmatpush.bf16.msra.mxu0 %v3218
  %7752 = vmatmul.bf16.gmra.mxu0 %v7742
  %v7753 = vpop.f32.mrf.mxu0
  %v7754 = vadd.f32 %v911, %v7753
  %v7755 = vpop.f32.mrf.mxu0
  %7756 = vdwg.mxu0
  %7757 = vmatpush.bf16.msra.mxu0 %v3338
  %7758 = vmatpush.bf16.msra.mxu0 %v3330
  %7759 = vmatpush.bf16.msra.mxu0 %v3322
  %7760 = vmatpush.bf16.msra.mxu0 %v3314
  %7761 = vmatpush.bf16.msra.mxu0 %v3306
  %7762 = vmatpush.bf16.msra.mxu0 %v3298
  %7763 = vmatpush.bf16.msra.mxu0 %v3290
  %7764 = vmatpush.bf16.msra.mxu0 %v3282
  %7765 = vmatmul.bf16.gmra.mxu0 %v7743
  %v7766 = vpop.f32.mrf.mxu0
  %v7767 = vadd.f32 %v7754, %v7766
  %v7768 = vpop.f32.mrf.mxu0
  %7769 = vdwg.mxu0
  %7770 = vmatpush.bf16.msra.mxu0 %v3275
  %7771 = vmatpush.bf16.msra.mxu0 %v3267
  %7772 = vmatpush.bf16.msra.mxu0 %v3259
  %7773 = vmatpush.bf16.msra.mxu0 %v3251
  %7774 = vmatpush.bf16.msra.mxu0 %v3243
  %7775 = vmatpush.bf16.msra.mxu0 %v3235
  %7776 = vmatpush.bf16.msra.mxu0 %v3227
  %7777 = vmatpush.bf16.msra.mxu0 %v3219
  %7778 = vmatmul.bf16.gmra.mxu0 %v7742
  %v7779 = vpop.f32.mrf.mxu0
  %v7780 = vadd.f32 %v912, %v7779
  %v7781 = vpop.f32.mrf.mxu0
  %7782 = vdwg.mxu0
  %7783 = vmatpush.bf16.msra.mxu0 %v3339
  %7784 = vmatpush.bf16.msra.mxu0 %v3331
  %7785 = vmatpush.bf16.msra.mxu0 %v3323
  %7786 = vmatpush.bf16.msra.mxu0 %v3315
  %7787 = vmatpush.bf16.msra.mxu0 %v3307
  %7788 = vmatpush.bf16.msra.mxu0 %v3299
  %7789 = vmatpush.bf16.msra.mxu0 %v3291
  %7790 = vmatpush.bf16.msra.mxu0 %v3283
  %7791 = vmatmul.bf16.gmra.mxu0 %v7743
  %v7792 = vpop.f32.mrf.mxu0
  %v7793 = vadd.f32 %v7780, %v7792
  %v7794 = vpop.f32.mrf.mxu0
  %7795 = vdwg.mxu0
  %7796 = vmatpush.bf16.msra.mxu0 %v3276
  %7797 = vmatpush.bf16.msra.mxu0 %v3268
  %7798 = vmatpush.bf16.msra.mxu0 %v3260
  %7799 = vmatpush.bf16.msra.mxu0 %v3252
  %7800 = vmatpush.bf16.msra.mxu0 %v3244
  %7801 = vmatpush.bf16.msra.mxu0 %v3236
  %7802 = vmatpush.bf16.msra.mxu0 %v3228
  %7803 = vmatpush.bf16.msra.mxu0 %v3220
  %7804 = vmatmul.bf16.gmra.mxu0 %v7742
  %v7805 = vpop.f32.mrf.mxu0
  %v7806 = vadd.f32 %v913, %v7805
  %v7807 = vpop.f32.mrf.mxu0
  %7808 = vdwg.mxu0
  %7809 = vmatpush.bf16.msra.mxu0 %v3340
  %7810 = vmatpush.bf16.msra.mxu0 %v3332
  %7811 = vmatpush.bf16.msra.mxu0 %v3324
  %7812 = vmatpush.bf16.msra.mxu0 %v3316
  %7813 = vmatpush.bf16.msra.mxu0 %v3308
  %7814 = vmatpush.bf16.msra.mxu0 %v3300
  %7815 = vmatpush.bf16.msra.mxu0 %v3292
  %7816 = vmatpush.bf16.msra.mxu0 %v3284
  %7817 = vmatmul.bf16.gmra.mxu0 %v7743
  %v7818 = vpop.f32.mrf.mxu0
  %v7819 = vadd.f32 %v7806, %v7818
  %v7820 = vpop.f32.mrf.mxu0
  %7821 = vdwg.mxu0
  %7822 = vmatpush.bf16.msra.mxu0 %v3277
  %7823 = vmatpush.bf16.msra.mxu0 %v3269
  %7824 = vmatpush.bf16.msra.mxu0 %v3261
  %7825 = vmatpush.bf16.msra.mxu0 %v3253
  %7826 = vmatpush.bf16.msra.mxu0 %v3245
  %7827 = vmatpush.bf16.msra.mxu0 %v3237
  %7828 = vmatpush.bf16.msra.mxu0 %v3229
  %7829 = vmatpush.bf16.msra.mxu0 %v3221
  %7830 = vmatmul.bf16.gmra.mxu0 %v7742
  %v7831 = vpop.f32.mrf.mxu0
  %v7832 = vadd.f32 %v914, %v7831
  %v7833 = vpop.f32.mrf.mxu0
  %7834 = vdwg.mxu0
  %7835 = vmatpush.bf16.msra.mxu0 %v3341
  %7836 = vmatpush.bf16.msra.mxu0 %v3333
  %7837 = vmatpush.bf16.msra.mxu0 %v3325
  %7838 = vmatpush.bf16.msra.mxu0 %v3317
  %7839 = vmatpush.bf16.msra.mxu0 %v3309
  %7840 = vmatpush.bf16.msra.mxu0 %v3301
  %7841 = vmatpush.bf16.msra.mxu0 %v3293
  %7842 = vmatpush.bf16.msra.mxu0 %v3285
  %7843 = vmatmul.bf16.gmra.mxu0 %v7743
  %v7844 = vpop.f32.mrf.mxu0
  %v7845 = vadd.f32 %v7832, %v7844
  %v7846 = vpop.f32.mrf.mxu0
  %7847 = vdwg.mxu0
  %7848 = vmatpush.bf16.msra.mxu0 %v3278
  %7849 = vmatpush.bf16.msra.mxu0 %v3270
  %7850 = vmatpush.bf16.msra.mxu0 %v3262
  %7851 = vmatpush.bf16.msra.mxu0 %v3254
  %7852 = vmatpush.bf16.msra.mxu0 %v3246
  %7853 = vmatpush.bf16.msra.mxu0 %v3238
  %7854 = vmatpush.bf16.msra.mxu0 %v3230
  %7855 = vmatpush.bf16.msra.mxu0 %v3222
  %7856 = vmatmul.bf16.gmra.mxu0 %v7742
  %v7857 = vpop.f32.mrf.mxu0
  %v7858 = vadd.f32 %v915, %v7857
  %v7859 = vpop.f32.mrf.mxu0
  %7860 = vdwg.mxu0
  %7861 = vmatpush.bf16.msra.mxu0 %v3342
  %7862 = vmatpush.bf16.msra.mxu0 %v3334
  %7863 = vmatpush.bf16.msra.mxu0 %v3326
  %7864 = vmatpush.bf16.msra.mxu0 %v3318
  %7865 = vmatpush.bf16.msra.mxu0 %v3310
  %7866 = vmatpush.bf16.msra.mxu0 %v3302
  %7867 = vmatpush.bf16.msra.mxu0 %v3294
  %7868 = vmatpush.bf16.msra.mxu0 %v3286
  %7869 = vmatmul.bf16.gmra.mxu0 %v7743
  %v7870 = vpop.f32.mrf.mxu0
  %v7871 = vadd.f32 %v7858, %v7870
  %v7872 = vpop.f32.mrf.mxu0
  %7873 = vdwg.mxu0
  %7874 = vmatpush.bf16.msra.mxu0 %v3279
  %7875 = vmatpush.bf16.msra.mxu0 %v3271
  %7876 = vmatpush.bf16.msra.mxu0 %v3263
  %7877 = vmatpush.bf16.msra.mxu0 %v3255
  %7878 = vmatpush.bf16.msra.mxu0 %v3247
  %7879 = vmatpush.bf16.msra.mxu0 %v3239
  %7880 = vmatpush.bf16.msra.mxu0 %v3231
  %7881 = vmatpush.bf16.msra.mxu0 %v3223
  %7882 = vmatmul.bf16.gmra.mxu0 %v7742
  %v7883 = vpop.f32.mrf.mxu0
  %v7884 = vadd.f32 %v916, %v7883
  %v7885 = vpop.f32.mrf.mxu0
  %7886 = vdwg.mxu0
  %7887 = vmatpush.bf16.msra.mxu0 %v3343
  %7888 = vmatpush.bf16.msra.mxu0 %v3335
  %7889 = vmatpush.bf16.msra.mxu0 %v3327
  %7890 = vmatpush.bf16.msra.mxu0 %v3319
  %7891 = vmatpush.bf16.msra.mxu0 %v3311
  %7892 = vmatpush.bf16.msra.mxu0 %v3303
  %7893 = vmatpush.bf16.msra.mxu0 %v3295
  %7894 = vmatpush.bf16.msra.mxu0 %v3287
  %7895 = vmatmul.bf16.gmra.mxu0 %v7743
  %v7896 = vpop.f32.mrf.mxu0
  %v7897 = vadd.f32 %v7884, %v7896
  %v7898 = vpop.f32.mrf.mxu0
  %7899 = vdwg.mxu0
  %7900 = vmatpush.bf16.msra.mxu0 %v3280
  %7901 = vmatpush.bf16.msra.mxu0 %v3272
  %7902 = vmatpush.bf16.msra.mxu0 %v3264
  %7903 = vmatpush.bf16.msra.mxu0 %v3256
  %7904 = vmatpush.bf16.msra.mxu0 %v3248
  %7905 = vmatpush.bf16.msra.mxu0 %v3240
  %7906 = vmatpush.bf16.msra.mxu0 %v3232
  %7907 = vmatpush.bf16.msra.mxu0 %v3224
  %7908 = vmatmul.bf16.gmra.mxu0 %v7742
  %v7909 = vpop.f32.mrf.mxu0
  %v7910 = vadd.f32 %v917, %v7909
  %v7911 = vpop.f32.mrf.mxu0
  %7912 = vdwg.mxu0
  %7913 = vmatpush.bf16.msra.mxu0 %v3344
  %7914 = vmatpush.bf16.msra.mxu0 %v3336
  %7915 = vmatpush.bf16.msra.mxu0 %v3328
  %7916 = vmatpush.bf16.msra.mxu0 %v3320
  %7917 = vmatpush.bf16.msra.mxu0 %v3312
  %7918 = vmatpush.bf16.msra.mxu0 %v3304
  %7919 = vmatpush.bf16.msra.mxu0 %v3296
  %7920 = vmatpush.bf16.msra.mxu0 %v3288
  %7921 = vmatmul.bf16.gmra.mxu0 %v7743
  %v7922 = vpop.f32.mrf.mxu0
  %v7923 = vadd.f32 %v7910, %v7922
  %v7924 = vpop.f32.mrf.mxu0
  %7925 = vdwg.mxu0
  %7926 = vmatpush.bf16.msra.mxu0 %v3281
  %7927 = vmatpush.bf16.msra.mxu0 %v3273
  %7928 = vmatpush.bf16.msra.mxu0 %v3265
  %7929 = vmatpush.bf16.msra.mxu0 %v3257
  %7930 = vmatpush.bf16.msra.mxu0 %v3249
  %7931 = vmatpush.bf16.msra.mxu0 %v3241
  %7932 = vmatpush.bf16.msra.mxu0 %v3233
  %7933 = vmatpush.bf16.msra.mxu0 %v3225
  %7934 = vmatmul.bf16.gmra.mxu0 %v7742
  %v7935 = vpop.f32.mrf.mxu0
  %v7936 = vadd.f32 %v918, %v7935
  %v7937 = vpop.f32.mrf.mxu0
  %7938 = vdwg.mxu0
  %7939 = vmatpush.bf16.msra.mxu0 %v3345
  %7940 = vmatpush.bf16.msra.mxu0 %v3337
  %7941 = vmatpush.bf16.msra.mxu0 %v3329
  %7942 = vmatpush.bf16.msra.mxu0 %v3321
  %7943 = vmatpush.bf16.msra.mxu0 %v3313
  %7944 = vmatpush.bf16.msra.mxu0 %v3305
  %7945 = vmatpush.bf16.msra.mxu0 %v3297
  %7946 = vmatpush.bf16.msra.mxu0 %v3289
  %7947 = vmatmul.bf16.gmra.mxu0 %v7743
  %v7948 = vpop.f32.mrf.mxu0
  %v7949 = vadd.f32 %v7936, %v7948
  %v7950 = vpop.f32.mrf.mxu0
  %7951 = vdwg.mxu0
  %v7952 = vld [vmem:[%s505] sm:$0xff]
  %v7953 = vld [vmem:[%s505 + $0x8] sm:$0xff]
  %v7962 = vrot.slane %v7231, 6
  %v7963 = vrot.slane %v7257, 4
  %v7964 = vrot.slane %v7283, 2
  %v7965 = vrot.slane %v7335, 6
  %v7966 = vrot.slane %v7361, 4
  %v7967 = vrot.slane %v7387, 2
  %v7968 = vsel %vm385, %v7205, %v7962
  %v7969 = vsel %vm387, %v7963, %v7964
  %v7970 = vsel %vm389, %v7968, %v7969
  %v7971 = vsel %vm385, %v7309, %v7965
  %v7972 = vsel %vm387, %v7966, %v7967
  %v7973 = vsel %vm389, %v7971, %v7972
  %v7976 = vadd.f32 %v7952, %v7970
  %v7977 = vadd.f32 %v7953, %v7973
  %v7978 = vxor.u32 %v7976, 2147483648
  %v7979 = vxor.u32 %v7977, 2147483648
  %v7980 = vmul.f32 %v7978, 1.442695
  %v7981 = vpow.pop %v7980
  %v7982 = vmul.f32 %v7979, 1.442695
  %v7983 = vpow.pop %v7982
  %v7984 = vadd.f32 %v7981, 1.0
  %v7985 = vadd.f32 %v7983, 1.0
  %v7986 = vrcp.pop %v7984
  %v7987 = vmul.f32 %v7984, %v7986
  %v7988 = vsub.f32 1.0, %v7987
  %v7989 = vmul.f32 %v7986, %v7988
  %v7990 = vadd.f32 %v7986, %v7989
  %vm7991 = vweird.f32 %v7984
  %vm7992 = vweird.f32 %v7986
  %vm7993 = vmor %vm7991, %vm7992
  %v7994 = vsel %vm7993, %v7986, %v7990
  %v7995 = vand.u32 2147483647, %v7984
  %vm7996 = vcmp.eq.f32.partialorder %v7995, 8.507059e+37
  %v7997 = vand.u32 %v7984, 2147483648
  %v7998 = vor.u32 1.1754944e-38, %v7997
  %v7999 = vsel %vm7996, %v7998, %v7994
  %v8000 = vmul.f32 1.0, %v7999
  %v8001 = vrcp.pop %v7985
  %v8002 = vmul.f32 %v7985, %v8001
  %v8003 = vsub.f32 1.0, %v8002
  %v8004 = vmul.f32 %v8001, %v8003
  %v8005 = vadd.f32 %v8001, %v8004
  %vm8006 = vweird.f32 %v7985
  %vm8007 = vweird.f32 %v8001
  %vm8008 = vmor %vm8006, %vm8007
  %v8009 = vsel %vm8008, %v8001, %v8005
  %v8010 = vand.u32 2147483647, %v7985
  %vm8011 = vcmp.eq.f32.partialorder %v8010, 8.507059e+37
  %v8012 = vand.u32 %v7985, 2147483648
  %v8013 = vor.u32 1.1754944e-38, %v8012
  %v8014 = vsel %vm8011, %v8013, %v8009
  %v8015 = vmul.f32 1.0, %v8014
  %v8017 = vrot.slane %v7977, 4
  %v8019 = vtanh.pop %v8017
  %v8021 = vrot.slane %v8000, 4
  %v8023 = vmul.f32 %v8021, %v7171
  %v8024 = vmul.f32 %v8000, %v8019
  %v8025 = vadd.f32 %v8023, %v8024
  %v8026 = vtanh.pop %v8025
  %v8027 = vmul.f32 %v8015, %v8026
  %8029 = vst [vmem:[#allocation1] ss:$4 sm:$0xff] %v8027
  %v8030 = vld.sshfl [vmem:[#allocation1] sm:$0xff pattern:$0x73625140]
  %v8031 = vld.sshfl [vmem:[#allocation1 + $0x8] sm:$0xff pattern:$0x73625140]
  %v8034 = vpack.c.bf16 %v8030, %v8030
  %v8035 = vpack.c.bf16 %v8031, %v8031
  %8036 = vmatpush.bf16.msra.mxu0 %v1429
  %8037 = vmatpush.bf16.msra.mxu0 %v1421
  %8038 = vmatpush.bf16.msra.mxu0 %v1413
  %8039 = vmatpush.bf16.msra.mxu0 %v1405
  %8040 = vmatpush.bf16.msra.mxu0 %v1397
  %8041 = vmatpush.bf16.msra.mxu0 %v1389
  %8042 = vmatpush.bf16.msra.mxu0 %v1381
  %8043 = vmatpush.bf16.msra.mxu0 %v1373
  %8044 = vmatmul.bf16.gmra.mxu0 %v8034
  %v8045 = vpop.f32.mrf.mxu0
  %v8046 = vadd.f32 0.0, %v8045
  %v8047 = vpop.f32.mrf.mxu0
  %8048 = vdwg.mxu0
  %8049 = vmatpush.bf16.msra.mxu0 %v1493
  %8050 = vmatpush.bf16.msra.mxu0 %v1485
  %8051 = vmatpush.bf16.msra.mxu0 %v1477
  %8052 = vmatpush.bf16.msra.mxu0 %v1469
  %8053 = vmatpush.bf16.msra.mxu0 %v1461
  %8054 = vmatpush.bf16.msra.mxu0 %v1453
  %8055 = vmatpush.bf16.msra.mxu0 %v1445
  %8056 = vmatpush.bf16.msra.mxu0 %v1437
  %8057 = vmatmul.bf16.gmra.mxu0 %v8035
  %v8058 = vpop.f32.mrf.mxu0
  %v8059 = vadd.f32 %v8046, %v8058
  %v8060 = vpop.f32.mrf.mxu0
  %8061 = vdwg.mxu0
  %8062 = vmatpush.bf16.msra.mxu0 %v1430
  %8063 = vmatpush.bf16.msra.mxu0 %v1422
  %8064 = vmatpush.bf16.msra.mxu0 %v1414
  %8065 = vmatpush.bf16.msra.mxu0 %v1406
  %8066 = vmatpush.bf16.msra.mxu0 %v1398
  %8067 = vmatpush.bf16.msra.mxu0 %v1390
  %8068 = vmatpush.bf16.msra.mxu0 %v1382
  %8069 = vmatpush.bf16.msra.mxu0 %v1374
  %8070 = vmatmul.bf16.gmra.mxu0 %v8034
  %v8071 = vpop.f32.mrf.mxu0
  %v8072 = vadd.f32 0.0, %v8071
  %v8073 = vpop.f32.mrf.mxu0
  %8074 = vdwg.mxu0
  %8075 = vmatpush.bf16.msra.mxu0 %v1494
  %8076 = vmatpush.bf16.msra.mxu0 %v1486
  %8077 = vmatpush.bf16.msra.mxu0 %v1478
  %8078 = vmatpush.bf16.msra.mxu0 %v1470
  %8079 = vmatpush.bf16.msra.mxu0 %v1462
  %8080 = vmatpush.bf16.msra.mxu0 %v1454
  %8081 = vmatpush.bf16.msra.mxu0 %v1446
  %8082 = vmatpush.bf16.msra.mxu0 %v1438
  %8083 = vmatmul.bf16.gmra.mxu0 %v8035
  %v8084 = vpop.f32.mrf.mxu0
  %v8085 = vadd.f32 %v8072, %v8084
  %v8086 = vpop.f32.mrf.mxu0
  %8087 = vdwg.mxu0
  %8088 = vmatpush.bf16.msra.mxu0 %v1431
  %8089 = vmatpush.bf16.msra.mxu0 %v1423
  %8090 = vmatpush.bf16.msra.mxu0 %v1415
  %8091 = vmatpush.bf16.msra.mxu0 %v1407
  %8092 = vmatpush.bf16.msra.mxu0 %v1399
  %8093 = vmatpush.bf16.msra.mxu0 %v1391
  %8094 = vmatpush.bf16.msra.mxu0 %v1383
  %8095 = vmatpush.bf16.msra.mxu0 %v1375
  %8096 = vmatmul.bf16.gmra.mxu0 %v8034
  %v8097 = vpop.f32.mrf.mxu0
  %v8098 = vadd.f32 0.0, %v8097
  %v8099 = vpop.f32.mrf.mxu0
  %8100 = vdwg.mxu0
  %8101 = vmatpush.bf16.msra.mxu0 %v1495
  %8102 = vmatpush.bf16.msra.mxu0 %v1487
  %8103 = vmatpush.bf16.msra.mxu0 %v1479
  %8104 = vmatpush.bf16.msra.mxu0 %v1471
  %8105 = vmatpush.bf16.msra.mxu0 %v1463
  %8106 = vmatpush.bf16.msra.mxu0 %v1455
  %8107 = vmatpush.bf16.msra.mxu0 %v1447
  %8108 = vmatpush.bf16.msra.mxu0 %v1439
  %8109 = vmatmul.bf16.gmra.mxu0 %v8035
  %v8110 = vpop.f32.mrf.mxu0
  %v8111 = vadd.f32 %v8098, %v8110
  %v8112 = vpop.f32.mrf.mxu0
  %8113 = vdwg.mxu0
  %8114 = vmatpush.bf16.msra.mxu0 %v1432
  %8115 = vmatpush.bf16.msra.mxu0 %v1424
  %8116 = vmatpush.bf16.msra.mxu0 %v1416
  %8117 = vmatpush.bf16.msra.mxu0 %v1408
  %8118 = vmatpush.bf16.msra.mxu0 %v1400
  %8119 = vmatpush.bf16.msra.mxu0 %v1392
  %8120 = vmatpush.bf16.msra.mxu0 %v1384
  %8121 = vmatpush.bf16.msra.mxu0 %v1376
  %8122 = vmatmul.bf16.gmra.mxu0 %v8034
  %v8123 = vpop.f32.mrf.mxu0
  %v8124 = vadd.f32 0.0, %v8123
  %v8125 = vpop.f32.mrf.mxu0
  %8126 = vdwg.mxu0
  %8127 = vmatpush.bf16.msra.mxu0 %v1496
  %8128 = vmatpush.bf16.msra.mxu0 %v1488
  %8129 = vmatpush.bf16.msra.mxu0 %v1480
  %8130 = vmatpush.bf16.msra.mxu0 %v1472
  %8131 = vmatpush.bf16.msra.mxu0 %v1464
  %8132 = vmatpush.bf16.msra.mxu0 %v1456
  %8133 = vmatpush.bf16.msra.mxu0 %v1448
  %8134 = vmatpush.bf16.msra.mxu0 %v1440
  %8135 = vmatmul.bf16.gmra.mxu0 %v8035
  %v8136 = vpop.f32.mrf.mxu0
  %v8137 = vadd.f32 %v8124, %v8136
  %v8138 = vpop.f32.mrf.mxu0
  %8139 = vdwg.mxu0
  %8140 = vmatpush.bf16.msra.mxu0 %v1433
  %8141 = vmatpush.bf16.msra.mxu0 %v1425
  %8142 = vmatpush.bf16.msra.mxu0 %v1417
  %8143 = vmatpush.bf16.msra.mxu0 %v1409
  %8144 = vmatpush.bf16.msra.mxu0 %v1401
  %8145 = vmatpush.bf16.msra.mxu0 %v1393
  %8146 = vmatpush.bf16.msra.mxu0 %v1385
  %8147 = vmatpush.bf16.msra.mxu0 %v1377
  %8148 = vmatmul.bf16.gmra.mxu0 %v8034
  %v8149 = vpop.f32.mrf.mxu0
  %v8150 = vadd.f32 0.0, %v8149
  %v8151 = vpop.f32.mrf.mxu0
  %8152 = vdwg.mxu0
  %8153 = vmatpush.bf16.msra.mxu0 %v1497
  %8154 = vmatpush.bf16.msra.mxu0 %v1489
  %8155 = vmatpush.bf16.msra.mxu0 %v1481
  %8156 = vmatpush.bf16.msra.mxu0 %v1473
  %8157 = vmatpush.bf16.msra.mxu0 %v1465
  %8158 = vmatpush.bf16.msra.mxu0 %v1457
  %8159 = vmatpush.bf16.msra.mxu0 %v1449
  %8160 = vmatpush.bf16.msra.mxu0 %v1441
  %8161 = vmatmul.bf16.gmra.mxu0 %v8035
  %v8162 = vpop.f32.mrf.mxu0
  %v8163 = vadd.f32 %v8150, %v8162
  %v8164 = vpop.f32.mrf.mxu0
  %8165 = vdwg.mxu0
  %8166 = vmatpush.bf16.msra.mxu0 %v1434
  %8167 = vmatpush.bf16.msra.mxu0 %v1426
  %8168 = vmatpush.bf16.msra.mxu0 %v1418
  %8169 = vmatpush.bf16.msra.mxu0 %v1410
  %8170 = vmatpush.bf16.msra.mxu0 %v1402
  %8171 = vmatpush.bf16.msra.mxu0 %v1394
  %8172 = vmatpush.bf16.msra.mxu0 %v1386
  %8173 = vmatpush.bf16.msra.mxu0 %v1378
  %8174 = vmatmul.bf16.gmra.mxu0 %v8034
  %v8175 = vpop.f32.mrf.mxu0
  %v8176 = vadd.f32 0.0, %v8175
  %v8177 = vpop.f32.mrf.mxu0
  %8178 = vdwg.mxu0
  %8179 = vmatpush.bf16.msra.mxu0 %v1498
  %8180 = vmatpush.bf16.msra.mxu0 %v1490
  %8181 = vmatpush.bf16.msra.mxu0 %v1482
  %8182 = vmatpush.bf16.msra.mxu0 %v1474
  %8183 = vmatpush.bf16.msra.mxu0 %v1466
  %8184 = vmatpush.bf16.msra.mxu0 %v1458
  %8185 = vmatpush.bf16.msra.mxu0 %v1450
  %8186 = vmatpush.bf16.msra.mxu0 %v1442
  %8187 = vmatmul.bf16.gmra.mxu0 %v8035
  %v8188 = vpop.f32.mrf.mxu0
  %v8189 = vadd.f32 %v8176, %v8188
  %v8190 = vpop.f32.mrf.mxu0
  %8191 = vdwg.mxu0
  %8192 = vmatpush.bf16.msra.mxu0 %v1435
  %8193 = vmatpush.bf16.msra.mxu0 %v1427
  %8194 = vmatpush.bf16.msra.mxu0 %v1419
  %8195 = vmatpush.bf16.msra.mxu0 %v1411
  %8196 = vmatpush.bf16.msra.mxu0 %v1403
  %8197 = vmatpush.bf16.msra.mxu0 %v1395
  %8198 = vmatpush.bf16.msra.mxu0 %v1387
  %8199 = vmatpush.bf16.msra.mxu0 %v1379
  %8200 = vmatmul.bf16.gmra.mxu0 %v8034
  %v8201 = vpop.f32.mrf.mxu0
  %v8202 = vadd.f32 0.0, %v8201
  %v8203 = vpop.f32.mrf.mxu0
  %8204 = vdwg.mxu0
  %8205 = vmatpush.bf16.msra.mxu0 %v1499
  %8206 = vmatpush.bf16.msra.mxu0 %v1491
  %8207 = vmatpush.bf16.msra.mxu0 %v1483
  %8208 = vmatpush.bf16.msra.mxu0 %v1475
  %8209 = vmatpush.bf16.msra.mxu0 %v1467
  %8210 = vmatpush.bf16.msra.mxu0 %v1459
  %8211 = vmatpush.bf16.msra.mxu0 %v1451
  %8212 = vmatpush.bf16.msra.mxu0 %v1443
  %8213 = vmatmul.bf16.gmra.mxu0 %v8035
  %v8214 = vpop.f32.mrf.mxu0
  %v8215 = vadd.f32 %v8202, %v8214
  %v8216 = vpop.f32.mrf.mxu0
  %8217 = vdwg.mxu0
  %8218 = vmatpush.bf16.msra.mxu0 %v1436
  %8219 = vmatpush.bf16.msra.mxu0 %v1428
  %8220 = vmatpush.bf16.msra.mxu0 %v1420
  %8221 = vmatpush.bf16.msra.mxu0 %v1412
  %8222 = vmatpush.bf16.msra.mxu0 %v1404
  %8223 = vmatpush.bf16.msra.mxu0 %v1396
  %8224 = vmatpush.bf16.msra.mxu0 %v1388
  %8225 = vmatpush.bf16.msra.mxu0 %v1380
  %8226 = vmatmul.bf16.gmra.mxu0 %v8034
  %v8227 = vpop.f32.mrf.mxu0
  %v8228 = vadd.f32 0.0, %v8227
  %v8229 = vpop.f32.mrf.mxu0
  %8230 = vdwg.mxu0
  %8231 = vmatpush.bf16.msra.mxu0 %v1500
  %8232 = vmatpush.bf16.msra.mxu0 %v1492
  %8233 = vmatpush.bf16.msra.mxu0 %v1484
  %8234 = vmatpush.bf16.msra.mxu0 %v1476
  %8235 = vmatpush.bf16.msra.mxu0 %v1468
  %8236 = vmatpush.bf16.msra.mxu0 %v1460
  %8237 = vmatpush.bf16.msra.mxu0 %v1452
  %8238 = vmatpush.bf16.msra.mxu0 %v1444
  %8239 = vmatmul.bf16.gmra.mxu0 %v8035
  %v8240 = vpop.f32.mrf.mxu0
  %v8241 = vadd.f32 %v8228, %v8240
  %v8242 = vpop.f32.mrf.mxu0
  %8243 = vdwg.mxu0
  %8244 = vmatpush.bf16.msra.mxu0 %v2277
  %8245 = vmatpush.bf16.msra.mxu0 %v2269
  %8246 = vmatpush.bf16.msra.mxu0 %v2261
  %8247 = vmatpush.bf16.msra.mxu0 %v2253
  %8248 = vmatpush.bf16.msra.mxu0 %v2245
  %8249 = vmatpush.bf16.msra.mxu0 %v2237
  %8250 = vmatpush.bf16.msra.mxu0 %v2229
  %8251 = vmatpush.bf16.msra.mxu0 %v2221
  %8252 = vmatmul.bf16.gmra.mxu0 %v8034
  %v8253 = vpop.f32.mrf.mxu0
  %v8254 = vadd.f32 0.0, %v8253
  %v8255 = vpop.f32.mrf.mxu0
  %8256 = vdwg.mxu0
  %8257 = vmatpush.bf16.msra.mxu0 %v2341
  %8258 = vmatpush.bf16.msra.mxu0 %v2333
  %8259 = vmatpush.bf16.msra.mxu0 %v2325
  %8260 = vmatpush.bf16.msra.mxu0 %v2317
  %8261 = vmatpush.bf16.msra.mxu0 %v2309
  %8262 = vmatpush.bf16.msra.mxu0 %v2301
  %8263 = vmatpush.bf16.msra.mxu0 %v2293
  %8264 = vmatpush.bf16.msra.mxu0 %v2285
  %8265 = vmatmul.bf16.gmra.mxu0 %v8035
  %v8266 = vpop.f32.mrf.mxu0
  %v8267 = vadd.f32 %v8254, %v8266
  %v8268 = vpop.f32.mrf.mxu0
  %8269 = vdwg.mxu0
  %8270 = vmatpush.bf16.msra.mxu0 %v2278
  %8271 = vmatpush.bf16.msra.mxu0 %v2270
  %8272 = vmatpush.bf16.msra.mxu0 %v2262
  %8273 = vmatpush.bf16.msra.mxu0 %v2254
  %8274 = vmatpush.bf16.msra.mxu0 %v2246
  %8275 = vmatpush.bf16.msra.mxu0 %v2238
  %8276 = vmatpush.bf16.msra.mxu0 %v2230
  %8277 = vmatpush.bf16.msra.mxu0 %v2222
  %8278 = vmatmul.bf16.gmra.mxu0 %v8034
  %v8279 = vpop.f32.mrf.mxu0
  %v8280 = vadd.f32 0.0, %v8279
  %v8281 = vpop.f32.mrf.mxu0
  %8282 = vdwg.mxu0
  %8283 = vmatpush.bf16.msra.mxu0 %v2342
  %8284 = vmatpush.bf16.msra.mxu0 %v2334
  %8285 = vmatpush.bf16.msra.mxu0 %v2326
  %8286 = vmatpush.bf16.msra.mxu0 %v2318
  %8287 = vmatpush.bf16.msra.mxu0 %v2310
  %8288 = vmatpush.bf16.msra.mxu0 %v2302
  %8289 = vmatpush.bf16.msra.mxu0 %v2294
  %8290 = vmatpush.bf16.msra.mxu0 %v2286
  %8291 = vmatmul.bf16.gmra.mxu0 %v8035
  %v8292 = vpop.f32.mrf.mxu0
  %v8293 = vadd.f32 %v8280, %v8292
  %v8294 = vpop.f32.mrf.mxu0
  %8295 = vdwg.mxu0
  %8296 = vmatpush.bf16.msra.mxu0 %v2279
  %8297 = vmatpush.bf16.msra.mxu0 %v2271
  %8298 = vmatpush.bf16.msra.mxu0 %v2263
  %8299 = vmatpush.bf16.msra.mxu0 %v2255
  %8300 = vmatpush.bf16.msra.mxu0 %v2247
  %8301 = vmatpush.bf16.msra.mxu0 %v2239
  %8302 = vmatpush.bf16.msra.mxu0 %v2231
  %8303 = vmatpush.bf16.msra.mxu0 %v2223
  %8304 = vmatmul.bf16.gmra.mxu0 %v8034
  %v8305 = vpop.f32.mrf.mxu0
  %v8306 = vadd.f32 0.0, %v8305
  %v8307 = vpop.f32.mrf.mxu0
  %8308 = vdwg.mxu0
  %8309 = vmatpush.bf16.msra.mxu0 %v2343
  %8310 = vmatpush.bf16.msra.mxu0 %v2335
  %8311 = vmatpush.bf16.msra.mxu0 %v2327
  %8312 = vmatpush.bf16.msra.mxu0 %v2319
  %8313 = vmatpush.bf16.msra.mxu0 %v2311
  %8314 = vmatpush.bf16.msra.mxu0 %v2303
  %8315 = vmatpush.bf16.msra.mxu0 %v2295
  %8316 = vmatpush.bf16.msra.mxu0 %v2287
  %8317 = vmatmul.bf16.gmra.mxu0 %v8035
  %v8318 = vpop.f32.mrf.mxu0
  %v8319 = vadd.f32 %v8306, %v8318
  %v8320 = vpop.f32.mrf.mxu0
  %8321 = vdwg.mxu0
  %8322 = vmatpush.bf16.msra.mxu0 %v2280
  %8323 = vmatpush.bf16.msra.mxu0 %v2272
  %8324 = vmatpush.bf16.msra.mxu0 %v2264
  %8325 = vmatpush.bf16.msra.mxu0 %v2256
  %8326 = vmatpush.bf16.msra.mxu0 %v2248
  %8327 = vmatpush.bf16.msra.mxu0 %v2240
  %8328 = vmatpush.bf16.msra.mxu0 %v2232
  %8329 = vmatpush.bf16.msra.mxu0 %v2224
  %8330 = vmatmul.bf16.gmra.mxu0 %v8034
  %v8331 = vpop.f32.mrf.mxu0
  %v8332 = vadd.f32 0.0, %v8331
  %v8333 = vpop.f32.mrf.mxu0
  %8334 = vdwg.mxu0
  %8335 = vmatpush.bf16.msra.mxu0 %v2344
  %8336 = vmatpush.bf16.msra.mxu0 %v2336
  %8337 = vmatpush.bf16.msra.mxu0 %v2328
  %8338 = vmatpush.bf16.msra.mxu0 %v2320
  %8339 = vmatpush.bf16.msra.mxu0 %v2312
  %8340 = vmatpush.bf16.msra.mxu0 %v2304
  %8341 = vmatpush.bf16.msra.mxu0 %v2296
  %8342 = vmatpush.bf16.msra.mxu0 %v2288
  %8343 = vmatmul.bf16.gmra.mxu0 %v8035
  %v8344 = vpop.f32.mrf.mxu0
  %v8345 = vadd.f32 %v8332, %v8344
  %v8346 = vpop.f32.mrf.mxu0
  %8347 = vdwg.mxu0
  %8348 = vmatpush.bf16.msra.mxu0 %v2281
  %8349 = vmatpush.bf16.msra.mxu0 %v2273
  %8350 = vmatpush.bf16.msra.mxu0 %v2265
  %8351 = vmatpush.bf16.msra.mxu0 %v2257
  %8352 = vmatpush.bf16.msra.mxu0 %v2249
  %8353 = vmatpush.bf16.msra.mxu0 %v2241
  %8354 = vmatpush.bf16.msra.mxu0 %v2233
  %8355 = vmatpush.bf16.msra.mxu0 %v2225
  %8356 = vmatmul.bf16.gmra.mxu0 %v8034
  %v8357 = vpop.f32.mrf.mxu0
  %v8358 = vadd.f32 0.0, %v8357
  %v8359 = vpop.f32.mrf.mxu0
  %8360 = vdwg.mxu0
  %8361 = vmatpush.bf16.msra.mxu0 %v2345
  %8362 = vmatpush.bf16.msra.mxu0 %v2337
  %8363 = vmatpush.bf16.msra.mxu0 %v2329
  %8364 = vmatpush.bf16.msra.mxu0 %v2321
  %8365 = vmatpush.bf16.msra.mxu0 %v2313
  %8366 = vmatpush.bf16.msra.mxu0 %v2305
  %8367 = vmatpush.bf16.msra.mxu0 %v2297
  %8368 = vmatpush.bf16.msra.mxu0 %v2289
  %8369 = vmatmul.bf16.gmra.mxu0 %v8035
  %v8370 = vpop.f32.mrf.mxu0
  %v8371 = vadd.f32 %v8358, %v8370
  %v8372 = vpop.f32.mrf.mxu0
  %8373 = vdwg.mxu0
  %8374 = vmatpush.bf16.msra.mxu0 %v2282
  %8375 = vmatpush.bf16.msra.mxu0 %v2274
  %8376 = vmatpush.bf16.msra.mxu0 %v2266
  %8377 = vmatpush.bf16.msra.mxu0 %v2258
  %8378 = vmatpush.bf16.msra.mxu0 %v2250
  %8379 = vmatpush.bf16.msra.mxu0 %v2242
  %8380 = vmatpush.bf16.msra.mxu0 %v2234
  %8381 = vmatpush.bf16.msra.mxu0 %v2226
  %8382 = vmatmul.bf16.gmra.mxu0 %v8034
  %v8383 = vpop.f32.mrf.mxu0
  %v8384 = vadd.f32 0.0, %v8383
  %v8385 = vpop.f32.mrf.mxu0
  %8386 = vdwg.mxu0
  %8387 = vmatpush.bf16.msra.mxu0 %v2346
  %8388 = vmatpush.bf16.msra.mxu0 %v2338
  %8389 = vmatpush.bf16.msra.mxu0 %v2330
  %8390 = vmatpush.bf16.msra.mxu0 %v2322
  %8391 = vmatpush.bf16.msra.mxu0 %v2314
  %8392 = vmatpush.bf16.msra.mxu0 %v2306
  %8393 = vmatpush.bf16.msra.mxu0 %v2298
  %8394 = vmatpush.bf16.msra.mxu0 %v2290
  %8395 = vmatmul.bf16.gmra.mxu0 %v8035
  %v8396 = vpop.f32.mrf.mxu0
  %v8397 = vadd.f32 %v8384, %v8396
  %v8398 = vpop.f32.mrf.mxu0
  %8399 = vdwg.mxu0
  %8400 = vmatpush.bf16.msra.mxu0 %v2283
  %8401 = vmatpush.bf16.msra.mxu0 %v2275
  %8402 = vmatpush.bf16.msra.mxu0 %v2267
  %8403 = vmatpush.bf16.msra.mxu0 %v2259
  %8404 = vmatpush.bf16.msra.mxu0 %v2251
  %8405 = vmatpush.bf16.msra.mxu0 %v2243
  %8406 = vmatpush.bf16.msra.mxu0 %v2235
  %8407 = vmatpush.bf16.msra.mxu0 %v2227
  %8408 = vmatmul.bf16.gmra.mxu0 %v8034
  %v8409 = vpop.f32.mrf.mxu0
  %v8410 = vadd.f32 0.0, %v8409
  %v8411 = vpop.f32.mrf.mxu0
  %8412 = vdwg.mxu0
  %8413 = vmatpush.bf16.msra.mxu0 %v2347
  %8414 = vmatpush.bf16.msra.mxu0 %v2339
  %8415 = vmatpush.bf16.msra.mxu0 %v2331
  %8416 = vmatpush.bf16.msra.mxu0 %v2323
  %8417 = vmatpush.bf16.msra.mxu0 %v2315
  %8418 = vmatpush.bf16.msra.mxu0 %v2307
  %8419 = vmatpush.bf16.msra.mxu0 %v2299
  %8420 = vmatpush.bf16.msra.mxu0 %v2291
  %8421 = vmatmul.bf16.gmra.mxu0 %v8035
  %v8422 = vpop.f32.mrf.mxu0
  %v8423 = vadd.f32 %v8410, %v8422
  %v8424 = vpop.f32.mrf.mxu0
  %8425 = vdwg.mxu0
  %8426 = vmatpush.bf16.msra.mxu0 %v2284
  %8427 = vmatpush.bf16.msra.mxu0 %v2276
  %8428 = vmatpush.bf16.msra.mxu0 %v2268
  %8429 = vmatpush.bf16.msra.mxu0 %v2260
  %8430 = vmatpush.bf16.msra.mxu0 %v2252
  %8431 = vmatpush.bf16.msra.mxu0 %v2244
  %8432 = vmatpush.bf16.msra.mxu0 %v2236
  %8433 = vmatpush.bf16.msra.mxu0 %v2228
  %8434 = vmatmul.bf16.gmra.mxu0 %v8034
  %v8435 = vpop.f32.mrf.mxu0
  %v8436 = vadd.f32 0.0, %v8435
  %v8437 = vpop.f32.mrf.mxu0
  %8438 = vdwg.mxu0
  %8439 = vmatpush.bf16.msra.mxu0 %v2348
  %8440 = vmatpush.bf16.msra.mxu0 %v2340
  %8441 = vmatpush.bf16.msra.mxu0 %v2332
  %8442 = vmatpush.bf16.msra.mxu0 %v2324
  %8443 = vmatpush.bf16.msra.mxu0 %v2316
  %8444 = vmatpush.bf16.msra.mxu0 %v2308
  %8445 = vmatpush.bf16.msra.mxu0 %v2300
  %8446 = vmatpush.bf16.msra.mxu0 %v2292
  %8447 = vmatmul.bf16.gmra.mxu0 %v8035
  %v8448 = vpop.f32.mrf.mxu0
  %v8449 = vadd.f32 %v8436, %v8448
  %v8450 = vpop.f32.mrf.mxu0
  %8451 = vdwg.mxu0
  %v8452 = vadd.f32 %v7767, %v8267
  %v8453 = vadd.f32 %v7793, %v8293
  %v8454 = vadd.f32 %v7819, %v8319
  %v8455 = vadd.f32 %v7845, %v8345
  %v8456 = vadd.f32 %v7871, %v8371
  %v8457 = vadd.f32 %v7897, %v8397
  %v8458 = vadd.f32 %v7923, %v8423
  %v8459 = vadd.f32 %v7949, %v8449
  %v8460 = vxor.u32 %v8452, 2147483648
  %v8461 = vxor.u32 %v8453, 2147483648
  %v8462 = vxor.u32 %v8454, 2147483648
  %v8463 = vxor.u32 %v8455, 2147483648
  %v8464 = vxor.u32 %v8456, 2147483648
  %v8465 = vxor.u32 %v8457, 2147483648
  %v8466 = vmul.f32 %v8460, 1.442695
  %v8467 = vpow.pop %v8466
  %v8468 = vmul.f32 %v8461, 1.442695
  %v8469 = vpow.pop %v8468
  %v8470 = vmul.f32 %v8462, 1.442695
  %v8471 = vpow.pop %v8470
  %v8472 = vmul.f32 %v8463, 1.442695
  %v8473 = vpow.pop %v8472
  %v8474 = vmul.f32 %v8464, 1.442695
  %v8475 = vpow.pop %v8474
  %v8476 = vmul.f32 %v8465, 1.442695
  %v8477 = vpow.pop %v8476
  %v8478 = vadd.f32 %v8467, 1.0
  %v8479 = vadd.f32 %v8469, 1.0
  %v8480 = vadd.f32 %v8471, 1.0
  %v8481 = vadd.f32 %v8473, 1.0
  %v8482 = vadd.f32 %v8475, 1.0
  %v8483 = vadd.f32 %v8477, 1.0
  %v8484 = vrcp.pop %v8478
  %v8485 = vmul.f32 %v8478, %v8484
  %v8486 = vsub.f32 1.0, %v8485
  %v8487 = vmul.f32 %v8484, %v8486
  %v8488 = vadd.f32 %v8484, %v8487
  %vm8489 = vweird.f32 %v8478
  %vm8490 = vweird.f32 %v8484
  %vm8491 = vmor %vm8489, %vm8490
  %v8492 = vsel %vm8491, %v8484, %v8488
  %v8493 = vand.u32 2147483647, %v8478
  %vm8494 = vcmp.eq.f32.partialorder %v8493, 8.507059e+37
  %v8495 = vand.u32 %v8478, 2147483648
  %v8496 = vor.u32 1.1754944e-38, %v8495
  %v8497 = vsel %vm8494, %v8496, %v8492
  %v8498 = vmul.f32 1.0, %v8497
  %v8499 = vrcp.pop %v8479
  %v8500 = vmul.f32 %v8479, %v8499
  %v8501 = vsub.f32 1.0, %v8500
  %v8502 = vmul.f32 %v8499, %v8501
  %v8503 = vadd.f32 %v8499, %v8502
  %vm8504 = vweird.f32 %v8479
  %vm8505 = vweird.f32 %v8499
  %vm8506 = vmor %vm8504, %vm8505
  %v8507 = vsel %vm8506, %v8499, %v8503
  %v8508 = vand.u32 2147483647, %v8479
  %vm8509 = vcmp.eq.f32.partialorder %v8508, 8.507059e+37
  %v8510 = vand.u32 %v8479, 2147483648
  %v8511 = vor.u32 1.1754944e-38, %v8510
  %v8512 = vsel %vm8509, %v8511, %v8507
  %v8513 = vmul.f32 1.0, %v8512
  %v8514 = vrcp.pop %v8480
  %v8515 = vmul.f32 %v8480, %v8514
  %v8516 = vsub.f32 1.0, %v8515
  %v8517 = vmul.f32 %v8514, %v8516
  %v8518 = vadd.f32 %v8514, %v8517
  %vm8519 = vweird.f32 %v8480
  %vm8520 = vweird.f32 %v8514
  %vm8521 = vmor %vm8519, %vm8520
  %v8522 = vsel %vm8521, %v8514, %v8518
  %v8523 = vand.u32 2147483647, %v8480
  %vm8524 = vcmp.eq.f32.partialorder %v8523, 8.507059e+37
  %v8525 = vand.u32 %v8480, 2147483648
  %v8526 = vor.u32 1.1754944e-38, %v8525
  %v8527 = vsel %vm8524, %v8526, %v8522
  %v8528 = vmul.f32 1.0, %v8527
  %v8529 = vrcp.pop %v8481
  %v8530 = vmul.f32 %v8481, %v8529
  %v8531 = vsub.f32 1.0, %v8530
  %v8532 = vmul.f32 %v8529, %v8531
  %v8533 = vadd.f32 %v8529, %v8532
  %vm8534 = vweird.f32 %v8481
  %vm8535 = vweird.f32 %v8529
  %vm8536 = vmor %vm8534, %vm8535
  %v8537 = vsel %vm8536, %v8529, %v8533
  %v8538 = vand.u32 2147483647, %v8481
  %vm8539 = vcmp.eq.f32.partialorder %v8538, 8.507059e+37
  %v8540 = vand.u32 %v8481, 2147483648
  %v8541 = vor.u32 1.1754944e-38, %v8540
  %v8542 = vsel %vm8539, %v8541, %v8537
  %v8543 = vmul.f32 1.0, %v8542
  %v8544 = vrcp.pop %v8482
  %v8545 = vmul.f32 %v8482, %v8544
  %v8546 = vsub.f32 1.0, %v8545
  %v8547 = vmul.f32 %v8544, %v8546
  %v8548 = vadd.f32 %v8544, %v8547
  %vm8549 = vweird.f32 %v8482
  %vm8550 = vweird.f32 %v8544
  %vm8551 = vmor %vm8549, %vm8550
  %v8552 = vsel %vm8551, %v8544, %v8548
  %v8553 = vand.u32 2147483647, %v8482
  %vm8554 = vcmp.eq.f32.partialorder %v8553, 8.507059e+37
  %v8555 = vand.u32 %v8482, 2147483648
  %v8556 = vor.u32 1.1754944e-38, %v8555
  %v8557 = vsel %vm8554, %v8556, %v8552
  %v8558 = vmul.f32 1.0, %v8557
  %v8559 = vrcp.pop %v8483
  %v8560 = vmul.f32 %v8483, %v8559
  %v8561 = vsub.f32 1.0, %v8560
  %v8562 = vmul.f32 %v8559, %v8561
  %v8563 = vadd.f32 %v8559, %v8562
  %vm8564 = vweird.f32 %v8483
  %vm8565 = vweird.f32 %v8559
  %vm8566 = vmor %vm8564, %vm8565
  %v8567 = vsel %vm8566, %v8559, %v8563
  %v8568 = vand.u32 2147483647, %v8483
  %vm8569 = vcmp.eq.f32.partialorder %v8568, 8.507059e+37
  %v8570 = vand.u32 %v8483, 2147483648
  %v8571 = vor.u32 1.1754944e-38, %v8570
  %v8572 = vsel %vm8569, %v8571, %v8567
  %v8573 = vmul.f32 1.0, %v8572
  %v8574 = vtanh.pop %v8458
  %v8575 = vtanh.pop %v8459
  %v8576 = vmul.f32 %v8528, %v7726
  %v8577 = vmul.f32 %v8543, %v7727
  %v8578 = vmul.f32 %v8498, %v8574
  %v8579 = vmul.f32 %v8513, %v8575
  %v8580 = vadd.f32 %v8576, %v8578
  %v8581 = vadd.f32 %v8577, %v8579
  %v8582 = vtanh.pop %v8580
  %v8583 = vtanh.pop %v8581
  %v8584 = vmul.f32 %v8558, %v8582
  %v8585 = vmul.f32 %v8573, %v8583
  %8588 = vst [vmem:[#allocation1] sm:$0xff] %v8584
  %8589 = vst [vmem:[#allocation1 + $0x9] sm:$0xff] %v8585
  %s8590 = scalar_lea.vmem [#allocation1], 1
  %v8591 = vld [vmem:[%s8590] ss:$9 sm:$0xff]
  %s8593 = scalar_lea.vmem [#allocation3], 6
  %8594 = vst.msk [vmem:[%s8593] ss:$8 sm:$0x3] %vm2829, %v8591
  %8595 = vst.msk [vmem:[%s8593] ss:$8 sm:$0x0] %vm2829, %v8591
  %v8596 = vpack.c.bf16 %v8584, %v8584
  %v8597 = vpack.c.bf16 %v8585, %v8585
  %8598 = vmatpush.bf16.msra.mxu0 %v3274
  %8599 = vmatpush.bf16.msra.mxu0 %v3266
  %8600 = vmatpush.bf16.msra.mxu0 %v3258
  %8601 = vmatpush.bf16.msra.mxu0 %v3250
  %8602 = vmatpush.bf16.msra.mxu0 %v3242
  %8603 = vmatpush.bf16.msra.mxu0 %v3234
  %8604 = vmatpush.bf16.msra.mxu0 %v3226
  %8605 = vmatpush.bf16.msra.mxu0 %v3218
  %8606 = vmatmul.bf16.gmra.mxu0 %v8596
  %v8607 = vpop.f32.mrf.mxu0
  %v8608 = vadd.f32 %v911, %v8607
  %v8609 = vpop.f32.mrf.mxu0
  %8610 = vdwg.mxu0
  %8611 = vmatpush.bf16.msra.mxu0 %v3338
  %8612 = vmatpush.bf16.msra.mxu0 %v3330
  %8613 = vmatpush.bf16.msra.mxu0 %v3322
  %8614 = vmatpush.bf16.msra.mxu0 %v3314
  %8615 = vmatpush.bf16.msra.mxu0 %v3306
  %8616 = vmatpush.bf16.msra.mxu0 %v3298
  %8617 = vmatpush.bf16.msra.mxu0 %v3290
  %8618 = vmatpush.bf16.msra.mxu0 %v3282
  %8619 = vmatmul.bf16.gmra.mxu0 %v8597
  %v8620 = vpop.f32.mrf.mxu0
  %v8621 = vadd.f32 %v8608, %v8620
  %v8622 = vpop.f32.mrf.mxu0
  %8623 = vdwg.mxu0
  %8624 = vmatpush.bf16.msra.mxu0 %v3275
  %8625 = vmatpush.bf16.msra.mxu0 %v3267
  %8626 = vmatpush.bf16.msra.mxu0 %v3259
  %8627 = vmatpush.bf16.msra.mxu0 %v3251
  %8628 = vmatpush.bf16.msra.mxu0 %v3243
  %8629 = vmatpush.bf16.msra.mxu0 %v3235
  %8630 = vmatpush.bf16.msra.mxu0 %v3227
  %8631 = vmatpush.bf16.msra.mxu0 %v3219
  %8632 = vmatmul.bf16.gmra.mxu0 %v8596
  %v8633 = vpop.f32.mrf.mxu0
  %v8634 = vadd.f32 %v912, %v8633
  %v8635 = vpop.f32.mrf.mxu0
  %8636 = vdwg.mxu0
  %8637 = vmatpush.bf16.msra.mxu0 %v3339
  %8638 = vmatpush.bf16.msra.mxu0 %v3331
  %8639 = vmatpush.bf16.msra.mxu0 %v3323
  %8640 = vmatpush.bf16.msra.mxu0 %v3315
  %8641 = vmatpush.bf16.msra.mxu0 %v3307
  %8642 = vmatpush.bf16.msra.mxu0 %v3299
  %8643 = vmatpush.bf16.msra.mxu0 %v3291
  %8644 = vmatpush.bf16.msra.mxu0 %v3283
  %8645 = vmatmul.bf16.gmra.mxu0 %v8597
  %v8646 = vpop.f32.mrf.mxu0
  %v8647 = vadd.f32 %v8634, %v8646
  %v8648 = vpop.f32.mrf.mxu0
  %8649 = vdwg.mxu0
  %8650 = vmatpush.bf16.msra.mxu0 %v3276
  %8651 = vmatpush.bf16.msra.mxu0 %v3268
  %8652 = vmatpush.bf16.msra.mxu0 %v3260
  %8653 = vmatpush.bf16.msra.mxu0 %v3252
  %8654 = vmatpush.bf16.msra.mxu0 %v3244
  %8655 = vmatpush.bf16.msra.mxu0 %v3236
  %8656 = vmatpush.bf16.msra.mxu0 %v3228
  %8657 = vmatpush.bf16.msra.mxu0 %v3220
  %8658 = vmatmul.bf16.gmra.mxu0 %v8596
  %v8659 = vpop.f32.mrf.mxu0
  %v8660 = vadd.f32 %v913, %v8659
  %v8661 = vpop.f32.mrf.mxu0
  %8662 = vdwg.mxu0
  %8663 = vmatpush.bf16.msra.mxu0 %v3340
  %8664 = vmatpush.bf16.msra.mxu0 %v3332
  %8665 = vmatpush.bf16.msra.mxu0 %v3324
  %8666 = vmatpush.bf16.msra.mxu0 %v3316
  %8667 = vmatpush.bf16.msra.mxu0 %v3308
  %8668 = vmatpush.bf16.msra.mxu0 %v3300
  %8669 = vmatpush.bf16.msra.mxu0 %v3292
  %8670 = vmatpush.bf16.msra.mxu0 %v3284
  %8671 = vmatmul.bf16.gmra.mxu0 %v8597
  %v8672 = vpop.f32.mrf.mxu0
  %v8673 = vadd.f32 %v8660, %v8672
  %v8674 = vpop.f32.mrf.mxu0
  %8675 = vdwg.mxu0
  %8676 = vmatpush.bf16.msra.mxu0 %v3277
  %8677 = vmatpush.bf16.msra.mxu0 %v3269
  %8678 = vmatpush.bf16.msra.mxu0 %v3261
  %8679 = vmatpush.bf16.msra.mxu0 %v3253
  %8680 = vmatpush.bf16.msra.mxu0 %v3245
  %8681 = vmatpush.bf16.msra.mxu0 %v3237
  %8682 = vmatpush.bf16.msra.mxu0 %v3229
  %8683 = vmatpush.bf16.msra.mxu0 %v3221
  %8684 = vmatmul.bf16.gmra.mxu0 %v8596
  %v8685 = vpop.f32.mrf.mxu0
  %v8686 = vadd.f32 %v914, %v8685
  %v8687 = vpop.f32.mrf.mxu0
  %8688 = vdwg.mxu0
  %8689 = vmatpush.bf16.msra.mxu0 %v3341
  %8690 = vmatpush.bf16.msra.mxu0 %v3333
  %8691 = vmatpush.bf16.msra.mxu0 %v3325
  %8692 = vmatpush.bf16.msra.mxu0 %v3317
  %8693 = vmatpush.bf16.msra.mxu0 %v3309
  %8694 = vmatpush.bf16.msra.mxu0 %v3301
  %8695 = vmatpush.bf16.msra.mxu0 %v3293
  %8696 = vmatpush.bf16.msra.mxu0 %v3285
  %8697 = vmatmul.bf16.gmra.mxu0 %v8597
  %v8698 = vpop.f32.mrf.mxu0
  %v8699 = vadd.f32 %v8686, %v8698
  %v8700 = vpop.f32.mrf.mxu0
  %8701 = vdwg.mxu0
  %8702 = vmatpush.bf16.msra.mxu0 %v3278
  %8703 = vmatpush.bf16.msra.mxu0 %v3270
  %8704 = vmatpush.bf16.msra.mxu0 %v3262
  %8705 = vmatpush.bf16.msra.mxu0 %v3254
  %8706 = vmatpush.bf16.msra.mxu0 %v3246
  %8707 = vmatpush.bf16.msra.mxu0 %v3238
  %8708 = vmatpush.bf16.msra.mxu0 %v3230
  %8709 = vmatpush.bf16.msra.mxu0 %v3222
  %8710 = vmatmul.bf16.gmra.mxu0 %v8596
  %v8711 = vpop.f32.mrf.mxu0
  %v8712 = vadd.f32 %v915, %v8711
  %v8713 = vpop.f32.mrf.mxu0
  %8714 = vdwg.mxu0
  %8715 = vmatpush.bf16.msra.mxu0 %v3342
  %8716 = vmatpush.bf16.msra.mxu0 %v3334
  %8717 = vmatpush.bf16.msra.mxu0 %v3326
  %8718 = vmatpush.bf16.msra.mxu0 %v3318
  %8719 = vmatpush.bf16.msra.mxu0 %v3310
  %8720 = vmatpush.bf16.msra.mxu0 %v3302
  %8721 = vmatpush.bf16.msra.mxu0 %v3294
  %8722 = vmatpush.bf16.msra.mxu0 %v3286
  %8723 = vmatmul.bf16.gmra.mxu0 %v8597
  %v8724 = vpop.f32.mrf.mxu0
  %v8725 = vadd.f32 %v8712, %v8724
  %v8726 = vpop.f32.mrf.mxu0
  %8727 = vdwg.mxu0
  %8728 = vmatpush.bf16.msra.mxu0 %v3279
  %8729 = vmatpush.bf16.msra.mxu0 %v3271
  %8730 = vmatpush.bf16.msra.mxu0 %v3263
  %8731 = vmatpush.bf16.msra.mxu0 %v3255
  %8732 = vmatpush.bf16.msra.mxu0 %v3247
  %8733 = vmatpush.bf16.msra.mxu0 %v3239
  %8734 = vmatpush.bf16.msra.mxu0 %v3231
  %8735 = vmatpush.bf16.msra.mxu0 %v3223
  %8736 = vmatmul.bf16.gmra.mxu0 %v8596
  %v8737 = vpop.f32.mrf.mxu0
  %v8738 = vadd.f32 %v916, %v8737
  %v8739 = vpop.f32.mrf.mxu0
  %8740 = vdwg.mxu0
  %8741 = vmatpush.bf16.msra.mxu0 %v3343
  %8742 = vmatpush.bf16.msra.mxu0 %v3335
  %8743 = vmatpush.bf16.msra.mxu0 %v3327
  %8744 = vmatpush.bf16.msra.mxu0 %v3319
  %8745 = vmatpush.bf16.msra.mxu0 %v3311
  %8746 = vmatpush.bf16.msra.mxu0 %v3303
  %8747 = vmatpush.bf16.msra.mxu0 %v3295
  %8748 = vmatpush.bf16.msra.mxu0 %v3287
  %8749 = vmatmul.bf16.gmra.mxu0 %v8597
  %v8750 = vpop.f32.mrf.mxu0
  %v8751 = vadd.f32 %v8738, %v8750
  %v8752 = vpop.f32.mrf.mxu0
  %8753 = vdwg.mxu0
  %8754 = vmatpush.bf16.msra.mxu0 %v3280
  %8755 = vmatpush.bf16.msra.mxu0 %v3272
  %8756 = vmatpush.bf16.msra.mxu0 %v3264
  %8757 = vmatpush.bf16.msra.mxu0 %v3256
  %8758 = vmatpush.bf16.msra.mxu0 %v3248
  %8759 = vmatpush.bf16.msra.mxu0 %v3240
  %8760 = vmatpush.bf16.msra.mxu0 %v3232
  %8761 = vmatpush.bf16.msra.mxu0 %v3224
  %8762 = vmatmul.bf16.gmra.mxu0 %v8596
  %v8763 = vpop.f32.mrf.mxu0
  %v8764 = vadd.f32 %v917, %v8763
  %v8765 = vpop.f32.mrf.mxu0
  %8766 = vdwg.mxu0
  %8767 = vmatpush.bf16.msra.mxu0 %v3344
  %8768 = vmatpush.bf16.msra.mxu0 %v3336
  %8769 = vmatpush.bf16.msra.mxu0 %v3328
  %8770 = vmatpush.bf16.msra.mxu0 %v3320
  %8771 = vmatpush.bf16.msra.mxu0 %v3312
  %8772 = vmatpush.bf16.msra.mxu0 %v3304
  %8773 = vmatpush.bf16.msra.mxu0 %v3296
  %8774 = vmatpush.bf16.msra.mxu0 %v3288
  %8775 = vmatmul.bf16.gmra.mxu0 %v8597
  %v8776 = vpop.f32.mrf.mxu0
  %v8777 = vadd.f32 %v8764, %v8776
  %v8778 = vpop.f32.mrf.mxu0
  %8779 = vdwg.mxu0
  %8780 = vmatpush.bf16.msra.mxu0 %v3281
  %8781 = vmatpush.bf16.msra.mxu0 %v3273
  %8782 = vmatpush.bf16.msra.mxu0 %v3265
  %8783 = vmatpush.bf16.msra.mxu0 %v3257
  %8784 = vmatpush.bf16.msra.mxu0 %v3249
  %8785 = vmatpush.bf16.msra.mxu0 %v3241
  %8786 = vmatpush.bf16.msra.mxu0 %v3233
  %8787 = vmatpush.bf16.msra.mxu0 %v3225
  %8788 = vmatmul.bf16.gmra.mxu0 %v8596
  %v8789 = vpop.f32.mrf.mxu0
  %v8790 = vadd.f32 %v918, %v8789
  %v8791 = vpop.f32.mrf.mxu0
  %8792 = vdwg.mxu0
  %8793 = vmatpush.bf16.msra.mxu0 %v3345
  %8794 = vmatpush.bf16.msra.mxu0 %v3337
  %8795 = vmatpush.bf16.msra.mxu0 %v3329
  %8796 = vmatpush.bf16.msra.mxu0 %v3321
  %8797 = vmatpush.bf16.msra.mxu0 %v3313
  %8798 = vmatpush.bf16.msra.mxu0 %v3305
  %8799 = vmatpush.bf16.msra.mxu0 %v3297
  %8800 = vmatpush.bf16.msra.mxu0 %v3289
  %8801 = vmatmul.bf16.gmra.mxu0 %v8597
  %v8802 = vpop.f32.mrf.mxu0
  %v8803 = vadd.f32 %v8790, %v8802
  %v8804 = vpop.f32.mrf.mxu0
  %8805 = vdwg.mxu0
  %v8806 = vld [vmem:[%s522] sm:$0xff]
  %v8807 = vld [vmem:[%s522 + $0x8] sm:$0xff]
  %v8816 = vrot.slane %v8085, 6
  %v8817 = vrot.slane %v8111, 4
  %v8818 = vrot.slane %v8137, 2
  %v8819 = vrot.slane %v8189, 6
  %v8820 = vrot.slane %v8215, 4
  %v8821 = vrot.slane %v8241, 2
  %v8822 = vsel %vm385, %v8059, %v8816
  %v8823 = vsel %vm387, %v8817, %v8818
  %v8824 = vsel %vm389, %v8822, %v8823
  %v8825 = vsel %vm385, %v8163, %v8819
  %v8826 = vsel %vm387, %v8820, %v8821
  %v8827 = vsel %vm389, %v8825, %v8826
  %v8830 = vadd.f32 %v8806, %v8824
  %v8831 = vadd.f32 %v8807, %v8827
  %v8832 = vxor.u32 %v8830, 2147483648
  %v8833 = vxor.u32 %v8831, 2147483648
  %v8834 = vmul.f32 %v8832, 1.442695
  %v8835 = vpow.pop %v8834
  %v8836 = vmul.f32 %v8833, 1.442695
  %v8837 = vpow.pop %v8836
  %v8838 = vadd.f32 %v8835, 1.0
  %v8839 = vadd.f32 %v8837, 1.0
  %v8840 = vrcp.pop %v8838
  %v8841 = vmul.f32 %v8838, %v8840
  %v8842 = vsub.f32 1.0, %v8841
  %v8843 = vmul.f32 %v8840, %v8842
  %v8844 = vadd.f32 %v8840, %v8843
  %vm8845 = vweird.f32 %v8838
  %vm8846 = vweird.f32 %v8840
  %vm8847 = vmor %vm8845, %vm8846
  %v8848 = vsel %vm8847, %v8840, %v8844
  %v8849 = vand.u32 2147483647, %v8838
  %vm8850 = vcmp.eq.f32.partialorder %v8849, 8.507059e+37
  %v8851 = vand.u32 %v8838, 2147483648
  %v8852 = vor.u32 1.1754944e-38, %v8851
  %v8853 = vsel %vm8850, %v8852, %v8848
  %v8854 = vmul.f32 1.0, %v8853
  %v8855 = vrcp.pop %v8839
  %v8856 = vmul.f32 %v8839, %v8855
  %v8857 = vsub.f32 1.0, %v8856
  %v8858 = vmul.f32 %v8855, %v8857
  %v8859 = vadd.f32 %v8855, %v8858
  %vm8860 = vweird.f32 %v8839
  %vm8861 = vweird.f32 %v8855
  %vm8862 = vmor %vm8860, %vm8861
  %v8863 = vsel %vm8862, %v8855, %v8859
  %v8864 = vand.u32 2147483647, %v8839
  %vm8865 = vcmp.eq.f32.partialorder %v8864, 8.507059e+37
  %v8866 = vand.u32 %v8839, 2147483648
  %v8867 = vor.u32 1.1754944e-38, %v8866
  %v8868 = vsel %vm8865, %v8867, %v8863
  %v8869 = vmul.f32 1.0, %v8868
  %v8871 = vrot.slane %v8831, 4
  %v8873 = vtanh.pop %v8871
  %v8875 = vrot.slane %v8854, 4
  %v8877 = vmul.f32 %v8875, %v8025
  %v8878 = vmul.f32 %v8854, %v8873
  %v8879 = vadd.f32 %v8877, %v8878
  %v8880 = vtanh.pop %v8879
  %v8881 = vmul.f32 %v8869, %v8880
  %8883 = vst [vmem:[#allocation1] ss:$4 sm:$0xff] %v8881
  %v8884 = vld.sshfl [vmem:[#allocation1] sm:$0xff pattern:$0x73625140]
  %v8885 = vld.sshfl [vmem:[#allocation1 + $0x8] sm:$0xff pattern:$0x73625140]
  %v8888 = vpack.c.bf16 %v8884, %v8884
  %v8889 = vpack.c.bf16 %v8885, %v8885
  %8890 = vmatpush.bf16.msra.mxu0 %v2277
  %8891 = vmatpush.bf16.msra.mxu0 %v2269
  %8892 = vmatpush.bf16.msra.mxu0 %v2261
  %8893 = vmatpush.bf16.msra.mxu0 %v2253
  %8894 = vmatpush.bf16.msra.mxu0 %v2245
  %8895 = vmatpush.bf16.msra.mxu0 %v2237
  %8896 = vmatpush.bf16.msra.mxu0 %v2229
  %8897 = vmatpush.bf16.msra.mxu0 %v2221
  %8898 = vmatmul.bf16.gmra.mxu0 %v8888
  %v8899 = vpop.f32.mrf.mxu0
  %v8900 = vadd.f32 0.0, %v8899
  %v8901 = vpop.f32.mrf.mxu0
  %8902 = vdwg.mxu0
  %8903 = vmatpush.bf16.msra.mxu0 %v2341
  %8904 = vmatpush.bf16.msra.mxu0 %v2333
  %8905 = vmatpush.bf16.msra.mxu0 %v2325
  %8906 = vmatpush.bf16.msra.mxu0 %v2317
  %8907 = vmatpush.bf16.msra.mxu0 %v2309
  %8908 = vmatpush.bf16.msra.mxu0 %v2301
  %8909 = vmatpush.bf16.msra.mxu0 %v2293
  %8910 = vmatpush.bf16.msra.mxu0 %v2285
  %8911 = vmatmul.bf16.gmra.mxu0 %v8889
  %v8912 = vpop.f32.mrf.mxu0
  %v8913 = vadd.f32 %v8900, %v8912
  %v8914 = vpop.f32.mrf.mxu0
  %8915 = vdwg.mxu0
  %8916 = vmatpush.bf16.msra.mxu0 %v2278
  %8917 = vmatpush.bf16.msra.mxu0 %v2270
  %8918 = vmatpush.bf16.msra.mxu0 %v2262
  %8919 = vmatpush.bf16.msra.mxu0 %v2254
  %8920 = vmatpush.bf16.msra.mxu0 %v2246
  %8921 = vmatpush.bf16.msra.mxu0 %v2238
  %8922 = vmatpush.bf16.msra.mxu0 %v2230
  %8923 = vmatpush.bf16.msra.mxu0 %v2222
  %8924 = vmatmul.bf16.gmra.mxu0 %v8888
  %v8925 = vpop.f32.mrf.mxu0
  %v8926 = vadd.f32 0.0, %v8925
  %v8927 = vpop.f32.mrf.mxu0
  %8928 = vdwg.mxu0
  %8929 = vmatpush.bf16.msra.mxu0 %v2342
  %8930 = vmatpush.bf16.msra.mxu0 %v2334
  %8931 = vmatpush.bf16.msra.mxu0 %v2326
  %8932 = vmatpush.bf16.msra.mxu0 %v2318
  %8933 = vmatpush.bf16.msra.mxu0 %v2310
  %8934 = vmatpush.bf16.msra.mxu0 %v2302
  %8935 = vmatpush.bf16.msra.mxu0 %v2294
  %8936 = vmatpush.bf16.msra.mxu0 %v2286
  %8937 = vmatmul.bf16.gmra.mxu0 %v8889
  %v8938 = vpop.f32.mrf.mxu0
  %v8939 = vadd.f32 %v8926, %v8938
  %v8940 = vpop.f32.mrf.mxu0
  %8941 = vdwg.mxu0
  %8942 = vmatpush.bf16.msra.mxu0 %v2279
  %8943 = vmatpush.bf16.msra.mxu0 %v2271
  %8944 = vmatpush.bf16.msra.mxu0 %v2263
  %8945 = vmatpush.bf16.msra.mxu0 %v2255
  %8946 = vmatpush.bf16.msra.mxu0 %v2247
  %8947 = vmatpush.bf16.msra.mxu0 %v2239
  %8948 = vmatpush.bf16.msra.mxu0 %v2231
  %8949 = vmatpush.bf16.msra.mxu0 %v2223
  %8950 = vmatmul.bf16.gmra.mxu0 %v8888
  %v8951 = vpop.f32.mrf.mxu0
  %v8952 = vadd.f32 0.0, %v8951
  %v8953 = vpop.f32.mrf.mxu0
  %8954 = vdwg.mxu0
  %8955 = vmatpush.bf16.msra.mxu0 %v2343
  %8956 = vmatpush.bf16.msra.mxu0 %v2335
  %8957 = vmatpush.bf16.msra.mxu0 %v2327
  %8958 = vmatpush.bf16.msra.mxu0 %v2319
  %8959 = vmatpush.bf16.msra.mxu0 %v2311
  %8960 = vmatpush.bf16.msra.mxu0 %v2303
  %8961 = vmatpush.bf16.msra.mxu0 %v2295
  %8962 = vmatpush.bf16.msra.mxu0 %v2287
  %8963 = vmatmul.bf16.gmra.mxu0 %v8889
  %v8964 = vpop.f32.mrf.mxu0
  %v8965 = vadd.f32 %v8952, %v8964
  %v8966 = vpop.f32.mrf.mxu0
  %8967 = vdwg.mxu0
  %8968 = vmatpush.bf16.msra.mxu0 %v2280
  %8969 = vmatpush.bf16.msra.mxu0 %v2272
  %8970 = vmatpush.bf16.msra.mxu0 %v2264
  %8971 = vmatpush.bf16.msra.mxu0 %v2256
  %8972 = vmatpush.bf16.msra.mxu0 %v2248
  %8973 = vmatpush.bf16.msra.mxu0 %v2240
  %8974 = vmatpush.bf16.msra.mxu0 %v2232
  %8975 = vmatpush.bf16.msra.mxu0 %v2224
  %8976 = vmatmul.bf16.gmra.mxu0 %v8888
  %v8977 = vpop.f32.mrf.mxu0
  %v8978 = vadd.f32 0.0, %v8977
  %v8979 = vpop.f32.mrf.mxu0
  %8980 = vdwg.mxu0
  %8981 = vmatpush.bf16.msra.mxu0 %v2344
  %8982 = vmatpush.bf16.msra.mxu0 %v2336
  %8983 = vmatpush.bf16.msra.mxu0 %v2328
  %8984 = vmatpush.bf16.msra.mxu0 %v2320
  %8985 = vmatpush.bf16.msra.mxu0 %v2312
  %8986 = vmatpush.bf16.msra.mxu0 %v2304
  %8987 = vmatpush.bf16.msra.mxu0 %v2296
  %8988 = vmatpush.bf16.msra.mxu0 %v2288
  %8989 = vmatmul.bf16.gmra.mxu0 %v8889
  %v8990 = vpop.f32.mrf.mxu0
  %v8991 = vadd.f32 %v8978, %v8990
  %v8992 = vpop.f32.mrf.mxu0
  %8993 = vdwg.mxu0
  %8994 = vmatpush.bf16.msra.mxu0 %v2281
  %8995 = vmatpush.bf16.msra.mxu0 %v2273
  %8996 = vmatpush.bf16.msra.mxu0 %v2265
  %8997 = vmatpush.bf16.msra.mxu0 %v2257
  %8998 = vmatpush.bf16.msra.mxu0 %v2249
  %8999 = vmatpush.bf16.msra.mxu0 %v2241
  %9000 = vmatpush.bf16.msra.mxu0 %v2233
  %9001 = vmatpush.bf16.msra.mxu0 %v2225
  %9002 = vmatmul.bf16.gmra.mxu0 %v8888
  %v9003 = vpop.f32.mrf.mxu0
  %v9004 = vadd.f32 0.0, %v9003
  %v9005 = vpop.f32.mrf.mxu0
  %9006 = vdwg.mxu0
  %9007 = vmatpush.bf16.msra.mxu0 %v2345
  %9008 = vmatpush.bf16.msra.mxu0 %v2337
  %9009 = vmatpush.bf16.msra.mxu0 %v2329
  %9010 = vmatpush.bf16.msra.mxu0 %v2321
  %9011 = vmatpush.bf16.msra.mxu0 %v2313
  %9012 = vmatpush.bf16.msra.mxu0 %v2305
  %9013 = vmatpush.bf16.msra.mxu0 %v2297
  %9014 = vmatpush.bf16.msra.mxu0 %v2289
  %9015 = vmatmul.bf16.gmra.mxu0 %v8889
  %v9016 = vpop.f32.mrf.mxu0
  %v9017 = vadd.f32 %v9004, %v9016
  %v9018 = vpop.f32.mrf.mxu0
  %9019 = vdwg.mxu0
  %9020 = vmatpush.bf16.msra.mxu0 %v2282
  %9021 = vmatpush.bf16.msra.mxu0 %v2274
  %9022 = vmatpush.bf16.msra.mxu0 %v2266
  %9023 = vmatpush.bf16.msra.mxu0 %v2258
  %9024 = vmatpush.bf16.msra.mxu0 %v2250
  %9025 = vmatpush.bf16.msra.mxu0 %v2242
  %9026 = vmatpush.bf16.msra.mxu0 %v2234
  %9027 = vmatpush.bf16.msra.mxu0 %v2226
  %9028 = vmatmul.bf16.gmra.mxu0 %v8888
  %v9029 = vpop.f32.mrf.mxu0
  %v9030 = vadd.f32 0.0, %v9029
  %v9031 = vpop.f32.mrf.mxu0
  %9032 = vdwg.mxu0
  %9033 = vmatpush.bf16.msra.mxu0 %v2346
  %9034 = vmatpush.bf16.msra.mxu0 %v2338
  %9035 = vmatpush.bf16.msra.mxu0 %v2330
  %9036 = vmatpush.bf16.msra.mxu0 %v2322
  %9037 = vmatpush.bf16.msra.mxu0 %v2314
  %9038 = vmatpush.bf16.msra.mxu0 %v2306
  %9039 = vmatpush.bf16.msra.mxu0 %v2298
  %9040 = vmatpush.bf16.msra.mxu0 %v2290
  %9041 = vmatmul.bf16.gmra.mxu0 %v8889
  %v9042 = vpop.f32.mrf.mxu0
  %v9043 = vadd.f32 %v9030, %v9042
  %v9044 = vpop.f32.mrf.mxu0
  %9045 = vdwg.mxu0
  %9046 = vmatpush.bf16.msra.mxu0 %v2283
  %9047 = vmatpush.bf16.msra.mxu0 %v2275
  %9048 = vmatpush.bf16.msra.mxu0 %v2267
  %9049 = vmatpush.bf16.msra.mxu0 %v2259
  %9050 = vmatpush.bf16.msra.mxu0 %v2251
  %9051 = vmatpush.bf16.msra.mxu0 %v2243
  %9052 = vmatpush.bf16.msra.mxu0 %v2235
  %9053 = vmatpush.bf16.msra.mxu0 %v2227
  %9054 = vmatmul.bf16.gmra.mxu0 %v8888
  %v9055 = vpop.f32.mrf.mxu0
  %v9056 = vadd.f32 0.0, %v9055
  %v9057 = vpop.f32.mrf.mxu0
  %9058 = vdwg.mxu0
  %9059 = vmatpush.bf16.msra.mxu0 %v2347
  %9060 = vmatpush.bf16.msra.mxu0 %v2339
  %9061 = vmatpush.bf16.msra.mxu0 %v2331
  %9062 = vmatpush.bf16.msra.mxu0 %v2323
  %9063 = vmatpush.bf16.msra.mxu0 %v2315
  %9064 = vmatpush.bf16.msra.mxu0 %v2307
  %9065 = vmatpush.bf16.msra.mxu0 %v2299
  %9066 = vmatpush.bf16.msra.mxu0 %v2291
  %9067 = vmatmul.bf16.gmra.mxu0 %v8889
  %v9068 = vpop.f32.mrf.mxu0
  %v9069 = vadd.f32 %v9056, %v9068
  %v9070 = vpop.f32.mrf.mxu0
  %9071 = vdwg.mxu0
  %9072 = vmatpush.bf16.msra.mxu0 %v2284
  %9073 = vmatpush.bf16.msra.mxu0 %v2276
  %9074 = vmatpush.bf16.msra.mxu0 %v2268
  %9075 = vmatpush.bf16.msra.mxu0 %v2260
  %9076 = vmatpush.bf16.msra.mxu0 %v2252
  %9077 = vmatpush.bf16.msra.mxu0 %v2244
  %9078 = vmatpush.bf16.msra.mxu0 %v2236
  %9079 = vmatpush.bf16.msra.mxu0 %v2228
  %9080 = vmatmul.bf16.gmra.mxu0 %v8888
  %v9081 = vpop.f32.mrf.mxu0
  %v9082 = vadd.f32 0.0, %v9081
  %v9083 = vpop.f32.mrf.mxu0
  %9084 = vdwg.mxu0
  %9085 = vmatpush.bf16.msra.mxu0 %v2348
  %9086 = vmatpush.bf16.msra.mxu0 %v2340
  %9087 = vmatpush.bf16.msra.mxu0 %v2332
  %9088 = vmatpush.bf16.msra.mxu0 %v2324
  %9089 = vmatpush.bf16.msra.mxu0 %v2316
  %9090 = vmatpush.bf16.msra.mxu0 %v2308
  %9091 = vmatpush.bf16.msra.mxu0 %v2300
  %9092 = vmatpush.bf16.msra.mxu0 %v2292
  %9093 = vmatmul.bf16.gmra.mxu0 %v8889
  %v9094 = vpop.f32.mrf.mxu0
  %v9095 = vadd.f32 %v9082, %v9094
  %v9096 = vpop.f32.mrf.mxu0
  %9097 = vdwg.mxu0
  %v9098 = vadd.f32 %v8621, %v8913
  %v9099 = vadd.f32 %v8647, %v8939
  %v9100 = vadd.f32 %v8673, %v8965
  %v9101 = vadd.f32 %v8699, %v8991
  %v9102 = vadd.f32 %v8725, %v9017
  %v9103 = vadd.f32 %v8751, %v9043
  %v9104 = vadd.f32 %v8777, %v9069
  %v9105 = vadd.f32 %v8803, %v9095
  %v9106 = vxor.u32 %v9098, 2147483648
  %v9107 = vxor.u32 %v9099, 2147483648
  %v9108 = vxor.u32 %v9100, 2147483648
  %v9109 = vxor.u32 %v9101, 2147483648
  %v9110 = vxor.u32 %v9102, 2147483648
  %v9111 = vxor.u32 %v9103, 2147483648
  %v9112 = vmul.f32 %v9106, 1.442695
  %v9113 = vpow.pop %v9112
  %v9114 = vmul.f32 %v9107, 1.442695
  %v9115 = vpow.pop %v9114
  %v9116 = vmul.f32 %v9108, 1.442695
  %v9117 = vpow.pop %v9116
  %v9118 = vmul.f32 %v9109, 1.442695
  %v9119 = vpow.pop %v9118
  %v9120 = vmul.f32 %v9110, 1.442695
  %v9121 = vpow.pop %v9120
  %v9122 = vmul.f32 %v9111, 1.442695
  %v9123 = vpow.pop %v9122
  %v9124 = vadd.f32 %v9113, 1.0
  %v9125 = vadd.f32 %v9115, 1.0
  %v9126 = vadd.f32 %v9117, 1.0
  %v9127 = vadd.f32 %v9119, 1.0
  %v9128 = vadd.f32 %v9121, 1.0
  %v9129 = vadd.f32 %v9123, 1.0
  %v9130 = vrcp.pop %v9124
  %v9131 = vmul.f32 %v9124, %v9130
  %v9132 = vsub.f32 1.0, %v9131
  %v9133 = vmul.f32 %v9130, %v9132
  %v9134 = vadd.f32 %v9130, %v9133
  %vm9135 = vweird.f32 %v9124
  %vm9136 = vweird.f32 %v9130
  %vm9137 = vmor %vm9135, %vm9136
  %v9138 = vsel %vm9137, %v9130, %v9134
  %v9139 = vand.u32 2147483647, %v9124
  %vm9140 = vcmp.eq.f32.partialorder %v9139, 8.507059e+37
  %v9141 = vand.u32 %v9124, 2147483648
  %v9142 = vor.u32 1.1754944e-38, %v9141
  %v9143 = vsel %vm9140, %v9142, %v9138
  %v9144 = vmul.f32 1.0, %v9143
  %v9145 = vrcp.pop %v9125
  %v9146 = vmul.f32 %v9125, %v9145
  %v9147 = vsub.f32 1.0, %v9146
  %v9148 = vmul.f32 %v9145, %v9147
  %v9149 = vadd.f32 %v9145, %v9148
  %vm9150 = vweird.f32 %v9125
  %vm9151 = vweird.f32 %v9145
  %vm9152 = vmor %vm9150, %vm9151
  %v9153 = vsel %vm9152, %v9145, %v9149
  %v9154 = vand.u32 2147483647, %v9125
  %vm9155 = vcmp.eq.f32.partialorder %v9154, 8.507059e+37
  %v9156 = vand.u32 %v9125, 2147483648
  %v9157 = vor.u32 1.1754944e-38, %v9156
  %v9158 = vsel %vm9155, %v9157, %v9153
  %v9159 = vmul.f32 1.0, %v9158
  %v9160 = vrcp.pop %v9126
  %v9161 = vmul.f32 %v9126, %v9160
  %v9162 = vsub.f32 1.0, %v9161
  %v9163 = vmul.f32 %v9160, %v9162
  %v9164 = vadd.f32 %v9160, %v9163
  %vm9165 = vweird.f32 %v9126
  %vm9166 = vweird.f32 %v9160
  %vm9167 = vmor %vm9165, %vm9166
  %v9168 = vsel %vm9167, %v9160, %v9164
  %v9169 = vand.u32 2147483647, %v9126
  %vm9170 = vcmp.eq.f32.partialorder %v9169, 8.507059e+37
  %v9171 = vand.u32 %v9126, 2147483648
  %v9172 = vor.u32 1.1754944e-38, %v9171
  %v9173 = vsel %vm9170, %v9172, %v9168
  %v9174 = vmul.f32 1.0, %v9173
  %v9175 = vrcp.pop %v9127
  %v9176 = vmul.f32 %v9127, %v9175
  %v9177 = vsub.f32 1.0, %v9176
  %v9178 = vmul.f32 %v9175, %v9177
  %v9179 = vadd.f32 %v9175, %v9178
  %vm9180 = vweird.f32 %v9127
  %vm9181 = vweird.f32 %v9175
  %vm9182 = vmor %vm9180, %vm9181
  %v9183 = vsel %vm9182, %v9175, %v9179
  %v9184 = vand.u32 2147483647, %v9127
  %vm9185 = vcmp.eq.f32.partialorder %v9184, 8.507059e+37
  %v9186 = vand.u32 %v9127, 2147483648
  %v9187 = vor.u32 1.1754944e-38, %v9186
  %v9188 = vsel %vm9185, %v9187, %v9183
  %v9189 = vmul.f32 1.0, %v9188
  %v9190 = vrcp.pop %v9128
  %v9191 = vmul.f32 %v9128, %v9190
  %v9192 = vsub.f32 1.0, %v9191
  %v9193 = vmul.f32 %v9190, %v9192
  %v9194 = vadd.f32 %v9190, %v9193
  %vm9195 = vweird.f32 %v9128
  %vm9196 = vweird.f32 %v9190
  %vm9197 = vmor %vm9195, %vm9196
  %v9198 = vsel %vm9197, %v9190, %v9194
  %v9199 = vand.u32 2147483647, %v9128
  %vm9200 = vcmp.eq.f32.partialorder %v9199, 8.507059e+37
  %v9201 = vand.u32 %v9128, 2147483648
  %v9202 = vor.u32 1.1754944e-38, %v9201
  %v9203 = vsel %vm9200, %v9202, %v9198
  %v9204 = vmul.f32 1.0, %v9203
  %v9205 = vrcp.pop %v9129
  %v9206 = vmul.f32 %v9129, %v9205
  %v9207 = vsub.f32 1.0, %v9206
  %v9208 = vmul.f32 %v9205, %v9207
  %v9209 = vadd.f32 %v9205, %v9208
  %vm9210 = vweird.f32 %v9129
  %vm9211 = vweird.f32 %v9205
  %vm9212 = vmor %vm9210, %vm9211
  %v9213 = vsel %vm9212, %v9205, %v9209
  %v9214 = vand.u32 2147483647, %v9129
  %vm9215 = vcmp.eq.f32.partialorder %v9214, 8.507059e+37
  %v9216 = vand.u32 %v9129, 2147483648
  %v9217 = vor.u32 1.1754944e-38, %v9216
  %v9218 = vsel %vm9215, %v9217, %v9213
  %v9219 = vmul.f32 1.0, %v9218
  %v9220 = vtanh.pop %v9104
  %v9221 = vtanh.pop %v9105
  %v9222 = vmul.f32 %v9174, %v8580
  %v9223 = vmul.f32 %v9189, %v8581
  %v9224 = vmul.f32 %v9144, %v9220
  %v9225 = vmul.f32 %v9159, %v9221
  %v9226 = vadd.f32 %v9222, %v9224
  %v9227 = vadd.f32 %v9223, %v9225
  %v9228 = vtanh.pop %v9226
  %v9229 = vtanh.pop %v9227
  %v9230 = vmul.f32 %v9204, %v9228
  %v9231 = vmul.f32 %v9219, %v9229
  %9234 = vst [vmem:[#allocation1] sm:$0xff] %v9230
  %9235 = vst [vmem:[#allocation1 + $0x9] sm:$0xff] %v9231
  %s9236 = scalar_lea.vmem [#allocation1], 1
  %v9237 = vld [vmem:[%s9236] ss:$9 sm:$0xff]
  %s9239 = scalar_lea.vmem [#allocation3], 7
  %9240 = vst.msk [vmem:[%s9239] ss:$8 sm:$0x3] %vm2829, %v9237
  %9241 = vst.msk [vmem:[%s9239] ss:$8 sm:$0x0] %vm2829, %v9237
  %v9242 = vld [vmem:[#allocation3] sm:$0xff]
  %v9243 = vld [vmem:[#allocation3 + $0x8] sm:$0xff]
  %v9244 = vpack.c.bf16 %v9242, %v9242
  %v9245 = vpack.c.bf16 %v9243, %v9243
  %v9246 = vld [vmem:[%s7] sm:$0xff]
  %v9247 = vld [vmem:[%s7 + $0x8] sm:$0xff]
  %v9248 = vld [vmem:[%s7 + $0x10] sm:$0xff]
  %v9249 = vld [vmem:[%s7 + $0x18] sm:$0xff]
  %v9250 = vld [vmem:[%s7 + $0x20] sm:$0xff]
  %v9251 = vld [vmem:[%s7 + $0x28] sm:$0xff]
  %v9252 = vld [vmem:[%s7 + $0x30] sm:$0xff]
  %v9253 = vld [vmem:[%s7 + $0x38] sm:$0xff]
  %v9254 = vld [vmem:[%s7 + $0x40] sm:$0xff]
  %v9255 = vld [vmem:[%s7 + $0x48] sm:$0xff]
  %v9256 = vld [vmem:[%s7 + $0x50] sm:$0xff]
  %v9257 = vld [vmem:[%s7 + $0x58] sm:$0xff]
  %v9258 = vld [vmem:[%s7 + $0x60] sm:$0xff]
  %v9259 = vld [vmem:[%s7 + $0x68] sm:$0xff]
  %v9260 = vld [vmem:[%s7 + $0x70] sm:$0xff]
  %v9261 = vld [vmem:[%s7 + $0x78] sm:$0xff]
  %v9262 = vld [vmem:[%s7 + $0x80] sm:$0xff]
  %v9263 = vld [vmem:[%s7 + $0x88] sm:$0xff]
  %v9264 = vld [vmem:[%s7 + $0x90] sm:$0xff]
  %v9265 = vld [vmem:[%s7 + $0x98] sm:$0xff]
  %v9266 = vld [vmem:[%s7 + $0xa0] sm:$0xff]
  %v9267 = vld [vmem:[%s7 + $0xa8] sm:$0xff]
  %v9268 = vld [vmem:[%s7 + $0xb0] sm:$0xff]
  %v9269 = vld [vmem:[%s7 + $0xb8] sm:$0xff]
  %v9270 = vld [vmem:[%s7 + $0xc0] sm:$0xff]
  %v9271 = vld [vmem:[%s7 + $0xc8] sm:$0xff]
  %v9272 = vld [vmem:[%s7 + $0xd0] sm:$0xff]
  %v9273 = vld [vmem:[%s7 + $0xd8] sm:$0xff]
  %v9274 = vld [vmem:[%s7 + $0xe0] sm:$0xff]
  %v9275 = vld [vmem:[%s7 + $0xe8] sm:$0xff]
  %v9276 = vld [vmem:[%s7 + $0xf0] sm:$0xff]
  %v9277 = vld [vmem:[%s7 + $0xf8] sm:$0xff]
  %v9278 = vld [vmem:[%s8] sm:$0x3]
  %v9280 = vperm.slane %v9278, 0
  %v9281 = vperm.slane %v9278, 1
  %v9316 = vunpack.c.l.b16 %v9246
  %v9317 = vunpack.c.h.b16 %v9246
  %v9318 = vunpack.c.l.b16 %v9247
  %v9319 = vunpack.c.h.b16 %v9247
  %v9320 = vunpack.c.l.b16 %v9248
  %v9321 = vunpack.c.h.b16 %v9248
  %v9322 = vunpack.c.l.b16 %v9249
  %v9323 = vunpack.c.h.b16 %v9249
  %v9324 = vunpack.c.l.b16 %v9250
  %v9325 = vunpack.c.h.b16 %v9250
  %v9326 = vunpack.c.l.b16 %v9251
  %v9327 = vunpack.c.h.b16 %v9251
  %v9328 = vunpack.c.l.b16 %v9252
  %v9329 = vunpack.c.h.b16 %v9252
  %v9330 = vunpack.c.l.b16 %v9253
  %v9331 = vunpack.c.h.b16 %v9253
  %v9332 = vunpack.c.l.b16 %v9254
  %v9333 = vunpack.c.h.b16 %v9254
  %v9334 = vunpack.c.l.b16 %v9255
  %v9335 = vunpack.c.h.b16 %v9255
  %v9336 = vunpack.c.l.b16 %v9256
  %v9337 = vunpack.c.h.b16 %v9256
  %v9338 = vunpack.c.l.b16 %v9257
  %v9339 = vunpack.c.h.b16 %v9257
  %v9340 = vunpack.c.l.b16 %v9258
  %v9341 = vunpack.c.h.b16 %v9258
  %v9342 = vunpack.c.l.b16 %v9259
  %v9343 = vunpack.c.h.b16 %v9259
  %v9344 = vunpack.c.l.b16 %v9260
  %v9345 = vunpack.c.h.b16 %v9260
  %v9346 = vunpack.c.l.b16 %v9261
  %v9347 = vunpack.c.h.b16 %v9261
  %v9348 = vunpack.c.l.b16 %v9262
  %v9349 = vunpack.c.h.b16 %v9262
  %v9350 = vunpack.c.l.b16 %v9263
  %v9351 = vunpack.c.h.b16 %v9263
  %v9352 = vunpack.c.l.b16 %v9264
  %v9353 = vunpack.c.h.b16 %v9264
  %v9354 = vunpack.c.l.b16 %v9265
  %v9355 = vunpack.c.h.b16 %v9265
  %v9356 = vunpack.c.l.b16 %v9266
  %v9357 = vunpack.c.h.b16 %v9266
  %v9358 = vunpack.c.l.b16 %v9267
  %v9359 = vunpack.c.h.b16 %v9267
  %v9360 = vunpack.c.l.b16 %v9268
  %v9361 = vunpack.c.h.b16 %v9268
  %v9362 = vunpack.c.l.b16 %v9269
  %v9363 = vunpack.c.h.b16 %v9269
  %v9364 = vunpack.c.l.b16 %v9270
  %v9365 = vunpack.c.h.b16 %v9270
  %v9366 = vunpack.c.l.b16 %v9271
  %v9367 = vunpack.c.h.b16 %v9271
  %v9368 = vunpack.c.l.b16 %v9272
  %v9369 = vunpack.c.h.b16 %v9272
  %v9370 = vunpack.c.l.b16 %v9273
  %v9371 = vunpack.c.h.b16 %v9273
  %v9372 = vunpack.c.l.b16 %v9274
  %v9373 = vunpack.c.h.b16 %v9274
  %v9374 = vunpack.c.l.b16 %v9275
  %v9375 = vunpack.c.h.b16 %v9275
  %v9376 = vunpack.c.l.b16 %v9276
  %v9377 = vunpack.c.h.b16 %v9276
  %v9378 = vunpack.c.l.b16 %v9277
  %v9379 = vunpack.c.h.b16 %v9277
  %v9380 = vpack.c.b16 %v9318, %v9316
  %v9381 = vpack.c.b16 %v9319, %v9317
  %v9382 = vpack.c.b16 %v9322, %v9320
  %v9383 = vpack.c.b16 %v9323, %v9321
  %v9384 = vpack.c.b16 %v9326, %v9324
  %v9385 = vpack.c.b16 %v9327, %v9325
  %v9386 = vpack.c.b16 %v9330, %v9328
  %v9387 = vpack.c.b16 %v9331, %v9329
  %v9388 = vpack.c.b16 %v9334, %v9332
  %v9389 = vpack.c.b16 %v9335, %v9333
  %v9390 = vpack.c.b16 %v9338, %v9336
  %v9391 = vpack.c.b16 %v9339, %v9337
  %v9392 = vpack.c.b16 %v9342, %v9340
  %v9393 = vpack.c.b16 %v9343, %v9341
  %v9394 = vpack.c.b16 %v9346, %v9344
  %v9395 = vpack.c.b16 %v9347, %v9345
  %v9396 = vpack.c.b16 %v9350, %v9348
  %v9397 = vpack.c.b16 %v9351, %v9349
  %v9398 = vpack.c.b16 %v9354, %v9352
  %v9399 = vpack.c.b16 %v9355, %v9353
  %v9400 = vpack.c.b16 %v9358, %v9356
  %v9401 = vpack.c.b16 %v9359, %v9357
  %v9402 = vpack.c.b16 %v9362, %v9360
  %v9403 = vpack.c.b16 %v9363, %v9361
  %v9404 = vpack.c.b16 %v9366, %v9364
  %v9405 = vpack.c.b16 %v9367, %v9365
  %v9406 = vpack.c.b16 %v9370, %v9368
  %v9407 = vpack.c.b16 %v9371, %v9369
  %v9408 = vpack.c.b16 %v9374, %v9372
  %v9409 = vpack.c.b16 %v9375, %v9373
  %v9410 = vpack.c.b16 %v9378, %v9376
  %v9411 = vpack.c.b16 %v9379, %v9377
  %9444 = vmatpush.bf16.msra.mxu0 %v9394
  %9445 = vmatpush.bf16.msra.mxu0 %v9392
  %9446 = vmatpush.bf16.msra.mxu0 %v9390
  %9447 = vmatpush.bf16.msra.mxu0 %v9388
  %9448 = vmatpush.bf16.msra.mxu0 %v9386
  %9449 = vmatpush.bf16.msra.mxu0 %v9384
  %9450 = vmatpush.bf16.msra.mxu0 %v9382
  %9451 = vmatpush.bf16.msra.mxu0 %v9380
  %9452 = vmatmul.bf16.gmra.mxu0 %v9244
  %v9453 = vpop.f32.mrf.mxu0
  %v9454 = vadd.f32 %v9280, %v9453
  %v9455 = vpop.f32.mrf.mxu0
  %9456 = vdwg.mxu0
  %9457 = vmatpush.bf16.msra.mxu0 %v9410
  %9458 = vmatpush.bf16.msra.mxu0 %v9408
  %9459 = vmatpush.bf16.msra.mxu0 %v9406
  %9460 = vmatpush.bf16.msra.mxu0 %v9404
  %9461 = vmatpush.bf16.msra.mxu0 %v9402
  %9462 = vmatpush.bf16.msra.mxu0 %v9400
  %9463 = vmatpush.bf16.msra.mxu0 %v9398
  %9464 = vmatpush.bf16.msra.mxu0 %v9396
  %9465 = vmatmul.bf16.gmra.mxu0 %v9245
  %v9466 = vpop.f32.mrf.mxu0
  %v9467 = vadd.f32 %v9454, %v9466
  %v9468 = vpop.f32.mrf.mxu0
  %9469 = vdwg.mxu0
  %9470 = vmatpush.bf16.msra.mxu0 %v9395
  %9471 = vmatpush.bf16.msra.mxu0 %v9393
  %9472 = vmatpush.bf16.msra.mxu0 %v9391
  %9473 = vmatpush.bf16.msra.mxu0 %v9389
  %9474 = vmatpush.bf16.msra.mxu0 %v9387
  %9475 = vmatpush.bf16.msra.mxu0 %v9385
  %9476 = vmatpush.bf16.msra.mxu0 %v9383
  %9477 = vmatpush.bf16.msra.mxu0 %v9381
  %9478 = vmatmul.bf16.gmra.mxu0 %v9244
  %v9479 = vpop.f32.mrf.mxu0
  %v9480 = vadd.f32 %v9281, %v9479
  %v9481 = vpop.f32.mrf.mxu0
  %9482 = vdwg.mxu0
  %9483 = vmatpush.bf16.msra.mxu0 %v9411
  %9484 = vmatpush.bf16.msra.mxu0 %v9409
  %9485 = vmatpush.bf16.msra.mxu0 %v9407
  %9486 = vmatpush.bf16.msra.mxu0 %v9405
  %9487 = vmatpush.bf16.msra.mxu0 %v9403
  %9488 = vmatpush.bf16.msra.mxu0 %v9401
  %9489 = vmatpush.bf16.msra.mxu0 %v9399
  %9490 = vmatpush.bf16.msra.mxu0 %v9397
  %9491 = vmatmul.bf16.gmra.mxu0 %v9245
  %v9492 = vpop.f32.mrf.mxu0
  %v9493 = vadd.f32 %v9480, %v9492
  %v9494 = vpop.f32.mrf.mxu0
  %9495 = vdwg.mxu0
  %v9496 = vmax.f32 %v9467, 0.0
  %v9497 = vmax.f32 %v9493, 0.0
  %v9498 = vld [vmem:[%s9] sm:$0x3]
  %v9500 = vperm.slane %v9498, 0
  %v9501 = vperm.slane %v9498, 1
  %v9504 = vmul.f32 %v9496, %v9500
  %v9505 = vmul.f32 %v9497, %v9501
  %v9506 = vadd.f32 %v9504, %v9505
  %9507 = vadd.xlane.f32.xlu0 %v9506
  %v9508 = vpop.xlane.xlu0 %9507
  %v9509 = vld [vmem:[#allocation4] sm:$0x1]
  %v9511 = vperm.slane %v9509, 0
  %v9513 = vadd.f32 %v9508, %v9511
  %vm9514 = vcmask 7168
  %9515 = vst.msk [vmem:[%s11] sm:$0xff] %vm9514, %v9513
  // Predicated region
  $region46: #{lstm_model_forward.1} parent=0 // pred_check
    _
  $region47: #{lstm_model_forward.1} parent=0 // pred_check_branch
    %9517 = sbr.rel (0) target = $region49
  $region48: #{lstm_model_forward.1} parent=0 // pred_region
    _
  $region49: #{lstm_model_forward.1} parent=0 // pred_fallthru
    _
  // Predicated region
  $region50: #{lstm_model_forward.1} parent=0 // pred_check
    _
  $region51: #{lstm_model_forward.1} parent=0 // pred_check_branch
    %9519 = sbr.rel (0) target = $region53
  $region52: #{lstm_model_forward.1} parent=0 // pred_region
    _
  $region53: #{lstm_model_forward.1} parent=0 // pred_fallthru
    _

</llo_original>
